<compile_context>
chip_gen: v7x
topology: tpu7x:2x2x1
jax: 0.10.0
libtpu: 0.0.40
codegen_flags: <defaults>
</compile_context>

<pallas_src>
import jax
import jax.numpy as jnp
import numpy as np
from jax import lax
from jax.experimental import pallas as pl
from jax.experimental.pallas import tpu as pltpu

EPS = 1e-5


def _round_up(a, m):
    return (a + m - 1) // m * m


def _cdiv(a, b):
    return (a + b - 1) // b


# --------------------- glue: phase decomposition (no im2col) ---------------------
def _phase_decompose(x_dct, kd, kt, sd, st, pd, pt, tt):
    """x_dct: (B, D, C, T) -> (B, P=sd*st, Dph, C, Tph) bf16, plus geometry.

    Single jnp.pad (the conv zero padding + phase/tile evenness) + strided
    slices + stack: one pass over the input, no kd*kt amplification.
    """
    B, D, C, T = x_dct.shape
    D_p, T_p = D + 2 * pd, T + 2 * pt
    Dout = (D_p - kd) // sd + 1
    Tout = (T_p - kt) // st + 1
    n_t = _cdiv(Tout, tt)
    H = (kt - 1) // st                                   # time halo (phase cols)
    Dph = _cdiv(D_p, sd)
    Tph = max(_cdiv(T_p, st), n_t * tt + H)              # in-kernel slices stay in-bounds
    xp = jnp.pad(x_dct.astype(jnp.bfloat16),
                 ((0, 0),
                  (pd, sd * Dph - D - pd),
                  (0, 0),
                  (pt, st * Tph - T - pt)))
    xph = jnp.stack([xp[:, si::sd, :, sj::st]
                     for si in range(sd) for sj in range(st)], axis=1)
    return xph, Dout, Tout, n_t, H, Dph, Tph


# ------------------------------ fused conv block ------------------------------
def conv_bn_act_mask_block(x_dct, lengths, w, b, gamma, beta, mean, var,
                           stride, pad, out_dtype=jnp.bfloat16, tt_cap=2048):
    """Conv2d -> BN(eval) -> Hardtanh(0,20) -> time mask, fused in one kernel.

    x_dct: (B, D, C, T) activations (D-major layout).  Returns (B, Dout, Cout, Tout).
    """
    B, D, C, T = x_dct.shape
    Cout, Cin, kd, kt = w.shape
    assert Cin == C
    sd, st = stride
    pd, pt = pad

    # Time tile: lane-dense multiple of 128; tt_cap keeps per-step output tiles
    # ~MBs at real DeepSpeech shapes while the per-dout strip-mining below keeps
    # the live f32 accumulator at (Cout, tt) so nothing spills.
    D_p, T_p = D + 2 * pd, T + 2 * pt
    Tout_pre = (T_p - kt) // st + 1
    tt = min(tt_cap, _round_up(Tout_pre, 128))

    xph, Dout, Tout, n_t, H, Dph, Tph = _phase_decompose(
        x_dct, kd, kt, sd, st, pd, pt, tt)
    P = sd * st

    # Per-kernel-position weights, bf16 for the MXU.  BN scale / shift stay f32
    # and are applied in the f32 epilogue (no bf16 re-quantisation of scaled
    # weights for channels with tiny running variance).
    w2 = jnp.transpose(w, (2, 3, 0, 1)).reshape(kd * kt, Cout, Cin)
    w2 = w2.astype(jnp.bfloat16)
    s = gamma / jnp.sqrt(var + EPS)
    scale = s.reshape(Cout, 1).astype(jnp.float32)
    shift = ((b - mean) * s + beta).reshape(Cout, 1).astype(jnp.float32)

    def kernel(len_ref, x_ref, w_ref, sc_ref, sh_ref, o_ref):
        bi = pl.program_id(0)
        t0 = pl.multiple_of(pl.program_id(1) * tt, 128)
        # In-kernel time index (no tidx DMA stream, no modulo): lane l is
        # global output time t0 + l; zero where t >= lengths[b].
        tvec = lax.broadcasted_iota(jnp.int32, (1, tt), 1) + t0
        # Hoisted broadcasts (JAX does not CSE broadcast_in_dim).
        maskf = jnp.broadcast_to(tvec >= len_ref[bi], (Cout, tt))
        scalef = jnp.broadcast_to(sc_ref[...], (Cout, tt))
        shiftf = jnp.broadcast_to(sh_ref[...], (Cout, tt))

        for dout in range(Dout):                      # strip-mined epilogue
            acc = jnp.zeros((Cout, tt), jnp.float32)
            for i in range(kd):
                r = i // sd + dout                    # static phase row
                for sj in range(st):
                    p = (i % sd) * st + sj            # static phase index
                    # Aligned dynamic slice (start multiple of 128) + halo.
                    xw = x_ref[0, p, r, :, pl.ds(t0, tt + H)]     # (Cin, tt+H)
                    for j in range(sj, kt, st):       # all j with j % st == sj
                        xs = xw[:, j // st:j // st + tt]          # (Cin, tt)
                        wij = w_ref[i * kt + j]                   # (Cout, Cin)
                        if Cin == 1:
                            # Degenerate K=1 contraction -> VPU outer product.
                            acc += wij.astype(jnp.float32) * xs.astype(jnp.float32)
                        else:
                            acc += jnp.dot(wij, xs,
                                           preferred_element_type=jnp.float32)
            y = jnp.clip(acc * scalef + shiftf, 0.0, 20.0)        # BN + Hardtanh
            y = jnp.where(maskf, 0.0, y)                          # time mask
            o_ref[0, dout, :, :] = y.astype(o_ref.dtype)

    out = pl.pallas_call(
        kernel,
        out_shape=jax.ShapeDtypeStruct((B, Dout, Cout, Tout), out_dtype),
        grid_spec=pltpu.PrefetchScalarGridSpec(
            num_scalar_prefetch=1,                     # lengths -> SMEM
            grid=(B, n_t),                             # time tiles innermost
            in_specs=[
                # per-batch phased input, resident across the time-tile axis
                pl.BlockSpec((1, P, Dph, C, Tph),
                             lambda bi, mi, L: (bi, 0, 0, 0, 0)),
                # weights / BN scale / BN shift: fetched once, stay resident
                pl.BlockSpec((kd * kt, Cout, Cin), lambda bi, mi, L: (0, 0, 0)),
                pl.BlockSpec((Cout, 1), lambda bi, mi, L: (0, 0)),
                pl.BlockSpec((Cout, 1), lambda bi, mi, L: (0, 0)),
            ],
            out_specs=pl.BlockSpec((1, Dout, Cout, tt),
                                   lambda bi, mi, L: (bi, 0, 0, mi)),
        ),
        compiler_params=pltpu.CompilerParams(
            dimension_semantics=("parallel", "parallel"),   # megacore on v7x
            vmem_limit_bytes=32 * 1024 * 1024),
    )(lengths, xph, w2, scale, shift)
    return out


def mask_conv_forward(x, lengths, params):
    """MaskConv.forward: x is NCDT (B, C, D, T).  Returns (x_out, lengths)."""
    # Internal activations are (B, D, C, T) so chained blocks need no transpose.
    y = jnp.transpose(x, (0, 2, 1, 3))
    for idx, p in enumerate(params):
        last = idx == len(params) - 1
        y = conv_bn_act_mask_block(
            y, lengths, p["w"], p["b"], p["gamma"], p["beta"],
            p["mean"], p["var"], p["stride"], p["pad"],
            out_dtype=jnp.float32 if last else jnp.bfloat16)
    return jnp.transpose(y, (0, 2, 1, 3)), lengths


# ----------------------------- pure-JAX reference -----------------------------
def _mask_time(x, lengths):
    T = x.shape[-1]
    m = jnp.arange(T)[None, :] >= lengths[:, None]          # (B, T)
    return jnp.where(m[:, None, None, :], 0.0, x)


def ref_forward(x, lengths, params):
    # Matches the PyTorch loop: mask after EVERY submodule (f32 throughout).
    for p in params:
        sd, st = p["stride"]
        pd, pt = p["pad"]
        x = jax.lax.conv_general_dilated(
            x, p["w"], window_strides=(sd, st),
            padding=[(pd, pd), (pt, pt)],
            dimension_numbers=("NCHW", "OIHW", "NCHW"),
        ) + p["b"][None, :, None, None]
        x = _mask_time(x, lengths)
        x = ((x - p["mean"][None, :, None, None])
             / jnp.sqrt(p["var"][None, :, None, None] + EPS)
             * p["gamma"][None, :, None, None]
             + p["beta"][None, :, None, None])
        x = _mask_time(x, lengths)
        x = jnp.clip(x, 0.0, 20.0)
        x = _mask_time(x, lengths)
    return x, lengths


# ------------------------------------ main ------------------------------------
if __name__ == "__main__":
    key = jax.random.PRNGKey(0)
    ks = jax.random.split(key, 16)

    B, Cin, D, T = 2, 1, 16, 512
    C1, C2 = 8, 8

    # deterministic synthetic parameters for the two conv blocks
    # (seq_module = Conv2d -> BN2d(eval) -> Hardtanh(0, 20), twice)
    params = [
        dict(w=0.1 * jax.random.normal(ks[0], (C1, Cin, 3, 3), jnp.float32),
             b=0.1 * jax.random.normal(ks[1], (C1,), jnp.float32),
             gamma=1.0 + 0.1 * jax.random.normal(ks[2], (C1,), jnp.float32),
             beta=0.1 * jax.random.normal(ks[3], (C1,), jnp.float32),
             mean=0.1 * jax.random.normal(ks[4], (C1,), jnp.float32),
             var=1.0 + 0.1 * jnp.abs(jax.random.normal(ks[5], (C1,), jnp.float32)),
             stride=(2, 2), pad=(1, 1)),
        dict(w=0.1 * jax.random.normal(ks[6], (C2, C1, 3, 3), jnp.float32),
             b=0.1 * jax.random.normal(ks[7], (C2,), jnp.float32),
             gamma=1.0 + 0.1 * jax.random.normal(ks[8], (C2,), jnp.float32),
             beta=0.1 * jax.random.normal(ks[9], (C2,), jnp.float32),
             mean=0.1 * jax.random.normal(ks[10], (C2,), jnp.float32),
             var=1.0 + 0.1 * jnp.abs(jax.random.normal(ks[11], (C2,), jnp.float32)),
             stride=(2, 1), pad=(1, 1)),
    ]

    x = jax.random.normal(ks[12], (B, Cin, D, T), jnp.float32)
    # lengths are compared against each block's output time size, exactly like
    # the PyTorch module (batch 0: no masking; batch 1: masked from t=150).
    lengths = jnp.array([256, 150], dtype=jnp.int32)

    fwd = jax.jit(lambda xx, ll: mask_conv_forward(xx, ll, params))
    out, out_lengths = fwd(x, lengths)
    out = jax.block_until_ready(out)

    ref, _ = ref_forward(x, lengths, params)
    # bf16 MXU operands + bf16 intermediate activations (f32 accumulation and
    # epilogue) vs an all-f32 reference.
    np.testing.assert_allclose(np.asarray(out), np.asarray(ref), rtol=5e-2, atol=5e-2)
    assert out.shape == (B, C2, 4, 256)
    assert np.array_equal(np.asarray(out_lengths), np.asarray(lengths))

    print("KERNEL_OK")
</pallas_src>

<mosaic_0001>
module attributes {stable_mosaic.version = 11 : i64} {
  func.func @kernel(%arg0: i32, %arg1: i32, %arg2: memref<2xi32, #tpu.memory_space<smem>>, %arg3: memref<1x4x9x1x257xbf16, #tpu.memory_space<vmem>>, %arg4: memref<9x8x1xbf16, #tpu.memory_space<vmem>>, %arg5: memref<8x1xf32, #tpu.memory_space<vmem>>, %arg6: memref<8x1xf32, #tpu.memory_space<vmem>>, %arg7: memref<1x8x8x256xbf16, #tpu.memory_space<vmem>>) attributes {dimension_semantics = [#tpu.dimension_semantics<parallel>, #tpu.dimension_semantics<parallel>], iteration_bounds = array<i64: 2, 1>, scalar_prefetch = 1 : i64, scratch_operands = 0 : i64, tpu.core_type = #tpu.core_type<tc>, window_params = [{transform_indices = @transform_0, window_bounds = array<i64: 1, 4, 9, 1, 257>}, {pipeline_mode = #tpu.pipeline_mode<synchronous>, transform_indices = @transform_1, window_bounds = array<i64: 9, 8, 1>}, {pipeline_mode = #tpu.pipeline_mode<synchronous>, transform_indices = @transform_2, window_bounds = array<i64: 8, 1>}, {pipeline_mode = #tpu.pipeline_mode<synchronous>, transform_indices = @transform_3, window_bounds = array<i64: 8, 1>}, {transform_indices = @transform_4, window_bounds = array<i64: 1, 8, 8, 256>}]} {
    %c256_i32 = arith.constant 256 : i32
    %0 = arith.muli %arg1, %c256_i32 : i32
    %1 = tpu.assume_multiple %0, 128 : i32
    %2 = tpu.iota {dimensions = array<i32: 1>} : vector<1x256xi32>
    %3 = vector.broadcast %1 : i32 to vector<1x256xi32>
    %4 = arith.addi %2, %3 : vector<1x256xi32>
    %5 = arith.index_cast %arg0 : i32 to index
    %6 = memref.load %arg2[%5] : memref<2xi32, #tpu.memory_space<smem>>
    %7 = vector.broadcast %6 : i32 to vector<1x256xi32>
    %8 = arith.cmpi sge, %4, %7 : vector<1x256xi32>
    %9 = vector.shape_cast %8 : vector<1x256xi1> to vector<1x256xi1>
    %10 = vector.broadcast %9 : vector<1x256xi1> to vector<8x256xi1>
    %c0 = arith.constant 0 : index
    %c0_0 = arith.constant 0 : index
    %11 = vector.load %arg5[%c0, %c0_0] : memref<8x1xf32, #tpu.memory_space<vmem>>, vector<8x1xf32>
    %12 = vector.shape_cast %11 : vector<8x1xf32> to vector<8x1xf32>
    %13 = vector.broadcast %12 : vector<8x1xf32> to vector<8x256xf32>
    %c0_1 = arith.constant 0 : index
    %c0_2 = arith.constant 0 : index
    %14 = vector.load %arg6[%c0_1, %c0_2] : memref<8x1xf32, #tpu.memory_space<vmem>>, vector<8x1xf32>
    %15 = vector.shape_cast %14 : vector<8x1xf32> to vector<8x1xf32>
    %16 = vector.broadcast %15 : vector<8x1xf32> to vector<8x256xf32>
    %cst = arith.constant 0.000000e+00 : f32
    %17 = vector.broadcast %cst : f32 to vector<8x256xf32>
    %c0_3 = arith.constant 0 : index
    %c0_4 = arith.constant 0 : index
    %c0_5 = arith.constant 0 : index
    %c0_6 = arith.constant 0 : index
    %18 = arith.index_cast %1 : i32 to index
    %19 = vector.load %arg3[%c0_3, %c0_4, %c0_5, %c0_6, %18] : memref<1x4x9x1x257xbf16, #tpu.memory_space<vmem>>, vector<1x1x1x1x257xbf16>
    %20 = vector.shape_cast %19 : vector<1x1x1x1x257xbf16> to vector<1x257xbf16>
    %21 = vector.extract_strided_slice %20 {offsets = [0, 0], sizes = [1, 256], strides = [1, 1]} : vector<1x257xbf16> to vector<1x256xbf16>
    %c0_7 = arith.constant 0 : index
    %c0_8 = arith.constant 0 : index
    %c0_9 = arith.constant 0 : index
    %22 = vector.load %arg4[%c0_7, %c0_8, %c0_9] : memref<9x8x1xbf16, #tpu.memory_space<vmem>>, vector<1x8x1xbf16>
    %23 = vector.shape_cast %22 : vector<1x8x1xbf16> to vector<8x1xbf16>
    %24 = arith.extf %23 : vector<8x1xbf16> to vector<8x1xf32>
    %25 = arith.extf %21 : vector<1x256xbf16> to vector<1x256xf32>
    %26 = vector.broadcast %24 : vector<8x1xf32> to vector<8x256xf32>
    %27 = vector.broadcast %25 : vector<1x256xf32> to vector<8x256xf32>
    %28 = arith.mulf %26, %27 : vector<8x256xf32>
    %29 = arith.addf %17, %28 : vector<8x256xf32>
    %30 = vector.extract_strided_slice %20 {offsets = [0, 1], sizes = [1, 256], strides = [1, 1]} : vector<1x257xbf16> to vector<1x256xbf16>
    %c2 = arith.constant 2 : index
    %c0_10 = arith.constant 0 : index
    %c0_11 = arith.constant 0 : index
    %31 = vector.load %arg4[%c2, %c0_10, %c0_11] : memref<9x8x1xbf16, #tpu.memory_space<vmem>>, vector<1x8x1xbf16>
    %32 = vector.shape_cast %31 : vector<1x8x1xbf16> to vector<8x1xbf16>
    %33 = arith.extf %32 : vector<8x1xbf16> to vector<8x1xf32>
    %34 = arith.extf %30 : vector<1x256xbf16> to vector<1x256xf32>
    %35 = vector.broadcast %33 : vector<8x1xf32> to vector<8x256xf32>
    %36 = vector.broadcast %34 : vector<1x256xf32> to vector<8x256xf32>
    %37 = arith.mulf %35, %36 : vector<8x256xf32>
    %38 = arith.addf %29, %37 : vector<8x256xf32>
    %c0_12 = arith.constant 0 : index
    %c1 = arith.constant 1 : index
    %c0_13 = arith.constant 0 : index
    %c0_14 = arith.constant 0 : index
    %39 = arith.index_cast %1 : i32 to index
    %40 = vector.load %arg3[%c0_12, %c1, %c0_13, %c0_14, %39] : memref<1x4x9x1x257xbf16, #tpu.memory_space<vmem>>, vector<1x1x1x1x257xbf16>
    %41 = vector.shape_cast %40 : vector<1x1x1x1x257xbf16> to vector<1x257xbf16>
    %42 = vector.extract_strided_slice %41 {offsets = [0, 0], sizes = [1, 256], strides = [1, 1]} : vector<1x257xbf16> to vector<1x256xbf16>
    %c1_15 = arith.constant 1 : index
    %c0_16 = arith.constant 0 : index
    %c0_17 = arith.constant 0 : index
    %43 = vector.load %arg4[%c1_15, %c0_16, %c0_17] : memref<9x8x1xbf16, #tpu.memory_space<vmem>>, vector<1x8x1xbf16>
    %44 = vector.shape_cast %43 : vector<1x8x1xbf16> to vector<8x1xbf16>
    %45 = arith.extf %44 : vector<8x1xbf16> to vector<8x1xf32>
    %46 = arith.extf %42 : vector<1x256xbf16> to vector<1x256xf32>
    %47 = vector.broadcast %45 : vector<8x1xf32> to vector<8x256xf32>
    %48 = vector.broadcast %46 : vector<1x256xf32> to vector<8x256xf32>
    %49 = arith.mulf %47, %48 : vector<8x256xf32>
    %50 = arith.addf %38, %49 : vector<8x256xf32>
    %c0_18 = arith.constant 0 : index
    %c2_19 = arith.constant 2 : index
    %c0_20 = arith.constant 0 : index
    %c0_21 = arith.constant 0 : index
    %51 = arith.index_cast %1 : i32 to index
    %52 = vector.load %arg3[%c0_18, %c2_19, %c0_20, %c0_21, %51] : memref<1x4x9x1x257xbf16, #tpu.memory_space<vmem>>, vector<1x1x1x1x257xbf16>
    %53 = vector.shape_cast %52 : vector<1x1x1x1x257xbf16> to vector<1x257xbf16>
    %54 = vector.extract_strided_slice %53 {offsets = [0, 0], sizes = [1, 256], strides = [1, 1]} : vector<1x257xbf16> to vector<1x256xbf16>
    %c3 = arith.constant 3 : index
    %c0_22 = arith.constant 0 : index
    %c0_23 = arith.constant 0 : index
    %55 = vector.load %arg4[%c3, %c0_22, %c0_23] : memref<9x8x1xbf16, #tpu.memory_space<vmem>>, vector<1x8x1xbf16>
    %56 = vector.shape_cast %55 : vector<1x8x1xbf16> to vector<8x1xbf16>
    %57 = arith.extf %56 : vector<8x1xbf16> to vector<8x1xf32>
    %58 = arith.extf %54 : vector<1x256xbf16> to vector<1x256xf32>
    %59 = vector.broadcast %57 : vector<8x1xf32> to vector<8x256xf32>
    %60 = vector.broadcast %58 : vector<1x256xf32> to vector<8x256xf32>
    %61 = arith.mulf %59, %60 : vector<8x256xf32>
    %62 = arith.addf %50, %61 : vector<8x256xf32>
    %63 = vector.extract_strided_slice %53 {offsets = [0, 1], sizes = [1, 256], strides = [1, 1]} : vector<1x257xbf16> to vector<1x256xbf16>
    %c5 = arith.constant 5 : index
    %c0_24 = arith.constant 0 : index
    %c0_25 = arith.constant 0 : index
    %64 = vector.load %arg4[%c5, %c0_24, %c0_25] : memref<9x8x1xbf16, #tpu.memory_space<vmem>>, vector<1x8x1xbf16>
    %65 = vector.shape_cast %64 : vector<1x8x1xbf16> to vector<8x1xbf16>
    %66 = arith.extf %65 : vector<8x1xbf16> to vector<8x1xf32>
    %67 = arith.extf %63 : vector<1x256xbf16> to vector<1x256xf32>
    %68 = vector.broadcast %66 : vector<8x1xf32> to vector<8x256xf32>
    %69 = vector.broadcast %67 : vector<1x256xf32> to vector<8x256xf32>
    %70 = arith.mulf %68, %69 : vector<8x256xf32>
    %71 = arith.addf %62, %70 : vector<8x256xf32>
    %c0_26 = arith.constant 0 : index
    %c3_27 = arith.constant 3 : index
    %c0_28 = arith.constant 0 : index
    %c0_29 = arith.constant 0 : index
    %72 = arith.index_cast %1 : i32 to index
    %73 = vector.load %arg3[%c0_26, %c3_27, %c0_28, %c0_29, %72] : memref<1x4x9x1x257xbf16, #tpu.memory_space<vmem>>, vector<1x1x1x1x257xbf16>
    %74 = vector.shape_cast %73 : vector<1x1x1x1x257xbf16> to vector<1x257xbf16>
    %75 = vector.extract_strided_slice %74 {offsets = [0, 0], sizes = [1, 256], strides = [1, 1]} : vector<1x257xbf16> to vector<1x256xbf16>
    %c4 = arith.constant 4 : index
    %c0_30 = arith.constant 0 : index
    %c0_31 = arith.constant 0 : index
    %76 = vector.load %arg4[%c4, %c0_30, %c0_31] : memref<9x8x1xbf16, #tpu.memory_space<vmem>>, vector<1x8x1xbf16>
    %77 = vector.shape_cast %76 : vector<1x8x1xbf16> to vector<8x1xbf16>
    %78 = arith.extf %77 : vector<8x1xbf16> to vector<8x1xf32>
    %79 = arith.extf %75 : vector<1x256xbf16> to vector<1x256xf32>
    %80 = vector.broadcast %78 : vector<8x1xf32> to vector<8x256xf32>
    %81 = vector.broadcast %79 : vector<1x256xf32> to vector<8x256xf32>
    %82 = arith.mulf %80, %81 : vector<8x256xf32>
    %83 = arith.addf %71, %82 : vector<8x256xf32>
    %c0_32 = arith.constant 0 : index
    %c0_33 = arith.constant 0 : index
    %c1_34 = arith.constant 1 : index
    %c0_35 = arith.constant 0 : index
    %84 = arith.index_cast %1 : i32 to index
    %85 = vector.load %arg3[%c0_32, %c0_33, %c1_34, %c0_35, %84] : memref<1x4x9x1x257xbf16, #tpu.memory_space<vmem>>, vector<1x1x1x1x257xbf16>
    %86 = vector.shape_cast %85 : vector<1x1x1x1x257xbf16> to vector<1x257xbf16>
    %87 = vector.extract_strided_slice %86 {offsets = [0, 0], sizes = [1, 256], strides = [1, 1]} : vector<1x257xbf16> to vector<1x256xbf16>
    %c6 = arith.constant 6 : index
    %c0_36 = arith.constant 0 : index
    %c0_37 = arith.constant 0 : index
    %88 = vector.load %arg4[%c6, %c0_36, %c0_37] : memref<9x8x1xbf16, #tpu.memory_space<vmem>>, vector<1x8x1xbf16>
    %89 = vector.shape_cast %88 : vector<1x8x1xbf16> to vector<8x1xbf16>
    %90 = arith.extf %89 : vector<8x1xbf16> to vector<8x1xf32>
    %91 = arith.extf %87 : vector<1x256xbf16> to vector<1x256xf32>
    %92 = vector.broadcast %90 : vector<8x1xf32> to vector<8x256xf32>
    %93 = vector.broadcast %91 : vector<1x256xf32> to vector<8x256xf32>
    %94 = arith.mulf %92, %93 : vector<8x256xf32>
    %95 = arith.addf %83, %94 : vector<8x256xf32>
    %96 = vector.extract_strided_slice %86 {offsets = [0, 1], sizes = [1, 256], strides = [1, 1]} : vector<1x257xbf16> to vector<1x256xbf16>
    %c8 = arith.constant 8 : index
    %c0_38 = arith.constant 0 : index
    %c0_39 = arith.constant 0 : index
    %97 = vector.load %arg4[%c8, %c0_38, %c0_39] : memref<9x8x1xbf16, #tpu.memory_space<vmem>>, vector<1x8x1xbf16>
    %98 = vector.shape_cast %97 : vector<1x8x1xbf16> to vector<8x1xbf16>
    %99 = arith.extf %98 : vector<8x1xbf16> to vector<8x1xf32>
    %100 = arith.extf %96 : vector<1x256xbf16> to vector<1x256xf32>
    %101 = vector.broadcast %99 : vector<8x1xf32> to vector<8x256xf32>
    %102 = vector.broadcast %100 : vector<1x256xf32> to vector<8x256xf32>
    %103 = arith.mulf %101, %102 : vector<8x256xf32>
    %104 = arith.addf %95, %103 : vector<8x256xf32>
    %c0_40 = arith.constant 0 : index
    %c1_41 = arith.constant 1 : index
    %c1_42 = arith.constant 1 : index
    %c0_43 = arith.constant 0 : index
    %105 = arith.index_cast %1 : i32 to index
    %106 = vector.load %arg3[%c0_40, %c1_41, %c1_42, %c0_43, %105] : memref<1x4x9x1x257xbf16, #tpu.memory_space<vmem>>, vector<1x1x1x1x257xbf16>
    %107 = vector.shape_cast %106 : vector<1x1x1x1x257xbf16> to vector<1x257xbf16>
    %108 = vector.extract_strided_slice %107 {offsets = [0, 0], sizes = [1, 256], strides = [1, 1]} : vector<1x257xbf16> to vector<1x256xbf16>
    %c7 = arith.constant 7 : index
    %c0_44 = arith.constant 0 : index
    %c0_45 = arith.constant 0 : index
    %109 = vector.load %arg4[%c7, %c0_44, %c0_45] : memref<9x8x1xbf16, #tpu.memory_space<vmem>>, vector<1x8x1xbf16>
    %110 = vector.shape_cast %109 : vector<1x8x1xbf16> to vector<8x1xbf16>
    %111 = arith.extf %110 : vector<8x1xbf16> to vector<8x1xf32>
    %112 = arith.extf %108 : vector<1x256xbf16> to vector<1x256xf32>
    %113 = vector.broadcast %111 : vector<8x1xf32> to vector<8x256xf32>
    %114 = vector.broadcast %112 : vector<1x256xf32> to vector<8x256xf32>
    %115 = arith.mulf %113, %114 : vector<8x256xf32>
    %116 = arith.addf %104, %115 : vector<8x256xf32>
    %117 = arith.mulf %116, %13 : vector<8x256xf32>
    %118 = arith.addf %117, %16 : vector<8x256xf32>
    %cst_46 = arith.constant 0.000000e+00 : f32
    %cst_47 = arith.constant 2.000000e+01 : f32
    %119 = vector.broadcast %cst_46 : f32 to vector<8x256xf32>
    %120 = arith.maximumf %119, %118 : vector<8x256xf32>
    %121 = vector.broadcast %cst_47 : f32 to vector<8x256xf32>
    %122 = arith.minimumf %121, %120 : vector<8x256xf32>
    %cst_48 = arith.constant 0.000000e+00 : f32
    %123 = vector.broadcast %cst_48 : f32 to vector<8x256xf32>
    %124 = arith.select %10, %123, %122 : vector<8x256xi1>, vector<8x256xf32>
    %125 = arith.truncf %124 : vector<8x256xf32> to vector<8x256xbf16>
    %c0_49 = arith.constant 0 : index
    %c0_50 = arith.constant 0 : index
    %c0_51 = arith.constant 0 : index
    %c0_52 = arith.constant 0 : index
    %126 = vector.load %arg7[%c0_49, %c0_50, %c0_51, %c0_52] : memref<1x8x8x256xbf16, #tpu.memory_space<vmem>>, vector<1x1x8x256xbf16>
    %127 = vector.shape_cast %126 : vector<1x1x8x256xbf16> to vector<8x256xbf16>
    %128 = vector.shape_cast %125 : vector<8x256xbf16> to vector<1x1x8x256xbf16>
    tpu.vector_store %arg7[%c0_49, %c0_50, %c0_51, %c0_52], %128 {strides = array<i32>} : memref<1x8x8x256xbf16, #tpu.memory_space<vmem>>, vector<1x1x8x256xbf16>,
    %cst_53 = arith.constant 0.000000e+00 : f32
    %129 = vector.broadcast %cst_53 : f32 to vector<8x256xf32>
    %c0_54 = arith.constant 0 : index
    %c0_55 = arith.constant 0 : index
    %c1_56 = arith.constant 1 : index
    %c0_57 = arith.constant 0 : index
    %130 = arith.index_cast %1 : i32 to index
    %131 = vector.load %arg3[%c0_54, %c0_55, %c1_56, %c0_57, %130] : memref<1x4x9x1x257xbf16, #tpu.memory_space<vmem>>, vector<1x1x1x1x257xbf16>
    %132 = vector.shape_cast %131 : vector<1x1x1x1x257xbf16> to vector<1x257xbf16>
    %133 = vector.extract_strided_slice %132 {offsets = [0, 0], sizes = [1, 256], strides = [1, 1]} : vector<1x257xbf16> to vector<1x256xbf16>
    %c0_58 = arith.constant 0 : index
    %c0_59 = arith.constant 0 : index
    %c0_60 = arith.constant 0 : index
    %134 = vector.load %arg4[%c0_58, %c0_59, %c0_60] : memref<9x8x1xbf16, #tpu.memory_space<vmem>>, vector<1x8x1xbf16>
    %135 = vector.shape_cast %134 : vector<1x8x1xbf16> to vector<8x1xbf16>
    %136 = arith.extf %135 : vector<8x1xbf16> to vector<8x1xf32>
    %137 = arith.extf %133 : vector<1x256xbf16> to vector<1x256xf32>
    %138 = vector.broadcast %136 : vector<8x1xf32> to vector<8x256xf32>
    %139 = vector.broadcast %137 : vector<1x256xf32> to vector<8x256xf32>
    %140 = arith.mulf %138, %139 : vector<8x256xf32>
    %141 = arith.addf %129, %140 : vector<8x256xf32>
    %142 = vector.extract_strided_slice %132 {offsets = [0, 1], sizes = [1, 256], strides = [1, 1]} : vector<1x257xbf16> to vector<1x256xbf16>
    %c2_61 = arith.constant 2 : index
    %c0_62 = arith.constant 0 : index
    %c0_63 = arith.constant 0 : index
    %143 = vector.load %arg4[%c2_61, %c0_62, %c0_63] : memref<9x8x1xbf16, #tpu.memory_space<vmem>>, vector<1x8x1xbf16>
    %144 = vector.shape_cast %143 : vector<1x8x1xbf16> to vector<8x1xbf16>
    %145 = arith.extf %144 : vector<8x1xbf16> to vector<8x1xf32>
    %146 = arith.extf %142 : vector<1x256xbf16> to vector<1x256xf32>
    %147 = vector.broadcast %145 : vector<8x1xf32> to vector<8x256xf32>
    %148 = vector.broadcast %146 : vector<1x256xf32> to vector<8x256xf32>
    %149 = arith.mulf %147, %148 : vector<8x256xf32>
    %150 = arith.addf %141, %149 : vector<8x256xf32>
    %c0_64 = arith.constant 0 : index
    %c1_65 = arith.constant 1 : index
    %c1_66 = arith.constant 1 : index
    %c0_67 = arith.constant 0 : index
    %151 = arith.index_cast %1 : i32 to index
    %152 = vector.load %arg3[%c0_64, %c1_65, %c1_66, %c0_67, %151] : memref<1x4x9x1x257xbf16, #tpu.memory_space<vmem>>, vector<1x1x1x1x257xbf16>
    %153 = vector.shape_cast %152 : vector<1x1x1x1x257xbf16> to vector<1x257xbf16>
    %154 = vector.extract_strided_slice %153 {offsets = [0, 0], sizes = [1, 256], strides = [1, 1]} : vector<1x257xbf16> to vector<1x256xbf16>
    %c1_68 = arith.constant 1 : index
    %c0_69 = arith.constant 0 : index
    %c0_70 = arith.constant 0 : index
    %155 = vector.load %arg4[%c1_68, %c0_69, %c0_70] : memref<9x8x1xbf16, #tpu.memory_space<vmem>>, vector<1x8x1xbf16>
    %156 = vector.shape_cast %155 : vector<1x8x1xbf16> to vector<8x1xbf16>
    %157 = arith.extf %156 : vector<8x1xbf16> to vector<8x1xf32>
    %158 = arith.extf %154 : vector<1x256xbf16> to vector<1x256xf32>
    %159 = vector.broadcast %157 : vector<8x1xf32> to vector<8x256xf32>
    %160 = vector.broadcast %158 : vector<1x256xf32> to vector<8x256xf32>
    %161 = arith.mulf %159, %160 : vector<8x256xf32>
    %162 = arith.addf %150, %161 : vector<8x256xf32>
    %c0_71 = arith.constant 0 : index
    %c2_72 = arith.constant 2 : index
    %c1_73 = arith.constant 1 : index
    %c0_74 = arith.constant 0 : index
    %163 = arith.index_cast %1 : i32 to index
    %164 = vector.load %arg3[%c0_71, %c2_72, %c1_73, %c0_74, %163] : memref<1x4x9x1x257xbf16, #tpu.memory_space<vmem>>, vector<1x1x1x1x257xbf16>
    %165 = vector.shape_cast %164 : vector<1x1x1x1x257xbf16> to vector<1x257xbf16>
    %166 = vector.extract_strided_slice %165 {offsets = [0, 0], sizes = [1, 256], strides = [1, 1]} : vector<1x257xbf16> to vector<1x256xbf16>
    %c3_75 = arith.constant 3 : index
    %c0_76 = arith.constant 0 : index
    %c0_77 = arith.constant 0 : index
    %167 = vector.load %arg4[%c3_75, %c0_76, %c0_77] : memref<9x8x1xbf16, #tpu.memory_space<vmem>>, vector<1x8x1xbf16>
    %168 = vector.shape_cast %167 : vector<1x8x1xbf16> to vector<8x1xbf16>
    %169 = arith.extf %168 : vector<8x1xbf16> to vector<8x1xf32>
    %170 = arith.extf %166 : vector<1x256xbf16> to vector<1x256xf32>
    %171 = vector.broadcast %169 : vector<8x1xf32> to vector<8x256xf32>
    %172 = vector.broadcast %170 : vector<1x256xf32> to vector<8x256xf32>
    %173 = arith.mulf %171, %172 : vector<8x256xf32>
    %174 = arith.addf %162, %173 : vector<8x256xf32>
    %175 = vector.extract_strided_slice %165 {offsets = [0, 1], sizes = [1, 256], strides = [1, 1]} : vector<1x257xbf16> to vector<1x256xbf16>
    %c5_78 = arith.constant 5 : index
    %c0_79 = arith.constant 0 : index
    %c0_80 = arith.constant 0 : index
    %176 = vector.load %arg4[%c5_78, %c0_79, %c0_80] : memref<9x8x1xbf16, #tpu.memory_space<vmem>>, vector<1x8x1xbf16>
    %177 = vector.shape_cast %176 : vector<1x8x1xbf16> to vector<8x1xbf16>
    %178 = arith.extf %177 : vector<8x1xbf16> to vector<8x1xf32>
    %179 = arith.extf %175 : vector<1x256xbf16> to vector<1x256xf32>
    %180 = vector.broadcast %178 : vector<8x1xf32> to vector<8x256xf32>
    %181 = vector.broadcast %179 : vector<1x256xf32> to vector<8x256xf32>
    %182 = arith.mulf %180, %181 : vector<8x256xf32>
    %183 = arith.addf %174, %182 : vector<8x256xf32>
    %c0_81 = arith.constant 0 : index
    %c3_82 = arith.constant 3 : index
    %c1_83 = arith.constant 1 : index
    %c0_84 = arith.constant 0 : index
    %184 = arith.index_cast %1 : i32 to index
    %185 = vector.load %arg3[%c0_81, %c3_82, %c1_83, %c0_84, %184] : memref<1x4x9x1x257xbf16, #tpu.memory_space<vmem>>, vector<1x1x1x1x257xbf16>
    %186 = vector.shape_cast %185 : vector<1x1x1x1x257xbf16> to vector<1x257xbf16>
    %187 = vector.extract_strided_slice %186 {offsets = [0, 0], sizes = [1, 256], strides = [1, 1]} : vector<1x257xbf16> to vector<1x256xbf16>
    %c4_85 = arith.constant 4 : index
    %c0_86 = arith.constant 0 : index
    %c0_87 = arith.constant 0 : index
    %188 = vector.load %arg4[%c4_85, %c0_86, %c0_87] : memref<9x8x1xbf16, #tpu.memory_space<vmem>>, vector<1x8x1xbf16>
    %189 = vector.shape_cast %188 : vector<1x8x1xbf16> to vector<8x1xbf16>
    %190 = arith.extf %189 : vector<8x1xbf16> to vector<8x1xf32>
    %191 = arith.extf %187 : vector<1x256xbf16> to vector<1x256xf32>
    %192 = vector.broadcast %190 : vector<8x1xf32> to vector<8x256xf32>
    %193 = vector.broadcast %191 : vector<1x256xf32> to vector<8x256xf32>
    %194 = arith.mulf %192, %193 : vector<8x256xf32>
    %195 = arith.addf %183, %194 : vector<8x256xf32>
    %c0_88 = arith.constant 0 : index
    %c0_89 = arith.constant 0 : index
    %c2_90 = arith.constant 2 : index
    %c0_91 = arith.constant 0 : index
    %196 = arith.index_cast %1 : i32 to index
    %197 = vector.load %arg3[%c0_88, %c0_89, %c2_90, %c0_91, %196] : memref<1x4x9x1x257xbf16, #tpu.memory_space<vmem>>, vector<1x1x1x1x257xbf16>
    %198 = vector.shape_cast %197 : vector<1x1x1x1x257xbf16> to vector<1x257xbf16>
    %199 = vector.extract_strided_slice %198 {offsets = [0, 0], sizes = [1, 256], strides = [1, 1]} : vector<1x257xbf16> to vector<1x256xbf16>
    %c6_92 = arith.constant 6 : index
    %c0_93 = arith.constant 0 : index
    %c0_94 = arith.constant 0 : index
    %200 = vector.load %arg4[%c6_92, %c0_93, %c0_94] : memref<9x8x1xbf16, #tpu.memory_space<vmem>>, vector<1x8x1xbf16>
    %201 = vector.shape_cast %200 : vector<1x8x1xbf16> to vector<8x1xbf16>
    %202 = arith.extf %201 : vector<8x1xbf16> to vector<8x1xf32>
    %203 = arith.extf %199 : vector<1x256xbf16> to vector<1x256xf32>
    %204 = vector.broadcast %202 : vector<8x1xf32> to vector<8x256xf32>
    %205 = vector.broadcast %203 : vector<1x256xf32> to vector<8x256xf32>
    %206 = arith.mulf %204, %205 : vector<8x256xf32>
    %207 = arith.addf %195, %206 : vector<8x256xf32>
    %208 = vector.extract_strided_slice %198 {offsets = [0, 1], sizes = [1, 256], strides = [1, 1]} : vector<1x257xbf16> to vector<1x256xbf16>
    %c8_95 = arith.constant 8 : index
    %c0_96 = arith.constant 0 : index
    %c0_97 = arith.constant 0 : index
    %209 = vector.load %arg4[%c8_95, %c0_96, %c0_97] : memref<9x8x1xbf16, #tpu.memory_space<vmem>>, vector<1x8x1xbf16>
    %210 = vector.shape_cast %209 : vector<1x8x1xbf16> to vector<8x1xbf16>
    %211 = arith.extf %210 : vector<8x1xbf16> to vector<8x1xf32>
    %212 = arith.extf %208 : vector<1x256xbf16> to vector<1x256xf32>
    %213 = vector.broadcast %211 : vector<8x1xf32> to vector<8x256xf32>
    %214 = vector.broadcast %212 : vector<1x256xf32> to vector<8x256xf32>
    %215 = arith.mulf %213, %214 : vector<8x256xf32>
    %216 = arith.addf %207, %215 : vector<8x256xf32>
    %c0_98 = arith.constant 0 : index
    %c1_99 = arith.constant 1 : index
    %c2_100 = arith.constant 2 : index
    %c0_101 = arith.constant 0 : index
    %217 = arith.index_cast %1 : i32 to index
    %218 = vector.load %arg3[%c0_98, %c1_99, %c2_100, %c0_101, %217] : memref<1x4x9x1x257xbf16, #tpu.memory_space<vmem>>, vector<1x1x1x1x257xbf16>
    %219 = vector.shape_cast %218 : vector<1x1x1x1x257xbf16> to vector<1x257xbf16>
    %220 = vector.extract_strided_slice %219 {offsets = [0, 0], sizes = [1, 256], strides = [1, 1]} : vector<1x257xbf16> to vector<1x256xbf16>
    %c7_102 = arith.constant 7 : index
    %c0_103 = arith.constant 0 : index
    %c0_104 = arith.constant 0 : index
    %221 = vector.load %arg4[%c7_102, %c0_103, %c0_104] : memref<9x8x1xbf16, #tpu.memory_space<vmem>>, vector<1x8x1xbf16>
    %222 = vector.shape_cast %221 : vector<1x8x1xbf16> to vector<8x1xbf16>
    %223 = arith.extf %222 : vector<8x1xbf16> to vector<8x1xf32>
    %224 = arith.extf %220 : vector<1x256xbf16> to vector<1x256xf32>
    %225 = vector.broadcast %223 : vector<8x1xf32> to vector<8x256xf32>
    %226 = vector.broadcast %224 : vector<1x256xf32> to vector<8x256xf32>
    %227 = arith.mulf %225, %226 : vector<8x256xf32>
    %228 = arith.addf %216, %227 : vector<8x256xf32>
    %229 = arith.mulf %228, %13 : vector<8x256xf32>
    %230 = arith.addf %229, %16 : vector<8x256xf32>
    %cst_105 = arith.constant 0.000000e+00 : f32
    %cst_106 = arith.constant 2.000000e+01 : f32
    %231 = vector.broadcast %cst_105 : f32 to vector<8x256xf32>
    %232 = arith.maximumf %231, %230 : vector<8x256xf32>
    %233 = vector.broadcast %cst_106 : f32 to vector<8x256xf32>
    %234 = arith.minimumf %233, %232 : vector<8x256xf32>
    %cst_107 = arith.constant 0.000000e+00 : f32
    %235 = vector.broadcast %cst_107 : f32 to vector<8x256xf32>
    %236 = arith.select %10, %235, %234 : vector<8x256xi1>, vector<8x256xf32>
    %237 = arith.truncf %236 : vector<8x256xf32> to vector<8x256xbf16>
    %c0_108 = arith.constant 0 : index
    %c1_109 = arith.constant 1 : index
    %c0_110 = arith.constant 0 : index
    %c0_111 = arith.constant 0 : index
    %238 = vector.load %arg7[%c0_108, %c1_109, %c0_110, %c0_111] : memref<1x8x8x256xbf16, #tpu.memory_space<vmem>>, vector<1x1x8x256xbf16>
    %239 = vector.shape_cast %238 : vector<1x1x8x256xbf16> to vector<8x256xbf16>
    %240 = vector.shape_cast %237 : vector<8x256xbf16> to vector<1x1x8x256xbf16>
    tpu.vector_store %arg7[%c0_108, %c1_109, %c0_110, %c0_111], %240 {strides = array<i32>} : memref<1x8x8x256xbf16, #tpu.memory_space<vmem>>, vector<1x1x8x256xbf16>,
    %cst_112 = arith.constant 0.000000e+00 : f32
    %241 = vector.broadcast %cst_112 : f32 to vector<8x256xf32>
    %c0_113 = arith.constant 0 : index
    %c0_114 = arith.constant 0 : index
    %c2_115 = arith.constant 2 : index
    %c0_116 = arith.constant 0 : index
    %242 = arith.index_cast %1 : i32 to index
    %243 = vector.load %arg3[%c0_113, %c0_114, %c2_115, %c0_116, %242] : memref<1x4x9x1x257xbf16, #tpu.memory_space<vmem>>, vector<1x1x1x1x257xbf16>
    %244 = vector.shape_cast %243 : vector<1x1x1x1x257xbf16> to vector<1x257xbf16>
    %245 = vector.extract_strided_slice %244 {offsets = [0, 0], sizes = [1, 256], strides = [1, 1]} : vector<1x257xbf16> to vector<1x256xbf16>
    %c0_117 = arith.constant 0 : index
    %c0_118 = arith.constant 0 : index
    %c0_119 = arith.constant 0 : index
    %246 = vector.load %arg4[%c0_117, %c0_118, %c0_119] : memref<9x8x1xbf16, #tpu.memory_space<vmem>>, vector<1x8x1xbf16>
    %247 = vector.shape_cast %246 : vector<1x8x1xbf16> to vector<8x1xbf16>
    %248 = arith.extf %247 : vector<8x1xbf16> to vector<8x1xf32>
    %249 = arith.extf %245 : vector<1x256xbf16> to vector<1x256xf32>
    %250 = vector.broadcast %248 : vector<8x1xf32> to vector<8x256xf32>
    %251 = vector.broadcast %249 : vector<1x256xf32> to vector<8x256xf32>
    %252 = arith.mulf %250, %251 : vector<8x256xf32>
    %253 = arith.addf %241, %252 : vector<8x256xf32>
    %254 = vector.extract_strided_slice %244 {offsets = [0, 1], sizes = [1, 256], strides = [1, 1]} : vector<1x257xbf16> to vector<1x256xbf16>
    %c2_120 = arith.constant 2 : index
    %c0_121 = arith.constant 0 : index
    %c0_122 = arith.constant 0 : index
    %255 = vector.load %arg4[%c2_120, %c0_121, %c0_122] : memref<9x8x1xbf16, #tpu.memory_space<vmem>>, vector<1x8x1xbf16>
    %256 = vector.shape_cast %255 : vector<1x8x1xbf16> to vector<8x1xbf16>
    %257 = arith.extf %256 : vector<8x1xbf16> to vector<8x1xf32>
    %258 = arith.extf %254 : vector<1x256xbf16> to vector<1x256xf32>
    %259 = vector.broadcast %257 : vector<8x1xf32> to vector<8x256xf32>
    %260 = vector.broadcast %258 : vector<1x256xf32> to vector<8x256xf32>
    %261 = arith.mulf %259, %260 : vector<8x256xf32>
    %262 = arith.addf %253, %261 : vector<8x256xf32>
    %c0_123 = arith.constant 0 : index
    %c1_124 = arith.constant 1 : index
    %c2_125 = arith.constant 2 : index
    %c0_126 = arith.constant 0 : index
    %263 = arith.index_cast %1 : i32 to index
    %264 = vector.load %arg3[%c0_123, %c1_124, %c2_125, %c0_126, %263] : memref<1x4x9x1x257xbf16, #tpu.memory_space<vmem>>, vector<1x1x1x1x257xbf16>
    %265 = vector.shape_cast %264 : vector<1x1x1x1x257xbf16> to vector<1x257xbf16>
    %266 = vector.extract_strided_slice %265 {offsets = [0, 0], sizes = [1, 256], strides = [1, 1]} : vector<1x257xbf16> to vector<1x256xbf16>
    %c1_127 = arith.constant 1 : index
    %c0_128 = arith.constant 0 : index
    %c0_129 = arith.constant 0 : index
    %267 = vector.load %arg4[%c1_127, %c0_128, %c0_129] : memref<9x8x1xbf16, #tpu.memory_space<vmem>>, vector<1x8x1xbf16>
    %268 = vector.shape_cast %267 : vector<1x8x1xbf16> to vector<8x1xbf16>
    %269 = arith.extf %268 : vector<8x1xbf16> to vector<8x1xf32>
    %270 = arith.extf %266 : vector<1x256xbf16> to vector<1x256xf32>
    %271 = vector.broadcast %269 : vector<8x1xf32> to vector<8x256xf32>
    %272 = vector.broadcast %270 : vector<1x256xf32> to vector<8x256xf32>
    %273 = arith.mulf %271, %272 : vector<8x256xf32>
    %274 = arith.addf %262, %273 : vector<8x256xf32>
    %c0_130 = arith.constant 0 : index
    %c2_131 = arith.constant 2 : index
    %c2_132 = arith.constant 2 : index
    %c0_133 = arith.constant 0 : index
    %275 = arith.index_cast %1 : i32 to index
    %276 = vector.load %arg3[%c0_130, %c2_131, %c2_132, %c0_133, %275] : memref<1x4x9x1x257xbf16, #tpu.memory_space<vmem>>, vector<1x1x1x1x257xbf16>
    %277 = vector.shape_cast %276 : vector<1x1x1x1x257xbf16> to vector<1x257xbf16>
    %278 = vector.extract_strided_slice %277 {offsets = [0, 0], sizes = [1, 256], strides = [1, 1]} : vector<1x257xbf16> to vector<1x256xbf16>
    %c3_134 = arith.constant 3 : index
    %c0_135 = arith.constant 0 : index
    %c0_136 = arith.constant 0 : index
    %279 = vector.load %arg4[%c3_134, %c0_135, %c0_136] : memref<9x8x1xbf16, #tpu.memory_space<vmem>>, vector<1x8x1xbf16>
    %280 = vector.shape_cast %279 : vector<1x8x1xbf16> to vector<8x1xbf16>
    %281 = arith.extf %280 : vector<8x1xbf16> to vector<8x1xf32>
    %282 = arith.extf %278 : vector<1x256xbf16> to vector<1x256xf32>
    %283 = vector.broadcast %281 : vector<8x1xf32> to vector<8x256xf32>
    %284 = vector.broadcast %282 : vector<1x256xf32> to vector<8x256xf32>
    %285 = arith.mulf %283, %284 : vector<8x256xf32>
    %286 = arith.addf %274, %285 : vector<8x256xf32>
    %287 = vector.extract_strided_slice %277 {offsets = [0, 1], sizes = [1, 256], strides = [1, 1]} : vector<1x257xbf16> to vector<1x256xbf16>
    %c5_137 = arith.constant 5 : index
    %c0_138 = arith.constant 0 : index
    %c0_139 = arith.constant 0 : index
    %288 = vector.load %arg4[%c5_137, %c0_138, %c0_139] : memref<9x8x1xbf16, #tpu.memory_space<vmem>>, vector<1x8x1xbf16>
    %289 = vector.shape_cast %288 : vector<1x8x1xbf16> to vector<8x1xbf16>
    %290 = arith.extf %289 : vector<8x1xbf16> to vector<8x1xf32>
    %291 = arith.extf %287 : vector<1x256xbf16> to vector<1x256xf32>
    %292 = vector.broadcast %290 : vector<8x1xf32> to vector<8x256xf32>
    %293 = vector.broadcast %291 : vector<1x256xf32> to vector<8x256xf32>
    %294 = arith.mulf %292, %293 : vector<8x256xf32>
    %295 = arith.addf %286, %294 : vector<8x256xf32>
    %c0_140 = arith.constant 0 : index
    %c3_141 = arith.constant 3 : index
    %c2_142 = arith.constant 2 : index
    %c0_143 = arith.constant 0 : index
    %296 = arith.index_cast %1 : i32 to index
    %297 = vector.load %arg3[%c0_140, %c3_141, %c2_142, %c0_143, %296] : memref<1x4x9x1x257xbf16, #tpu.memory_space<vmem>>, vector<1x1x1x1x257xbf16>
    %298 = vector.shape_cast %297 : vector<1x1x1x1x257xbf16> to vector<1x257xbf16>
    %299 = vector.extract_strided_slice %298 {offsets = [0, 0], sizes = [1, 256], strides = [1, 1]} : vector<1x257xbf16> to vector<1x256xbf16>
    %c4_144 = arith.constant 4 : index
    %c0_145 = arith.constant 0 : index
    %c0_146 = arith.constant 0 : index
    %300 = vector.load %arg4[%c4_144, %c0_145, %c0_146] : memref<9x8x1xbf16, #tpu.memory_space<vmem>>, vector<1x8x1xbf16>
    %301 = vector.shape_cast %300 : vector<1x8x1xbf16> to vector<8x1xbf16>
    %302 = arith.extf %301 : vector<8x1xbf16> to vector<8x1xf32>
    %303 = arith.extf %299 : vector<1x256xbf16> to vector<1x256xf32>
    %304 = vector.broadcast %302 : vector<8x1xf32> to vector<8x256xf32>
    %305 = vector.broadcast %303 : vector<1x256xf32> to vector<8x256xf32>
    %306 = arith.mulf %304, %305 : vector<8x256xf32>
    %307 = arith.addf %295, %306 : vector<8x256xf32>
    %c0_147 = arith.constant 0 : index
    %c0_148 = arith.constant 0 : index
    %c3_149 = arith.constant 3 : index
    %c0_150 = arith.constant 0 : index
    %308 = arith.index_cast %1 : i32 to index
    %309 = vector.load %arg3[%c0_147, %c0_148, %c3_149, %c0_150, %308] : memref<1x4x9x1x257xbf16, #tpu.memory_space<vmem>>, vector<1x1x1x1x257xbf16>
    %310 = vector.shape_cast %309 : vector<1x1x1x1x257xbf16> to vector<1x257xbf16>
    %311 = vector.extract_strided_slice %310 {offsets = [0, 0], sizes = [1, 256], strides = [1, 1]} : vector<1x257xbf16> to vector<1x256xbf16>
    %c6_151 = arith.constant 6 : index
    %c0_152 = arith.constant 0 : index
    %c0_153 = arith.constant 0 : index
    %312 = vector.load %arg4[%c6_151, %c0_152, %c0_153] : memref<9x8x1xbf16, #tpu.memory_space<vmem>>, vector<1x8x1xbf16>
    %313 = vector.shape_cast %312 : vector<1x8x1xbf16> to vector<8x1xbf16>
    %314 = arith.extf %313 : vector<8x1xbf16> to vector<8x1xf32>
    %315 = arith.extf %311 : vector<1x256xbf16> to vector<1x256xf32>
    %316 = vector.broadcast %314 : vector<8x1xf32> to vector<8x256xf32>
    %317 = vector.broadcast %315 : vector<1x256xf32> to vector<8x256xf32>
    %318 = arith.mulf %316, %317 : vector<8x256xf32>
    %319 = arith.addf %307, %318 : vector<8x256xf32>
    %320 = vector.extract_strided_slice %310 {offsets = [0, 1], sizes = [1, 256], strides = [1, 1]} : vector<1x257xbf16> to vector<1x256xbf16>
    %c8_154 = arith.constant 8 : index
    %c0_155 = arith.constant 0 : index
    %c0_156 = arith.constant 0 : index
    %321 = vector.load %arg4[%c8_154, %c0_155, %c0_156] : memref<9x8x1xbf16, #tpu.memory_space<vmem>>, vector<1x8x1xbf16>
    %322 = vector.shape_cast %321 : vector<1x8x1xbf16> to vector<8x1xbf16>
    %323 = arith.extf %322 : vector<8x1xbf16> to vector<8x1xf32>
    %324 = arith.extf %320 : vector<1x256xbf16> to vector<1x256xf32>
    %325 = vector.broadcast %323 : vector<8x1xf32> to vector<8x256xf32>
    %326 = vector.broadcast %324 : vector<1x256xf32> to vector<8x256xf32>
    %327 = arith.mulf %325, %326 : vector<8x256xf32>
    %328 = arith.addf %319, %327 : vector<8x256xf32>
    %c0_157 = arith.constant 0 : index
    %c1_158 = arith.constant 1 : index
    %c3_159 = arith.constant 3 : index
    %c0_160 = arith.constant 0 : index
    %329 = arith.index_cast %1 : i32 to index
    %330 = vector.load %arg3[%c0_157, %c1_158, %c3_159, %c0_160, %329] : memref<1x4x9x1x257xbf16, #tpu.memory_space<vmem>>, vector<1x1x1x1x257xbf16>
    %331 = vector.shape_cast %330 : vector<1x1x1x1x257xbf16> to vector<1x257xbf16>
    %332 = vector.extract_strided_slice %331 {offsets = [0, 0], sizes = [1, 256], strides = [1, 1]} : vector<1x257xbf16> to vector<1x256xbf16>
    %c7_161 = arith.constant 7 : index
    %c0_162 = arith.constant 0 : index
    %c0_163 = arith.constant 0 : index
    %333 = vector.load %arg4[%c7_161, %c0_162, %c0_163] : memref<9x8x1xbf16, #tpu.memory_space<vmem>>, vector<1x8x1xbf16>
    %334 = vector.shape_cast %333 : vector<1x8x1xbf16> to vector<8x1xbf16>
    %335 = arith.extf %334 : vector<8x1xbf16> to vector<8x1xf32>
    %336 = arith.extf %332 : vector<1x256xbf16> to vector<1x256xf32>
    %337 = vector.broadcast %335 : vector<8x1xf32> to vector<8x256xf32>
    %338 = vector.broadcast %336 : vector<1x256xf32> to vector<8x256xf32>
    %339 = arith.mulf %337, %338 : vector<8x256xf32>
    %340 = arith.addf %328, %339 : vector<8x256xf32>
    %341 = arith.mulf %340, %13 : vector<8x256xf32>
    %342 = arith.addf %341, %16 : vector<8x256xf32>
    %cst_164 = arith.constant 0.000000e+00 : f32
    %cst_165 = arith.constant 2.000000e+01 : f32
    %343 = vector.broadcast %cst_164 : f32 to vector<8x256xf32>
    %344 = arith.maximumf %343, %342 : vector<8x256xf32>
    %345 = vector.broadcast %cst_165 : f32 to vector<8x256xf32>
    %346 = arith.minimumf %345, %344 : vector<8x256xf32>
    %cst_166 = arith.constant 0.000000e+00 : f32
    %347 = vector.broadcast %cst_166 : f32 to vector<8x256xf32>
    %348 = arith.select %10, %347, %346 : vector<8x256xi1>, vector<8x256xf32>
    %349 = arith.truncf %348 : vector<8x256xf32> to vector<8x256xbf16>
    %c0_167 = arith.constant 0 : index
    %c2_168 = arith.constant 2 : index
    %c0_169 = arith.constant 0 : index
    %c0_170 = arith.constant 0 : index
    %350 = vector.load %arg7[%c0_167, %c2_168, %c0_169, %c0_170] : memref<1x8x8x256xbf16, #tpu.memory_space<vmem>>, vector<1x1x8x256xbf16>
    %351 = vector.shape_cast %350 : vector<1x1x8x256xbf16> to vector<8x256xbf16>
    %352 = vector.shape_cast %349 : vector<8x256xbf16> to vector<1x1x8x256xbf16>
    tpu.vector_store %arg7[%c0_167, %c2_168, %c0_169, %c0_170], %352 {strides = array<i32>} : memref<1x8x8x256xbf16, #tpu.memory_space<vmem>>, vector<1x1x8x256xbf16>,
    %cst_171 = arith.constant 0.000000e+00 : f32
    %353 = vector.broadcast %cst_171 : f32 to vector<8x256xf32>
    %c0_172 = arith.constant 0 : index
    %c0_173 = arith.constant 0 : index
    %c3_174 = arith.constant 3 : index
    %c0_175 = arith.constant 0 : index
    %354 = arith.index_cast %1 : i32 to index
    %355 = vector.load %arg3[%c0_172, %c0_173, %c3_174, %c0_175, %354] : memref<1x4x9x1x257xbf16, #tpu.memory_space<vmem>>, vector<1x1x1x1x257xbf16>
    %356 = vector.shape_cast %355 : vector<1x1x1x1x257xbf16> to vector<1x257xbf16>
    %357 = vector.extract_strided_slice %356 {offsets = [0, 0], sizes = [1, 256], strides = [1, 1]} : vector<1x257xbf16> to vector<1x256xbf16>
    %c0_176 = arith.constant 0 : index
    %c0_177 = arith.constant 0 : index
    %c0_178 = arith.constant 0 : index
    %358 = vector.load %arg4[%c0_176, %c0_177, %c0_178] : memref<9x8x1xbf16, #tpu.memory_space<vmem>>, vector<1x8x1xbf16>
    %359 = vector.shape_cast %358 : vector<1x8x1xbf16> to vector<8x1xbf16>
    %360 = arith.extf %359 : vector<8x1xbf16> to vector<8x1xf32>
    %361 = arith.extf %357 : vector<1x256xbf16> to vector<1x256xf32>
    %362 = vector.broadcast %360 : vector<8x1xf32> to vector<8x256xf32>
    %363 = vector.broadcast %361 : vector<1x256xf32> to vector<8x256xf32>
    %364 = arith.mulf %362, %363 : vector<8x256xf32>
    %365 = arith.addf %353, %364 : vector<8x256xf32>
    %366 = vector.extract_strided_slice %356 {offsets = [0, 1], sizes = [1, 256], strides = [1, 1]} : vector<1x257xbf16> to vector<1x256xbf16>
    %c2_179 = arith.constant 2 : index
    %c0_180 = arith.constant 0 : index
    %c0_181 = arith.constant 0 : index
    %367 = vector.load %arg4[%c2_179, %c0_180, %c0_181] : memref<9x8x1xbf16, #tpu.memory_space<vmem>>, vector<1x8x1xbf16>
    %368 = vector.shape_cast %367 : vector<1x8x1xbf16> to vector<8x1xbf16>
    %369 = arith.extf %368 : vector<8x1xbf16> to vector<8x1xf32>
    %370 = arith.extf %366 : vector<1x256xbf16> to vector<1x256xf32>
    %371 = vector.broadcast %369 : vector<8x1xf32> to vector<8x256xf32>
    %372 = vector.broadcast %370 : vector<1x256xf32> to vector<8x256xf32>
    %373 = arith.mulf %371, %372 : vector<8x256xf32>
    %374 = arith.addf %365, %373 : vector<8x256xf32>
    %c0_182 = arith.constant 0 : index
    %c1_183 = arith.constant 1 : index
    %c3_184 = arith.constant 3 : index
    %c0_185 = arith.constant 0 : index
    %375 = arith.index_cast %1 : i32 to index
    %376 = vector.load %arg3[%c0_182, %c1_183, %c3_184, %c0_185, %375] : memref<1x4x9x1x257xbf16, #tpu.memory_space<vmem>>, vector<1x1x1x1x257xbf16>
    %377 = vector.shape_cast %376 : vector<1x1x1x1x257xbf16> to vector<1x257xbf16>
    %378 = vector.extract_strided_slice %377 {offsets = [0, 0], sizes = [1, 256], strides = [1, 1]} : vector<1x257xbf16> to vector<1x256xbf16>
    %c1_186 = arith.constant 1 : index
    %c0_187 = arith.constant 0 : index
    %c0_188 = arith.constant 0 : index
    %379 = vector.load %arg4[%c1_186, %c0_187, %c0_188] : memref<9x8x1xbf16, #tpu.memory_space<vmem>>, vector<1x8x1xbf16>
    %380 = vector.shape_cast %379 : vector<1x8x1xbf16> to vector<8x1xbf16>
    %381 = arith.extf %380 : vector<8x1xbf16> to vector<8x1xf32>
    %382 = arith.extf %378 : vector<1x256xbf16> to vector<1x256xf32>
    %383 = vector.broadcast %381 : vector<8x1xf32> to vector<8x256xf32>
    %384 = vector.broadcast %382 : vector<1x256xf32> to vector<8x256xf32>
    %385 = arith.mulf %383, %384 : vector<8x256xf32>
    %386 = arith.addf %374, %385 : vector<8x256xf32>
    %c0_189 = arith.constant 0 : index
    %c2_190 = arith.constant 2 : index
    %c3_191 = arith.constant 3 : index
    %c0_192 = arith.constant 0 : index
    %387 = arith.index_cast %1 : i32 to index
    %388 = vector.load %arg3[%c0_189, %c2_190, %c3_191, %c0_192, %387] : memref<1x4x9x1x257xbf16, #tpu.memory_space<vmem>>, vector<1x1x1x1x257xbf16>
    %389 = vector.shape_cast %388 : vector<1x1x1x1x257xbf16> to vector<1x257xbf16>
    %390 = vector.extract_strided_slice %389 {offsets = [0, 0], sizes = [1, 256], strides = [1, 1]} : vector<1x257xbf16> to vector<1x256xbf16>
    %c3_193 = arith.constant 3 : index
    %c0_194 = arith.constant 0 : index
    %c0_195 = arith.constant 0 : index
    %391 = vector.load %arg4[%c3_193, %c0_194, %c0_195] : memref<9x8x1xbf16, #tpu.memory_space<vmem>>, vector<1x8x1xbf16>
    %392 = vector.shape_cast %391 : vector<1x8x1xbf16> to vector<8x1xbf16>
    %393 = arith.extf %392 : vector<8x1xbf16> to vector<8x1xf32>
    %394 = arith.extf %390 : vector<1x256xbf16> to vector<1x256xf32>
    %395 = vector.broadcast %393 : vector<8x1xf32> to vector<8x256xf32>
    %396 = vector.broadcast %394 : vector<1x256xf32> to vector<8x256xf32>
    %397 = arith.mulf %395, %396 : vector<8x256xf32>
    %398 = arith.addf %386, %397 : vector<8x256xf32>
    %399 = vector.extract_strided_slice %389 {offsets = [0, 1], sizes = [1, 256], strides = [1, 1]} : vector<1x257xbf16> to vector<1x256xbf16>
    %c5_196 = arith.constant 5 : index
    %c0_197 = arith.constant 0 : index
    %c0_198 = arith.constant 0 : index
    %400 = vector.load %arg4[%c5_196, %c0_197, %c0_198] : memref<9x8x1xbf16, #tpu.memory_space<vmem>>, vector<1x8x1xbf16>
    %401 = vector.shape_cast %400 : vector<1x8x1xbf16> to vector<8x1xbf16>
    %402 = arith.extf %401 : vector<8x1xbf16> to vector<8x1xf32>
    %403 = arith.extf %399 : vector<1x256xbf16> to vector<1x256xf32>
    %404 = vector.broadcast %402 : vector<8x1xf32> to vector<8x256xf32>
    %405 = vector.broadcast %403 : vector<1x256xf32> to vector<8x256xf32>
    %406 = arith.mulf %404, %405 : vector<8x256xf32>
    %407 = arith.addf %398, %406 : vector<8x256xf32>
    %c0_199 = arith.constant 0 : index
    %c3_200 = arith.constant 3 : index
    %c3_201 = arith.constant 3 : index
    %c0_202 = arith.constant 0 : index
    %408 = arith.index_cast %1 : i32 to index
    %409 = vector.load %arg3[%c0_199, %c3_200, %c3_201, %c0_202, %408] : memref<1x4x9x1x257xbf16, #tpu.memory_space<vmem>>, vector<1x1x1x1x257xbf16>
    %410 = vector.shape_cast %409 : vector<1x1x1x1x257xbf16> to vector<1x257xbf16>
    %411 = vector.extract_strided_slice %410 {offsets = [0, 0], sizes = [1, 256], strides = [1, 1]} : vector<1x257xbf16> to vector<1x256xbf16>
    %c4_203 = arith.constant 4 : index
    %c0_204 = arith.constant 0 : index
    %c0_205 = arith.constant 0 : index
    %412 = vector.load %arg4[%c4_203, %c0_204, %c0_205] : memref<9x8x1xbf16, #tpu.memory_space<vmem>>, vector<1x8x1xbf16>
    %413 = vector.shape_cast %412 : vector<1x8x1xbf16> to vector<8x1xbf16>
    %414 = arith.extf %413 : vector<8x1xbf16> to vector<8x1xf32>
    %415 = arith.extf %411 : vector<1x256xbf16> to vector<1x256xf32>
    %416 = vector.broadcast %414 : vector<8x1xf32> to vector<8x256xf32>
    %417 = vector.broadcast %415 : vector<1x256xf32> to vector<8x256xf32>
    %418 = arith.mulf %416, %417 : vector<8x256xf32>
    %419 = arith.addf %407, %418 : vector<8x256xf32>
    %c0_206 = arith.constant 0 : index
    %c0_207 = arith.constant 0 : index
    %c4_208 = arith.constant 4 : index
    %c0_209 = arith.constant 0 : index
    %420 = arith.index_cast %1 : i32 to index
    %421 = vector.load %arg3[%c0_206, %c0_207, %c4_208, %c0_209, %420] : memref<1x4x9x1x257xbf16, #tpu.memory_space<vmem>>, vector<1x1x1x1x257xbf16>
    %422 = vector.shape_cast %421 : vector<1x1x1x1x257xbf16> to vector<1x257xbf16>
    %423 = vector.extract_strided_slice %422 {offsets = [0, 0], sizes = [1, 256], strides = [1, 1]} : vector<1x257xbf16> to vector<1x256xbf16>
    %c6_210 = arith.constant 6 : index
    %c0_211 = arith.constant 0 : index
    %c0_212 = arith.constant 0 : index
    %424 = vector.load %arg4[%c6_210, %c0_211, %c0_212] : memref<9x8x1xbf16, #tpu.memory_space<vmem>>, vector<1x8x1xbf16>
    %425 = vector.shape_cast %424 : vector<1x8x1xbf16> to vector<8x1xbf16>
    %426 = arith.extf %425 : vector<8x1xbf16> to vector<8x1xf32>
    %427 = arith.extf %423 : vector<1x256xbf16> to vector<1x256xf32>
    %428 = vector.broadcast %426 : vector<8x1xf32> to vector<8x256xf32>
    %429 = vector.broadcast %427 : vector<1x256xf32> to vector<8x256xf32>
    %430 = arith.mulf %428, %429 : vector<8x256xf32>
    %431 = arith.addf %419, %430 : vector<8x256xf32>
    %432 = vector.extract_strided_slice %422 {offsets = [0, 1], sizes = [1, 256], strides = [1, 1]} : vector<1x257xbf16> to vector<1x256xbf16>
    %c8_213 = arith.constant 8 : index
    %c0_214 = arith.constant 0 : index
    %c0_215 = arith.constant 0 : index
    %433 = vector.load %arg4[%c8_213, %c0_214, %c0_215] : memref<9x8x1xbf16, #tpu.memory_space<vmem>>, vector<1x8x1xbf16>
    %434 = vector.shape_cast %433 : vector<1x8x1xbf16> to vector<8x1xbf16>
    %435 = arith.extf %434 : vector<8x1xbf16> to vector<8x1xf32>
    %436 = arith.extf %432 : vector<1x256xbf16> to vector<1x256xf32>
    %437 = vector.broadcast %435 : vector<8x1xf32> to vector<8x256xf32>
    %438 = vector.broadcast %436 : vector<1x256xf32> to vector<8x256xf32>
    %439 = arith.mulf %437, %438 : vector<8x256xf32>
    %440 = arith.addf %431, %439 : vector<8x256xf32>
    %c0_216 = arith.constant 0 : index
    %c1_217 = arith.constant 1 : index
    %c4_218 = arith.constant 4 : index
    %c0_219 = arith.constant 0 : index
    %441 = arith.index_cast %1 : i32 to index
    %442 = vector.load %arg3[%c0_216, %c1_217, %c4_218, %c0_219, %441] : memref<1x4x9x1x257xbf16, #tpu.memory_space<vmem>>, vector<1x1x1x1x257xbf16>
    %443 = vector.shape_cast %442 : vector<1x1x1x1x257xbf16> to vector<1x257xbf16>
    %444 = vector.extract_strided_slice %443 {offsets = [0, 0], sizes = [1, 256], strides = [1, 1]} : vector<1x257xbf16> to vector<1x256xbf16>
    %c7_220 = arith.constant 7 : index
    %c0_221 = arith.constant 0 : index
    %c0_222 = arith.constant 0 : index
    %445 = vector.load %arg4[%c7_220, %c0_221, %c0_222] : memref<9x8x1xbf16, #tpu.memory_space<vmem>>, vector<1x8x1xbf16>
    %446 = vector.shape_cast %445 : vector<1x8x1xbf16> to vector<8x1xbf16>
    %447 = arith.extf %446 : vector<8x1xbf16> to vector<8x1xf32>
    %448 = arith.extf %444 : vector<1x256xbf16> to vector<1x256xf32>
    %449 = vector.broadcast %447 : vector<8x1xf32> to vector<8x256xf32>
    %450 = vector.broadcast %448 : vector<1x256xf32> to vector<8x256xf32>
    %451 = arith.mulf %449, %450 : vector<8x256xf32>
    %452 = arith.addf %440, %451 : vector<8x256xf32>
    %453 = arith.mulf %452, %13 : vector<8x256xf32>
    %454 = arith.addf %453, %16 : vector<8x256xf32>
    %cst_223 = arith.constant 0.000000e+00 : f32
    %cst_224 = arith.constant 2.000000e+01 : f32
    %455 = vector.broadcast %cst_223 : f32 to vector<8x256xf32>
    %456 = arith.maximumf %455, %454 : vector<8x256xf32>
    %457 = vector.broadcast %cst_224 : f32 to vector<8x256xf32>
    %458 = arith.minimumf %457, %456 : vector<8x256xf32>
    %cst_225 = arith.constant 0.000000e+00 : f32
    %459 = vector.broadcast %cst_225 : f32 to vector<8x256xf32>
    %460 = arith.select %10, %459, %458 : vector<8x256xi1>, vector<8x256xf32>
    %461 = arith.truncf %460 : vector<8x256xf32> to vector<8x256xbf16>
    %c0_226 = arith.constant 0 : index
    %c3_227 = arith.constant 3 : index
    %c0_228 = arith.constant 0 : index
    %c0_229 = arith.constant 0 : index
    %462 = vector.load %arg7[%c0_226, %c3_227, %c0_228, %c0_229] : memref<1x8x8x256xbf16, #tpu.memory_space<vmem>>, vector<1x1x8x256xbf16>
    %463 = vector.shape_cast %462 : vector<1x1x8x256xbf16> to vector<8x256xbf16>
    %464 = vector.shape_cast %461 : vector<8x256xbf16> to vector<1x1x8x256xbf16>
    tpu.vector_store %arg7[%c0_226, %c3_227, %c0_228, %c0_229], %464 {strides = array<i32>} : memref<1x8x8x256xbf16, #tpu.memory_space<vmem>>, vector<1x1x8x256xbf16>,
    %cst_230 = arith.constant 0.000000e+00 : f32
    %465 = vector.broadcast %cst_230 : f32 to vector<8x256xf32>
    %c0_231 = arith.constant 0 : index
    %c0_232 = arith.constant 0 : index
    %c4_233 = arith.constant 4 : index
    %c0_234 = arith.constant 0 : index
    %466 = arith.index_cast %1 : i32 to index
    %467 = vector.load %arg3[%c0_231, %c0_232, %c4_233, %c0_234, %466] : memref<1x4x9x1x257xbf16, #tpu.memory_space<vmem>>, vector<1x1x1x1x257xbf16>
    %468 = vector.shape_cast %467 : vector<1x1x1x1x257xbf16> to vector<1x257xbf16>
    %469 = vector.extract_strided_slice %468 {offsets = [0, 0], sizes = [1, 256], strides = [1, 1]} : vector<1x257xbf16> to vector<1x256xbf16>
    %c0_235 = arith.constant 0 : index
    %c0_236 = arith.constant 0 : index
    %c0_237 = arith.constant 0 : index
    %470 = vector.load %arg4[%c0_235, %c0_236, %c0_237] : memref<9x8x1xbf16, #tpu.memory_space<vmem>>, vector<1x8x1xbf16>
    %471 = vector.shape_cast %470 : vector<1x8x1xbf16> to vector<8x1xbf16>
    %472 = arith.extf %471 : vector<8x1xbf16> to vector<8x1xf32>
    %473 = arith.extf %469 : vector<1x256xbf16> to vector<1x256xf32>
    %474 = vector.broadcast %472 : vector<8x1xf32> to vector<8x256xf32>
    %475 = vector.broadcast %473 : vector<1x256xf32> to vector<8x256xf32>
    %476 = arith.mulf %474, %475 : vector<8x256xf32>
    %477 = arith.addf %465, %476 : vector<8x256xf32>
    %478 = vector.extract_strided_slice %468 {offsets = [0, 1], sizes = [1, 256], strides = [1, 1]} : vector<1x257xbf16> to vector<1x256xbf16>
    %c2_238 = arith.constant 2 : index
    %c0_239 = arith.constant 0 : index
    %c0_240 = arith.constant 0 : index
    %479 = vector.load %arg4[%c2_238, %c0_239, %c0_240] : memref<9x8x1xbf16, #tpu.memory_space<vmem>>, vector<1x8x1xbf16>
    %480 = vector.shape_cast %479 : vector<1x8x1xbf16> to vector<8x1xbf16>
    %481 = arith.extf %480 : vector<8x1xbf16> to vector<8x1xf32>
    %482 = arith.extf %478 : vector<1x256xbf16> to vector<1x256xf32>
    %483 = vector.broadcast %481 : vector<8x1xf32> to vector<8x256xf32>
    %484 = vector.broadcast %482 : vector<1x256xf32> to vector<8x256xf32>
    %485 = arith.mulf %483, %484 : vector<8x256xf32>
    %486 = arith.addf %477, %485 : vector<8x256xf32>
    %c0_241 = arith.constant 0 : index
    %c1_242 = arith.constant 1 : index
    %c4_243 = arith.constant 4 : index
    %c0_244 = arith.constant 0 : index
    %487 = arith.index_cast %1 : i32 to index
    %488 = vector.load %arg3[%c0_241, %c1_242, %c4_243, %c0_244, %487] : memref<1x4x9x1x257xbf16, #tpu.memory_space<vmem>>, vector<1x1x1x1x257xbf16>
    %489 = vector.shape_cast %488 : vector<1x1x1x1x257xbf16> to vector<1x257xbf16>
    %490 = vector.extract_strided_slice %489 {offsets = [0, 0], sizes = [1, 256], strides = [1, 1]} : vector<1x257xbf16> to vector<1x256xbf16>
    %c1_245 = arith.constant 1 : index
    %c0_246 = arith.constant 0 : index
    %c0_247 = arith.constant 0 : index
    %491 = vector.load %arg4[%c1_245, %c0_246, %c0_247] : memref<9x8x1xbf16, #tpu.memory_space<vmem>>, vector<1x8x1xbf16>
    %492 = vector.shape_cast %491 : vector<1x8x1xbf16> to vector<8x1xbf16>
    %493 = arith.extf %492 : vector<8x1xbf16> to vector<8x1xf32>
    %494 = arith.extf %490 : vector<1x256xbf16> to vector<1x256xf32>
    %495 = vector.broadcast %493 : vector<8x1xf32> to vector<8x256xf32>
    %496 = vector.broadcast %494 : vector<1x256xf32> to vector<8x256xf32>
    %497 = arith.mulf %495, %496 : vector<8x256xf32>
    %498 = arith.addf %486, %497 : vector<8x256xf32>
    %c0_248 = arith.constant 0 : index
    %c2_249 = arith.constant 2 : index
    %c4_250 = arith.constant 4 : index
    %c0_251 = arith.constant 0 : index
    %499 = arith.index_cast %1 : i32 to index
    %500 = vector.load %arg3[%c0_248, %c2_249, %c4_250, %c0_251, %499] : memref<1x4x9x1x257xbf16, #tpu.memory_space<vmem>>, vector<1x1x1x1x257xbf16>
    %501 = vector.shape_cast %500 : vector<1x1x1x1x257xbf16> to vector<1x257xbf16>
    %502 = vector.extract_strided_slice %501 {offsets = [0, 0], sizes = [1, 256], strides = [1, 1]} : vector<1x257xbf16> to vector<1x256xbf16>
    %c3_252 = arith.constant 3 : index
    %c0_253 = arith.constant 0 : index
    %c0_254 = arith.constant 0 : index
    %503 = vector.load %arg4[%c3_252, %c0_253, %c0_254] : memref<9x8x1xbf16, #tpu.memory_space<vmem>>, vector<1x8x1xbf16>
    %504 = vector.shape_cast %503 : vector<1x8x1xbf16> to vector<8x1xbf16>
    %505 = arith.extf %504 : vector<8x1xbf16> to vector<8x1xf32>
    %506 = arith.extf %502 : vector<1x256xbf16> to vector<1x256xf32>
    %507 = vector.broadcast %505 : vector<8x1xf32> to vector<8x256xf32>
    %508 = vector.broadcast %506 : vector<1x256xf32> to vector<8x256xf32>
    %509 = arith.mulf %507, %508 : vector<8x256xf32>
    %510 = arith.addf %498, %509 : vector<8x256xf32>
    %511 = vector.extract_strided_slice %501 {offsets = [0, 1], sizes = [1, 256], strides = [1, 1]} : vector<1x257xbf16> to vector<1x256xbf16>
    %c5_255 = arith.constant 5 : index
    %c0_256 = arith.constant 0 : index
    %c0_257 = arith.constant 0 : index
    %512 = vector.load %arg4[%c5_255, %c0_256, %c0_257] : memref<9x8x1xbf16, #tpu.memory_space<vmem>>, vector<1x8x1xbf16>
    %513 = vector.shape_cast %512 : vector<1x8x1xbf16> to vector<8x1xbf16>
    %514 = arith.extf %513 : vector<8x1xbf16> to vector<8x1xf32>
    %515 = arith.extf %511 : vector<1x256xbf16> to vector<1x256xf32>
    %516 = vector.broadcast %514 : vector<8x1xf32> to vector<8x256xf32>
    %517 = vector.broadcast %515 : vector<1x256xf32> to vector<8x256xf32>
    %518 = arith.mulf %516, %517 : vector<8x256xf32>
    %519 = arith.addf %510, %518 : vector<8x256xf32>
    %c0_258 = arith.constant 0 : index
    %c3_259 = arith.constant 3 : index
    %c4_260 = arith.constant 4 : index
    %c0_261 = arith.constant 0 : index
    %520 = arith.index_cast %1 : i32 to index
    %521 = vector.load %arg3[%c0_258, %c3_259, %c4_260, %c0_261, %520] : memref<1x4x9x1x257xbf16, #tpu.memory_space<vmem>>, vector<1x1x1x1x257xbf16>
    %522 = vector.shape_cast %521 : vector<1x1x1x1x257xbf16> to vector<1x257xbf16>
    %523 = vector.extract_strided_slice %522 {offsets = [0, 0], sizes = [1, 256], strides = [1, 1]} : vector<1x257xbf16> to vector<1x256xbf16>
    %c4_262 = arith.constant 4 : index
    %c0_263 = arith.constant 0 : index
    %c0_264 = arith.constant 0 : index
    %524 = vector.load %arg4[%c4_262, %c0_263, %c0_264] : memref<9x8x1xbf16, #tpu.memory_space<vmem>>, vector<1x8x1xbf16>
    %525 = vector.shape_cast %524 : vector<1x8x1xbf16> to vector<8x1xbf16>
    %526 = arith.extf %525 : vector<8x1xbf16> to vector<8x1xf32>
    %527 = arith.extf %523 : vector<1x256xbf16> to vector<1x256xf32>
    %528 = vector.broadcast %526 : vector<8x1xf32> to vector<8x256xf32>
    %529 = vector.broadcast %527 : vector<1x256xf32> to vector<8x256xf32>
    %530 = arith.mulf %528, %529 : vector<8x256xf32>
    %531 = arith.addf %519, %530 : vector<8x256xf32>
    %c0_265 = arith.constant 0 : index
    %c0_266 = arith.constant 0 : index
    %c5_267 = arith.constant 5 : index
    %c0_268 = arith.constant 0 : index
    %532 = arith.index_cast %1 : i32 to index
    %533 = vector.load %arg3[%c0_265, %c0_266, %c5_267, %c0_268, %532] : memref<1x4x9x1x257xbf16, #tpu.memory_space<vmem>>, vector<1x1x1x1x257xbf16>
    %534 = vector.shape_cast %533 : vector<1x1x1x1x257xbf16> to vector<1x257xbf16>
    %535 = vector.extract_strided_slice %534 {offsets = [0, 0], sizes = [1, 256], strides = [1, 1]} : vector<1x257xbf16> to vector<1x256xbf16>
    %c6_269 = arith.constant 6 : index
    %c0_270 = arith.constant 0 : index
    %c0_271 = arith.constant 0 : index
    %536 = vector.load %arg4[%c6_269, %c0_270, %c0_271] : memref<9x8x1xbf16, #tpu.memory_space<vmem>>, vector<1x8x1xbf16>
    %537 = vector.shape_cast %536 : vector<1x8x1xbf16> to vector<8x1xbf16>
    %538 = arith.extf %537 : vector<8x1xbf16> to vector<8x1xf32>
    %539 = arith.extf %535 : vector<1x256xbf16> to vector<1x256xf32>
    %540 = vector.broadcast %538 : vector<8x1xf32> to vector<8x256xf32>
    %541 = vector.broadcast %539 : vector<1x256xf32> to vector<8x256xf32>
    %542 = arith.mulf %540, %541 : vector<8x256xf32>
    %543 = arith.addf %531, %542 : vector<8x256xf32>
    %544 = vector.extract_strided_slice %534 {offsets = [0, 1], sizes = [1, 256], strides = [1, 1]} : vector<1x257xbf16> to vector<1x256xbf16>
    %c8_272 = arith.constant 8 : index
    %c0_273 = arith.constant 0 : index
    %c0_274 = arith.constant 0 : index
    %545 = vector.load %arg4[%c8_272, %c0_273, %c0_274] : memref<9x8x1xbf16, #tpu.memory_space<vmem>>, vector<1x8x1xbf16>
    %546 = vector.shape_cast %545 : vector<1x8x1xbf16> to vector<8x1xbf16>
    %547 = arith.extf %546 : vector<8x1xbf16> to vector<8x1xf32>
    %548 = arith.extf %544 : vector<1x256xbf16> to vector<1x256xf32>
    %549 = vector.broadcast %547 : vector<8x1xf32> to vector<8x256xf32>
    %550 = vector.broadcast %548 : vector<1x256xf32> to vector<8x256xf32>
    %551 = arith.mulf %549, %550 : vector<8x256xf32>
    %552 = arith.addf %543, %551 : vector<8x256xf32>
    %c0_275 = arith.constant 0 : index
    %c1_276 = arith.constant 1 : index
    %c5_277 = arith.constant 5 : index
    %c0_278 = arith.constant 0 : index
    %553 = arith.index_cast %1 : i32 to index
    %554 = vector.load %arg3[%c0_275, %c1_276, %c5_277, %c0_278, %553] : memref<1x4x9x1x257xbf16, #tpu.memory_space<vmem>>, vector<1x1x1x1x257xbf16>
    %555 = vector.shape_cast %554 : vector<1x1x1x1x257xbf16> to vector<1x257xbf16>
    %556 = vector.extract_strided_slice %555 {offsets = [0, 0], sizes = [1, 256], strides = [1, 1]} : vector<1x257xbf16> to vector<1x256xbf16>
    %c7_279 = arith.constant 7 : index
    %c0_280 = arith.constant 0 : index
    %c0_281 = arith.constant 0 : index
    %557 = vector.load %arg4[%c7_279, %c0_280, %c0_281] : memref<9x8x1xbf16, #tpu.memory_space<vmem>>, vector<1x8x1xbf16>
    %558 = vector.shape_cast %557 : vector<1x8x1xbf16> to vector<8x1xbf16>
    %559 = arith.extf %558 : vector<8x1xbf16> to vector<8x1xf32>
    %560 = arith.extf %556 : vector<1x256xbf16> to vector<1x256xf32>
    %561 = vector.broadcast %559 : vector<8x1xf32> to vector<8x256xf32>
    %562 = vector.broadcast %560 : vector<1x256xf32> to vector<8x256xf32>
    %563 = arith.mulf %561, %562 : vector<8x256xf32>
    %564 = arith.addf %552, %563 : vector<8x256xf32>
    %565 = arith.mulf %564, %13 : vector<8x256xf32>
    %566 = arith.addf %565, %16 : vector<8x256xf32>
    %cst_282 = arith.constant 0.000000e+00 : f32
    %cst_283 = arith.constant 2.000000e+01 : f32
    %567 = vector.broadcast %cst_282 : f32 to vector<8x256xf32>
    %568 = arith.maximumf %567, %566 : vector<8x256xf32>
    %569 = vector.broadcast %cst_283 : f32 to vector<8x256xf32>
    %570 = arith.minimumf %569, %568 : vector<8x256xf32>
    %cst_284 = arith.constant 0.000000e+00 : f32
    %571 = vector.broadcast %cst_284 : f32 to vector<8x256xf32>
    %572 = arith.select %10, %571, %570 : vector<8x256xi1>, vector<8x256xf32>
    %573 = arith.truncf %572 : vector<8x256xf32> to vector<8x256xbf16>
    %c0_285 = arith.constant 0 : index
    %c4_286 = arith.constant 4 : index
    %c0_287 = arith.constant 0 : index
    %c0_288 = arith.constant 0 : index
    %574 = vector.load %arg7[%c0_285, %c4_286, %c0_287, %c0_288] : memref<1x8x8x256xbf16, #tpu.memory_space<vmem>>, vector<1x1x8x256xbf16>
    %575 = vector.shape_cast %574 : vector<1x1x8x256xbf16> to vector<8x256xbf16>
    %576 = vector.shape_cast %573 : vector<8x256xbf16> to vector<1x1x8x256xbf16>
    tpu.vector_store %arg7[%c0_285, %c4_286, %c0_287, %c0_288], %576 {strides = array<i32>} : memref<1x8x8x256xbf16, #tpu.memory_space<vmem>>, vector<1x1x8x256xbf16>,
    %cst_289 = arith.constant 0.000000e+00 : f32
    %577 = vector.broadcast %cst_289 : f32 to vector<8x256xf32>
    %c0_290 = arith.constant 0 : index
    %c0_291 = arith.constant 0 : index
    %c5_292 = arith.constant 5 : index
    %c0_293 = arith.constant 0 : index
    %578 = arith.index_cast %1 : i32 to index
    %579 = vector.load %arg3[%c0_290, %c0_291, %c5_292, %c0_293, %578] : memref<1x4x9x1x257xbf16, #tpu.memory_space<vmem>>, vector<1x1x1x1x257xbf16>
    %580 = vector.shape_cast %579 : vector<1x1x1x1x257xbf16> to vector<1x257xbf16>
    %581 = vector.extract_strided_slice %580 {offsets = [0, 0], sizes = [1, 256], strides = [1, 1]} : vector<1x257xbf16> to vector<1x256xbf16>
    %c0_294 = arith.constant 0 : index
    %c0_295 = arith.constant 0 : index
    %c0_296 = arith.constant 0 : index
    %582 = vector.load %arg4[%c0_294, %c0_295, %c0_296] : memref<9x8x1xbf16, #tpu.memory_space<vmem>>, vector<1x8x1xbf16>
    %583 = vector.shape_cast %582 : vector<1x8x1xbf16> to vector<8x1xbf16>
    %584 = arith.extf %583 : vector<8x1xbf16> to vector<8x1xf32>
    %585 = arith.extf %581 : vector<1x256xbf16> to vector<1x256xf32>
    %586 = vector.broadcast %584 : vector<8x1xf32> to vector<8x256xf32>
    %587 = vector.broadcast %585 : vector<1x256xf32> to vector<8x256xf32>
    %588 = arith.mulf %586, %587 : vector<8x256xf32>
    %589 = arith.addf %577, %588 : vector<8x256xf32>
    %590 = vector.extract_strided_slice %580 {offsets = [0, 1], sizes = [1, 256], strides = [1, 1]} : vector<1x257xbf16> to vector<1x256xbf16>
    %c2_297 = arith.constant 2 : index
    %c0_298 = arith.constant 0 : index
    %c0_299 = arith.constant 0 : index
    %591 = vector.load %arg4[%c2_297, %c0_298, %c0_299] : memref<9x8x1xbf16, #tpu.memory_space<vmem>>, vector<1x8x1xbf16>
    %592 = vector.shape_cast %591 : vector<1x8x1xbf16> to vector<8x1xbf16>
    %593 = arith.extf %592 : vector<8x1xbf16> to vector<8x1xf32>
    %594 = arith.extf %590 : vector<1x256xbf16> to vector<1x256xf32>
    %595 = vector.broadcast %593 : vector<8x1xf32> to vector<8x256xf32>
    %596 = vector.broadcast %594 : vector<1x256xf32> to vector<8x256xf32>
    %597 = arith.mulf %595, %596 : vector<8x256xf32>
    %598 = arith.addf %589, %597 : vector<8x256xf32>
    %c0_300 = arith.constant 0 : index
    %c1_301 = arith.constant 1 : index
    %c5_302 = arith.constant 5 : index
    %c0_303 = arith.constant 0 : index
    %599 = arith.index_cast %1 : i32 to index
    %600 = vector.load %arg3[%c0_300, %c1_301, %c5_302, %c0_303, %599] : memref<1x4x9x1x257xbf16, #tpu.memory_space<vmem>>, vector<1x1x1x1x257xbf16>
    %601 = vector.shape_cast %600 : vector<1x1x1x1x257xbf16> to vector<1x257xbf16>
    %602 = vector.extract_strided_slice %601 {offsets = [0, 0], sizes = [1, 256], strides = [1, 1]} : vector<1x257xbf16> to vector<1x256xbf16>
    %c1_304 = arith.constant 1 : index
    %c0_305 = arith.constant 0 : index
    %c0_306 = arith.constant 0 : index
    %603 = vector.load %arg4[%c1_304, %c0_305, %c0_306] : memref<9x8x1xbf16, #tpu.memory_space<vmem>>, vector<1x8x1xbf16>
    %604 = vector.shape_cast %603 : vector<1x8x1xbf16> to vector<8x1xbf16>
    %605 = arith.extf %604 : vector<8x1xbf16> to vector<8x1xf32>
    %606 = arith.extf %602 : vector<1x256xbf16> to vector<1x256xf32>
    %607 = vector.broadcast %605 : vector<8x1xf32> to vector<8x256xf32>
    %608 = vector.broadcast %606 : vector<1x256xf32> to vector<8x256xf32>
    %609 = arith.mulf %607, %608 : vector<8x256xf32>
    %610 = arith.addf %598, %609 : vector<8x256xf32>
    %c0_307 = arith.constant 0 : index
    %c2_308 = arith.constant 2 : index
    %c5_309 = arith.constant 5 : index
    %c0_310 = arith.constant 0 : index
    %611 = arith.index_cast %1 : i32 to index
    %612 = vector.load %arg3[%c0_307, %c2_308, %c5_309, %c0_310, %611] : memref<1x4x9x1x257xbf16, #tpu.memory_space<vmem>>, vector<1x1x1x1x257xbf16>
    %613 = vector.shape_cast %612 : vector<1x1x1x1x257xbf16> to vector<1x257xbf16>
    %614 = vector.extract_strided_slice %613 {offsets = [0, 0], sizes = [1, 256], strides = [1, 1]} : vector<1x257xbf16> to vector<1x256xbf16>
    %c3_311 = arith.constant 3 : index
    %c0_312 = arith.constant 0 : index
    %c0_313 = arith.constant 0 : index
    %615 = vector.load %arg4[%c3_311, %c0_312, %c0_313] : memref<9x8x1xbf16, #tpu.memory_space<vmem>>, vector<1x8x1xbf16>
    %616 = vector.shape_cast %615 : vector<1x8x1xbf16> to vector<8x1xbf16>
    %617 = arith.extf %616 : vector<8x1xbf16> to vector<8x1xf32>
    %618 = arith.extf %614 : vector<1x256xbf16> to vector<1x256xf32>
    %619 = vector.broadcast %617 : vector<8x1xf32> to vector<8x256xf32>
    %620 = vector.broadcast %618 : vector<1x256xf32> to vector<8x256xf32>
    %621 = arith.mulf %619, %620 : vector<8x256xf32>
    %622 = arith.addf %610, %621 : vector<8x256xf32>
    %623 = vector.extract_strided_slice %613 {offsets = [0, 1], sizes = [1, 256], strides = [1, 1]} : vector<1x257xbf16> to vector<1x256xbf16>
    %c5_314 = arith.constant 5 : index
    %c0_315 = arith.constant 0 : index
    %c0_316 = arith.constant 0 : index
    %624 = vector.load %arg4[%c5_314, %c0_315, %c0_316] : memref<9x8x1xbf16, #tpu.memory_space<vmem>>, vector<1x8x1xbf16>
    %625 = vector.shape_cast %624 : vector<1x8x1xbf16> to vector<8x1xbf16>
    %626 = arith.extf %625 : vector<8x1xbf16> to vector<8x1xf32>
    %627 = arith.extf %623 : vector<1x256xbf16> to vector<1x256xf32>
    %628 = vector.broadcast %626 : vector<8x1xf32> to vector<8x256xf32>
    %629 = vector.broadcast %627 : vector<1x256xf32> to vector<8x256xf32>
    %630 = arith.mulf %628, %629 : vector<8x256xf32>
    %631 = arith.addf %622, %630 : vector<8x256xf32>
    %c0_317 = arith.constant 0 : index
    %c3_318 = arith.constant 3 : index
    %c5_319 = arith.constant 5 : index
    %c0_320 = arith.constant 0 : index
    %632 = arith.index_cast %1 : i32 to index
    %633 = vector.load %arg3[%c0_317, %c3_318, %c5_319, %c0_320, %632] : memref<1x4x9x1x257xbf16, #tpu.memory_space<vmem>>, vector<1x1x1x1x257xbf16>
    %634 = vector.shape_cast %633 : vector<1x1x1x1x257xbf16> to vector<1x257xbf16>
    %635 = vector.extract_strided_slice %634 {offsets = [0, 0], sizes = [1, 256], strides = [1, 1]} : vector<1x257xbf16> to vector<1x256xbf16>
    %c4_321 = arith.constant 4 : index
    %c0_322 = arith.constant 0 : index
    %c0_323 = arith.constant 0 : index
    %636 = vector.load %arg4[%c4_321, %c0_322, %c0_323] : memref<9x8x1xbf16, #tpu.memory_space<vmem>>, vector<1x8x1xbf16>
    %637 = vector.shape_cast %636 : vector<1x8x1xbf16> to vector<8x1xbf16>
    %638 = arith.extf %637 : vector<8x1xbf16> to vector<8x1xf32>
    %639 = arith.extf %635 : vector<1x256xbf16> to vector<1x256xf32>
    %640 = vector.broadcast %638 : vector<8x1xf32> to vector<8x256xf32>
    %641 = vector.broadcast %639 : vector<1x256xf32> to vector<8x256xf32>
    %642 = arith.mulf %640, %641 : vector<8x256xf32>
    %643 = arith.addf %631, %642 : vector<8x256xf32>
    %c0_324 = arith.constant 0 : index
    %c0_325 = arith.constant 0 : index
    %c6_326 = arith.constant 6 : index
    %c0_327 = arith.constant 0 : index
    %644 = arith.index_cast %1 : i32 to index
    %645 = vector.load %arg3[%c0_324, %c0_325, %c6_326, %c0_327, %644] : memref<1x4x9x1x257xbf16, #tpu.memory_space<vmem>>, vector<1x1x1x1x257xbf16>
    %646 = vector.shape_cast %645 : vector<1x1x1x1x257xbf16> to vector<1x257xbf16>
    %647 = vector.extract_strided_slice %646 {offsets = [0, 0], sizes = [1, 256], strides = [1, 1]} : vector<1x257xbf16> to vector<1x256xbf16>
    %c6_328 = arith.constant 6 : index
    %c0_329 = arith.constant 0 : index
    %c0_330 = arith.constant 0 : index
    %648 = vector.load %arg4[%c6_328, %c0_329, %c0_330] : memref<9x8x1xbf16, #tpu.memory_space<vmem>>, vector<1x8x1xbf16>
    %649 = vector.shape_cast %648 : vector<1x8x1xbf16> to vector<8x1xbf16>
    %650 = arith.extf %649 : vector<8x1xbf16> to vector<8x1xf32>
    %651 = arith.extf %647 : vector<1x256xbf16> to vector<1x256xf32>
    %652 = vector.broadcast %650 : vector<8x1xf32> to vector<8x256xf32>
    %653 = vector.broadcast %651 : vector<1x256xf32> to vector<8x256xf32>
    %654 = arith.mulf %652, %653 : vector<8x256xf32>
    %655 = arith.addf %643, %654 : vector<8x256xf32>
    %656 = vector.extract_strided_slice %646 {offsets = [0, 1], sizes = [1, 256], strides = [1, 1]} : vector<1x257xbf16> to vector<1x256xbf16>
    %c8_331 = arith.constant 8 : index
    %c0_332 = arith.constant 0 : index
    %c0_333 = arith.constant 0 : index
    %657 = vector.load %arg4[%c8_331, %c0_332, %c0_333] : memref<9x8x1xbf16, #tpu.memory_space<vmem>>, vector<1x8x1xbf16>
    %658 = vector.shape_cast %657 : vector<1x8x1xbf16> to vector<8x1xbf16>
    %659 = arith.extf %658 : vector<8x1xbf16> to vector<8x1xf32>
    %660 = arith.extf %656 : vector<1x256xbf16> to vector<1x256xf32>
    %661 = vector.broadcast %659 : vector<8x1xf32> to vector<8x256xf32>
    %662 = vector.broadcast %660 : vector<1x256xf32> to vector<8x256xf32>
    %663 = arith.mulf %661, %662 : vector<8x256xf32>
    %664 = arith.addf %655, %663 : vector<8x256xf32>
    %c0_334 = arith.constant 0 : index
    %c1_335 = arith.constant 1 : index
    %c6_336 = arith.constant 6 : index
    %c0_337 = arith.constant 0 : index
    %665 = arith.index_cast %1 : i32 to index
    %666 = vector.load %arg3[%c0_334, %c1_335, %c6_336, %c0_337, %665] : memref<1x4x9x1x257xbf16, #tpu.memory_space<vmem>>, vector<1x1x1x1x257xbf16>
    %667 = vector.shape_cast %666 : vector<1x1x1x1x257xbf16> to vector<1x257xbf16>
    %668 = vector.extract_strided_slice %667 {offsets = [0, 0], sizes = [1, 256], strides = [1, 1]} : vector<1x257xbf16> to vector<1x256xbf16>
    %c7_338 = arith.constant 7 : index
    %c0_339 = arith.constant 0 : index
    %c0_340 = arith.constant 0 : index
    %669 = vector.load %arg4[%c7_338, %c0_339, %c0_340] : memref<9x8x1xbf16, #tpu.memory_space<vmem>>, vector<1x8x1xbf16>
    %670 = vector.shape_cast %669 : vector<1x8x1xbf16> to vector<8x1xbf16>
    %671 = arith.extf %670 : vector<8x1xbf16> to vector<8x1xf32>
    %672 = arith.extf %668 : vector<1x256xbf16> to vector<1x256xf32>
    %673 = vector.broadcast %671 : vector<8x1xf32> to vector<8x256xf32>
    %674 = vector.broadcast %672 : vector<1x256xf32> to vector<8x256xf32>
    %675 = arith.mulf %673, %674 : vector<8x256xf32>
    %676 = arith.addf %664, %675 : vector<8x256xf32>
    %677 = arith.mulf %676, %13 : vector<8x256xf32>
    %678 = arith.addf %677, %16 : vector<8x256xf32>
    %cst_341 = arith.constant 0.000000e+00 : f32
    %cst_342 = arith.constant 2.000000e+01 : f32
    %679 = vector.broadcast %cst_341 : f32 to vector<8x256xf32>
    %680 = arith.maximumf %679, %678 : vector<8x256xf32>
    %681 = vector.broadcast %cst_342 : f32 to vector<8x256xf32>
    %682 = arith.minimumf %681, %680 : vector<8x256xf32>
    %cst_343 = arith.constant 0.000000e+00 : f32
    %683 = vector.broadcast %cst_343 : f32 to vector<8x256xf32>
    %684 = arith.select %10, %683, %682 : vector<8x256xi1>, vector<8x256xf32>
    %685 = arith.truncf %684 : vector<8x256xf32> to vector<8x256xbf16>
    %c0_344 = arith.constant 0 : index
    %c5_345 = arith.constant 5 : index
    %c0_346 = arith.constant 0 : index
    %c0_347 = arith.constant 0 : index
    %686 = vector.load %arg7[%c0_344, %c5_345, %c0_346, %c0_347] : memref<1x8x8x256xbf16, #tpu.memory_space<vmem>>, vector<1x1x8x256xbf16>
    %687 = vector.shape_cast %686 : vector<1x1x8x256xbf16> to vector<8x256xbf16>
    %688 = vector.shape_cast %685 : vector<8x256xbf16> to vector<1x1x8x256xbf16>
    tpu.vector_store %arg7[%c0_344, %c5_345, %c0_346, %c0_347], %688 {strides = array<i32>} : memref<1x8x8x256xbf16, #tpu.memory_space<vmem>>, vector<1x1x8x256xbf16>,
    %cst_348 = arith.constant 0.000000e+00 : f32
    %689 = vector.broadcast %cst_348 : f32 to vector<8x256xf32>
    %c0_349 = arith.constant 0 : index
    %c0_350 = arith.constant 0 : index
    %c6_351 = arith.constant 6 : index
    %c0_352 = arith.constant 0 : index
    %690 = arith.index_cast %1 : i32 to index
    %691 = vector.load %arg3[%c0_349, %c0_350, %c6_351, %c0_352, %690] : memref<1x4x9x1x257xbf16, #tpu.memory_space<vmem>>, vector<1x1x1x1x257xbf16>
    %692 = vector.shape_cast %691 : vector<1x1x1x1x257xbf16> to vector<1x257xbf16>
    %693 = vector.extract_strided_slice %692 {offsets = [0, 0], sizes = [1, 256], strides = [1, 1]} : vector<1x257xbf16> to vector<1x256xbf16>
    %c0_353 = arith.constant 0 : index
    %c0_354 = arith.constant 0 : index
    %c0_355 = arith.constant 0 : index
    %694 = vector.load %arg4[%c0_353, %c0_354, %c0_355] : memref<9x8x1xbf16, #tpu.memory_space<vmem>>, vector<1x8x1xbf16>
    %695 = vector.shape_cast %694 : vector<1x8x1xbf16> to vector<8x1xbf16>
    %696 = arith.extf %695 : vector<8x1xbf16> to vector<8x1xf32>
    %697 = arith.extf %693 : vector<1x256xbf16> to vector<1x256xf32>
    %698 = vector.broadcast %696 : vector<8x1xf32> to vector<8x256xf32>
    %699 = vector.broadcast %697 : vector<1x256xf32> to vector<8x256xf32>
    %700 = arith.mulf %698, %699 : vector<8x256xf32>
    %701 = arith.addf %689, %700 : vector<8x256xf32>
    %702 = vector.extract_strided_slice %692 {offsets = [0, 1], sizes = [1, 256], strides = [1, 1]} : vector<1x257xbf16> to vector<1x256xbf16>
    %c2_356 = arith.constant 2 : index
    %c0_357 = arith.constant 0 : index
    %c0_358 = arith.constant 0 : index
    %703 = vector.load %arg4[%c2_356, %c0_357, %c0_358] : memref<9x8x1xbf16, #tpu.memory_space<vmem>>, vector<1x8x1xbf16>
    %704 = vector.shape_cast %703 : vector<1x8x1xbf16> to vector<8x1xbf16>
    %705 = arith.extf %704 : vector<8x1xbf16> to vector<8x1xf32>
    %706 = arith.extf %702 : vector<1x256xbf16> to vector<1x256xf32>
    %707 = vector.broadcast %705 : vector<8x1xf32> to vector<8x256xf32>
    %708 = vector.broadcast %706 : vector<1x256xf32> to vector<8x256xf32>
    %709 = arith.mulf %707, %708 : vector<8x256xf32>
    %710 = arith.addf %701, %709 : vector<8x256xf32>
    %c0_359 = arith.constant 0 : index
    %c1_360 = arith.constant 1 : index
    %c6_361 = arith.constant 6 : index
    %c0_362 = arith.constant 0 : index
    %711 = arith.index_cast %1 : i32 to index
    %712 = vector.load %arg3[%c0_359, %c1_360, %c6_361, %c0_362, %711] : memref<1x4x9x1x257xbf16, #tpu.memory_space<vmem>>, vector<1x1x1x1x257xbf16>
    %713 = vector.shape_cast %712 : vector<1x1x1x1x257xbf16> to vector<1x257xbf16>
    %714 = vector.extract_strided_slice %713 {offsets = [0, 0], sizes = [1, 256], strides = [1, 1]} : vector<1x257xbf16> to vector<1x256xbf16>
    %c1_363 = arith.constant 1 : index
    %c0_364 = arith.constant 0 : index
    %c0_365 = arith.constant 0 : index
    %715 = vector.load %arg4[%c1_363, %c0_364, %c0_365] : memref<9x8x1xbf16, #tpu.memory_space<vmem>>, vector<1x8x1xbf16>
    %716 = vector.shape_cast %715 : vector<1x8x1xbf16> to vector<8x1xbf16>
    %717 = arith.extf %716 : vector<8x1xbf16> to vector<8x1xf32>
    %718 = arith.extf %714 : vector<1x256xbf16> to vector<1x256xf32>
    %719 = vector.broadcast %717 : vector<8x1xf32> to vector<8x256xf32>
    %720 = vector.broadcast %718 : vector<1x256xf32> to vector<8x256xf32>
    %721 = arith.mulf %719, %720 : vector<8x256xf32>
    %722 = arith.addf %710, %721 : vector<8x256xf32>
    %c0_366 = arith.constant 0 : index
    %c2_367 = arith.constant 2 : index
    %c6_368 = arith.constant 6 : index
    %c0_369 = arith.constant 0 : index
    %723 = arith.index_cast %1 : i32 to index
    %724 = vector.load %arg3[%c0_366, %c2_367, %c6_368, %c0_369, %723] : memref<1x4x9x1x257xbf16, #tpu.memory_space<vmem>>, vector<1x1x1x1x257xbf16>
    %725 = vector.shape_cast %724 : vector<1x1x1x1x257xbf16> to vector<1x257xbf16>
    %726 = vector.extract_strided_slice %725 {offsets = [0, 0], sizes = [1, 256], strides = [1, 1]} : vector<1x257xbf16> to vector<1x256xbf16>
    %c3_370 = arith.constant 3 : index
    %c0_371 = arith.constant 0 : index
    %c0_372 = arith.constant 0 : index
    %727 = vector.load %arg4[%c3_370, %c0_371, %c0_372] : memref<9x8x1xbf16, #tpu.memory_space<vmem>>, vector<1x8x1xbf16>
    %728 = vector.shape_cast %727 : vector<1x8x1xbf16> to vector<8x1xbf16>
    %729 = arith.extf %728 : vector<8x1xbf16> to vector<8x1xf32>
    %730 = arith.extf %726 : vector<1x256xbf16> to vector<1x256xf32>
    %731 = vector.broadcast %729 : vector<8x1xf32> to vector<8x256xf32>
    %732 = vector.broadcast %730 : vector<1x256xf32> to vector<8x256xf32>
    %733 = arith.mulf %731, %732 : vector<8x256xf32>
    %734 = arith.addf %722, %733 : vector<8x256xf32>
    %735 = vector.extract_strided_slice %725 {offsets = [0, 1], sizes = [1, 256], strides = [1, 1]} : vector<1x257xbf16> to vector<1x256xbf16>
    %c5_373 = arith.constant 5 : index
    %c0_374 = arith.constant 0 : index
    %c0_375 = arith.constant 0 : index
    %736 = vector.load %arg4[%c5_373, %c0_374, %c0_375] : memref<9x8x1xbf16, #tpu.memory_space<vmem>>, vector<1x8x1xbf16>
    %737 = vector.shape_cast %736 : vector<1x8x1xbf16> to vector<8x1xbf16>
    %738 = arith.extf %737 : vector<8x1xbf16> to vector<8x1xf32>
    %739 = arith.extf %735 : vector<1x256xbf16> to vector<1x256xf32>
    %740 = vector.broadcast %738 : vector<8x1xf32> to vector<8x256xf32>
    %741 = vector.broadcast %739 : vector<1x256xf32> to vector<8x256xf32>
    %742 = arith.mulf %740, %741 : vector<8x256xf32>
    %743 = arith.addf %734, %742 : vector<8x256xf32>
    %c0_376 = arith.constant 0 : index
    %c3_377 = arith.constant 3 : index
    %c6_378 = arith.constant 6 : index
    %c0_379 = arith.constant 0 : index
    %744 = arith.index_cast %1 : i32 to index
    %745 = vector.load %arg3[%c0_376, %c3_377, %c6_378, %c0_379, %744] : memref<1x4x9x1x257xbf16, #tpu.memory_space<vmem>>, vector<1x1x1x1x257xbf16>
    %746 = vector.shape_cast %745 : vector<1x1x1x1x257xbf16> to vector<1x257xbf16>
    %747 = vector.extract_strided_slice %746 {offsets = [0, 0], sizes = [1, 256], strides = [1, 1]} : vector<1x257xbf16> to vector<1x256xbf16>
    %c4_380 = arith.constant 4 : index
    %c0_381 = arith.constant 0 : index
    %c0_382 = arith.constant 0 : index
    %748 = vector.load %arg4[%c4_380, %c0_381, %c0_382] : memref<9x8x1xbf16, #tpu.memory_space<vmem>>, vector<1x8x1xbf16>
    %749 = vector.shape_cast %748 : vector<1x8x1xbf16> to vector<8x1xbf16>
    %750 = arith.extf %749 : vector<8x1xbf16> to vector<8x1xf32>
    %751 = arith.extf %747 : vector<1x256xbf16> to vector<1x256xf32>
    %752 = vector.broadcast %750 : vector<8x1xf32> to vector<8x256xf32>
    %753 = vector.broadcast %751 : vector<1x256xf32> to vector<8x256xf32>
    %754 = arith.mulf %752, %753 : vector<8x256xf32>
    %755 = arith.addf %743, %754 : vector<8x256xf32>
    %c0_383 = arith.constant 0 : index
    %c0_384 = arith.constant 0 : index
    %c7_385 = arith.constant 7 : index
    %c0_386 = arith.constant 0 : index
    %756 = arith.index_cast %1 : i32 to index
    %757 = vector.load %arg3[%c0_383, %c0_384, %c7_385, %c0_386, %756] : memref<1x4x9x1x257xbf16, #tpu.memory_space<vmem>>, vector<1x1x1x1x257xbf16>
    %758 = vector.shape_cast %757 : vector<1x1x1x1x257xbf16> to vector<1x257xbf16>
    %759 = vector.extract_strided_slice %758 {offsets = [0, 0], sizes = [1, 256], strides = [1, 1]} : vector<1x257xbf16> to vector<1x256xbf16>
    %c6_387 = arith.constant 6 : index
    %c0_388 = arith.constant 0 : index
    %c0_389 = arith.constant 0 : index
    %760 = vector.load %arg4[%c6_387, %c0_388, %c0_389] : memref<9x8x1xbf16, #tpu.memory_space<vmem>>, vector<1x8x1xbf16>
    %761 = vector.shape_cast %760 : vector<1x8x1xbf16> to vector<8x1xbf16>
    %762 = arith.extf %761 : vector<8x1xbf16> to vector<8x1xf32>
    %763 = arith.extf %759 : vector<1x256xbf16> to vector<1x256xf32>
    %764 = vector.broadcast %762 : vector<8x1xf32> to vector<8x256xf32>
    %765 = vector.broadcast %763 : vector<1x256xf32> to vector<8x256xf32>
    %766 = arith.mulf %764, %765 : vector<8x256xf32>
    %767 = arith.addf %755, %766 : vector<8x256xf32>
    %768 = vector.extract_strided_slice %758 {offsets = [0, 1], sizes = [1, 256], strides = [1, 1]} : vector<1x257xbf16> to vector<1x256xbf16>
    %c8_390 = arith.constant 8 : index
    %c0_391 = arith.constant 0 : index
    %c0_392 = arith.constant 0 : index
    %769 = vector.load %arg4[%c8_390, %c0_391, %c0_392] : memref<9x8x1xbf16, #tpu.memory_space<vmem>>, vector<1x8x1xbf16>
    %770 = vector.shape_cast %769 : vector<1x8x1xbf16> to vector<8x1xbf16>
    %771 = arith.extf %770 : vector<8x1xbf16> to vector<8x1xf32>
    %772 = arith.extf %768 : vector<1x256xbf16> to vector<1x256xf32>
    %773 = vector.broadcast %771 : vector<8x1xf32> to vector<8x256xf32>
    %774 = vector.broadcast %772 : vector<1x256xf32> to vector<8x256xf32>
    %775 = arith.mulf %773, %774 : vector<8x256xf32>
    %776 = arith.addf %767, %775 : vector<8x256xf32>
    %c0_393 = arith.constant 0 : index
    %c1_394 = arith.constant 1 : index
    %c7_395 = arith.constant 7 : index
    %c0_396 = arith.constant 0 : index
    %777 = arith.index_cast %1 : i32 to index
    %778 = vector.load %arg3[%c0_393, %c1_394, %c7_395, %c0_396, %777] : memref<1x4x9x1x257xbf16, #tpu.memory_space<vmem>>, vector<1x1x1x1x257xbf16>
    %779 = vector.shape_cast %778 : vector<1x1x1x1x257xbf16> to vector<1x257xbf16>
    %780 = vector.extract_strided_slice %779 {offsets = [0, 0], sizes = [1, 256], strides = [1, 1]} : vector<1x257xbf16> to vector<1x256xbf16>
    %c7_397 = arith.constant 7 : index
    %c0_398 = arith.constant 0 : index
    %c0_399 = arith.constant 0 : index
    %781 = vector.load %arg4[%c7_397, %c0_398, %c0_399] : memref<9x8x1xbf16, #tpu.memory_space<vmem>>, vector<1x8x1xbf16>
    %782 = vector.shape_cast %781 : vector<1x8x1xbf16> to vector<8x1xbf16>
    %783 = arith.extf %782 : vector<8x1xbf16> to vector<8x1xf32>
    %784 = arith.extf %780 : vector<1x256xbf16> to vector<1x256xf32>
    %785 = vector.broadcast %783 : vector<8x1xf32> to vector<8x256xf32>
    %786 = vector.broadcast %784 : vector<1x256xf32> to vector<8x256xf32>
    %787 = arith.mulf %785, %786 : vector<8x256xf32>
    %788 = arith.addf %776, %787 : vector<8x256xf32>
    %789 = arith.mulf %788, %13 : vector<8x256xf32>
    %790 = arith.addf %789, %16 : vector<8x256xf32>
    %cst_400 = arith.constant 0.000000e+00 : f32
    %cst_401 = arith.constant 2.000000e+01 : f32
    %791 = vector.broadcast %cst_400 : f32 to vector<8x256xf32>
    %792 = arith.maximumf %791, %790 : vector<8x256xf32>
    %793 = vector.broadcast %cst_401 : f32 to vector<8x256xf32>
    %794 = arith.minimumf %793, %792 : vector<8x256xf32>
    %cst_402 = arith.constant 0.000000e+00 : f32
    %795 = vector.broadcast %cst_402 : f32 to vector<8x256xf32>
    %796 = arith.select %10, %795, %794 : vector<8x256xi1>, vector<8x256xf32>
    %797 = arith.truncf %796 : vector<8x256xf32> to vector<8x256xbf16>
    %c0_403 = arith.constant 0 : index
    %c6_404 = arith.constant 6 : index
    %c0_405 = arith.constant 0 : index
    %c0_406 = arith.constant 0 : index
    %798 = vector.load %arg7[%c0_403, %c6_404, %c0_405, %c0_406] : memref<1x8x8x256xbf16, #tpu.memory_space<vmem>>, vector<1x1x8x256xbf16>
    %799 = vector.shape_cast %798 : vector<1x1x8x256xbf16> to vector<8x256xbf16>
    %800 = vector.shape_cast %797 : vector<8x256xbf16> to vector<1x1x8x256xbf16>
    tpu.vector_store %arg7[%c0_403, %c6_404, %c0_405, %c0_406], %800 {strides = array<i32>} : memref<1x8x8x256xbf16, #tpu.memory_space<vmem>>, vector<1x1x8x256xbf16>,
    %cst_407 = arith.constant 0.000000e+00 : f32
    %801 = vector.broadcast %cst_407 : f32 to vector<8x256xf32>
    %c0_408 = arith.constant 0 : index
    %c0_409 = arith.constant 0 : index
    %c7_410 = arith.constant 7 : index
    %c0_411 = arith.constant 0 : index
    %802 = arith.index_cast %1 : i32 to index
    %803 = vector.load %arg3[%c0_408, %c0_409, %c7_410, %c0_411, %802] : memref<1x4x9x1x257xbf16, #tpu.memory_space<vmem>>, vector<1x1x1x1x257xbf16>
    %804 = vector.shape_cast %803 : vector<1x1x1x1x257xbf16> to vector<1x257xbf16>
    %805 = vector.extract_strided_slice %804 {offsets = [0, 0], sizes = [1, 256], strides = [1, 1]} : vector<1x257xbf16> to vector<1x256xbf16>
    %c0_412 = arith.constant 0 : index
    %c0_413 = arith.constant 0 : index
    %c0_414 = arith.constant 0 : index
    %806 = vector.load %arg4[%c0_412, %c0_413, %c0_414] : memref<9x8x1xbf16, #tpu.memory_space<vmem>>, vector<1x8x1xbf16>
    %807 = vector.shape_cast %806 : vector<1x8x1xbf16> to vector<8x1xbf16>
    %808 = arith.extf %807 : vector<8x1xbf16> to vector<8x1xf32>
    %809 = arith.extf %805 : vector<1x256xbf16> to vector<1x256xf32>
    %810 = vector.broadcast %808 : vector<8x1xf32> to vector<8x256xf32>
    %811 = vector.broadcast %809 : vector<1x256xf32> to vector<8x256xf32>
    %812 = arith.mulf %810, %811 : vector<8x256xf32>
    %813 = arith.addf %801, %812 : vector<8x256xf32>
    %814 = vector.extract_strided_slice %804 {offsets = [0, 1], sizes = [1, 256], strides = [1, 1]} : vector<1x257xbf16> to vector<1x256xbf16>
    %c2_415 = arith.constant 2 : index
    %c0_416 = arith.constant 0 : index
    %c0_417 = arith.constant 0 : index
    %815 = vector.load %arg4[%c2_415, %c0_416, %c0_417] : memref<9x8x1xbf16, #tpu.memory_space<vmem>>, vector<1x8x1xbf16>
    %816 = vector.shape_cast %815 : vector<1x8x1xbf16> to vector<8x1xbf16>
    %817 = arith.extf %816 : vector<8x1xbf16> to vector<8x1xf32>
    %818 = arith.extf %814 : vector<1x256xbf16> to vector<1x256xf32>
    %819 = vector.broadcast %817 : vector<8x1xf32> to vector<8x256xf32>
    %820 = vector.broadcast %818 : vector<1x256xf32> to vector<8x256xf32>
    %821 = arith.mulf %819, %820 : vector<8x256xf32>
    %822 = arith.addf %813, %821 : vector<8x256xf32>
    %c0_418 = arith.constant 0 : index
    %c1_419 = arith.constant 1 : index
    %c7_420 = arith.constant 7 : index
    %c0_421 = arith.constant 0 : index
    %823 = arith.index_cast %1 : i32 to index
    %824 = vector.load %arg3[%c0_418, %c1_419, %c7_420, %c0_421, %823] : memref<1x4x9x1x257xbf16, #tpu.memory_space<vmem>>, vector<1x1x1x1x257xbf16>
    %825 = vector.shape_cast %824 : vector<1x1x1x1x257xbf16> to vector<1x257xbf16>
    %826 = vector.extract_strided_slice %825 {offsets = [0, 0], sizes = [1, 256], strides = [1, 1]} : vector<1x257xbf16> to vector<1x256xbf16>
    %c1_422 = arith.constant 1 : index
    %c0_423 = arith.constant 0 : index
    %c0_424 = arith.constant 0 : index
    %827 = vector.load %arg4[%c1_422, %c0_423, %c0_424] : memref<9x8x1xbf16, #tpu.memory_space<vmem>>, vector<1x8x1xbf16>
    %828 = vector.shape_cast %827 : vector<1x8x1xbf16> to vector<8x1xbf16>
    %829 = arith.extf %828 : vector<8x1xbf16> to vector<8x1xf32>
    %830 = arith.extf %826 : vector<1x256xbf16> to vector<1x256xf32>
    %831 = vector.broadcast %829 : vector<8x1xf32> to vector<8x256xf32>
    %832 = vector.broadcast %830 : vector<1x256xf32> to vector<8x256xf32>
    %833 = arith.mulf %831, %832 : vector<8x256xf32>
    %834 = arith.addf %822, %833 : vector<8x256xf32>
    %c0_425 = arith.constant 0 : index
    %c2_426 = arith.constant 2 : index
    %c7_427 = arith.constant 7 : index
    %c0_428 = arith.constant 0 : index
    %835 = arith.index_cast %1 : i32 to index
    %836 = vector.load %arg3[%c0_425, %c2_426, %c7_427, %c0_428, %835] : memref<1x4x9x1x257xbf16, #tpu.memory_space<vmem>>, vector<1x1x1x1x257xbf16>
    %837 = vector.shape_cast %836 : vector<1x1x1x1x257xbf16> to vector<1x257xbf16>
    %838 = vector.extract_strided_slice %837 {offsets = [0, 0], sizes = [1, 256], strides = [1, 1]} : vector<1x257xbf16> to vector<1x256xbf16>
    %c3_429 = arith.constant 3 : index
    %c0_430 = arith.constant 0 : index
    %c0_431 = arith.constant 0 : index
    %839 = vector.load %arg4[%c3_429, %c0_430, %c0_431] : memref<9x8x1xbf16, #tpu.memory_space<vmem>>, vector<1x8x1xbf16>
    %840 = vector.shape_cast %839 : vector<1x8x1xbf16> to vector<8x1xbf16>
    %841 = arith.extf %840 : vector<8x1xbf16> to vector<8x1xf32>
    %842 = arith.extf %838 : vector<1x256xbf16> to vector<1x256xf32>
    %843 = vector.broadcast %841 : vector<8x1xf32> to vector<8x256xf32>
    %844 = vector.broadcast %842 : vector<1x256xf32> to vector<8x256xf32>
    %845 = arith.mulf %843, %844 : vector<8x256xf32>
    %846 = arith.addf %834, %845 : vector<8x256xf32>
    %847 = vector.extract_strided_slice %837 {offsets = [0, 1], sizes = [1, 256], strides = [1, 1]} : vector<1x257xbf16> to vector<1x256xbf16>
    %c5_432 = arith.constant 5 : index
    %c0_433 = arith.constant 0 : index
    %c0_434 = arith.constant 0 : index
    %848 = vector.load %arg4[%c5_432, %c0_433, %c0_434] : memref<9x8x1xbf16, #tpu.memory_space<vmem>>, vector<1x8x1xbf16>
    %849 = vector.shape_cast %848 : vector<1x8x1xbf16> to vector<8x1xbf16>
    %850 = arith.extf %849 : vector<8x1xbf16> to vector<8x1xf32>
    %851 = arith.extf %847 : vector<1x256xbf16> to vector<1x256xf32>
    %852 = vector.broadcast %850 : vector<8x1xf32> to vector<8x256xf32>
    %853 = vector.broadcast %851 : vector<1x256xf32> to vector<8x256xf32>
    %854 = arith.mulf %852, %853 : vector<8x256xf32>
    %855 = arith.addf %846, %854 : vector<8x256xf32>
    %c0_435 = arith.constant 0 : index
    %c3_436 = arith.constant 3 : index
    %c7_437 = arith.constant 7 : index
    %c0_438 = arith.constant 0 : index
    %856 = arith.index_cast %1 : i32 to index
    %857 = vector.load %arg3[%c0_435, %c3_436, %c7_437, %c0_438, %856] : memref<1x4x9x1x257xbf16, #tpu.memory_space<vmem>>, vector<1x1x1x1x257xbf16>
    %858 = vector.shape_cast %857 : vector<1x1x1x1x257xbf16> to vector<1x257xbf16>
    %859 = vector.extract_strided_slice %858 {offsets = [0, 0], sizes = [1, 256], strides = [1, 1]} : vector<1x257xbf16> to vector<1x256xbf16>
    %c4_439 = arith.constant 4 : index
    %c0_440 = arith.constant 0 : index
    %c0_441 = arith.constant 0 : index
    %860 = vector.load %arg4[%c4_439, %c0_440, %c0_441] : memref<9x8x1xbf16, #tpu.memory_space<vmem>>, vector<1x8x1xbf16>
    %861 = vector.shape_cast %860 : vector<1x8x1xbf16> to vector<8x1xbf16>
    %862 = arith.extf %861 : vector<8x1xbf16> to vector<8x1xf32>
    %863 = arith.extf %859 : vector<1x256xbf16> to vector<1x256xf32>
    %864 = vector.broadcast %862 : vector<8x1xf32> to vector<8x256xf32>
    %865 = vector.broadcast %863 : vector<1x256xf32> to vector<8x256xf32>
    %866 = arith.mulf %864, %865 : vector<8x256xf32>
    %867 = arith.addf %855, %866 : vector<8x256xf32>
    %c0_442 = arith.constant 0 : index
    %c0_443 = arith.constant 0 : index
    %c8_444 = arith.constant 8 : index
    %c0_445 = arith.constant 0 : index
    %868 = arith.index_cast %1 : i32 to index
    %869 = vector.load %arg3[%c0_442, %c0_443, %c8_444, %c0_445, %868] : memref<1x4x9x1x257xbf16, #tpu.memory_space<vmem>>, vector<1x1x1x1x257xbf16>
    %870 = vector.shape_cast %869 : vector<1x1x1x1x257xbf16> to vector<1x257xbf16>
    %871 = vector.extract_strided_slice %870 {offsets = [0, 0], sizes = [1, 256], strides = [1, 1]} : vector<1x257xbf16> to vector<1x256xbf16>
    %c6_446 = arith.constant 6 : index
    %c0_447 = arith.constant 0 : index
    %c0_448 = arith.constant 0 : index
    %872 = vector.load %arg4[%c6_446, %c0_447, %c0_448] : memref<9x8x1xbf16, #tpu.memory_space<vmem>>, vector<1x8x1xbf16>
    %873 = vector.shape_cast %872 : vector<1x8x1xbf16> to vector<8x1xbf16>
    %874 = arith.extf %873 : vector<8x1xbf16> to vector<8x1xf32>
    %875 = arith.extf %871 : vector<1x256xbf16> to vector<1x256xf32>
    %876 = vector.broadcast %874 : vector<8x1xf32> to vector<8x256xf32>
    %877 = vector.broadcast %875 : vector<1x256xf32> to vector<8x256xf32>
    %878 = arith.mulf %876, %877 : vector<8x256xf32>
    %879 = arith.addf %867, %878 : vector<8x256xf32>
    %880 = vector.extract_strided_slice %870 {offsets = [0, 1], sizes = [1, 256], strides = [1, 1]} : vector<1x257xbf16> to vector<1x256xbf16>
    %c8_449 = arith.constant 8 : index
    %c0_450 = arith.constant 0 : index
    %c0_451 = arith.constant 0 : index
    %881 = vector.load %arg4[%c8_449, %c0_450, %c0_451] : memref<9x8x1xbf16, #tpu.memory_space<vmem>>, vector<1x8x1xbf16>
    %882 = vector.shape_cast %881 : vector<1x8x1xbf16> to vector<8x1xbf16>
    %883 = arith.extf %882 : vector<8x1xbf16> to vector<8x1xf32>
    %884 = arith.extf %880 : vector<1x256xbf16> to vector<1x256xf32>
    %885 = vector.broadcast %883 : vector<8x1xf32> to vector<8x256xf32>
    %886 = vector.broadcast %884 : vector<1x256xf32> to vector<8x256xf32>
    %887 = arith.mulf %885, %886 : vector<8x256xf32>
    %888 = arith.addf %879, %887 : vector<8x256xf32>
    %c0_452 = arith.constant 0 : index
    %c1_453 = arith.constant 1 : index
    %c8_454 = arith.constant 8 : index
    %c0_455 = arith.constant 0 : index
    %889 = arith.index_cast %1 : i32 to index
    %890 = vector.load %arg3[%c0_452, %c1_453, %c8_454, %c0_455, %889] : memref<1x4x9x1x257xbf16, #tpu.memory_space<vmem>>, vector<1x1x1x1x257xbf16>
    %891 = vector.shape_cast %890 : vector<1x1x1x1x257xbf16> to vector<1x257xbf16>
    %892 = vector.extract_strided_slice %891 {offsets = [0, 0], sizes = [1, 256], strides = [1, 1]} : vector<1x257xbf16> to vector<1x256xbf16>
    %c7_456 = arith.constant 7 : index
    %c0_457 = arith.constant 0 : index
    %c0_458 = arith.constant 0 : index
    %893 = vector.load %arg4[%c7_456, %c0_457, %c0_458] : memref<9x8x1xbf16, #tpu.memory_space<vmem>>, vector<1x8x1xbf16>
    %894 = vector.shape_cast %893 : vector<1x8x1xbf16> to vector<8x1xbf16>
    %895 = arith.extf %894 : vector<8x1xbf16> to vector<8x1xf32>
    %896 = arith.extf %892 : vector<1x256xbf16> to vector<1x256xf32>
    %897 = vector.broadcast %895 : vector<8x1xf32> to vector<8x256xf32>
    %898 = vector.broadcast %896 : vector<1x256xf32> to vector<8x256xf32>
    %899 = arith.mulf %897, %898 : vector<8x256xf32>
    %900 = arith.addf %888, %899 : vector<8x256xf32>
    %901 = arith.mulf %900, %13 : vector<8x256xf32>
    %902 = arith.addf %901, %16 : vector<8x256xf32>
    %cst_459 = arith.constant 0.000000e+00 : f32
    %cst_460 = arith.constant 2.000000e+01 : f32
    %903 = vector.broadcast %cst_459 : f32 to vector<8x256xf32>
    %904 = arith.maximumf %903, %902 : vector<8x256xf32>
    %905 = vector.broadcast %cst_460 : f32 to vector<8x256xf32>
    %906 = arith.minimumf %905, %904 : vector<8x256xf32>
    %cst_461 = arith.constant 0.000000e+00 : f32
    %907 = vector.broadcast %cst_461 : f32 to vector<8x256xf32>
    %908 = arith.select %10, %907, %906 : vector<8x256xi1>, vector<8x256xf32>
    %909 = arith.truncf %908 : vector<8x256xf32> to vector<8x256xbf16>
    %c0_462 = arith.constant 0 : index
    %c7_463 = arith.constant 7 : index
    %c0_464 = arith.constant 0 : index
    %c0_465 = arith.constant 0 : index
    %910 = vector.load %arg7[%c0_462, %c7_463, %c0_464, %c0_465] : memref<1x8x8x256xbf16, #tpu.memory_space<vmem>>, vector<1x1x8x256xbf16>
    %911 = vector.shape_cast %910 : vector<1x1x8x256xbf16> to vector<8x256xbf16>
    %912 = vector.shape_cast %909 : vector<8x256xbf16> to vector<1x1x8x256xbf16>
    tpu.vector_store %arg7[%c0_462, %c7_463, %c0_464, %c0_465], %912 {strides = array<i32>} : memref<1x8x8x256xbf16, #tpu.memory_space<vmem>>, vector<1x1x8x256xbf16>,
    return
  }
  func.func @transform_0(%arg0: i32, %arg1: i32, %arg2: memref<2xi32, #tpu.memory_space<smem>>) -> (i32, i32, i32, i32, i32) {
    %c0_i32 = arith.constant 0 : i32
    %c0_i32_0 = arith.constant 0 : i32
    %c0_i32_1 = arith.constant 0 : i32
    %c0_i32_2 = arith.constant 0 : i32
    %c0_i32_3 = arith.constant 0 : i32
    return %arg0, %c0_i32, %c0_i32_0, %c0_i32_1, %c0_i32_2 : i32, i32, i32, i32, i32
  }
  func.func @transform_1(%arg0: i32, %arg1: i32, %arg2: memref<2xi32, #tpu.memory_space<smem>>) -> (i32, i32, i32) {
    %c0_i32 = arith.constant 0 : i32
    %c0_i32_0 = arith.constant 0 : i32
    %c0_i32_1 = arith.constant 0 : i32
    %c0_i32_2 = arith.constant 0 : i32
    return %c0_i32, %c0_i32_0, %c0_i32_1 : i32, i32, i32
  }
  func.func @transform_2(%arg0: i32, %arg1: i32, %arg2: memref<2xi32, #tpu.memory_space<smem>>) -> (i32, i32) {
    %c0_i32 = arith.constant 0 : i32
    %c0_i32_0 = arith.constant 0 : i32
    %c0_i32_1 = arith.constant 0 : i32
    return %c0_i32, %c0_i32_0 : i32, i32
  }
  func.func @transform_3(%arg0: i32, %arg1: i32, %arg2: memref<2xi32, #tpu.memory_space<smem>>) -> (i32, i32) {
    %c0_i32 = arith.constant 0 : i32
    %c0_i32_0 = arith.constant 0 : i32
    %c0_i32_1 = arith.constant 0 : i32
    return %c0_i32, %c0_i32_0 : i32, i32
  }
  func.func @transform_4(%arg0: i32, %arg1: i32, %arg2: memref<2xi32, #tpu.memory_space<smem>>) -> (i32, i32, i32, i32) {
    %c0_i32 = arith.constant 0 : i32
    %c0_i32_0 = arith.constant 0 : i32
    %c0_i32_1 = arith.constant 0 : i32
    return %arg0, %c0_i32, %c0_i32_0, %arg1 : i32, i32, i32, i32
  }
}

module attributes {stable_mosaic.version = 11 : i64} {
  func.func @kernel(%arg0: i32, %arg1: i32, %arg2: memref<2xi32, #tpu.memory_space<smem>>, %arg3: memref<1x2x5x8x258xbf16, #tpu.memory_space<vmem>>, %arg4: memref<9x8x8xbf16, #tpu.memory_space<vmem>>, %arg5: memref<8x1xf32, #tpu.memory_space<vmem>>, %arg6: memref<8x1xf32, #tpu.memory_space<vmem>>, %arg7: memref<1x4x8x256xf32, #tpu.memory_space<vmem>>) attributes {dimension_semantics = [#tpu.dimension_semantics<parallel>, #tpu.dimension_semantics<parallel>], iteration_bounds = array<i64: 2, 1>, scalar_prefetch = 1 : i64, scratch_operands = 0 : i64, tpu.core_type = #tpu.core_type<tc>, window_params = [{transform_indices = @transform_0, window_bounds = array<i64: 1, 2, 5, 8, 258>}, {pipeline_mode = #tpu.pipeline_mode<synchronous>, transform_indices = @transform_1, window_bounds = array<i64: 9, 8, 8>}, {pipeline_mode = #tpu.pipeline_mode<synchronous>, transform_indices = @transform_2, window_bounds = array<i64: 8, 1>}, {pipeline_mode = #tpu.pipeline_mode<synchronous>, transform_indices = @transform_3, window_bounds = array<i64: 8, 1>}, {transform_indices = @transform_4, window_bounds = array<i64: 1, 4, 8, 256>}]} {
    %c256_i32 = arith.constant 256 : i32
    %0 = arith.muli %arg1, %c256_i32 : i32
    %1 = tpu.assume_multiple %0, 128 : i32
    %2 = tpu.iota {dimensions = array<i32: 1>} : vector<1x256xi32>
    %3 = vector.broadcast %1 : i32 to vector<1x256xi32>
    %4 = arith.addi %2, %3 : vector<1x256xi32>
    %5 = arith.index_cast %arg0 : i32 to index
    %6 = memref.load %arg2[%5] : memref<2xi32, #tpu.memory_space<smem>>
    %7 = vector.broadcast %6 : i32 to vector<1x256xi32>
    %8 = arith.cmpi sge, %4, %7 : vector<1x256xi32>
    %9 = vector.shape_cast %8 : vector<1x256xi1> to vector<1x256xi1>
    %10 = vector.broadcast %9 : vector<1x256xi1> to vector<8x256xi1>
    %c0 = arith.constant 0 : index
    %c0_0 = arith.constant 0 : index
    %11 = vector.load %arg5[%c0, %c0_0] : memref<8x1xf32, #tpu.memory_space<vmem>>, vector<8x1xf32>
    %12 = vector.shape_cast %11 : vector<8x1xf32> to vector<8x1xf32>
    %13 = vector.broadcast %12 : vector<8x1xf32> to vector<8x256xf32>
    %c0_1 = arith.constant 0 : index
    %c0_2 = arith.constant 0 : index
    %14 = vector.load %arg6[%c0_1, %c0_2] : memref<8x1xf32, #tpu.memory_space<vmem>>, vector<8x1xf32>
    %15 = vector.shape_cast %14 : vector<8x1xf32> to vector<8x1xf32>
    %16 = vector.broadcast %15 : vector<8x1xf32> to vector<8x256xf32>
    %cst = arith.constant 0.000000e+00 : f32
    %17 = vector.broadcast %cst : f32 to vector<8x256xf32>
    %c0_3 = arith.constant 0 : index
    %c0_4 = arith.constant 0 : index
    %c0_5 = arith.constant 0 : index
    %c0_6 = arith.constant 0 : index
    %18 = arith.index_cast %1 : i32 to index
    %19 = vector.load %arg3[%c0_3, %c0_4, %c0_5, %c0_6, %18] : memref<1x2x5x8x258xbf16, #tpu.memory_space<vmem>>, vector<1x1x1x8x258xbf16>
    %20 = vector.shape_cast %19 : vector<1x1x1x8x258xbf16> to vector<8x258xbf16>
    %21 = vector.extract_strided_slice %20 {offsets = [0, 0], sizes = [8, 256], strides = [1, 1]} : vector<8x258xbf16> to vector<8x256xbf16>
    %c0_7 = arith.constant 0 : index
    %c0_8 = arith.constant 0 : index
    %c0_9 = arith.constant 0 : index
    %22 = vector.load %arg4[%c0_7, %c0_8, %c0_9] : memref<9x8x8xbf16, #tpu.memory_space<vmem>>, vector<1x8x8xbf16>
    %23 = vector.shape_cast %22 : vector<1x8x8xbf16> to vector<8x8xbf16>
    %cst_10 = arith.constant dense<0.000000e+00> : vector<8x256xf32>
    %24 = tpu.matmul %23, %21, %cst_10 {dimension_numbers = #tpu.dot_dimension_numbers<[1], [0], [0], [1], [0, 0, 1, 1], [], []>} : vector<8x8xbf16>, vector<8x256xbf16>, vector<8x256xf32> -> vector<8x256xf32>
    %25 = arith.addf %17, %24 : vector<8x256xf32>
    %26 = vector.extract_strided_slice %20 {offsets = [0, 1], sizes = [8, 256], strides = [1, 1]} : vector<8x258xbf16> to vector<8x256xbf16>
    %c1 = arith.constant 1 : index
    %c0_11 = arith.constant 0 : index
    %c0_12 = arith.constant 0 : index
    %27 = vector.load %arg4[%c1, %c0_11, %c0_12] : memref<9x8x8xbf16, #tpu.memory_space<vmem>>, vector<1x8x8xbf16>
    %28 = vector.shape_cast %27 : vector<1x8x8xbf16> to vector<8x8xbf16>
    %cst_13 = arith.constant dense<0.000000e+00> : vector<8x256xf32>
    %29 = tpu.matmul %28, %26, %cst_13 {dimension_numbers = #tpu.dot_dimension_numbers<[1], [0], [0], [1], [0, 0, 1, 1], [], []>} : vector<8x8xbf16>, vector<8x256xbf16>, vector<8x256xf32> -> vector<8x256xf32>
    %30 = arith.addf %25, %29 : vector<8x256xf32>
    %31 = vector.extract_strided_slice %20 {offsets = [0, 2], sizes = [8, 256], strides = [1, 1]} : vector<8x258xbf16> to vector<8x256xbf16>
    %c2 = arith.constant 2 : index
    %c0_14 = arith.constant 0 : index
    %c0_15 = arith.constant 0 : index
    %32 = vector.load %arg4[%c2, %c0_14, %c0_15] : memref<9x8x8xbf16, #tpu.memory_space<vmem>>, vector<1x8x8xbf16>
    %33 = vector.shape_cast %32 : vector<1x8x8xbf16> to vector<8x8xbf16>
    %cst_16 = arith.constant dense<0.000000e+00> : vector<8x256xf32>
    %34 = tpu.matmul %33, %31, %cst_16 {dimension_numbers = #tpu.dot_dimension_numbers<[1], [0], [0], [1], [0, 0, 1, 1], [], []>} : vector<8x8xbf16>, vector<8x256xbf16>, vector<8x256xf32> -> vector<8x256xf32>
    %35 = arith.addf %30, %34 : vector<8x256xf32>
    %c0_17 = arith.constant 0 : index
    %c1_18 = arith.constant 1 : index
    %c0_19 = arith.constant 0 : index
    %c0_20 = arith.constant 0 : index
    %36 = arith.index_cast %1 : i32 to index
    %37 = vector.load %arg3[%c0_17, %c1_18, %c0_19, %c0_20, %36] : memref<1x2x5x8x258xbf16, #tpu.memory_space<vmem>>, vector<1x1x1x8x258xbf16>
    %38 = vector.shape_cast %37 : vector<1x1x1x8x258xbf16> to vector<8x258xbf16>
    %39 = vector.extract_strided_slice %38 {offsets = [0, 0], sizes = [8, 256], strides = [1, 1]} : vector<8x258xbf16> to vector<8x256xbf16>
    %c3 = arith.constant 3 : index
    %c0_21 = arith.constant 0 : index
    %c0_22 = arith.constant 0 : index
    %40 = vector.load %arg4[%c3, %c0_21, %c0_22] : memref<9x8x8xbf16, #tpu.memory_space<vmem>>, vector<1x8x8xbf16>
    %41 = vector.shape_cast %40 : vector<1x8x8xbf16> to vector<8x8xbf16>
    %cst_23 = arith.constant dense<0.000000e+00> : vector<8x256xf32>
    %42 = tpu.matmul %41, %39, %cst_23 {dimension_numbers = #tpu.dot_dimension_numbers<[1], [0], [0], [1], [0, 0, 1, 1], [], []>} : vector<8x8xbf16>, vector<8x256xbf16>, vector<8x256xf32> -> vector<8x256xf32>
    %43 = arith.addf %35, %42 : vector<8x256xf32>
    %44 = vector.extract_strided_slice %38 {offsets = [0, 1], sizes = [8, 256], strides = [1, 1]} : vector<8x258xbf16> to vector<8x256xbf16>
    %c4 = arith.constant 4 : index
    %c0_24 = arith.constant 0 : index
    %c0_25 = arith.constant 0 : index
    %45 = vector.load %arg4[%c4, %c0_24, %c0_25] : memref<9x8x8xbf16, #tpu.memory_space<vmem>>, vector<1x8x8xbf16>
    %46 = vector.shape_cast %45 : vector<1x8x8xbf16> to vector<8x8xbf16>
    %cst_26 = arith.constant dense<0.000000e+00> : vector<8x256xf32>
    %47 = tpu.matmul %46, %44, %cst_26 {dimension_numbers = #tpu.dot_dimension_numbers<[1], [0], [0], [1], [0, 0, 1, 1], [], []>} : vector<8x8xbf16>, vector<8x256xbf16>, vector<8x256xf32> -> vector<8x256xf32>
    %48 = arith.addf %43, %47 : vector<8x256xf32>
    %49 = vector.extract_strided_slice %38 {offsets = [0, 2], sizes = [8, 256], strides = [1, 1]} : vector<8x258xbf16> to vector<8x256xbf16>
    %c5 = arith.constant 5 : index
    %c0_27 = arith.constant 0 : index
    %c0_28 = arith.constant 0 : index
    %50 = vector.load %arg4[%c5, %c0_27, %c0_28] : memref<9x8x8xbf16, #tpu.memory_space<vmem>>, vector<1x8x8xbf16>
    %51 = vector.shape_cast %50 : vector<1x8x8xbf16> to vector<8x8xbf16>
    %cst_29 = arith.constant dense<0.000000e+00> : vector<8x256xf32>
    %52 = tpu.matmul %51, %49, %cst_29 {dimension_numbers = #tpu.dot_dimension_numbers<[1], [0], [0], [1], [0, 0, 1, 1], [], []>} : vector<8x8xbf16>, vector<8x256xbf16>, vector<8x256xf32> -> vector<8x256xf32>
    %53 = arith.addf %48, %52 : vector<8x256xf32>
    %c0_30 = arith.constant 0 : index
    %c0_31 = arith.constant 0 : index
    %c1_32 = arith.constant 1 : index
    %c0_33 = arith.constant 0 : index
    %54 = arith.index_cast %1 : i32 to index
    %55 = vector.load %arg3[%c0_30, %c0_31, %c1_32, %c0_33, %54] : memref<1x2x5x8x258xbf16, #tpu.memory_space<vmem>>, vector<1x1x1x8x258xbf16>
    %56 = vector.shape_cast %55 : vector<1x1x1x8x258xbf16> to vector<8x258xbf16>
    %57 = vector.extract_strided_slice %56 {offsets = [0, 0], sizes = [8, 256], strides = [1, 1]} : vector<8x258xbf16> to vector<8x256xbf16>
    %c6 = arith.constant 6 : index
    %c0_34 = arith.constant 0 : index
    %c0_35 = arith.constant 0 : index
    %58 = vector.load %arg4[%c6, %c0_34, %c0_35] : memref<9x8x8xbf16, #tpu.memory_space<vmem>>, vector<1x8x8xbf16>
    %59 = vector.shape_cast %58 : vector<1x8x8xbf16> to vector<8x8xbf16>
    %cst_36 = arith.constant dense<0.000000e+00> : vector<8x256xf32>
    %60 = tpu.matmul %59, %57, %cst_36 {dimension_numbers = #tpu.dot_dimension_numbers<[1], [0], [0], [1], [0, 0, 1, 1], [], []>} : vector<8x8xbf16>, vector<8x256xbf16>, vector<8x256xf32> -> vector<8x256xf32>
    %61 = arith.addf %53, %60 : vector<8x256xf32>
    %62 = vector.extract_strided_slice %56 {offsets = [0, 1], sizes = [8, 256], strides = [1, 1]} : vector<8x258xbf16> to vector<8x256xbf16>
    %c7 = arith.constant 7 : index
    %c0_37 = arith.constant 0 : index
    %c0_38 = arith.constant 0 : index
    %63 = vector.load %arg4[%c7, %c0_37, %c0_38] : memref<9x8x8xbf16, #tpu.memory_space<vmem>>, vector<1x8x8xbf16>
    %64 = vector.shape_cast %63 : vector<1x8x8xbf16> to vector<8x8xbf16>
    %cst_39 = arith.constant dense<0.000000e+00> : vector<8x256xf32>
    %65 = tpu.matmul %64, %62, %cst_39 {dimension_numbers = #tpu.dot_dimension_numbers<[1], [0], [0], [1], [0, 0, 1, 1], [], []>} : vector<8x8xbf16>, vector<8x256xbf16>, vector<8x256xf32> -> vector<8x256xf32>
    %66 = arith.addf %61, %65 : vector<8x256xf32>
    %67 = vector.extract_strided_slice %56 {offsets = [0, 2], sizes = [8, 256], strides = [1, 1]} : vector<8x258xbf16> to vector<8x256xbf16>
    %c8 = arith.constant 8 : index
    %c0_40 = arith.constant 0 : index
    %c0_41 = arith.constant 0 : index
    %68 = vector.load %arg4[%c8, %c0_40, %c0_41] : memref<9x8x8xbf16, #tpu.memory_space<vmem>>, vector<1x8x8xbf16>
    %69 = vector.shape_cast %68 : vector<1x8x8xbf16> to vector<8x8xbf16>
    %cst_42 = arith.constant dense<0.000000e+00> : vector<8x256xf32>
    %70 = tpu.matmul %69, %67, %cst_42 {dimension_numbers = #tpu.dot_dimension_numbers<[1], [0], [0], [1], [0, 0, 1, 1], [], []>} : vector<8x8xbf16>, vector<8x256xbf16>, vector<8x256xf32> -> vector<8x256xf32>
    %71 = arith.addf %66, %70 : vector<8x256xf32>
    %72 = arith.mulf %71, %13 : vector<8x256xf32>
    %73 = arith.addf %72, %16 : vector<8x256xf32>
    %cst_43 = arith.constant 0.000000e+00 : f32
    %cst_44 = arith.constant 2.000000e+01 : f32
    %74 = vector.broadcast %cst_43 : f32 to vector<8x256xf32>
    %75 = arith.maximumf %74, %73 : vector<8x256xf32>
    %76 = vector.broadcast %cst_44 : f32 to vector<8x256xf32>
    %77 = arith.minimumf %76, %75 : vector<8x256xf32>
    %cst_45 = arith.constant 0.000000e+00 : f32
    %78 = vector.broadcast %cst_45 : f32 to vector<8x256xf32>
    %79 = arith.select %10, %78, %77 : vector<8x256xi1>, vector<8x256xf32>
    %c0_46 = arith.constant 0 : index
    %c0_47 = arith.constant 0 : index
    %c0_48 = arith.constant 0 : index
    %c0_49 = arith.constant 0 : index
    %80 = vector.load %arg7[%c0_46, %c0_47, %c0_48, %c0_49] : memref<1x4x8x256xf32, #tpu.memory_space<vmem>>, vector<1x1x8x256xf32>
    %81 = vector.shape_cast %80 : vector<1x1x8x256xf32> to vector<8x256xf32>
    %82 = vector.shape_cast %79 : vector<8x256xf32> to vector<1x1x8x256xf32>
    tpu.vector_store %arg7[%c0_46, %c0_47, %c0_48, %c0_49], %82 {strides = array<i32>} : memref<1x4x8x256xf32, #tpu.memory_space<vmem>>, vector<1x1x8x256xf32>,
    %cst_50 = arith.constant 0.000000e+00 : f32
    %83 = vector.broadcast %cst_50 : f32 to vector<8x256xf32>
    %c0_51 = arith.constant 0 : index
    %c0_52 = arith.constant 0 : index
    %c1_53 = arith.constant 1 : index
    %c0_54 = arith.constant 0 : index
    %84 = arith.index_cast %1 : i32 to index
    %85 = vector.load %arg3[%c0_51, %c0_52, %c1_53, %c0_54, %84] : memref<1x2x5x8x258xbf16, #tpu.memory_space<vmem>>, vector<1x1x1x8x258xbf16>
    %86 = vector.shape_cast %85 : vector<1x1x1x8x258xbf16> to vector<8x258xbf16>
    %87 = vector.extract_strided_slice %86 {offsets = [0, 0], sizes = [8, 256], strides = [1, 1]} : vector<8x258xbf16> to vector<8x256xbf16>
    %c0_55 = arith.constant 0 : index
    %c0_56 = arith.constant 0 : index
    %c0_57 = arith.constant 0 : index
    %88 = vector.load %arg4[%c0_55, %c0_56, %c0_57] : memref<9x8x8xbf16, #tpu.memory_space<vmem>>, vector<1x8x8xbf16>
    %89 = vector.shape_cast %88 : vector<1x8x8xbf16> to vector<8x8xbf16>
    %cst_58 = arith.constant dense<0.000000e+00> : vector<8x256xf32>
    %90 = tpu.matmul %89, %87, %cst_58 {dimension_numbers = #tpu.dot_dimension_numbers<[1], [0], [0], [1], [0, 0, 1, 1], [], []>} : vector<8x8xbf16>, vector<8x256xbf16>, vector<8x256xf32> -> vector<8x256xf32>
    %91 = arith.addf %83, %90 : vector<8x256xf32>
    %92 = vector.extract_strided_slice %86 {offsets = [0, 1], sizes = [8, 256], strides = [1, 1]} : vector<8x258xbf16> to vector<8x256xbf16>
    %c1_59 = arith.constant 1 : index
    %c0_60 = arith.constant 0 : index
    %c0_61 = arith.constant 0 : index
    %93 = vector.load %arg4[%c1_59, %c0_60, %c0_61] : memref<9x8x8xbf16, #tpu.memory_space<vmem>>, vector<1x8x8xbf16>
    %94 = vector.shape_cast %93 : vector<1x8x8xbf16> to vector<8x8xbf16>
    %cst_62 = arith.constant dense<0.000000e+00> : vector<8x256xf32>
    %95 = tpu.matmul %94, %92, %cst_62 {dimension_numbers = #tpu.dot_dimension_numbers<[1], [0], [0], [1], [0, 0, 1, 1], [], []>} : vector<8x8xbf16>, vector<8x256xbf16>, vector<8x256xf32> -> vector<8x256xf32>
    %96 = arith.addf %91, %95 : vector<8x256xf32>
    %97 = vector.extract_strided_slice %86 {offsets = [0, 2], sizes = [8, 256], strides = [1, 1]} : vector<8x258xbf16> to vector<8x256xbf16>
    %c2_63 = arith.constant 2 : index
    %c0_64 = arith.constant 0 : index
    %c0_65 = arith.constant 0 : index
    %98 = vector.load %arg4[%c2_63, %c0_64, %c0_65] : memref<9x8x8xbf16, #tpu.memory_space<vmem>>, vector<1x8x8xbf16>
    %99 = vector.shape_cast %98 : vector<1x8x8xbf16> to vector<8x8xbf16>
    %cst_66 = arith.constant dense<0.000000e+00> : vector<8x256xf32>
    %100 = tpu.matmul %99, %97, %cst_66 {dimension_numbers = #tpu.dot_dimension_numbers<[1], [0], [0], [1], [0, 0, 1, 1], [], []>} : vector<8x8xbf16>, vector<8x256xbf16>, vector<8x256xf32> -> vector<8x256xf32>
    %101 = arith.addf %96, %100 : vector<8x256xf32>
    %c0_67 = arith.constant 0 : index
    %c1_68 = arith.constant 1 : index
    %c1_69 = arith.constant 1 : index
    %c0_70 = arith.constant 0 : index
    %102 = arith.index_cast %1 : i32 to index
    %103 = vector.load %arg3[%c0_67, %c1_68, %c1_69, %c0_70, %102] : memref<1x2x5x8x258xbf16, #tpu.memory_space<vmem>>, vector<1x1x1x8x258xbf16>
    %104 = vector.shape_cast %103 : vector<1x1x1x8x258xbf16> to vector<8x258xbf16>
    %105 = vector.extract_strided_slice %104 {offsets = [0, 0], sizes = [8, 256], strides = [1, 1]} : vector<8x258xbf16> to vector<8x256xbf16>
    %c3_71 = arith.constant 3 : index
    %c0_72 = arith.constant 0 : index
    %c0_73 = arith.constant 0 : index
    %106 = vector.load %arg4[%c3_71, %c0_72, %c0_73] : memref<9x8x8xbf16, #tpu.memory_space<vmem>>, vector<1x8x8xbf16>
    %107 = vector.shape_cast %106 : vector<1x8x8xbf16> to vector<8x8xbf16>
    %cst_74 = arith.constant dense<0.000000e+00> : vector<8x256xf32>
    %108 = tpu.matmul %107, %105, %cst_74 {dimension_numbers = #tpu.dot_dimension_numbers<[1], [0], [0], [1], [0, 0, 1, 1], [], []>} : vector<8x8xbf16>, vector<8x256xbf16>, vector<8x256xf32> -> vector<8x256xf32>
    %109 = arith.addf %101, %108 : vector<8x256xf32>
    %110 = vector.extract_strided_slice %104 {offsets = [0, 1], sizes = [8, 256], strides = [1, 1]} : vector<8x258xbf16> to vector<8x256xbf16>
    %c4_75 = arith.constant 4 : index
    %c0_76 = arith.constant 0 : index
    %c0_77 = arith.constant 0 : index
    %111 = vector.load %arg4[%c4_75, %c0_76, %c0_77] : memref<9x8x8xbf16, #tpu.memory_space<vmem>>, vector<1x8x8xbf16>
    %112 = vector.shape_cast %111 : vector<1x8x8xbf16> to vector<8x8xbf16>
    %cst_78 = arith.constant dense<0.000000e+00> : vector<8x256xf32>
    %113 = tpu.matmul %112, %110, %cst_78 {dimension_numbers = #tpu.dot_dimension_numbers<[1], [0], [0], [1], [0, 0, 1, 1], [], []>} : vector<8x8xbf16>, vector<8x256xbf16>, vector<8x256xf32> -> vector<8x256xf32>
    %114 = arith.addf %109, %113 : vector<8x256xf32>
    %115 = vector.extract_strided_slice %104 {offsets = [0, 2], sizes = [8, 256], strides = [1, 1]} : vector<8x258xbf16> to vector<8x256xbf16>
    %c5_79 = arith.constant 5 : index
    %c0_80 = arith.constant 0 : index
    %c0_81 = arith.constant 0 : index
    %116 = vector.load %arg4[%c5_79, %c0_80, %c0_81] : memref<9x8x8xbf16, #tpu.memory_space<vmem>>, vector<1x8x8xbf16>
    %117 = vector.shape_cast %116 : vector<1x8x8xbf16> to vector<8x8xbf16>
    %cst_82 = arith.constant dense<0.000000e+00> : vector<8x256xf32>
    %118 = tpu.matmul %117, %115, %cst_82 {dimension_numbers = #tpu.dot_dimension_numbers<[1], [0], [0], [1], [0, 0, 1, 1], [], []>} : vector<8x8xbf16>, vector<8x256xbf16>, vector<8x256xf32> -> vector<8x256xf32>
    %119 = arith.addf %114, %118 : vector<8x256xf32>
    %c0_83 = arith.constant 0 : index
    %c0_84 = arith.constant 0 : index
    %c2_85 = arith.constant 2 : index
    %c0_86 = arith.constant 0 : index
    %120 = arith.index_cast %1 : i32 to index
    %121 = vector.load %arg3[%c0_83, %c0_84, %c2_85, %c0_86, %120] : memref<1x2x5x8x258xbf16, #tpu.memory_space<vmem>>, vector<1x1x1x8x258xbf16>
    %122 = vector.shape_cast %121 : vector<1x1x1x8x258xbf16> to vector<8x258xbf16>
    %123 = vector.extract_strided_slice %122 {offsets = [0, 0], sizes = [8, 256], strides = [1, 1]} : vector<8x258xbf16> to vector<8x256xbf16>
    %c6_87 = arith.constant 6 : index
    %c0_88 = arith.constant 0 : index
    %c0_89 = arith.constant 0 : index
    %124 = vector.load %arg4[%c6_87, %c0_88, %c0_89] : memref<9x8x8xbf16, #tpu.memory_space<vmem>>, vector<1x8x8xbf16>
    %125 = vector.shape_cast %124 : vector<1x8x8xbf16> to vector<8x8xbf16>
    %cst_90 = arith.constant dense<0.000000e+00> : vector<8x256xf32>
    %126 = tpu.matmul %125, %123, %cst_90 {dimension_numbers = #tpu.dot_dimension_numbers<[1], [0], [0], [1], [0, 0, 1, 1], [], []>} : vector<8x8xbf16>, vector<8x256xbf16>, vector<8x256xf32> -> vector<8x256xf32>
    %127 = arith.addf %119, %126 : vector<8x256xf32>
    %128 = vector.extract_strided_slice %122 {offsets = [0, 1], sizes = [8, 256], strides = [1, 1]} : vector<8x258xbf16> to vector<8x256xbf16>
    %c7_91 = arith.constant 7 : index
    %c0_92 = arith.constant 0 : index
    %c0_93 = arith.constant 0 : index
    %129 = vector.load %arg4[%c7_91, %c0_92, %c0_93] : memref<9x8x8xbf16, #tpu.memory_space<vmem>>, vector<1x8x8xbf16>
    %130 = vector.shape_cast %129 : vector<1x8x8xbf16> to vector<8x8xbf16>
    %cst_94 = arith.constant dense<0.000000e+00> : vector<8x256xf32>
    %131 = tpu.matmul %130, %128, %cst_94 {dimension_numbers = #tpu.dot_dimension_numbers<[1], [0], [0], [1], [0, 0, 1, 1], [], []>} : vector<8x8xbf16>, vector<8x256xbf16>, vector<8x256xf32> -> vector<8x256xf32>
    %132 = arith.addf %127, %131 : vector<8x256xf32>
    %133 = vector.extract_strided_slice %122 {offsets = [0, 2], sizes = [8, 256], strides = [1, 1]} : vector<8x258xbf16> to vector<8x256xbf16>
    %c8_95 = arith.constant 8 : index
    %c0_96 = arith.constant 0 : index
    %c0_97 = arith.constant 0 : index
    %134 = vector.load %arg4[%c8_95, %c0_96, %c0_97] : memref<9x8x8xbf16, #tpu.memory_space<vmem>>, vector<1x8x8xbf16>
    %135 = vector.shape_cast %134 : vector<1x8x8xbf16> to vector<8x8xbf16>
    %cst_98 = arith.constant dense<0.000000e+00> : vector<8x256xf32>
    %136 = tpu.matmul %135, %133, %cst_98 {dimension_numbers = #tpu.dot_dimension_numbers<[1], [0], [0], [1], [0, 0, 1, 1], [], []>} : vector<8x8xbf16>, vector<8x256xbf16>, vector<8x256xf32> -> vector<8x256xf32>
    %137 = arith.addf %132, %136 : vector<8x256xf32>
    %138 = arith.mulf %137, %13 : vector<8x256xf32>
    %139 = arith.addf %138, %16 : vector<8x256xf32>
    %cst_99 = arith.constant 0.000000e+00 : f32
    %cst_100 = arith.constant 2.000000e+01 : f32
    %140 = vector.broadcast %cst_99 : f32 to vector<8x256xf32>
    %141 = arith.maximumf %140, %139 : vector<8x256xf32>
    %142 = vector.broadcast %cst_100 : f32 to vector<8x256xf32>
    %143 = arith.minimumf %142, %141 : vector<8x256xf32>
    %cst_101 = arith.constant 0.000000e+00 : f32
    %144 = vector.broadcast %cst_101 : f32 to vector<8x256xf32>
    %145 = arith.select %10, %144, %143 : vector<8x256xi1>, vector<8x256xf32>
    %c0_102 = arith.constant 0 : index
    %c1_103 = arith.constant 1 : index
    %c0_104 = arith.constant 0 : index
    %c0_105 = arith.constant 0 : index
    %146 = vector.load %arg7[%c0_102, %c1_103, %c0_104, %c0_105] : memref<1x4x8x256xf32, #tpu.memory_space<vmem>>, vector<1x1x8x256xf32>
    %147 = vector.shape_cast %146 : vector<1x1x8x256xf32> to vector<8x256xf32>
    %148 = vector.shape_cast %145 : vector<8x256xf32> to vector<1x1x8x256xf32>
    tpu.vector_store %arg7[%c0_102, %c1_103, %c0_104, %c0_105], %148 {strides = array<i32>} : memref<1x4x8x256xf32, #tpu.memory_space<vmem>>, vector<1x1x8x256xf32>,
    %cst_106 = arith.constant 0.000000e+00 : f32
    %149 = vector.broadcast %cst_106 : f32 to vector<8x256xf32>
    %c0_107 = arith.constant 0 : index
    %c0_108 = arith.constant 0 : index
    %c2_109 = arith.constant 2 : index
    %c0_110 = arith.constant 0 : index
    %150 = arith.index_cast %1 : i32 to index
    %151 = vector.load %arg3[%c0_107, %c0_108, %c2_109, %c0_110, %150] : memref<1x2x5x8x258xbf16, #tpu.memory_space<vmem>>, vector<1x1x1x8x258xbf16>
    %152 = vector.shape_cast %151 : vector<1x1x1x8x258xbf16> to vector<8x258xbf16>
    %153 = vector.extract_strided_slice %152 {offsets = [0, 0], sizes = [8, 256], strides = [1, 1]} : vector<8x258xbf16> to vector<8x256xbf16>
    %c0_111 = arith.constant 0 : index
    %c0_112 = arith.constant 0 : index
    %c0_113 = arith.constant 0 : index
    %154 = vector.load %arg4[%c0_111, %c0_112, %c0_113] : memref<9x8x8xbf16, #tpu.memory_space<vmem>>, vector<1x8x8xbf16>
    %155 = vector.shape_cast %154 : vector<1x8x8xbf16> to vector<8x8xbf16>
    %cst_114 = arith.constant dense<0.000000e+00> : vector<8x256xf32>
    %156 = tpu.matmul %155, %153, %cst_114 {dimension_numbers = #tpu.dot_dimension_numbers<[1], [0], [0], [1], [0, 0, 1, 1], [], []>} : vector<8x8xbf16>, vector<8x256xbf16>, vector<8x256xf32> -> vector<8x256xf32>
    %157 = arith.addf %149, %156 : vector<8x256xf32>
    %158 = vector.extract_strided_slice %152 {offsets = [0, 1], sizes = [8, 256], strides = [1, 1]} : vector<8x258xbf16> to vector<8x256xbf16>
    %c1_115 = arith.constant 1 : index
    %c0_116 = arith.constant 0 : index
    %c0_117 = arith.constant 0 : index
    %159 = vector.load %arg4[%c1_115, %c0_116, %c0_117] : memref<9x8x8xbf16, #tpu.memory_space<vmem>>, vector<1x8x8xbf16>
    %160 = vector.shape_cast %159 : vector<1x8x8xbf16> to vector<8x8xbf16>
    %cst_118 = arith.constant dense<0.000000e+00> : vector<8x256xf32>
    %161 = tpu.matmul %160, %158, %cst_118 {dimension_numbers = #tpu.dot_dimension_numbers<[1], [0], [0], [1], [0, 0, 1, 1], [], []>} : vector<8x8xbf16>, vector<8x256xbf16>, vector<8x256xf32> -> vector<8x256xf32>
    %162 = arith.addf %157, %161 : vector<8x256xf32>
    %163 = vector.extract_strided_slice %152 {offsets = [0, 2], sizes = [8, 256], strides = [1, 1]} : vector<8x258xbf16> to vector<8x256xbf16>
    %c2_119 = arith.constant 2 : index
    %c0_120 = arith.constant 0 : index
    %c0_121 = arith.constant 0 : index
    %164 = vector.load %arg4[%c2_119, %c0_120, %c0_121] : memref<9x8x8xbf16, #tpu.memory_space<vmem>>, vector<1x8x8xbf16>
    %165 = vector.shape_cast %164 : vector<1x8x8xbf16> to vector<8x8xbf16>
    %cst_122 = arith.constant dense<0.000000e+00> : vector<8x256xf32>
    %166 = tpu.matmul %165, %163, %cst_122 {dimension_numbers = #tpu.dot_dimension_numbers<[1], [0], [0], [1], [0, 0, 1, 1], [], []>} : vector<8x8xbf16>, vector<8x256xbf16>, vector<8x256xf32> -> vector<8x256xf32>
    %167 = arith.addf %162, %166 : vector<8x256xf32>
    %c0_123 = arith.constant 0 : index
    %c1_124 = arith.constant 1 : index
    %c2_125 = arith.constant 2 : index
    %c0_126 = arith.constant 0 : index
    %168 = arith.index_cast %1 : i32 to index
    %169 = vector.load %arg3[%c0_123, %c1_124, %c2_125, %c0_126, %168] : memref<1x2x5x8x258xbf16, #tpu.memory_space<vmem>>, vector<1x1x1x8x258xbf16>
    %170 = vector.shape_cast %169 : vector<1x1x1x8x258xbf16> to vector<8x258xbf16>
    %171 = vector.extract_strided_slice %170 {offsets = [0, 0], sizes = [8, 256], strides = [1, 1]} : vector<8x258xbf16> to vector<8x256xbf16>
    %c3_127 = arith.constant 3 : index
    %c0_128 = arith.constant 0 : index
    %c0_129 = arith.constant 0 : index
    %172 = vector.load %arg4[%c3_127, %c0_128, %c0_129] : memref<9x8x8xbf16, #tpu.memory_space<vmem>>, vector<1x8x8xbf16>
    %173 = vector.shape_cast %172 : vector<1x8x8xbf16> to vector<8x8xbf16>
    %cst_130 = arith.constant dense<0.000000e+00> : vector<8x256xf32>
    %174 = tpu.matmul %173, %171, %cst_130 {dimension_numbers = #tpu.dot_dimension_numbers<[1], [0], [0], [1], [0, 0, 1, 1], [], []>} : vector<8x8xbf16>, vector<8x256xbf16>, vector<8x256xf32> -> vector<8x256xf32>
    %175 = arith.addf %167, %174 : vector<8x256xf32>
    %176 = vector.extract_strided_slice %170 {offsets = [0, 1], sizes = [8, 256], strides = [1, 1]} : vector<8x258xbf16> to vector<8x256xbf16>
    %c4_131 = arith.constant 4 : index
    %c0_132 = arith.constant 0 : index
    %c0_133 = arith.constant 0 : index
    %177 = vector.load %arg4[%c4_131, %c0_132, %c0_133] : memref<9x8x8xbf16, #tpu.memory_space<vmem>>, vector<1x8x8xbf16>
    %178 = vector.shape_cast %177 : vector<1x8x8xbf16> to vector<8x8xbf16>
    %cst_134 = arith.constant dense<0.000000e+00> : vector<8x256xf32>
    %179 = tpu.matmul %178, %176, %cst_134 {dimension_numbers = #tpu.dot_dimension_numbers<[1], [0], [0], [1], [0, 0, 1, 1], [], []>} : vector<8x8xbf16>, vector<8x256xbf16>, vector<8x256xf32> -> vector<8x256xf32>
    %180 = arith.addf %175, %179 : vector<8x256xf32>
    %181 = vector.extract_strided_slice %170 {offsets = [0, 2], sizes = [8, 256], strides = [1, 1]} : vector<8x258xbf16> to vector<8x256xbf16>
    %c5_135 = arith.constant 5 : index
    %c0_136 = arith.constant 0 : index
    %c0_137 = arith.constant 0 : index
    %182 = vector.load %arg4[%c5_135, %c0_136, %c0_137] : memref<9x8x8xbf16, #tpu.memory_space<vmem>>, vector<1x8x8xbf16>
    %183 = vector.shape_cast %182 : vector<1x8x8xbf16> to vector<8x8xbf16>
    %cst_138 = arith.constant dense<0.000000e+00> : vector<8x256xf32>
    %184 = tpu.matmul %183, %181, %cst_138 {dimension_numbers = #tpu.dot_dimension_numbers<[1], [0], [0], [1], [0, 0, 1, 1], [], []>} : vector<8x8xbf16>, vector<8x256xbf16>, vector<8x256xf32> -> vector<8x256xf32>
    %185 = arith.addf %180, %184 : vector<8x256xf32>
    %c0_139 = arith.constant 0 : index
    %c0_140 = arith.constant 0 : index
    %c3_141 = arith.constant 3 : index
    %c0_142 = arith.constant 0 : index
    %186 = arith.index_cast %1 : i32 to index
    %187 = vector.load %arg3[%c0_139, %c0_140, %c3_141, %c0_142, %186] : memref<1x2x5x8x258xbf16, #tpu.memory_space<vmem>>, vector<1x1x1x8x258xbf16>
    %188 = vector.shape_cast %187 : vector<1x1x1x8x258xbf16> to vector<8x258xbf16>
    %189 = vector.extract_strided_slice %188 {offsets = [0, 0], sizes = [8, 256], strides = [1, 1]} : vector<8x258xbf16> to vector<8x256xbf16>
    %c6_143 = arith.constant 6 : index
    %c0_144 = arith.constant 0 : index
    %c0_145 = arith.constant 0 : index
    %190 = vector.load %arg4[%c6_143, %c0_144, %c0_145] : memref<9x8x8xbf16, #tpu.memory_space<vmem>>, vector<1x8x8xbf16>
    %191 = vector.shape_cast %190 : vector<1x8x8xbf16> to vector<8x8xbf16>
    %cst_146 = arith.constant dense<0.000000e+00> : vector<8x256xf32>
    %192 = tpu.matmul %191, %189, %cst_146 {dimension_numbers = #tpu.dot_dimension_numbers<[1], [0], [0], [1], [0, 0, 1, 1], [], []>} : vector<8x8xbf16>, vector<8x256xbf16>, vector<8x256xf32> -> vector<8x256xf32>
    %193 = arith.addf %185, %192 : vector<8x256xf32>
    %194 = vector.extract_strided_slice %188 {offsets = [0, 1], sizes = [8, 256], strides = [1, 1]} : vector<8x258xbf16> to vector<8x256xbf16>
    %c7_147 = arith.constant 7 : index
    %c0_148 = arith.constant 0 : index
    %c0_149 = arith.constant 0 : index
    %195 = vector.load %arg4[%c7_147, %c0_148, %c0_149] : memref<9x8x8xbf16, #tpu.memory_space<vmem>>, vector<1x8x8xbf16>
    %196 = vector.shape_cast %195 : vector<1x8x8xbf16> to vector<8x8xbf16>
    %cst_150 = arith.constant dense<0.000000e+00> : vector<8x256xf32>
    %197 = tpu.matmul %196, %194, %cst_150 {dimension_numbers = #tpu.dot_dimension_numbers<[1], [0], [0], [1], [0, 0, 1, 1], [], []>} : vector<8x8xbf16>, vector<8x256xbf16>, vector<8x256xf32> -> vector<8x256xf32>
    %198 = arith.addf %193, %197 : vector<8x256xf32>
    %199 = vector.extract_strided_slice %188 {offsets = [0, 2], sizes = [8, 256], strides = [1, 1]} : vector<8x258xbf16> to vector<8x256xbf16>
    %c8_151 = arith.constant 8 : index
    %c0_152 = arith.constant 0 : index
    %c0_153 = arith.constant 0 : index
    %200 = vector.load %arg4[%c8_151, %c0_152, %c0_153] : memref<9x8x8xbf16, #tpu.memory_space<vmem>>, vector<1x8x8xbf16>
    %201 = vector.shape_cast %200 : vector<1x8x8xbf16> to vector<8x8xbf16>
    %cst_154 = arith.constant dense<0.000000e+00> : vector<8x256xf32>
    %202 = tpu.matmul %201, %199, %cst_154 {dimension_numbers = #tpu.dot_dimension_numbers<[1], [0], [0], [1], [0, 0, 1, 1], [], []>} : vector<8x8xbf16>, vector<8x256xbf16>, vector<8x256xf32> -> vector<8x256xf32>
    %203 = arith.addf %198, %202 : vector<8x256xf32>
    %204 = arith.mulf %203, %13 : vector<8x256xf32>
    %205 = arith.addf %204, %16 : vector<8x256xf32>
    %cst_155 = arith.constant 0.000000e+00 : f32
    %cst_156 = arith.constant 2.000000e+01 : f32
    %206 = vector.broadcast %cst_155 : f32 to vector<8x256xf32>
    %207 = arith.maximumf %206, %205 : vector<8x256xf32>
    %208 = vector.broadcast %cst_156 : f32 to vector<8x256xf32>
    %209 = arith.minimumf %208, %207 : vector<8x256xf32>
    %cst_157 = arith.constant 0.000000e+00 : f32
    %210 = vector.broadcast %cst_157 : f32 to vector<8x256xf32>
    %211 = arith.select %10, %210, %209 : vector<8x256xi1>, vector<8x256xf32>
    %c0_158 = arith.constant 0 : index
    %c2_159 = arith.constant 2 : index
    %c0_160 = arith.constant 0 : index
    %c0_161 = arith.constant 0 : index
    %212 = vector.load %arg7[%c0_158, %c2_159, %c0_160, %c0_161] : memref<1x4x8x256xf32, #tpu.memory_space<vmem>>, vector<1x1x8x256xf32>
    %213 = vector.shape_cast %212 : vector<1x1x8x256xf32> to vector<8x256xf32>
    %214 = vector.shape_cast %211 : vector<8x256xf32> to vector<1x1x8x256xf32>
    tpu.vector_store %arg7[%c0_158, %c2_159, %c0_160, %c0_161], %214 {strides = array<i32>} : memref<1x4x8x256xf32, #tpu.memory_space<vmem>>, vector<1x1x8x256xf32>,
    %cst_162 = arith.constant 0.000000e+00 : f32
    %215 = vector.broadcast %cst_162 : f32 to vector<8x256xf32>
    %c0_163 = arith.constant 0 : index
    %c0_164 = arith.constant 0 : index
    %c3_165 = arith.constant 3 : index
    %c0_166 = arith.constant 0 : index
    %216 = arith.index_cast %1 : i32 to index
    %217 = vector.load %arg3[%c0_163, %c0_164, %c3_165, %c0_166, %216] : memref<1x2x5x8x258xbf16, #tpu.memory_space<vmem>>, vector<1x1x1x8x258xbf16>
    %218 = vector.shape_cast %217 : vector<1x1x1x8x258xbf16> to vector<8x258xbf16>
    %219 = vector.extract_strided_slice %218 {offsets = [0, 0], sizes = [8, 256], strides = [1, 1]} : vector<8x258xbf16> to vector<8x256xbf16>
    %c0_167 = arith.constant 0 : index
    %c0_168 = arith.constant 0 : index
    %c0_169 = arith.constant 0 : index
    %220 = vector.load %arg4[%c0_167, %c0_168, %c0_169] : memref<9x8x8xbf16, #tpu.memory_space<vmem>>, vector<1x8x8xbf16>
    %221 = vector.shape_cast %220 : vector<1x8x8xbf16> to vector<8x8xbf16>
    %cst_170 = arith.constant dense<0.000000e+00> : vector<8x256xf32>
    %222 = tpu.matmul %221, %219, %cst_170 {dimension_numbers = #tpu.dot_dimension_numbers<[1], [0], [0], [1], [0, 0, 1, 1], [], []>} : vector<8x8xbf16>, vector<8x256xbf16>, vector<8x256xf32> -> vector<8x256xf32>
    %223 = arith.addf %215, %222 : vector<8x256xf32>
    %224 = vector.extract_strided_slice %218 {offsets = [0, 1], sizes = [8, 256], strides = [1, 1]} : vector<8x258xbf16> to vector<8x256xbf16>
    %c1_171 = arith.constant 1 : index
    %c0_172 = arith.constant 0 : index
    %c0_173 = arith.constant 0 : index
    %225 = vector.load %arg4[%c1_171, %c0_172, %c0_173] : memref<9x8x8xbf16, #tpu.memory_space<vmem>>, vector<1x8x8xbf16>
    %226 = vector.shape_cast %225 : vector<1x8x8xbf16> to vector<8x8xbf16>
    %cst_174 = arith.constant dense<0.000000e+00> : vector<8x256xf32>
    %227 = tpu.matmul %226, %224, %cst_174 {dimension_numbers = #tpu.dot_dimension_numbers<[1], [0], [0], [1], [0, 0, 1, 1], [], []>} : vector<8x8xbf16>, vector<8x256xbf16>, vector<8x256xf32> -> vector<8x256xf32>
    %228 = arith.addf %223, %227 : vector<8x256xf32>
    %229 = vector.extract_strided_slice %218 {offsets = [0, 2], sizes = [8, 256], strides = [1, 1]} : vector<8x258xbf16> to vector<8x256xbf16>
    %c2_175 = arith.constant 2 : index
    %c0_176 = arith.constant 0 : index
    %c0_177 = arith.constant 0 : index
    %230 = vector.load %arg4[%c2_175, %c0_176, %c0_177] : memref<9x8x8xbf16, #tpu.memory_space<vmem>>, vector<1x8x8xbf16>
    %231 = vector.shape_cast %230 : vector<1x8x8xbf16> to vector<8x8xbf16>
    %cst_178 = arith.constant dense<0.000000e+00> : vector<8x256xf32>
    %232 = tpu.matmul %231, %229, %cst_178 {dimension_numbers = #tpu.dot_dimension_numbers<[1], [0], [0], [1], [0, 0, 1, 1], [], []>} : vector<8x8xbf16>, vector<8x256xbf16>, vector<8x256xf32> -> vector<8x256xf32>
    %233 = arith.addf %228, %232 : vector<8x256xf32>
    %c0_179 = arith.constant 0 : index
    %c1_180 = arith.constant 1 : index
    %c3_181 = arith.constant 3 : index
    %c0_182 = arith.constant 0 : index
    %234 = arith.index_cast %1 : i32 to index
    %235 = vector.load %arg3[%c0_179, %c1_180, %c3_181, %c0_182, %234] : memref<1x2x5x8x258xbf16, #tpu.memory_space<vmem>>, vector<1x1x1x8x258xbf16>
    %236 = vector.shape_cast %235 : vector<1x1x1x8x258xbf16> to vector<8x258xbf16>
    %237 = vector.extract_strided_slice %236 {offsets = [0, 0], sizes = [8, 256], strides = [1, 1]} : vector<8x258xbf16> to vector<8x256xbf16>
    %c3_183 = arith.constant 3 : index
    %c0_184 = arith.constant 0 : index
    %c0_185 = arith.constant 0 : index
    %238 = vector.load %arg4[%c3_183, %c0_184, %c0_185] : memref<9x8x8xbf16, #tpu.memory_space<vmem>>, vector<1x8x8xbf16>
    %239 = vector.shape_cast %238 : vector<1x8x8xbf16> to vector<8x8xbf16>
    %cst_186 = arith.constant dense<0.000000e+00> : vector<8x256xf32>
    %240 = tpu.matmul %239, %237, %cst_186 {dimension_numbers = #tpu.dot_dimension_numbers<[1], [0], [0], [1], [0, 0, 1, 1], [], []>} : vector<8x8xbf16>, vector<8x256xbf16>, vector<8x256xf32> -> vector<8x256xf32>
    %241 = arith.addf %233, %240 : vector<8x256xf32>
    %242 = vector.extract_strided_slice %236 {offsets = [0, 1], sizes = [8, 256], strides = [1, 1]} : vector<8x258xbf16> to vector<8x256xbf16>
    %c4_187 = arith.constant 4 : index
    %c0_188 = arith.constant 0 : index
    %c0_189 = arith.constant 0 : index
    %243 = vector.load %arg4[%c4_187, %c0_188, %c0_189] : memref<9x8x8xbf16, #tpu.memory_space<vmem>>, vector<1x8x8xbf16>
    %244 = vector.shape_cast %243 : vector<1x8x8xbf16> to vector<8x8xbf16>
    %cst_190 = arith.constant dense<0.000000e+00> : vector<8x256xf32>
    %245 = tpu.matmul %244, %242, %cst_190 {dimension_numbers = #tpu.dot_dimension_numbers<[1], [0], [0], [1], [0, 0, 1, 1], [], []>} : vector<8x8xbf16>, vector<8x256xbf16>, vector<8x256xf32> -> vector<8x256xf32>
    %246 = arith.addf %241, %245 : vector<8x256xf32>
    %247 = vector.extract_strided_slice %236 {offsets = [0, 2], sizes = [8, 256], strides = [1, 1]} : vector<8x258xbf16> to vector<8x256xbf16>
    %c5_191 = arith.constant 5 : index
    %c0_192 = arith.constant 0 : index
    %c0_193 = arith.constant 0 : index
    %248 = vector.load %arg4[%c5_191, %c0_192, %c0_193] : memref<9x8x8xbf16, #tpu.memory_space<vmem>>, vector<1x8x8xbf16>
    %249 = vector.shape_cast %248 : vector<1x8x8xbf16> to vector<8x8xbf16>
    %cst_194 = arith.constant dense<0.000000e+00> : vector<8x256xf32>
    %250 = tpu.matmul %249, %247, %cst_194 {dimension_numbers = #tpu.dot_dimension_numbers<[1], [0], [0], [1], [0, 0, 1, 1], [], []>} : vector<8x8xbf16>, vector<8x256xbf16>, vector<8x256xf32> -> vector<8x256xf32>
    %251 = arith.addf %246, %250 : vector<8x256xf32>
    %c0_195 = arith.constant 0 : index
    %c0_196 = arith.constant 0 : index
    %c4_197 = arith.constant 4 : index
    %c0_198 = arith.constant 0 : index
    %252 = arith.index_cast %1 : i32 to index
    %253 = vector.load %arg3[%c0_195, %c0_196, %c4_197, %c0_198, %252] : memref<1x2x5x8x258xbf16, #tpu.memory_space<vmem>>, vector<1x1x1x8x258xbf16>
    %254 = vector.shape_cast %253 : vector<1x1x1x8x258xbf16> to vector<8x258xbf16>
    %255 = vector.extract_strided_slice %254 {offsets = [0, 0], sizes = [8, 256], strides = [1, 1]} : vector<8x258xbf16> to vector<8x256xbf16>
    %c6_199 = arith.constant 6 : index
    %c0_200 = arith.constant 0 : index
    %c0_201 = arith.constant 0 : index
    %256 = vector.load %arg4[%c6_199, %c0_200, %c0_201] : memref<9x8x8xbf16, #tpu.memory_space<vmem>>, vector<1x8x8xbf16>
    %257 = vector.shape_cast %256 : vector<1x8x8xbf16> to vector<8x8xbf16>
    %cst_202 = arith.constant dense<0.000000e+00> : vector<8x256xf32>
    %258 = tpu.matmul %257, %255, %cst_202 {dimension_numbers = #tpu.dot_dimension_numbers<[1], [0], [0], [1], [0, 0, 1, 1], [], []>} : vector<8x8xbf16>, vector<8x256xbf16>, vector<8x256xf32> -> vector<8x256xf32>
    %259 = arith.addf %251, %258 : vector<8x256xf32>
    %260 = vector.extract_strided_slice %254 {offsets = [0, 1], sizes = [8, 256], strides = [1, 1]} : vector<8x258xbf16> to vector<8x256xbf16>
    %c7_203 = arith.constant 7 : index
    %c0_204 = arith.constant 0 : index
    %c0_205 = arith.constant 0 : index
    %261 = vector.load %arg4[%c7_203, %c0_204, %c0_205] : memref<9x8x8xbf16, #tpu.memory_space<vmem>>, vector<1x8x8xbf16>
    %262 = vector.shape_cast %261 : vector<1x8x8xbf16> to vector<8x8xbf16>
    %cst_206 = arith.constant dense<0.000000e+00> : vector<8x256xf32>
    %263 = tpu.matmul %262, %260, %cst_206 {dimension_numbers = #tpu.dot_dimension_numbers<[1], [0], [0], [1], [0, 0, 1, 1], [], []>} : vector<8x8xbf16>, vector<8x256xbf16>, vector<8x256xf32> -> vector<8x256xf32>
    %264 = arith.addf %259, %263 : vector<8x256xf32>
    %265 = vector.extract_strided_slice %254 {offsets = [0, 2], sizes = [8, 256], strides = [1, 1]} : vector<8x258xbf16> to vector<8x256xbf16>
    %c8_207 = arith.constant 8 : index
    %c0_208 = arith.constant 0 : index
    %c0_209 = arith.constant 0 : index
    %266 = vector.load %arg4[%c8_207, %c0_208, %c0_209] : memref<9x8x8xbf16, #tpu.memory_space<vmem>>, vector<1x8x8xbf16>
    %267 = vector.shape_cast %266 : vector<1x8x8xbf16> to vector<8x8xbf16>
    %cst_210 = arith.constant dense<0.000000e+00> : vector<8x256xf32>
    %268 = tpu.matmul %267, %265, %cst_210 {dimension_numbers = #tpu.dot_dimension_numbers<[1], [0], [0], [1], [0, 0, 1, 1], [], []>} : vector<8x8xbf16>, vector<8x256xbf16>, vector<8x256xf32> -> vector<8x256xf32>
    %269 = arith.addf %264, %268 : vector<8x256xf32>
    %270 = arith.mulf %269, %13 : vector<8x256xf32>
    %271 = arith.addf %270, %16 : vector<8x256xf32>
    %cst_211 = arith.constant 0.000000e+00 : f32
    %cst_212 = arith.constant 2.000000e+01 : f32
    %272 = vector.broadcast %cst_211 : f32 to vector<8x256xf32>
    %273 = arith.maximumf %272, %271 : vector<8x256xf32>
    %274 = vector.broadcast %cst_212 : f32 to vector<8x256xf32>
    %275 = arith.minimumf %274, %273 : vector<8x256xf32>
    %cst_213 = arith.constant 0.000000e+00 : f32
    %276 = vector.broadcast %cst_213 : f32 to vector<8x256xf32>
    %277 = arith.select %10, %276, %275 : vector<8x256xi1>, vector<8x256xf32>
    %c0_214 = arith.constant 0 : index
    %c3_215 = arith.constant 3 : index
    %c0_216 = arith.constant 0 : index
    %c0_217 = arith.constant 0 : index
    %278 = vector.load %arg7[%c0_214, %c3_215, %c0_216, %c0_217] : memref<1x4x8x256xf32, #tpu.memory_space<vmem>>, vector<1x1x8x256xf32>
    %279 = vector.shape_cast %278 : vector<1x1x8x256xf32> to vector<8x256xf32>
    %280 = vector.shape_cast %277 : vector<8x256xf32> to vector<1x1x8x256xf32>
    tpu.vector_store %arg7[%c0_214, %c3_215, %c0_216, %c0_217], %280 {strides = array<i32>} : memref<1x4x8x256xf32, #tpu.memory_space<vmem>>, vector<1x1x8x256xf32>,
    return
  }
  func.func @transform_0(%arg0: i32, %arg1: i32, %arg2: memref<2xi32, #tpu.memory_space<smem>>) -> (i32, i32, i32, i32, i32) {
    %c0_i32 = arith.constant 0 : i32
    %c0_i32_0 = arith.constant 0 : i32
    %c0_i32_1 = arith.constant 0 : i32
    %c0_i32_2 = arith.constant 0 : i32
    %c0_i32_3 = arith.constant 0 : i32
    return %arg0, %c0_i32, %c0_i32_0, %c0_i32_1, %c0_i32_2 : i32, i32, i32, i32, i32
  }
  func.func @transform_1(%arg0: i32, %arg1: i32, %arg2: memref<2xi32, #tpu.memory_space<smem>>) -> (i32, i32, i32) {
    %c0_i32 = arith.constant 0 : i32
    %c0_i32_0 = arith.constant 0 : i32
    %c0_i32_1 = arith.constant 0 : i32
    %c0_i32_2 = arith.constant 0 : i32
    return %c0_i32, %c0_i32_0, %c0_i32_1 : i32, i32, i32
  }
  func.func @transform_2(%arg0: i32, %arg1: i32, %arg2: memref<2xi32, #tpu.memory_space<smem>>) -> (i32, i32) {
    %c0_i32 = arith.constant 0 : i32
    %c0_i32_0 = arith.constant 0 : i32
    %c0_i32_1 = arith.constant 0 : i32
    return %c0_i32, %c0_i32_0 : i32, i32
  }
  func.func @transform_3(%arg0: i32, %arg1: i32, %arg2: memref<2xi32, #tpu.memory_space<smem>>) -> (i32, i32) {
    %c0_i32 = arith.constant 0 : i32
    %c0_i32_0 = arith.constant 0 : i32
    %c0_i32_1 = arith.constant 0 : i32
    return %c0_i32, %c0_i32_0 : i32, i32
  }
  func.func @transform_4(%arg0: i32, %arg1: i32, %arg2: memref<2xi32, #tpu.memory_space<smem>>) -> (i32, i32, i32, i32) {
    %c0_i32 = arith.constant 0 : i32
    %c0_i32_0 = arith.constant 0 : i32
    %c0_i32_1 = arith.constant 0 : i32
    return %arg0, %c0_i32, %c0_i32_0, %arg1 : i32, i32, i32, i32
  }
}

</mosaic_0001>

<llo_original>
// kernel: _lambda_.2
$region0: #{_lambda_.2}
  #allocation0 [shape = 'u32[]', space=smem, size = 0x4, offset = 0x4, fixed_abs, tag = 'smem constant byte address 0x4 - core index']
  #allocation1 [shape = 'u32[144,128]{1,0:T(1,128)}', space=vmem, size = 0x12000, scoped, tag = 'internal scratch']
  #allocation2 [shape = 's32[1]{0}', space=sflag, size = 0x4, scoped, tag = 'scoped memory for _lambda_.2']
  #allocation3 [shape = 'u8[512]{0}', space=smem, size = 0x200, scoped, tag = 'prefetched SMEM operand 0']
  %s0 = inlined_call_operand.vmem [shape: s32[2], index: 0, kind: input, shape index: {}]
  %s1 = inlined_call_operand.vmem [shape: bf16[2,4,9,1,257], index: 1, kind: input, shape index: {}]
  %s2 = inlined_call_operand.vmem [shape: bf16[9,8,1], index: 2, kind: input, shape index: {}]
  %s3 = inlined_call_operand.vmem [shape: f32[8,1], index: 3, kind: input, shape index: {}]
  %s4 = inlined_call_operand.vmem [shape: f32[8,1], index: 4, kind: input, shape index: {}]
  %s5 = inlined_call_operand.vmem [shape: bf16[2,8,8,256], index: 5, kind: output, shape index: {}]
  %s6 = sld [smem:[#allocation0]]
  $region49: #{_lambda_.2} parent=0
    _
  %s8 = ssub.s32 1, %s6
  %s9 = scalar_select 0, %s8, %s6
  %s10 = sshll.u32 %s0, 4
  %s11 = int_to_ptr.vmem [resolvable:$true] %s10
  %13 = dma.vmem_to_smem %s11, 16, [#allocation3], [#allocation2]
  %14 = dma.done [#allocation2], 16
  %15 = sfence
  loop: start=0, step=1, limit=4
  $region2: #{_lambda_.2} parent=0 // loop_pre_header
    _
  $region3: #{_lambda_.2} parent=0 // loop_header
    %s17 = sphi 0, %s21
    %p18 = scmp.ge.s32.totalorder %s17, 4
    %s24 = sphi 0, %s36
    %s25 = sphi 0, %s32
    %s26 = sphi 0, %s24
    %s27 = sphi 0, %s25
    %s28 = sphi 0, %s26
    %s29 = sphi 0, %s27
    %s39 = sphi 0, %s41
    %s42 = sphi 0, %s39
    %s43 = sphi 0, %s42
    %s59 = sphi 0, %s43
    %s63 = sphi 0, %s63
    %s65 = sphi 0, %s63
    %s66 = sphi 0, %s65
    %s80 = sphi 0, %s66
    %s84 = sphi 0, %s84
    %s86 = sphi 0, %s84
    %s87 = sphi 0, %s86
    %s101 = sphi 0, %s87
    %s105 = sphi 0, %s105
    %s107 = sphi 0, %s105
    %s108 = sphi 0, %s107
    %s122 = sphi 0, %s108
    %s130 = sphi 0, %s132
    %s133 = sphi 0, %s130
    %s134 = sphi 0, %s133
    %s150 = sphi 0, %s134
  $region4: #{_lambda_.2} parent=0 // loop_header_branch
    %20 = sbr.rel (%p18) target = $region8
  $region5: #{_lambda_.2} parent=0 // loop_body
    %s22 = ssub.s32 %s17, 1
    %s23 = ssub.s32 %s17, 2
    %s30 = sadd.s32 1, %s25
    %p31 = scmp.ge.s32.totalorder %s30, 1
    %s32 = scalar_select %p31, 0, %s30
    %s33 = sadd.s32 1, %s24
    %s34 = scalar_select %p31, %s33, %s24
    %p35 = scmp.ge.s32.totalorder %s34, 2
    %s36 = scalar_select %p35, 0, %s34
    %s37 = ssub.s32 %s24, %s36
    %p38 = scmp.eq.s32.totalorder %s37, 0
    %s40 = sadd.s32 %s39, 1
    %s41 = scalar_select %p38, %s39, %s40
    %p44 = pneg %p38
    %p45 = scmp.eq.s32.totalorder %s17, 1
    %p46 = por %p44, %p45
    %p47 = scmp.ne.s32.totalorder %s39, %s42
    %p48 = scmp.eq.s32.totalorder %s17, 0
    %p49 = por %p47, %p48
    %p50 = scmp.ne.s32.totalorder %s39, %s42
    %p51 = scmp.eq.s32.totalorder %s22, 1
    %p52 = por %p50, %p51
    %p53 = scmp.ne.s32.totalorder %s42, %s43
    %p54 = scmp.eq.s32.totalorder %s22, 0
    %p55 = por %p53, %p54
    %p56 = scmp.ne.s32.totalorder %s42, %s43
    %p57 = scmp.eq.s32.totalorder %s23, 1
    %p58 = por %p56, %p57
    %p60 = scmp.ne.s32.totalorder %s43, %s59
    %p61 = scmp.eq.s32.totalorder %s23, 0
    %p62 = por %p60, %p61
    %s64 = sadd.s32 %s63, 1
    %p67 = scmp.eq.s32.totalorder %s17, 1
    %p68 = scmp.ne.s32.totalorder %s63, %s65
    %p69 = scmp.eq.s32.totalorder %s17, 0
    %p70 = por %p68, %p69
    %p71 = scmp.ne.s32.totalorder %s63, %s65
    %p72 = scmp.eq.s32.totalorder %s22, 1
    %p73 = por %p71, %p72
    %p74 = scmp.ne.s32.totalorder %s65, %s66
    %p75 = scmp.eq.s32.totalorder %s22, 0
    %p76 = por %p74, %p75
    %p77 = scmp.ne.s32.totalorder %s65, %s66
    %p78 = scmp.eq.s32.totalorder %s23, 1
    %p79 = por %p77, %p78
    %p81 = scmp.ne.s32.totalorder %s66, %s80
    %p82 = scmp.eq.s32.totalorder %s23, 0
    %p83 = por %p81, %p82
    %s85 = sadd.s32 %s84, 1
    %p88 = scmp.eq.s32.totalorder %s17, 1
    %p89 = scmp.ne.s32.totalorder %s84, %s86
    %p90 = scmp.eq.s32.totalorder %s17, 0
    %p91 = por %p89, %p90
    %p92 = scmp.ne.s32.totalorder %s84, %s86
    %p93 = scmp.eq.s32.totalorder %s22, 1
    %p94 = por %p92, %p93
    %p95 = scmp.ne.s32.totalorder %s86, %s87
    %p96 = scmp.eq.s32.totalorder %s22, 0
    %p97 = por %p95, %p96
    %p98 = scmp.ne.s32.totalorder %s86, %s87
    %p99 = scmp.eq.s32.totalorder %s23, 1
    %p100 = por %p98, %p99
    %p102 = scmp.ne.s32.totalorder %s87, %s101
    %p103 = scmp.eq.s32.totalorder %s23, 0
    %p104 = por %p102, %p103
    %s106 = sadd.s32 %s105, 1
    %p109 = scmp.eq.s32.totalorder %s17, 1
    %p110 = scmp.ne.s32.totalorder %s105, %s107
    %p111 = scmp.eq.s32.totalorder %s17, 0
    %p112 = por %p110, %p111
    %p113 = scmp.ne.s32.totalorder %s105, %s107
    %p114 = scmp.eq.s32.totalorder %s22, 1
    %p115 = por %p113, %p114
    %p116 = scmp.ne.s32.totalorder %s107, %s108
    %p117 = scmp.eq.s32.totalorder %s22, 0
    %p118 = por %p116, %p117
    %p119 = scmp.ne.s32.totalorder %s107, %s108
    %p120 = scmp.eq.s32.totalorder %s23, 1
    %p121 = por %p119, %p120
    %p123 = scmp.ne.s32.totalorder %s108, %s122
    %p124 = scmp.eq.s32.totalorder %s23, 0
    %p125 = por %p123, %p124
    %s126 = ssub.s32 %s24, %s36
    %s127 = ssub.s32 %s25, %s32
    %s128 = sor.u32 %s126, %s127
    %p129 = scmp.eq.s32.totalorder %s128, 0
    %s131 = sadd.s32 %s130, 1
    %s132 = scalar_select %p129, %s130, %s131
    %p135 = pneg %p129
    %p136 = scmp.eq.s32.totalorder %s17, 1
    %p137 = por %p135, %p136
    %p138 = scmp.ne.s32.totalorder %s130, %s133
    %p139 = scmp.eq.s32.totalorder %s17, 0
    %p140 = por %p138, %p139
    %p141 = scmp.ne.s32.totalorder %s130, %s133
    %p142 = scmp.eq.s32.totalorder %s22, 1
    %p143 = por %p141, %p142
    %p144 = scmp.ne.s32.totalorder %s133, %s134
    %p145 = scmp.eq.s32.totalorder %s22, 0
    %p146 = por %p144, %p145
    %p147 = scmp.ne.s32.totalorder %s133, %s134
    %p148 = scmp.eq.s32.totalorder %s23, 1
    %p149 = por %p147, %p148
    %p151 = scmp.ne.s32.totalorder %s134, %s150
    %p152 = scmp.eq.s32.totalorder %s23, 0
    %p153 = por %p151, %p152
    %p154 = scmp.le.s32.totalorder 1, %s17
    %p155 = scmp.lt.s32.totalorder %s17, 3
    %p156 = pnand %p154, %p155
    %p157 = pneg %p156
    // Predicated region
    $region9: #{_lambda_.2} parent=5 // pred_check
      _
    $region10: #{_lambda_.2} parent=5 // pred_check_branch
      %159 = sbr.rel (%p156) target = $region12
    $region11: #{_lambda_.2} parent=5 // pred_region
      %s160 = ssub.s32 %s17, 1
      // Predicated region
      $region13: #{_lambda_.2} parent=11 // pred_check
        %p161 = pneg %p76
      $region14: #{_lambda_.2} parent=11 // pred_check_branch
        %163 = sbr.rel (%p161) target = $region16
      $region15: #{_lambda_.2} parent=11 // pred_region
        _
      $region16: #{_lambda_.2} parent=11 // pred_fallthru
        _
      // Predicated region
      $region17: #{_lambda_.2} parent=11 // pred_check
        %p164 = pneg %p97
      $region18: #{_lambda_.2} parent=11 // pred_check_branch
        %166 = sbr.rel (%p164) target = $region20
      $region19: #{_lambda_.2} parent=11 // pred_region
        _
      $region20: #{_lambda_.2} parent=11 // pred_fallthru
        _
      // Predicated region
      $region21: #{_lambda_.2} parent=11 // pred_check
        %p167 = pneg %p118
      $region22: #{_lambda_.2} parent=11 // pred_check_branch
        %169 = sbr.rel (%p167) target = $region24
      $region23: #{_lambda_.2} parent=11 // pred_region
        _
      $region24: #{_lambda_.2} parent=11 // pred_fallthru
        _
    $region12: #{_lambda_.2} parent=5 // pred_fallthru
      _
    %p170 = scmp.lt.s32.totalorder %s17, 2
    // Predicated region
    $region25: #{_lambda_.2} parent=5 // pred_check
      %p171 = pneg %p170
    $region26: #{_lambda_.2} parent=5 // pred_check_branch
      %173 = sbr.rel (%p171) target = $region28
    $region27: #{_lambda_.2} parent=5 // pred_region
      // Predicated region
      $region29: #{_lambda_.2} parent=27 // pred_check
        %p174 = pneg %p49
      $region30: #{_lambda_.2} parent=27 // pred_check_branch
        %176 = sbr.rel (%p174) target = $region32
      $region31: #{_lambda_.2} parent=27 // pred_region
        %p177 = scmp.lt.s32.totalorder %s24, 1
        %s178 = scalar_select %p177, %s24, 1
        %s179 = smul.addr %s178, 108
        %s180 = scalar_lea.vmem %s1, %s179
      $region32: #{_lambda_.2} parent=27 // pred_fallthru
        _
    $region28: #{_lambda_.2} parent=5 // pred_fallthru
      _
    %p181 = scmp.le.s32.totalorder 1, %s17
    %p182 = scmp.lt.s32.totalorder %s17, 3
    %p183 = pnand %p181, %p182
    %p184 = pneg %p183
    // Predicated region
    $region33: #{_lambda_.2} parent=5 // pred_check
      _
    $region34: #{_lambda_.2} parent=5 // pred_check_branch
      %186 = sbr.rel (%p183) target = $region36
    $region35: #{_lambda_.2} parent=5 // pred_region
      %s187 = ssub.s32 %s17, 1
      %p188 = scmp.lt.s32.totalorder %s26, 1
      %s189 = scalar_select %p188, %s26, 1
      %s190 = smul.addr %s189, 108
      %s191 = scalar_lea.vmem %s1, %s190
      %p192 = pneg %p55
      %p193 = pneg %p52
      %p194 = pneg %p76
      %p195 = pneg %p73
      %p196 = pneg %p97
      %p197 = pneg %p94
      %p198 = pneg %p118
      %p199 = pneg %p115
      %p200 = pneg %p146
      %p201 = pneg %p143
      %s202 = smul.u32 2, %s27
      %p203 = scmp.lt.s32.totalorder %s26, 1
      %s204 = scalar_select %p203, %s26, 1
      %p205 = scmp.lt.s32.totalorder %s202, 1
      %s206 = scalar_select %p205, %s202, 1
      %s207 = smul.addr %s204, 16
      %s208 = sadd.s32 %s206, %s207
      %s209 = smul.addr %s208, 4
      %s210 = scalar_lea.vmem %s5, %s209
      %p211 = scmp.lt.s32.totalorder %s26, 1
      %s212 = scalar_select %p211, %s26, 1
      %s213 = smul.addr %s212, 108
      %s214 = scalar_lea.vmem %s1, %s213
      %s215 = smul.u32 2, %s27
      %p216 = scmp.lt.s32.totalorder %s26, 1
      %s217 = scalar_select %p216, %s26, 1
      %p218 = scmp.lt.s32.totalorder %s215, 1
      %s219 = scalar_select %p218, %s215, 1
      %s220 = smul.addr %s217, 16
      %s221 = sadd.s32 %s219, %s220
      %s222 = smul.addr %s221, 4
      %s223 = scalar_lea.vmem %s5, %s222
      %s224 = smul.u32 2, %s27
      %s225 = smul.u32 %s27, 256
      %v226 = vlaneseq
      %v227 = vand.u32 %v226, 127
      %v228 = vadd.s32 %v227, 128
      %v229 = vstv %s225
      %v230 = vadd.s32 %v227, %v229
      %v231 = vadd.s32 %v228, %v229
      %s232 = sld [smem:[#allocation3 + %s26]]
      %v233 = vstv %s232
      %vm234 = vcmp.ge.s32.totalorder %v230, %v233
      %vm235 = vcmp.ge.s32.totalorder %v231, %v233
      %v236 = vsel %vm234, 1, 0
      %v237 = vsel %vm235, 1, 0
      %vm238 = vcmp.eq.s32.totalorder %v236, 1
      %vm239 = vcmp.eq.s32.totalorder %v237, 1
      %v240 = vld [vmem:[%s3] sm:$0xff]
      %242 = vset.pattern.permute.xlu0 0
      %243 = vperm.xlu0 %242, %v240
      %v244 = vpop.permute.xlu0 %243
      %v246 = vld [vmem:[%s4] sm:$0xff]
      %248 = vset.pattern.permute.xlu0 0
      %249 = vperm.xlu0 %248, %v246
      %v250 = vpop.permute.xlu0 %249
      %s252 = sshra.s32 %s225, 7
      %s253 = sand.u32 %s225, 127
      %s254 = scalar_lea.vmem %s214, %s252
      %v255 = vld [vmem:[%s254] sm:$0x7]
      %v256 = vld [vmem:[%s2] sm:$0xf]
      %v257 = vunpack.c.l.bf16 %v256
      %v258 = vunpack.c.l.bf16 %v255
      %260 = vset.pattern.permute.xlu0 0
      %261 = vperm.xlu0 %260, %v257
      %v262 = vpop.permute.xlu0 %261
      %v265 = vlaneseq
      %v266 = vshrl.u32 %v265, 7
      %v267 = vsub.s32 0, %v266
      %v268 = vrot.slane %v258, %v267
      %v269 = vlaneseq
      %v270 = vshrl.u32 %v269, 7
      %v271 = vsub.s32 2, %v270
      %v272 = vrot.slane %v258, %v271
      %v275 = vlaneseq
      %v276 = vshrl.u32 %v275, 7
      %v277 = vsub.s32 0, %v276
      %v278 = vrot.slane %v268, %v277
      %v279 = vlaneseq
      %v280 = vshrl.u32 %v279, 7
      %v281 = vsub.s32 0, %v280
      %v282 = vrot.slane %v272, %v281
      %v283 = vmul.f32 %v262, %v278
      %v284 = vmul.f32 %v262, %v282
      %v285 = vadd.f32 %v283, 0.0
      %v286 = vadd.f32 %v284, 0.0
      %s287 = scalar_lea.vmem %s2, 8
      %v288 = vld [vmem:[%s287] sm:$0xf]
      %v289 = vunpack.c.l.bf16 %v288
      %291 = vset.pattern.permute.xlu0 0
      %292 = vperm.xlu0 %291, %v289
      %v293 = vpop.permute.xlu0 %292
      %v295 = vlaneseq
      %v296 = vshrl.u32 %v295, 7
      %v297 = vsub.s32 4, %v296
      %v298 = vrot.slane %v258, %v297
      %v300 = vlaneseq
      %v301 = vshrl.u32 %v300, 7
      %v302 = vsub.s32 0, %v301
      %v303 = vrot.slane %v298, %v302
      %v304 = vmul.f32 %v293, %v278
      %v305 = vmul.f32 %v293, %v282
      %v306 = vmul.f32 %v293, %v303
      %310 = vrot.lane.b32.xlu0 %v304, 127
      %v311 = vpop.permute.xlu0 %310
      %312 = vrot.lane.b32.xlu0 %v305, 127
      %v313 = vpop.permute.xlu0 %312
      %314 = vrot.lane.b32.xlu0 %v306, 127
      %v315 = vpop.permute.xlu0 %314
      %vm316 = vcmask 1039360
      %v317 = vsel %vm316, %v311, %v313
      %v318 = vsel %vm316, %v313, %v315
      %v321 = vadd.f32 %v285, %v317
      %v322 = vadd.f32 %v286, %v318
      %s323 = sadd.s32 %s252, 27
      %s324 = scalar_lea.vmem %s214, %s323
      %v325 = vld [vmem:[%s324] sm:$0x7]
      %s326 = scalar_lea.vmem %s2, 4
      %v327 = vld [vmem:[%s326] sm:$0xf]
      %v328 = vunpack.c.l.bf16 %v327
      %v329 = vunpack.c.l.bf16 %v325
      %331 = vset.pattern.permute.xlu0 0
      %332 = vperm.xlu0 %331, %v328
      %v333 = vpop.permute.xlu0 %332
      %v336 = vlaneseq
      %v337 = vshrl.u32 %v336, 7
      %v338 = vsub.s32 0, %v337
      %v339 = vrot.slane %v329, %v338
      %v340 = vlaneseq
      %v341 = vshrl.u32 %v340, 7
      %v342 = vsub.s32 2, %v341
      %v343 = vrot.slane %v329, %v342
      %v346 = vlaneseq
      %v347 = vshrl.u32 %v346, 7
      %v348 = vsub.s32 0, %v347
      %v349 = vrot.slane %v339, %v348
      %v350 = vlaneseq
      %v351 = vshrl.u32 %v350, 7
      %v352 = vsub.s32 0, %v351
      %v353 = vrot.slane %v343, %v352
      %v354 = vmul.f32 %v333, %v349
      %v355 = vmul.f32 %v333, %v353
      %v356 = vadd.f32 %v321, %v354
      %v357 = vadd.f32 %v322, %v355
      %s358 = sadd.s32 %s252, 54
      %s359 = scalar_lea.vmem %s214, %s358
      %v360 = vld [vmem:[%s359] sm:$0x7]
      %s361 = scalar_lea.vmem %s2, 12
      %v362 = vld [vmem:[%s361] sm:$0xf]
      %v363 = vunpack.c.l.bf16 %v362
      %v364 = vunpack.c.l.bf16 %v360
      %366 = vset.pattern.permute.xlu0 0
      %367 = vperm.xlu0 %366, %v363
      %v368 = vpop.permute.xlu0 %367
      %v371 = vlaneseq
      %v372 = vshrl.u32 %v371, 7
      %v373 = vsub.s32 0, %v372
      %v374 = vrot.slane %v364, %v373
      %v375 = vlaneseq
      %v376 = vshrl.u32 %v375, 7
      %v377 = vsub.s32 2, %v376
      %v378 = vrot.slane %v364, %v377
      %v381 = vlaneseq
      %v382 = vshrl.u32 %v381, 7
      %v383 = vsub.s32 0, %v382
      %v384 = vrot.slane %v374, %v383
      %v385 = vlaneseq
      %v386 = vshrl.u32 %v385, 7
      %v387 = vsub.s32 0, %v386
      %v388 = vrot.slane %v378, %v387
      %v389 = vmul.f32 %v368, %v384
      %v390 = vmul.f32 %v368, %v388
      %v391 = vadd.f32 %v356, %v389
      %v392 = vadd.f32 %v357, %v390
      %s393 = scalar_lea.vmem %s2, 20
      %v394 = vld [vmem:[%s393] sm:$0xf]
      %v395 = vunpack.c.l.bf16 %v394
      %397 = vset.pattern.permute.xlu0 0
      %398 = vperm.xlu0 %397, %v395
      %v399 = vpop.permute.xlu0 %398
      %v401 = vlaneseq
      %v402 = vshrl.u32 %v401, 7
      %v403 = vsub.s32 4, %v402
      %v404 = vrot.slane %v364, %v403
      %v406 = vlaneseq
      %v407 = vshrl.u32 %v406, 7
      %v408 = vsub.s32 0, %v407
      %v409 = vrot.slane %v404, %v408
      %v410 = vmul.f32 %v399, %v384
      %v411 = vmul.f32 %v399, %v388
      %v412 = vmul.f32 %v399, %v409
      %416 = vrot.lane.b32.xlu0 %v410, 127
      %v417 = vpop.permute.xlu0 %416
      %418 = vrot.lane.b32.xlu0 %v411, 127
      %v419 = vpop.permute.xlu0 %418
      %420 = vrot.lane.b32.xlu0 %v412, 127
      %v421 = vpop.permute.xlu0 %420
      %v422 = vsel %vm316, %v417, %v419
      %v423 = vsel %vm316, %v419, %v421
      %v426 = vadd.f32 %v391, %v422
      %v427 = vadd.f32 %v392, %v423
      %s428 = sadd.s32 %s252, 81
      %s429 = scalar_lea.vmem %s214, %s428
      %v430 = vld [vmem:[%s429] sm:$0x7]
      %s431 = scalar_lea.vmem %s2, 16
      %v432 = vld [vmem:[%s431] sm:$0xf]
      %v433 = vunpack.c.l.bf16 %v432
      %v434 = vunpack.c.l.bf16 %v430
      %436 = vset.pattern.permute.xlu0 0
      %437 = vperm.xlu0 %436, %v433
      %v438 = vpop.permute.xlu0 %437
      %v441 = vlaneseq
      %v442 = vshrl.u32 %v441, 7
      %v443 = vsub.s32 0, %v442
      %v444 = vrot.slane %v434, %v443
      %v445 = vlaneseq
      %v446 = vshrl.u32 %v445, 7
      %v447 = vsub.s32 2, %v446
      %v448 = vrot.slane %v434, %v447
      %v451 = vlaneseq
      %v452 = vshrl.u32 %v451, 7
      %v453 = vsub.s32 0, %v452
      %v454 = vrot.slane %v444, %v453
      %v455 = vlaneseq
      %v456 = vshrl.u32 %v455, 7
      %v457 = vsub.s32 0, %v456
      %v458 = vrot.slane %v448, %v457
      %v459 = vmul.f32 %v438, %v454
      %v460 = vmul.f32 %v438, %v458
      %v461 = vadd.f32 %v426, %v459
      %v462 = vadd.f32 %v427, %v460
      %s463 = sadd.s32 %s252, 3
      %s464 = scalar_lea.vmem %s214, %s463
      %v465 = vld [vmem:[%s464] sm:$0x7]
      %s466 = scalar_lea.vmem %s2, 24
      %v467 = vld [vmem:[%s466] sm:$0xf]
      %v468 = vunpack.c.l.bf16 %v467
      %v469 = vunpack.c.l.bf16 %v465
      %471 = vset.pattern.permute.xlu0 0
      %472 = vperm.xlu0 %471, %v468
      %v473 = vpop.permute.xlu0 %472
      %v476 = vlaneseq
      %v477 = vshrl.u32 %v476, 7
      %v478 = vsub.s32 0, %v477
      %v479 = vrot.slane %v469, %v478
      %v480 = vlaneseq
      %v481 = vshrl.u32 %v480, 7
      %v482 = vsub.s32 2, %v481
      %v483 = vrot.slane %v469, %v482
      %v486 = vlaneseq
      %v487 = vshrl.u32 %v486, 7
      %v488 = vsub.s32 0, %v487
      %v489 = vrot.slane %v479, %v488
      %v490 = vlaneseq
      %v491 = vshrl.u32 %v490, 7
      %v492 = vsub.s32 0, %v491
      %v493 = vrot.slane %v483, %v492
      %v494 = vmul.f32 %v473, %v489
      %v495 = vmul.f32 %v473, %v493
      %v496 = vadd.f32 %v461, %v494
      %v497 = vadd.f32 %v462, %v495
      %s498 = scalar_lea.vmem %s2, 32
      %v499 = vld [vmem:[%s498] sm:$0xf]
      %v500 = vunpack.c.l.bf16 %v499
      %502 = vset.pattern.permute.xlu0 0
      %503 = vperm.xlu0 %502, %v500
      %v504 = vpop.permute.xlu0 %503
      %v506 = vlaneseq
      %v507 = vshrl.u32 %v506, 7
      %v508 = vsub.s32 4, %v507
      %v509 = vrot.slane %v469, %v508
      %v511 = vlaneseq
      %v512 = vshrl.u32 %v511, 7
      %v513 = vsub.s32 0, %v512
      %v514 = vrot.slane %v509, %v513
      %v515 = vmul.f32 %v504, %v489
      %v516 = vmul.f32 %v504, %v493
      %v517 = vmul.f32 %v504, %v514
      %521 = vrot.lane.b32.xlu0 %v515, 127
      %v522 = vpop.permute.xlu0 %521
      %523 = vrot.lane.b32.xlu0 %v516, 127
      %v524 = vpop.permute.xlu0 %523
      %525 = vrot.lane.b32.xlu0 %v517, 127
      %v526 = vpop.permute.xlu0 %525
      %v527 = vsel %vm316, %v522, %v524
      %v528 = vsel %vm316, %v524, %v526
      %v531 = vadd.f32 %v496, %v527
      %v532 = vadd.f32 %v497, %v528
      %s533 = sadd.s32 %s463, 27
      %s534 = scalar_lea.vmem %s214, %s533
      %v535 = vld [vmem:[%s534] sm:$0x7]
      %s536 = scalar_lea.vmem %s2, 28
      %v537 = vld [vmem:[%s536] sm:$0xf]
      %v538 = vunpack.c.l.bf16 %v537
      %v539 = vunpack.c.l.bf16 %v535
      %541 = vset.pattern.permute.xlu0 0
      %542 = vperm.xlu0 %541, %v538
      %v543 = vpop.permute.xlu0 %542
      %v546 = vlaneseq
      %v547 = vshrl.u32 %v546, 7
      %v548 = vsub.s32 0, %v547
      %v549 = vrot.slane %v539, %v548
      %v550 = vlaneseq
      %v551 = vshrl.u32 %v550, 7
      %v552 = vsub.s32 2, %v551
      %v553 = vrot.slane %v539, %v552
      %v556 = vlaneseq
      %v557 = vshrl.u32 %v556, 7
      %v558 = vsub.s32 0, %v557
      %v559 = vrot.slane %v549, %v558
      %v560 = vlaneseq
      %v561 = vshrl.u32 %v560, 7
      %v562 = vsub.s32 0, %v561
      %v563 = vrot.slane %v553, %v562
      %v564 = vmul.f32 %v543, %v559
      %v565 = vmul.f32 %v543, %v563
      %v566 = vadd.f32 %v531, %v564
      %v567 = vadd.f32 %v532, %v565
      %v568 = vmul.f32 %v566, %v244
      %v569 = vmul.f32 %v567, %v244
      %v570 = vadd.f32 %v568, %v250
      %v571 = vadd.f32 %v569, %v250
      %v572 = vmax.f32 %v570, 0.0
      %v573 = vmax.f32 %v571, 0.0
      %v574 = vmin.f32 %v572, 20.0
      %v575 = vmin.f32 %v573, 20.0
      %v576 = vsel %vm238, 0.0, %v574
      %v577 = vsel %vm239, 0.0, %v575
      %v578 = vpack.c.bf16 %v576, %v576
      %v579 = vpack.c.bf16 %v577, %v577
      %v582 = vunpack.c.l.b16 %v578
      %v583 = vunpack.c.l.b16 %v579
      %v584 = vpack.c.b16 %v583, %v582
      %586 = vst [vmem:[%s223] sm:$0xff] %v584
      %v587 = vld [vmem:[%s464] sm:$0x7]
      %v588 = vld [vmem:[%s2] sm:$0xf]
      %v589 = vunpack.c.l.bf16 %v588
      %v590 = vunpack.c.l.bf16 %v587
      %592 = vset.pattern.permute.xlu0 0
      %593 = vperm.xlu0 %592, %v589
      %v594 = vpop.permute.xlu0 %593
      %v597 = vlaneseq
      %v598 = vshrl.u32 %v597, 7
      %v599 = vsub.s32 0, %v598
      %v600 = vrot.slane %v590, %v599
      %v601 = vlaneseq
      %v602 = vshrl.u32 %v601, 7
      %v603 = vsub.s32 2, %v602
      %v604 = vrot.slane %v590, %v603
      %v607 = vlaneseq
      %v608 = vshrl.u32 %v607, 7
      %v609 = vsub.s32 0, %v608
      %v610 = vrot.slane %v600, %v609
      %v611 = vlaneseq
      %v612 = vshrl.u32 %v611, 7
      %v613 = vsub.s32 0, %v612
      %v614 = vrot.slane %v604, %v613
      %v615 = vmul.f32 %v594, %v610
      %v616 = vmul.f32 %v594, %v614
      %v617 = vadd.f32 %v615, 0.0
      %v618 = vadd.f32 %v616, 0.0
      %v619 = vld [vmem:[%s287] sm:$0xf]
      %v620 = vunpack.c.l.bf16 %v619
      %622 = vset.pattern.permute.xlu0 0
      %623 = vperm.xlu0 %622, %v620
      %v624 = vpop.permute.xlu0 %623
      %v626 = vlaneseq
      %v627 = vshrl.u32 %v626, 7
      %v628 = vsub.s32 4, %v627
      %v629 = vrot.slane %v590, %v628
      %v631 = vlaneseq
      %v632 = vshrl.u32 %v631, 7
      %v633 = vsub.s32 0, %v632
      %v634 = vrot.slane %v629, %v633
      %v635 = vmul.f32 %v624, %v610
      %v636 = vmul.f32 %v624, %v614
      %v637 = vmul.f32 %v624, %v634
      %641 = vrot.lane.b32.xlu0 %v635, 127
      %v642 = vpop.permute.xlu0 %641
      %643 = vrot.lane.b32.xlu0 %v636, 127
      %v644 = vpop.permute.xlu0 %643
      %645 = vrot.lane.b32.xlu0 %v637, 127
      %v646 = vpop.permute.xlu0 %645
      %v647 = vsel %vm316, %v642, %v644
      %v648 = vsel %vm316, %v644, %v646
      %v651 = vadd.f32 %v617, %v647
      %v652 = vadd.f32 %v618, %v648
      %v653 = vld [vmem:[%s534] sm:$0x7]
      %v654 = vld [vmem:[%s326] sm:$0xf]
      %v655 = vunpack.c.l.bf16 %v654
      %v656 = vunpack.c.l.bf16 %v653
      %658 = vset.pattern.permute.xlu0 0
      %659 = vperm.xlu0 %658, %v655
      %v660 = vpop.permute.xlu0 %659
      %v663 = vlaneseq
      %v664 = vshrl.u32 %v663, 7
      %v665 = vsub.s32 0, %v664
      %v666 = vrot.slane %v656, %v665
      %v667 = vlaneseq
      %v668 = vshrl.u32 %v667, 7
      %v669 = vsub.s32 2, %v668
      %v670 = vrot.slane %v656, %v669
      %v673 = vlaneseq
      %v674 = vshrl.u32 %v673, 7
      %v675 = vsub.s32 0, %v674
      %v676 = vrot.slane %v666, %v675
      %v677 = vlaneseq
      %v678 = vshrl.u32 %v677, 7
      %v679 = vsub.s32 0, %v678
      %v680 = vrot.slane %v670, %v679
      %v681 = vmul.f32 %v660, %v676
      %v682 = vmul.f32 %v660, %v680
      %v683 = vadd.f32 %v651, %v681
      %v684 = vadd.f32 %v652, %v682
      %s685 = sadd.s32 %s463, 54
      %s686 = scalar_lea.vmem %s214, %s685
      %v687 = vld [vmem:[%s686] sm:$0x7]
      %v688 = vld [vmem:[%s361] sm:$0xf]
      %v689 = vunpack.c.l.bf16 %v688
      %v690 = vunpack.c.l.bf16 %v687
      %692 = vset.pattern.permute.xlu0 0
      %693 = vperm.xlu0 %692, %v689
      %v694 = vpop.permute.xlu0 %693
      %v697 = vlaneseq
      %v698 = vshrl.u32 %v697, 7
      %v699 = vsub.s32 0, %v698
      %v700 = vrot.slane %v690, %v699
      %v701 = vlaneseq
      %v702 = vshrl.u32 %v701, 7
      %v703 = vsub.s32 2, %v702
      %v704 = vrot.slane %v690, %v703
      %v707 = vlaneseq
      %v708 = vshrl.u32 %v707, 7
      %v709 = vsub.s32 0, %v708
      %v710 = vrot.slane %v700, %v709
      %v711 = vlaneseq
      %v712 = vshrl.u32 %v711, 7
      %v713 = vsub.s32 0, %v712
      %v714 = vrot.slane %v704, %v713
      %v715 = vmul.f32 %v694, %v710
      %v716 = vmul.f32 %v694, %v714
      %v717 = vadd.f32 %v683, %v715
      %v718 = vadd.f32 %v684, %v716
      %v719 = vld [vmem:[%s393] sm:$0xf]
      %v720 = vunpack.c.l.bf16 %v719
      %722 = vset.pattern.permute.xlu0 0
      %723 = vperm.xlu0 %722, %v720
      %v724 = vpop.permute.xlu0 %723
      %v726 = vlaneseq
      %v727 = vshrl.u32 %v726, 7
      %v728 = vsub.s32 4, %v727
      %v729 = vrot.slane %v690, %v728
      %v731 = vlaneseq
      %v732 = vshrl.u32 %v731, 7
      %v733 = vsub.s32 0, %v732
      %v734 = vrot.slane %v729, %v733
      %v735 = vmul.f32 %v724, %v710
      %v736 = vmul.f32 %v724, %v714
      %v737 = vmul.f32 %v724, %v734
      %741 = vrot.lane.b32.xlu0 %v735, 127
      %v742 = vpop.permute.xlu0 %741
      %743 = vrot.lane.b32.xlu0 %v736, 127
      %v744 = vpop.permute.xlu0 %743
      %745 = vrot.lane.b32.xlu0 %v737, 127
      %v746 = vpop.permute.xlu0 %745
      %v747 = vsel %vm316, %v742, %v744
      %v748 = vsel %vm316, %v744, %v746
      %v751 = vadd.f32 %v717, %v747
      %v752 = vadd.f32 %v718, %v748
      %s753 = sadd.s32 %s463, 81
      %s754 = scalar_lea.vmem %s214, %s753
      %v755 = vld [vmem:[%s754] sm:$0x7]
      %v756 = vld [vmem:[%s431] sm:$0xf]
      %v757 = vunpack.c.l.bf16 %v756
      %v758 = vunpack.c.l.bf16 %v755
      %760 = vset.pattern.permute.xlu0 0
      %761 = vperm.xlu0 %760, %v757
      %v762 = vpop.permute.xlu0 %761
      %v765 = vlaneseq
      %v766 = vshrl.u32 %v765, 7
      %v767 = vsub.s32 0, %v766
      %v768 = vrot.slane %v758, %v767
      %v769 = vlaneseq
      %v770 = vshrl.u32 %v769, 7
      %v771 = vsub.s32 2, %v770
      %v772 = vrot.slane %v758, %v771
      %v775 = vlaneseq
      %v776 = vshrl.u32 %v775, 7
      %v777 = vsub.s32 0, %v776
      %v778 = vrot.slane %v768, %v777
      %v779 = vlaneseq
      %v780 = vshrl.u32 %v779, 7
      %v781 = vsub.s32 0, %v780
      %v782 = vrot.slane %v772, %v781
      %v783 = vmul.f32 %v762, %v778
      %v784 = vmul.f32 %v762, %v782
      %v785 = vadd.f32 %v751, %v783
      %v786 = vadd.f32 %v752, %v784
      %s787 = sadd.s32 %s252, 6
      %s788 = scalar_lea.vmem %s214, %s787
      %v789 = vld [vmem:[%s788] sm:$0x7]
      %v790 = vld [vmem:[%s466] sm:$0xf]
      %v791 = vunpack.c.l.bf16 %v790
      %v792 = vunpack.c.l.bf16 %v789
      %794 = vset.pattern.permute.xlu0 0
      %795 = vperm.xlu0 %794, %v791
      %v796 = vpop.permute.xlu0 %795
      %v799 = vlaneseq
      %v800 = vshrl.u32 %v799, 7
      %v801 = vsub.s32 0, %v800
      %v802 = vrot.slane %v792, %v801
      %v803 = vlaneseq
      %v804 = vshrl.u32 %v803, 7
      %v805 = vsub.s32 2, %v804
      %v806 = vrot.slane %v792, %v805
      %v809 = vlaneseq
      %v810 = vshrl.u32 %v809, 7
      %v811 = vsub.s32 0, %v810
      %v812 = vrot.slane %v802, %v811
      %v813 = vlaneseq
      %v814 = vshrl.u32 %v813, 7
      %v815 = vsub.s32 0, %v814
      %v816 = vrot.slane %v806, %v815
      %v817 = vmul.f32 %v796, %v812
      %v818 = vmul.f32 %v796, %v816
      %v819 = vadd.f32 %v785, %v817
      %v820 = vadd.f32 %v786, %v818
      %v821 = vld [vmem:[%s498] sm:$0xf]
      %v822 = vunpack.c.l.bf16 %v821
      %824 = vset.pattern.permute.xlu0 0
      %825 = vperm.xlu0 %824, %v822
      %v826 = vpop.permute.xlu0 %825
      %v828 = vlaneseq
      %v829 = vshrl.u32 %v828, 7
      %v830 = vsub.s32 4, %v829
      %v831 = vrot.slane %v792, %v830
      %v833 = vlaneseq
      %v834 = vshrl.u32 %v833, 7
      %v835 = vsub.s32 0, %v834
      %v836 = vrot.slane %v831, %v835
      %v837 = vmul.f32 %v826, %v812
      %v838 = vmul.f32 %v826, %v816
      %v839 = vmul.f32 %v826, %v836
      %843 = vrot.lane.b32.xlu0 %v837, 127
      %v844 = vpop.permute.xlu0 %843
      %845 = vrot.lane.b32.xlu0 %v838, 127
      %v846 = vpop.permute.xlu0 %845
      %847 = vrot.lane.b32.xlu0 %v839, 127
      %v848 = vpop.permute.xlu0 %847
      %v849 = vsel %vm316, %v844, %v846
      %v850 = vsel %vm316, %v846, %v848
      %v853 = vadd.f32 %v819, %v849
      %v854 = vadd.f32 %v820, %v850
      %s855 = sadd.s32 %s787, 27
      %s856 = scalar_lea.vmem %s214, %s855
      %v857 = vld [vmem:[%s856] sm:$0x7]
      %v858 = vld [vmem:[%s536] sm:$0xf]
      %v859 = vunpack.c.l.bf16 %v858
      %v860 = vunpack.c.l.bf16 %v857
      %862 = vset.pattern.permute.xlu0 0
      %863 = vperm.xlu0 %862, %v859
      %v864 = vpop.permute.xlu0 %863
      %v867 = vlaneseq
      %v868 = vshrl.u32 %v867, 7
      %v869 = vsub.s32 0, %v868
      %v870 = vrot.slane %v860, %v869
      %v871 = vlaneseq
      %v872 = vshrl.u32 %v871, 7
      %v873 = vsub.s32 2, %v872
      %v874 = vrot.slane %v860, %v873
      %v877 = vlaneseq
      %v878 = vshrl.u32 %v877, 7
      %v879 = vsub.s32 0, %v878
      %v880 = vrot.slane %v870, %v879
      %v881 = vlaneseq
      %v882 = vshrl.u32 %v881, 7
      %v883 = vsub.s32 0, %v882
      %v884 = vrot.slane %v874, %v883
      %v885 = vmul.f32 %v864, %v880
      %v886 = vmul.f32 %v864, %v884
      %v887 = vadd.f32 %v853, %v885
      %v888 = vadd.f32 %v854, %v886
      %v889 = vmul.f32 %v887, %v244
      %v890 = vmul.f32 %v888, %v244
      %v891 = vadd.f32 %v889, %v250
      %v892 = vadd.f32 %v890, %v250
      %v893 = vmax.f32 %v891, 0.0
      %v894 = vmax.f32 %v892, 0.0
      %v895 = vmin.f32 %v893, 20.0
      %v896 = vmin.f32 %v894, 20.0
      %v897 = vsel %vm238, 0.0, %v895
      %v898 = vsel %vm239, 0.0, %v896
      %v899 = vpack.c.bf16 %v897, %v897
      %v900 = vpack.c.bf16 %v898, %v898
      %v903 = vunpack.c.l.b16 %v899
      %v904 = vunpack.c.l.b16 %v900
      %v905 = vpack.c.b16 %v904, %v903
      %s907 = scalar_lea.vmem %s223, 8
      %908 = vst [vmem:[%s907] sm:$0xff] %v905
      %v909 = vld [vmem:[%s788] sm:$0x7]
      %v910 = vld [vmem:[%s2] sm:$0xf]
      %v911 = vunpack.c.l.bf16 %v910
      %v912 = vunpack.c.l.bf16 %v909
      %914 = vset.pattern.permute.xlu0 0
      %915 = vperm.xlu0 %914, %v911
      %v916 = vpop.permute.xlu0 %915
      %v919 = vlaneseq
      %v920 = vshrl.u32 %v919, 7
      %v921 = vsub.s32 0, %v920
      %v922 = vrot.slane %v912, %v921
      %v923 = vlaneseq
      %v924 = vshrl.u32 %v923, 7
      %v925 = vsub.s32 2, %v924
      %v926 = vrot.slane %v912, %v925
      %v929 = vlaneseq
      %v930 = vshrl.u32 %v929, 7
      %v931 = vsub.s32 0, %v930
      %v932 = vrot.slane %v922, %v931
      %v933 = vlaneseq
      %v934 = vshrl.u32 %v933, 7
      %v935 = vsub.s32 0, %v934
      %v936 = vrot.slane %v926, %v935
      %v937 = vmul.f32 %v916, %v932
      %v938 = vmul.f32 %v916, %v936
      %v939 = vadd.f32 %v937, 0.0
      %v940 = vadd.f32 %v938, 0.0
      %v941 = vld [vmem:[%s287] sm:$0xf]
      %v942 = vunpack.c.l.bf16 %v941
      %944 = vset.pattern.permute.xlu0 0
      %945 = vperm.xlu0 %944, %v942
      %v946 = vpop.permute.xlu0 %945
      %v948 = vlaneseq
      %v949 = vshrl.u32 %v948, 7
      %v950 = vsub.s32 4, %v949
      %v951 = vrot.slane %v912, %v950
      %v953 = vlaneseq
      %v954 = vshrl.u32 %v953, 7
      %v955 = vsub.s32 0, %v954
      %v956 = vrot.slane %v951, %v955
      %v957 = vmul.f32 %v946, %v932
      %v958 = vmul.f32 %v946, %v936
      %v959 = vmul.f32 %v946, %v956
      %963 = vrot.lane.b32.xlu0 %v957, 127
      %v964 = vpop.permute.xlu0 %963
      %965 = vrot.lane.b32.xlu0 %v958, 127
      %v966 = vpop.permute.xlu0 %965
      %967 = vrot.lane.b32.xlu0 %v959, 127
      %v968 = vpop.permute.xlu0 %967
      %v969 = vsel %vm316, %v964, %v966
      %v970 = vsel %vm316, %v966, %v968
      %v973 = vadd.f32 %v939, %v969
      %v974 = vadd.f32 %v940, %v970
      %v975 = vld [vmem:[%s856] sm:$0x7]
      %v976 = vld [vmem:[%s326] sm:$0xf]
      %v977 = vunpack.c.l.bf16 %v976
      %v978 = vunpack.c.l.bf16 %v975
      %980 = vset.pattern.permute.xlu0 0
      %981 = vperm.xlu0 %980, %v977
      %v982 = vpop.permute.xlu0 %981
      %v985 = vlaneseq
      %v986 = vshrl.u32 %v985, 7
      %v987 = vsub.s32 0, %v986
      %v988 = vrot.slane %v978, %v987
      %v989 = vlaneseq
      %v990 = vshrl.u32 %v989, 7
      %v991 = vsub.s32 2, %v990
      %v992 = vrot.slane %v978, %v991
      %v995 = vlaneseq
      %v996 = vshrl.u32 %v995, 7
      %v997 = vsub.s32 0, %v996
      %v998 = vrot.slane %v988, %v997
      %v999 = vlaneseq
      %v1000 = vshrl.u32 %v999, 7
      %v1001 = vsub.s32 0, %v1000
      %v1002 = vrot.slane %v992, %v1001
      %v1003 = vmul.f32 %v982, %v998
      %v1004 = vmul.f32 %v982, %v1002
      %v1005 = vadd.f32 %v973, %v1003
      %v1006 = vadd.f32 %v974, %v1004
      %s1007 = sadd.s32 %s787, 54
      %s1008 = scalar_lea.vmem %s214, %s1007
      %v1009 = vld [vmem:[%s1008] sm:$0x7]
      %v1010 = vld [vmem:[%s361] sm:$0xf]
      %v1011 = vunpack.c.l.bf16 %v1010
      %v1012 = vunpack.c.l.bf16 %v1009
      %1014 = vset.pattern.permute.xlu0 0
      %1015 = vperm.xlu0 %1014, %v1011
      %v1016 = vpop.permute.xlu0 %1015
      %v1019 = vlaneseq
      %v1020 = vshrl.u32 %v1019, 7
      %v1021 = vsub.s32 0, %v1020
      %v1022 = vrot.slane %v1012, %v1021
      %v1023 = vlaneseq
      %v1024 = vshrl.u32 %v1023, 7
      %v1025 = vsub.s32 2, %v1024
      %v1026 = vrot.slane %v1012, %v1025
      %v1029 = vlaneseq
      %v1030 = vshrl.u32 %v1029, 7
      %v1031 = vsub.s32 0, %v1030
      %v1032 = vrot.slane %v1022, %v1031
      %v1033 = vlaneseq
      %v1034 = vshrl.u32 %v1033, 7
      %v1035 = vsub.s32 0, %v1034
      %v1036 = vrot.slane %v1026, %v1035
      %v1037 = vmul.f32 %v1016, %v1032
      %v1038 = vmul.f32 %v1016, %v1036
      %v1039 = vadd.f32 %v1005, %v1037
      %v1040 = vadd.f32 %v1006, %v1038
      %v1041 = vld [vmem:[%s393] sm:$0xf]
      %v1042 = vunpack.c.l.bf16 %v1041
      %1044 = vset.pattern.permute.xlu0 0
      %1045 = vperm.xlu0 %1044, %v1042
      %v1046 = vpop.permute.xlu0 %1045
      %v1048 = vlaneseq
      %v1049 = vshrl.u32 %v1048, 7
      %v1050 = vsub.s32 4, %v1049
      %v1051 = vrot.slane %v1012, %v1050
      %v1053 = vlaneseq
      %v1054 = vshrl.u32 %v1053, 7
      %v1055 = vsub.s32 0, %v1054
      %v1056 = vrot.slane %v1051, %v1055
      %v1057 = vmul.f32 %v1046, %v1032
      %v1058 = vmul.f32 %v1046, %v1036
      %v1059 = vmul.f32 %v1046, %v1056
      %1063 = vrot.lane.b32.xlu0 %v1057, 127
      %v1064 = vpop.permute.xlu0 %1063
      %1065 = vrot.lane.b32.xlu0 %v1058, 127
      %v1066 = vpop.permute.xlu0 %1065
      %1067 = vrot.lane.b32.xlu0 %v1059, 127
      %v1068 = vpop.permute.xlu0 %1067
      %v1069 = vsel %vm316, %v1064, %v1066
      %v1070 = vsel %vm316, %v1066, %v1068
      %v1073 = vadd.f32 %v1039, %v1069
      %v1074 = vadd.f32 %v1040, %v1070
      %s1075 = sadd.s32 %s787, 81
      %s1076 = scalar_lea.vmem %s214, %s1075
      %v1077 = vld [vmem:[%s1076] sm:$0x7]
      %v1078 = vld [vmem:[%s431] sm:$0xf]
      %v1079 = vunpack.c.l.bf16 %v1078
      %v1080 = vunpack.c.l.bf16 %v1077
      %1082 = vset.pattern.permute.xlu0 0
      %1083 = vperm.xlu0 %1082, %v1079
      %v1084 = vpop.permute.xlu0 %1083
      %v1087 = vlaneseq
      %v1088 = vshrl.u32 %v1087, 7
      %v1089 = vsub.s32 0, %v1088
      %v1090 = vrot.slane %v1080, %v1089
      %v1091 = vlaneseq
      %v1092 = vshrl.u32 %v1091, 7
      %v1093 = vsub.s32 2, %v1092
      %v1094 = vrot.slane %v1080, %v1093
      %v1097 = vlaneseq
      %v1098 = vshrl.u32 %v1097, 7
      %v1099 = vsub.s32 0, %v1098
      %v1100 = vrot.slane %v1090, %v1099
      %v1101 = vlaneseq
      %v1102 = vshrl.u32 %v1101, 7
      %v1103 = vsub.s32 0, %v1102
      %v1104 = vrot.slane %v1094, %v1103
      %v1105 = vmul.f32 %v1084, %v1100
      %v1106 = vmul.f32 %v1084, %v1104
      %v1107 = vadd.f32 %v1073, %v1105
      %v1108 = vadd.f32 %v1074, %v1106
      %s1109 = sadd.s32 %s252, 9
      %s1110 = scalar_lea.vmem %s214, %s1109
      %v1111 = vld [vmem:[%s1110] sm:$0x7]
      %v1112 = vld [vmem:[%s466] sm:$0xf]
      %v1113 = vunpack.c.l.bf16 %v1112
      %v1114 = vunpack.c.l.bf16 %v1111
      %1116 = vset.pattern.permute.xlu0 0
      %1117 = vperm.xlu0 %1116, %v1113
      %v1118 = vpop.permute.xlu0 %1117
      %v1121 = vlaneseq
      %v1122 = vshrl.u32 %v1121, 7
      %v1123 = vsub.s32 0, %v1122
      %v1124 = vrot.slane %v1114, %v1123
      %v1125 = vlaneseq
      %v1126 = vshrl.u32 %v1125, 7
      %v1127 = vsub.s32 2, %v1126
      %v1128 = vrot.slane %v1114, %v1127
      %v1131 = vlaneseq
      %v1132 = vshrl.u32 %v1131, 7
      %v1133 = vsub.s32 0, %v1132
      %v1134 = vrot.slane %v1124, %v1133
      %v1135 = vlaneseq
      %v1136 = vshrl.u32 %v1135, 7
      %v1137 = vsub.s32 0, %v1136
      %v1138 = vrot.slane %v1128, %v1137
      %v1139 = vmul.f32 %v1118, %v1134
      %v1140 = vmul.f32 %v1118, %v1138
      %v1141 = vadd.f32 %v1107, %v1139
      %v1142 = vadd.f32 %v1108, %v1140
      %v1143 = vld [vmem:[%s498] sm:$0xf]
      %v1144 = vunpack.c.l.bf16 %v1143
      %1146 = vset.pattern.permute.xlu0 0
      %1147 = vperm.xlu0 %1146, %v1144
      %v1148 = vpop.permute.xlu0 %1147
      %v1150 = vlaneseq
      %v1151 = vshrl.u32 %v1150, 7
      %v1152 = vsub.s32 4, %v1151
      %v1153 = vrot.slane %v1114, %v1152
      %v1155 = vlaneseq
      %v1156 = vshrl.u32 %v1155, 7
      %v1157 = vsub.s32 0, %v1156
      %v1158 = vrot.slane %v1153, %v1157
      %v1159 = vmul.f32 %v1148, %v1134
      %v1160 = vmul.f32 %v1148, %v1138
      %v1161 = vmul.f32 %v1148, %v1158
      %1165 = vrot.lane.b32.xlu0 %v1159, 127
      %v1166 = vpop.permute.xlu0 %1165
      %1167 = vrot.lane.b32.xlu0 %v1160, 127
      %v1168 = vpop.permute.xlu0 %1167
      %1169 = vrot.lane.b32.xlu0 %v1161, 127
      %v1170 = vpop.permute.xlu0 %1169
      %v1171 = vsel %vm316, %v1166, %v1168
      %v1172 = vsel %vm316, %v1168, %v1170
      %v1175 = vadd.f32 %v1141, %v1171
      %v1176 = vadd.f32 %v1142, %v1172
      %s1177 = sadd.s32 %s1109, 27
      %s1178 = scalar_lea.vmem %s214, %s1177
      %v1179 = vld [vmem:[%s1178] sm:$0x7]
      %v1180 = vld [vmem:[%s536] sm:$0xf]
      %v1181 = vunpack.c.l.bf16 %v1180
      %v1182 = vunpack.c.l.bf16 %v1179
      %1184 = vset.pattern.permute.xlu0 0
      %1185 = vperm.xlu0 %1184, %v1181
      %v1186 = vpop.permute.xlu0 %1185
      %v1189 = vlaneseq
      %v1190 = vshrl.u32 %v1189, 7
      %v1191 = vsub.s32 0, %v1190
      %v1192 = vrot.slane %v1182, %v1191
      %v1193 = vlaneseq
      %v1194 = vshrl.u32 %v1193, 7
      %v1195 = vsub.s32 2, %v1194
      %v1196 = vrot.slane %v1182, %v1195
      %v1199 = vlaneseq
      %v1200 = vshrl.u32 %v1199, 7
      %v1201 = vsub.s32 0, %v1200
      %v1202 = vrot.slane %v1192, %v1201
      %v1203 = vlaneseq
      %v1204 = vshrl.u32 %v1203, 7
      %v1205 = vsub.s32 0, %v1204
      %v1206 = vrot.slane %v1196, %v1205
      %v1207 = vmul.f32 %v1186, %v1202
      %v1208 = vmul.f32 %v1186, %v1206
      %v1209 = vadd.f32 %v1175, %v1207
      %v1210 = vadd.f32 %v1176, %v1208
      %v1211 = vmul.f32 %v1209, %v244
      %v1212 = vmul.f32 %v1210, %v244
      %v1213 = vadd.f32 %v1211, %v250
      %v1214 = vadd.f32 %v1212, %v250
      %v1215 = vmax.f32 %v1213, 0.0
      %v1216 = vmax.f32 %v1214, 0.0
      %v1217 = vmin.f32 %v1215, 20.0
      %v1218 = vmin.f32 %v1216, 20.0
      %v1219 = vsel %vm238, 0.0, %v1217
      %v1220 = vsel %vm239, 0.0, %v1218
      %v1221 = vpack.c.bf16 %v1219, %v1219
      %v1222 = vpack.c.bf16 %v1220, %v1220
      %v1225 = vunpack.c.l.b16 %v1221
      %v1226 = vunpack.c.l.b16 %v1222
      %v1227 = vpack.c.b16 %v1226, %v1225
      %s1229 = scalar_lea.vmem %s223, 16
      %1230 = vst [vmem:[%s1229] sm:$0xff] %v1227
      %v1231 = vld [vmem:[%s1110] sm:$0x7]
      %v1232 = vld [vmem:[%s2] sm:$0xf]
      %v1233 = vunpack.c.l.bf16 %v1232
      %v1234 = vunpack.c.l.bf16 %v1231
      %1236 = vset.pattern.permute.xlu0 0
      %1237 = vperm.xlu0 %1236, %v1233
      %v1238 = vpop.permute.xlu0 %1237
      %v1241 = vlaneseq
      %v1242 = vshrl.u32 %v1241, 7
      %v1243 = vsub.s32 0, %v1242
      %v1244 = vrot.slane %v1234, %v1243
      %v1245 = vlaneseq
      %v1246 = vshrl.u32 %v1245, 7
      %v1247 = vsub.s32 2, %v1246
      %v1248 = vrot.slane %v1234, %v1247
      %v1251 = vlaneseq
      %v1252 = vshrl.u32 %v1251, 7
      %v1253 = vsub.s32 0, %v1252
      %v1254 = vrot.slane %v1244, %v1253
      %v1255 = vlaneseq
      %v1256 = vshrl.u32 %v1255, 7
      %v1257 = vsub.s32 0, %v1256
      %v1258 = vrot.slane %v1248, %v1257
      %v1259 = vmul.f32 %v1238, %v1254
      %v1260 = vmul.f32 %v1238, %v1258
      %v1261 = vadd.f32 %v1259, 0.0
      %v1262 = vadd.f32 %v1260, 0.0
      %v1263 = vld [vmem:[%s287] sm:$0xf]
      %v1264 = vunpack.c.l.bf16 %v1263
      %1266 = vset.pattern.permute.xlu0 0
      %1267 = vperm.xlu0 %1266, %v1264
      %v1268 = vpop.permute.xlu0 %1267
      %v1270 = vlaneseq
      %v1271 = vshrl.u32 %v1270, 7
      %v1272 = vsub.s32 4, %v1271
      %v1273 = vrot.slane %v1234, %v1272
      %v1275 = vlaneseq
      %v1276 = vshrl.u32 %v1275, 7
      %v1277 = vsub.s32 0, %v1276
      %v1278 = vrot.slane %v1273, %v1277
      %v1279 = vmul.f32 %v1268, %v1254
      %v1280 = vmul.f32 %v1268, %v1258
      %v1281 = vmul.f32 %v1268, %v1278
      %1285 = vrot.lane.b32.xlu0 %v1279, 127
      %v1286 = vpop.permute.xlu0 %1285
      %1287 = vrot.lane.b32.xlu0 %v1280, 127
      %v1288 = vpop.permute.xlu0 %1287
      %1289 = vrot.lane.b32.xlu0 %v1281, 127
      %v1290 = vpop.permute.xlu0 %1289
      %v1291 = vsel %vm316, %v1286, %v1288
      %v1292 = vsel %vm316, %v1288, %v1290
      %v1295 = vadd.f32 %v1261, %v1291
      %v1296 = vadd.f32 %v1262, %v1292
      %v1297 = vld [vmem:[%s1178] sm:$0x7]
      %v1298 = vld [vmem:[%s326] sm:$0xf]
      %v1299 = vunpack.c.l.bf16 %v1298
      %v1300 = vunpack.c.l.bf16 %v1297
      %1302 = vset.pattern.permute.xlu0 0
      %1303 = vperm.xlu0 %1302, %v1299
      %v1304 = vpop.permute.xlu0 %1303
      %v1307 = vlaneseq
      %v1308 = vshrl.u32 %v1307, 7
      %v1309 = vsub.s32 0, %v1308
      %v1310 = vrot.slane %v1300, %v1309
      %v1311 = vlaneseq
      %v1312 = vshrl.u32 %v1311, 7
      %v1313 = vsub.s32 2, %v1312
      %v1314 = vrot.slane %v1300, %v1313
      %v1317 = vlaneseq
      %v1318 = vshrl.u32 %v1317, 7
      %v1319 = vsub.s32 0, %v1318
      %v1320 = vrot.slane %v1310, %v1319
      %v1321 = vlaneseq
      %v1322 = vshrl.u32 %v1321, 7
      %v1323 = vsub.s32 0, %v1322
      %v1324 = vrot.slane %v1314, %v1323
      %v1325 = vmul.f32 %v1304, %v1320
      %v1326 = vmul.f32 %v1304, %v1324
      %v1327 = vadd.f32 %v1295, %v1325
      %v1328 = vadd.f32 %v1296, %v1326
      %s1329 = sadd.s32 %s1109, 54
      %s1330 = scalar_lea.vmem %s214, %s1329
      %v1331 = vld [vmem:[%s1330] sm:$0x7]
      %v1332 = vld [vmem:[%s361] sm:$0xf]
      %v1333 = vunpack.c.l.bf16 %v1332
      %v1334 = vunpack.c.l.bf16 %v1331
      %1336 = vset.pattern.permute.xlu0 0
      %1337 = vperm.xlu0 %1336, %v1333
      %v1338 = vpop.permute.xlu0 %1337
      %v1341 = vlaneseq
      %v1342 = vshrl.u32 %v1341, 7
      %v1343 = vsub.s32 0, %v1342
      %v1344 = vrot.slane %v1334, %v1343
      %v1345 = vlaneseq
      %v1346 = vshrl.u32 %v1345, 7
      %v1347 = vsub.s32 2, %v1346
      %v1348 = vrot.slane %v1334, %v1347
      %v1351 = vlaneseq
      %v1352 = vshrl.u32 %v1351, 7
      %v1353 = vsub.s32 0, %v1352
      %v1354 = vrot.slane %v1344, %v1353
      %v1355 = vlaneseq
      %v1356 = vshrl.u32 %v1355, 7
      %v1357 = vsub.s32 0, %v1356
      %v1358 = vrot.slane %v1348, %v1357
      %v1359 = vmul.f32 %v1338, %v1354
      %v1360 = vmul.f32 %v1338, %v1358
      %v1361 = vadd.f32 %v1327, %v1359
      %v1362 = vadd.f32 %v1328, %v1360
      %v1363 = vld [vmem:[%s393] sm:$0xf]
      %v1364 = vunpack.c.l.bf16 %v1363
      %1366 = vset.pattern.permute.xlu0 0
      %1367 = vperm.xlu0 %1366, %v1364
      %v1368 = vpop.permute.xlu0 %1367
      %v1370 = vlaneseq
      %v1371 = vshrl.u32 %v1370, 7
      %v1372 = vsub.s32 4, %v1371
      %v1373 = vrot.slane %v1334, %v1372
      %v1375 = vlaneseq
      %v1376 = vshrl.u32 %v1375, 7
      %v1377 = vsub.s32 0, %v1376
      %v1378 = vrot.slane %v1373, %v1377
      %v1379 = vmul.f32 %v1368, %v1354
      %v1380 = vmul.f32 %v1368, %v1358
      %v1381 = vmul.f32 %v1368, %v1378
      %1385 = vrot.lane.b32.xlu0 %v1379, 127
      %v1386 = vpop.permute.xlu0 %1385
      %1387 = vrot.lane.b32.xlu0 %v1380, 127
      %v1388 = vpop.permute.xlu0 %1387
      %1389 = vrot.lane.b32.xlu0 %v1381, 127
      %v1390 = vpop.permute.xlu0 %1389
      %v1391 = vsel %vm316, %v1386, %v1388
      %v1392 = vsel %vm316, %v1388, %v1390
      %v1395 = vadd.f32 %v1361, %v1391
      %v1396 = vadd.f32 %v1362, %v1392
      %s1397 = sadd.s32 %s1109, 81
      %s1398 = scalar_lea.vmem %s214, %s1397
      %v1399 = vld [vmem:[%s1398] sm:$0x7]
      %v1400 = vld [vmem:[%s431] sm:$0xf]
      %v1401 = vunpack.c.l.bf16 %v1400
      %v1402 = vunpack.c.l.bf16 %v1399
      %1404 = vset.pattern.permute.xlu0 0
      %1405 = vperm.xlu0 %1404, %v1401
      %v1406 = vpop.permute.xlu0 %1405
      %v1409 = vlaneseq
      %v1410 = vshrl.u32 %v1409, 7
      %v1411 = vsub.s32 0, %v1410
      %v1412 = vrot.slane %v1402, %v1411
      %v1413 = vlaneseq
      %v1414 = vshrl.u32 %v1413, 7
      %v1415 = vsub.s32 2, %v1414
      %v1416 = vrot.slane %v1402, %v1415
      %v1419 = vlaneseq
      %v1420 = vshrl.u32 %v1419, 7
      %v1421 = vsub.s32 0, %v1420
      %v1422 = vrot.slane %v1412, %v1421
      %v1423 = vlaneseq
      %v1424 = vshrl.u32 %v1423, 7
      %v1425 = vsub.s32 0, %v1424
      %v1426 = vrot.slane %v1416, %v1425
      %v1427 = vmul.f32 %v1406, %v1422
      %v1428 = vmul.f32 %v1406, %v1426
      %v1429 = vadd.f32 %v1395, %v1427
      %v1430 = vadd.f32 %v1396, %v1428
      %s1431 = sadd.s32 %s252, 12
      %s1432 = scalar_lea.vmem %s214, %s1431
      %v1433 = vld [vmem:[%s1432] sm:$0x7]
      %v1434 = vld [vmem:[%s466] sm:$0xf]
      %v1435 = vunpack.c.l.bf16 %v1434
      %v1436 = vunpack.c.l.bf16 %v1433
      %1438 = vset.pattern.permute.xlu0 0
      %1439 = vperm.xlu0 %1438, %v1435
      %v1440 = vpop.permute.xlu0 %1439
      %v1443 = vlaneseq
      %v1444 = vshrl.u32 %v1443, 7
      %v1445 = vsub.s32 0, %v1444
      %v1446 = vrot.slane %v1436, %v1445
      %v1447 = vlaneseq
      %v1448 = vshrl.u32 %v1447, 7
      %v1449 = vsub.s32 2, %v1448
      %v1450 = vrot.slane %v1436, %v1449
      %v1453 = vlaneseq
      %v1454 = vshrl.u32 %v1453, 7
      %v1455 = vsub.s32 0, %v1454
      %v1456 = vrot.slane %v1446, %v1455
      %v1457 = vlaneseq
      %v1458 = vshrl.u32 %v1457, 7
      %v1459 = vsub.s32 0, %v1458
      %v1460 = vrot.slane %v1450, %v1459
      %v1461 = vmul.f32 %v1440, %v1456
      %v1462 = vmul.f32 %v1440, %v1460
      %v1463 = vadd.f32 %v1429, %v1461
      %v1464 = vadd.f32 %v1430, %v1462
      %v1465 = vld [vmem:[%s498] sm:$0xf]
      %v1466 = vunpack.c.l.bf16 %v1465
      %1468 = vset.pattern.permute.xlu0 0
      %1469 = vperm.xlu0 %1468, %v1466
      %v1470 = vpop.permute.xlu0 %1469
      %v1472 = vlaneseq
      %v1473 = vshrl.u32 %v1472, 7
      %v1474 = vsub.s32 4, %v1473
      %v1475 = vrot.slane %v1436, %v1474
      %v1477 = vlaneseq
      %v1478 = vshrl.u32 %v1477, 7
      %v1479 = vsub.s32 0, %v1478
      %v1480 = vrot.slane %v1475, %v1479
      %v1481 = vmul.f32 %v1470, %v1456
      %v1482 = vmul.f32 %v1470, %v1460
      %v1483 = vmul.f32 %v1470, %v1480
      %1487 = vrot.lane.b32.xlu0 %v1481, 127
      %v1488 = vpop.permute.xlu0 %1487
      %1489 = vrot.lane.b32.xlu0 %v1482, 127
      %v1490 = vpop.permute.xlu0 %1489
      %1491 = vrot.lane.b32.xlu0 %v1483, 127
      %v1492 = vpop.permute.xlu0 %1491
      %v1493 = vsel %vm316, %v1488, %v1490
      %v1494 = vsel %vm316, %v1490, %v1492
      %v1497 = vadd.f32 %v1463, %v1493
      %v1498 = vadd.f32 %v1464, %v1494
      %s1499 = sadd.s32 %s1431, 27
      %s1500 = scalar_lea.vmem %s214, %s1499
      %v1501 = vld [vmem:[%s1500] sm:$0x7]
      %v1502 = vld [vmem:[%s536] sm:$0xf]
      %v1503 = vunpack.c.l.bf16 %v1502
      %v1504 = vunpack.c.l.bf16 %v1501
      %1506 = vset.pattern.permute.xlu0 0
      %1507 = vperm.xlu0 %1506, %v1503
      %v1508 = vpop.permute.xlu0 %1507
      %v1511 = vlaneseq
      %v1512 = vshrl.u32 %v1511, 7
      %v1513 = vsub.s32 0, %v1512
      %v1514 = vrot.slane %v1504, %v1513
      %v1515 = vlaneseq
      %v1516 = vshrl.u32 %v1515, 7
      %v1517 = vsub.s32 2, %v1516
      %v1518 = vrot.slane %v1504, %v1517
      %v1521 = vlaneseq
      %v1522 = vshrl.u32 %v1521, 7
      %v1523 = vsub.s32 0, %v1522
      %v1524 = vrot.slane %v1514, %v1523
      %v1525 = vlaneseq
      %v1526 = vshrl.u32 %v1525, 7
      %v1527 = vsub.s32 0, %v1526
      %v1528 = vrot.slane %v1518, %v1527
      %v1529 = vmul.f32 %v1508, %v1524
      %v1530 = vmul.f32 %v1508, %v1528
      %v1531 = vadd.f32 %v1497, %v1529
      %v1532 = vadd.f32 %v1498, %v1530
      %v1533 = vmul.f32 %v1531, %v244
      %v1534 = vmul.f32 %v1532, %v244
      %v1535 = vadd.f32 %v1533, %v250
      %v1536 = vadd.f32 %v1534, %v250
      %v1537 = vmax.f32 %v1535, 0.0
      %v1538 = vmax.f32 %v1536, 0.0
      %v1539 = vmin.f32 %v1537, 20.0
      %v1540 = vmin.f32 %v1538, 20.0
      %v1541 = vsel %vm238, 0.0, %v1539
      %v1542 = vsel %vm239, 0.0, %v1540
      %v1543 = vpack.c.bf16 %v1541, %v1541
      %v1544 = vpack.c.bf16 %v1542, %v1542
      %v1547 = vunpack.c.l.b16 %v1543
      %v1548 = vunpack.c.l.b16 %v1544
      %v1549 = vpack.c.b16 %v1548, %v1547
      %s1551 = scalar_lea.vmem %s223, 24
      %1552 = vst [vmem:[%s1551] sm:$0xff] %v1549
      %v1553 = vld [vmem:[%s1432] sm:$0x7]
      %v1554 = vld [vmem:[%s2] sm:$0xf]
      %v1555 = vunpack.c.l.bf16 %v1554
      %v1556 = vunpack.c.l.bf16 %v1553
      %1558 = vset.pattern.permute.xlu0 0
      %1559 = vperm.xlu0 %1558, %v1555
      %v1560 = vpop.permute.xlu0 %1559
      %v1563 = vlaneseq
      %v1564 = vshrl.u32 %v1563, 7
      %v1565 = vsub.s32 0, %v1564
      %v1566 = vrot.slane %v1556, %v1565
      %v1567 = vlaneseq
      %v1568 = vshrl.u32 %v1567, 7
      %v1569 = vsub.s32 2, %v1568
      %v1570 = vrot.slane %v1556, %v1569
      %v1573 = vlaneseq
      %v1574 = vshrl.u32 %v1573, 7
      %v1575 = vsub.s32 0, %v1574
      %v1576 = vrot.slane %v1566, %v1575
      %v1577 = vlaneseq
      %v1578 = vshrl.u32 %v1577, 7
      %v1579 = vsub.s32 0, %v1578
      %v1580 = vrot.slane %v1570, %v1579
      %v1581 = vmul.f32 %v1560, %v1576
      %v1582 = vmul.f32 %v1560, %v1580
      %v1583 = vadd.f32 %v1581, 0.0
      %v1584 = vadd.f32 %v1582, 0.0
      %v1585 = vld [vmem:[%s287] sm:$0xf]
      %v1586 = vunpack.c.l.bf16 %v1585
      %1588 = vset.pattern.permute.xlu0 0
      %1589 = vperm.xlu0 %1588, %v1586
      %v1590 = vpop.permute.xlu0 %1589
      %v1592 = vlaneseq
      %v1593 = vshrl.u32 %v1592, 7
      %v1594 = vsub.s32 4, %v1593
      %v1595 = vrot.slane %v1556, %v1594
      %v1597 = vlaneseq
      %v1598 = vshrl.u32 %v1597, 7
      %v1599 = vsub.s32 0, %v1598
      %v1600 = vrot.slane %v1595, %v1599
      %v1601 = vmul.f32 %v1590, %v1576
      %v1602 = vmul.f32 %v1590, %v1580
      %v1603 = vmul.f32 %v1590, %v1600
      %1607 = vrot.lane.b32.xlu0 %v1601, 127
      %v1608 = vpop.permute.xlu0 %1607
      %1609 = vrot.lane.b32.xlu0 %v1602, 127
      %v1610 = vpop.permute.xlu0 %1609
      %1611 = vrot.lane.b32.xlu0 %v1603, 127
      %v1612 = vpop.permute.xlu0 %1611
      %v1613 = vsel %vm316, %v1608, %v1610
      %v1614 = vsel %vm316, %v1610, %v1612
      %v1617 = vadd.f32 %v1583, %v1613
      %v1618 = vadd.f32 %v1584, %v1614
      %v1619 = vld [vmem:[%s1500] sm:$0x7]
      %v1620 = vld [vmem:[%s326] sm:$0xf]
      %v1621 = vunpack.c.l.bf16 %v1620
      %v1622 = vunpack.c.l.bf16 %v1619
      %1624 = vset.pattern.permute.xlu0 0
      %1625 = vperm.xlu0 %1624, %v1621
      %v1626 = vpop.permute.xlu0 %1625
      %v1629 = vlaneseq
      %v1630 = vshrl.u32 %v1629, 7
      %v1631 = vsub.s32 0, %v1630
      %v1632 = vrot.slane %v1622, %v1631
      %v1633 = vlaneseq
      %v1634 = vshrl.u32 %v1633, 7
      %v1635 = vsub.s32 2, %v1634
      %v1636 = vrot.slane %v1622, %v1635
      %v1639 = vlaneseq
      %v1640 = vshrl.u32 %v1639, 7
      %v1641 = vsub.s32 0, %v1640
      %v1642 = vrot.slane %v1632, %v1641
      %v1643 = vlaneseq
      %v1644 = vshrl.u32 %v1643, 7
      %v1645 = vsub.s32 0, %v1644
      %v1646 = vrot.slane %v1636, %v1645
      %v1647 = vmul.f32 %v1626, %v1642
      %v1648 = vmul.f32 %v1626, %v1646
      %v1649 = vadd.f32 %v1617, %v1647
      %v1650 = vadd.f32 %v1618, %v1648
      %s1651 = sadd.s32 %s1431, 54
      %s1652 = scalar_lea.vmem %s214, %s1651
      %v1653 = vld [vmem:[%s1652] sm:$0x7]
      %v1654 = vld [vmem:[%s361] sm:$0xf]
      %v1655 = vunpack.c.l.bf16 %v1654
      %v1656 = vunpack.c.l.bf16 %v1653
      %1658 = vset.pattern.permute.xlu0 0
      %1659 = vperm.xlu0 %1658, %v1655
      %v1660 = vpop.permute.xlu0 %1659
      %v1663 = vlaneseq
      %v1664 = vshrl.u32 %v1663, 7
      %v1665 = vsub.s32 0, %v1664
      %v1666 = vrot.slane %v1656, %v1665
      %v1667 = vlaneseq
      %v1668 = vshrl.u32 %v1667, 7
      %v1669 = vsub.s32 2, %v1668
      %v1670 = vrot.slane %v1656, %v1669
      %v1673 = vlaneseq
      %v1674 = vshrl.u32 %v1673, 7
      %v1675 = vsub.s32 0, %v1674
      %v1676 = vrot.slane %v1666, %v1675
      %v1677 = vlaneseq
      %v1678 = vshrl.u32 %v1677, 7
      %v1679 = vsub.s32 0, %v1678
      %v1680 = vrot.slane %v1670, %v1679
      %v1681 = vmul.f32 %v1660, %v1676
      %v1682 = vmul.f32 %v1660, %v1680
      %v1683 = vadd.f32 %v1649, %v1681
      %v1684 = vadd.f32 %v1650, %v1682
      %v1685 = vld [vmem:[%s393] sm:$0xf]
      %v1686 = vunpack.c.l.bf16 %v1685
      %1688 = vset.pattern.permute.xlu0 0
      %1689 = vperm.xlu0 %1688, %v1686
      %v1690 = vpop.permute.xlu0 %1689
      %v1692 = vlaneseq
      %v1693 = vshrl.u32 %v1692, 7
      %v1694 = vsub.s32 4, %v1693
      %v1695 = vrot.slane %v1656, %v1694
      %v1697 = vlaneseq
      %v1698 = vshrl.u32 %v1697, 7
      %v1699 = vsub.s32 0, %v1698
      %v1700 = vrot.slane %v1695, %v1699
      %v1701 = vmul.f32 %v1690, %v1676
      %v1702 = vmul.f32 %v1690, %v1680
      %v1703 = vmul.f32 %v1690, %v1700
      %1707 = vrot.lane.b32.xlu0 %v1701, 127
      %v1708 = vpop.permute.xlu0 %1707
      %1709 = vrot.lane.b32.xlu0 %v1702, 127
      %v1710 = vpop.permute.xlu0 %1709
      %1711 = vrot.lane.b32.xlu0 %v1703, 127
      %v1712 = vpop.permute.xlu0 %1711
      %v1713 = vsel %vm316, %v1708, %v1710
      %v1714 = vsel %vm316, %v1710, %v1712
      %v1717 = vadd.f32 %v1683, %v1713
      %v1718 = vadd.f32 %v1684, %v1714
      %s1719 = sadd.s32 %s1431, 81
      %s1720 = scalar_lea.vmem %s214, %s1719
      %v1721 = vld [vmem:[%s1720] sm:$0x7]
      %v1722 = vld [vmem:[%s431] sm:$0xf]
      %v1723 = vunpack.c.l.bf16 %v1722
      %v1724 = vunpack.c.l.bf16 %v1721
      %1726 = vset.pattern.permute.xlu0 0
      %1727 = vperm.xlu0 %1726, %v1723
      %v1728 = vpop.permute.xlu0 %1727
      %v1731 = vlaneseq
      %v1732 = vshrl.u32 %v1731, 7
      %v1733 = vsub.s32 0, %v1732
      %v1734 = vrot.slane %v1724, %v1733
      %v1735 = vlaneseq
      %v1736 = vshrl.u32 %v1735, 7
      %v1737 = vsub.s32 2, %v1736
      %v1738 = vrot.slane %v1724, %v1737
      %v1741 = vlaneseq
      %v1742 = vshrl.u32 %v1741, 7
      %v1743 = vsub.s32 0, %v1742
      %v1744 = vrot.slane %v1734, %v1743
      %v1745 = vlaneseq
      %v1746 = vshrl.u32 %v1745, 7
      %v1747 = vsub.s32 0, %v1746
      %v1748 = vrot.slane %v1738, %v1747
      %v1749 = vmul.f32 %v1728, %v1744
      %v1750 = vmul.f32 %v1728, %v1748
      %v1751 = vadd.f32 %v1717, %v1749
      %v1752 = vadd.f32 %v1718, %v1750
      %s1753 = sadd.s32 %s252, 15
      %s1754 = scalar_lea.vmem %s214, %s1753
      %v1755 = vld [vmem:[%s1754] sm:$0x7]
      %v1756 = vld [vmem:[%s466] sm:$0xf]
      %v1757 = vunpack.c.l.bf16 %v1756
      %v1758 = vunpack.c.l.bf16 %v1755
      %1760 = vset.pattern.permute.xlu0 0
      %1761 = vperm.xlu0 %1760, %v1757
      %v1762 = vpop.permute.xlu0 %1761
      %v1765 = vlaneseq
      %v1766 = vshrl.u32 %v1765, 7
      %v1767 = vsub.s32 0, %v1766
      %v1768 = vrot.slane %v1758, %v1767
      %v1769 = vlaneseq
      %v1770 = vshrl.u32 %v1769, 7
      %v1771 = vsub.s32 2, %v1770
      %v1772 = vrot.slane %v1758, %v1771
      %v1775 = vlaneseq
      %v1776 = vshrl.u32 %v1775, 7
      %v1777 = vsub.s32 0, %v1776
      %v1778 = vrot.slane %v1768, %v1777
      %v1779 = vlaneseq
      %v1780 = vshrl.u32 %v1779, 7
      %v1781 = vsub.s32 0, %v1780
      %v1782 = vrot.slane %v1772, %v1781
      %v1783 = vmul.f32 %v1762, %v1778
      %v1784 = vmul.f32 %v1762, %v1782
      %v1785 = vadd.f32 %v1751, %v1783
      %v1786 = vadd.f32 %v1752, %v1784
      %v1787 = vld [vmem:[%s498] sm:$0xf]
      %v1788 = vunpack.c.l.bf16 %v1787
      %1790 = vset.pattern.permute.xlu0 0
      %1791 = vperm.xlu0 %1790, %v1788
      %v1792 = vpop.permute.xlu0 %1791
      %v1794 = vlaneseq
      %v1795 = vshrl.u32 %v1794, 7
      %v1796 = vsub.s32 4, %v1795
      %v1797 = vrot.slane %v1758, %v1796
      %v1799 = vlaneseq
      %v1800 = vshrl.u32 %v1799, 7
      %v1801 = vsub.s32 0, %v1800
      %v1802 = vrot.slane %v1797, %v1801
      %v1803 = vmul.f32 %v1792, %v1778
      %v1804 = vmul.f32 %v1792, %v1782
      %v1805 = vmul.f32 %v1792, %v1802
      %1809 = vrot.lane.b32.xlu0 %v1803, 127
      %v1810 = vpop.permute.xlu0 %1809
      %1811 = vrot.lane.b32.xlu0 %v1804, 127
      %v1812 = vpop.permute.xlu0 %1811
      %1813 = vrot.lane.b32.xlu0 %v1805, 127
      %v1814 = vpop.permute.xlu0 %1813
      %v1815 = vsel %vm316, %v1810, %v1812
      %v1816 = vsel %vm316, %v1812, %v1814
      %v1819 = vadd.f32 %v1785, %v1815
      %v1820 = vadd.f32 %v1786, %v1816
      %s1821 = sadd.s32 %s1753, 27
      %s1822 = scalar_lea.vmem %s214, %s1821
      %v1823 = vld [vmem:[%s1822] sm:$0x7]
      %v1824 = vld [vmem:[%s536] sm:$0xf]
      %v1825 = vunpack.c.l.bf16 %v1824
      %v1826 = vunpack.c.l.bf16 %v1823
      %1828 = vset.pattern.permute.xlu0 0
      %1829 = vperm.xlu0 %1828, %v1825
      %v1830 = vpop.permute.xlu0 %1829
      %v1833 = vlaneseq
      %v1834 = vshrl.u32 %v1833, 7
      %v1835 = vsub.s32 0, %v1834
      %v1836 = vrot.slane %v1826, %v1835
      %v1837 = vlaneseq
      %v1838 = vshrl.u32 %v1837, 7
      %v1839 = vsub.s32 2, %v1838
      %v1840 = vrot.slane %v1826, %v1839
      %v1843 = vlaneseq
      %v1844 = vshrl.u32 %v1843, 7
      %v1845 = vsub.s32 0, %v1844
      %v1846 = vrot.slane %v1836, %v1845
      %v1847 = vlaneseq
      %v1848 = vshrl.u32 %v1847, 7
      %v1849 = vsub.s32 0, %v1848
      %v1850 = vrot.slane %v1840, %v1849
      %v1851 = vmul.f32 %v1830, %v1846
      %v1852 = vmul.f32 %v1830, %v1850
      %v1853 = vadd.f32 %v1819, %v1851
      %v1854 = vadd.f32 %v1820, %v1852
      %v1855 = vmul.f32 %v1853, %v244
      %v1856 = vmul.f32 %v1854, %v244
      %v1857 = vadd.f32 %v1855, %v250
      %v1858 = vadd.f32 %v1856, %v250
      %v1859 = vmax.f32 %v1857, 0.0
      %v1860 = vmax.f32 %v1858, 0.0
      %v1861 = vmin.f32 %v1859, 20.0
      %v1862 = vmin.f32 %v1860, 20.0
      %v1863 = vsel %vm238, 0.0, %v1861
      %v1864 = vsel %vm239, 0.0, %v1862
      %v1865 = vpack.c.bf16 %v1863, %v1863
      %v1866 = vpack.c.bf16 %v1864, %v1864
      %v1869 = vunpack.c.l.b16 %v1865
      %v1870 = vunpack.c.l.b16 %v1866
      %v1871 = vpack.c.b16 %v1870, %v1869
      %s1873 = scalar_lea.vmem %s223, 32
      %1874 = vst [vmem:[%s1873] sm:$0xff] %v1871
      %v1875 = vld [vmem:[%s1754] sm:$0x7]
      %v1876 = vld [vmem:[%s2] sm:$0xf]
      %v1877 = vunpack.c.l.bf16 %v1876
      %v1878 = vunpack.c.l.bf16 %v1875
      %1880 = vset.pattern.permute.xlu0 0
      %1881 = vperm.xlu0 %1880, %v1877
      %v1882 = vpop.permute.xlu0 %1881
      %v1885 = vlaneseq
      %v1886 = vshrl.u32 %v1885, 7
      %v1887 = vsub.s32 0, %v1886
      %v1888 = vrot.slane %v1878, %v1887
      %v1889 = vlaneseq
      %v1890 = vshrl.u32 %v1889, 7
      %v1891 = vsub.s32 2, %v1890
      %v1892 = vrot.slane %v1878, %v1891
      %v1895 = vlaneseq
      %v1896 = vshrl.u32 %v1895, 7
      %v1897 = vsub.s32 0, %v1896
      %v1898 = vrot.slane %v1888, %v1897
      %v1899 = vlaneseq
      %v1900 = vshrl.u32 %v1899, 7
      %v1901 = vsub.s32 0, %v1900
      %v1902 = vrot.slane %v1892, %v1901
      %v1903 = vmul.f32 %v1882, %v1898
      %v1904 = vmul.f32 %v1882, %v1902
      %v1905 = vadd.f32 %v1903, 0.0
      %v1906 = vadd.f32 %v1904, 0.0
      %v1907 = vld [vmem:[%s287] sm:$0xf]
      %v1908 = vunpack.c.l.bf16 %v1907
      %1910 = vset.pattern.permute.xlu0 0
      %1911 = vperm.xlu0 %1910, %v1908
      %v1912 = vpop.permute.xlu0 %1911
      %v1914 = vlaneseq
      %v1915 = vshrl.u32 %v1914, 7
      %v1916 = vsub.s32 4, %v1915
      %v1917 = vrot.slane %v1878, %v1916
      %v1919 = vlaneseq
      %v1920 = vshrl.u32 %v1919, 7
      %v1921 = vsub.s32 0, %v1920
      %v1922 = vrot.slane %v1917, %v1921
      %v1923 = vmul.f32 %v1912, %v1898
      %v1924 = vmul.f32 %v1912, %v1902
      %v1925 = vmul.f32 %v1912, %v1922
      %1929 = vrot.lane.b32.xlu0 %v1923, 127
      %v1930 = vpop.permute.xlu0 %1929
      %1931 = vrot.lane.b32.xlu0 %v1924, 127
      %v1932 = vpop.permute.xlu0 %1931
      %1933 = vrot.lane.b32.xlu0 %v1925, 127
      %v1934 = vpop.permute.xlu0 %1933
      %v1935 = vsel %vm316, %v1930, %v1932
      %v1936 = vsel %vm316, %v1932, %v1934
      %v1939 = vadd.f32 %v1905, %v1935
      %v1940 = vadd.f32 %v1906, %v1936
      %v1941 = vld [vmem:[%s1822] sm:$0x7]
      %v1942 = vld [vmem:[%s326] sm:$0xf]
      %v1943 = vunpack.c.l.bf16 %v1942
      %v1944 = vunpack.c.l.bf16 %v1941
      %1946 = vset.pattern.permute.xlu0 0
      %1947 = vperm.xlu0 %1946, %v1943
      %v1948 = vpop.permute.xlu0 %1947
      %v1951 = vlaneseq
      %v1952 = vshrl.u32 %v1951, 7
      %v1953 = vsub.s32 0, %v1952
      %v1954 = vrot.slane %v1944, %v1953
      %v1955 = vlaneseq
      %v1956 = vshrl.u32 %v1955, 7
      %v1957 = vsub.s32 2, %v1956
      %v1958 = vrot.slane %v1944, %v1957
      %v1961 = vlaneseq
      %v1962 = vshrl.u32 %v1961, 7
      %v1963 = vsub.s32 0, %v1962
      %v1964 = vrot.slane %v1954, %v1963
      %v1965 = vlaneseq
      %v1966 = vshrl.u32 %v1965, 7
      %v1967 = vsub.s32 0, %v1966
      %v1968 = vrot.slane %v1958, %v1967
      %v1969 = vmul.f32 %v1948, %v1964
      %v1970 = vmul.f32 %v1948, %v1968
      %v1971 = vadd.f32 %v1939, %v1969
      %v1972 = vadd.f32 %v1940, %v1970
      %s1973 = sadd.s32 %s1753, 54
      %s1974 = scalar_lea.vmem %s214, %s1973
      %v1975 = vld [vmem:[%s1974] sm:$0x7]
      %v1976 = vld [vmem:[%s361] sm:$0xf]
      %v1977 = vunpack.c.l.bf16 %v1976
      %v1978 = vunpack.c.l.bf16 %v1975
      %1980 = vset.pattern.permute.xlu0 0
      %1981 = vperm.xlu0 %1980, %v1977
      %v1982 = vpop.permute.xlu0 %1981
      %v1985 = vlaneseq
      %v1986 = vshrl.u32 %v1985, 7
      %v1987 = vsub.s32 0, %v1986
      %v1988 = vrot.slane %v1978, %v1987
      %v1989 = vlaneseq
      %v1990 = vshrl.u32 %v1989, 7
      %v1991 = vsub.s32 2, %v1990
      %v1992 = vrot.slane %v1978, %v1991
      %v1995 = vlaneseq
      %v1996 = vshrl.u32 %v1995, 7
      %v1997 = vsub.s32 0, %v1996
      %v1998 = vrot.slane %v1988, %v1997
      %v1999 = vlaneseq
      %v2000 = vshrl.u32 %v1999, 7
      %v2001 = vsub.s32 0, %v2000
      %v2002 = vrot.slane %v1992, %v2001
      %v2003 = vmul.f32 %v1982, %v1998
      %v2004 = vmul.f32 %v1982, %v2002
      %v2005 = vadd.f32 %v1971, %v2003
      %v2006 = vadd.f32 %v1972, %v2004
      %v2007 = vld [vmem:[%s393] sm:$0xf]
      %v2008 = vunpack.c.l.bf16 %v2007
      %2010 = vset.pattern.permute.xlu0 0
      %2011 = vperm.xlu0 %2010, %v2008
      %v2012 = vpop.permute.xlu0 %2011
      %v2014 = vlaneseq
      %v2015 = vshrl.u32 %v2014, 7
      %v2016 = vsub.s32 4, %v2015
      %v2017 = vrot.slane %v1978, %v2016
      %v2019 = vlaneseq
      %v2020 = vshrl.u32 %v2019, 7
      %v2021 = vsub.s32 0, %v2020
      %v2022 = vrot.slane %v2017, %v2021
      %v2023 = vmul.f32 %v2012, %v1998
      %v2024 = vmul.f32 %v2012, %v2002
      %v2025 = vmul.f32 %v2012, %v2022
      %2029 = vrot.lane.b32.xlu0 %v2023, 127
      %v2030 = vpop.permute.xlu0 %2029
      %2031 = vrot.lane.b32.xlu0 %v2024, 127
      %v2032 = vpop.permute.xlu0 %2031
      %2033 = vrot.lane.b32.xlu0 %v2025, 127
      %v2034 = vpop.permute.xlu0 %2033
      %v2035 = vsel %vm316, %v2030, %v2032
      %v2036 = vsel %vm316, %v2032, %v2034
      %v2039 = vadd.f32 %v2005, %v2035
      %v2040 = vadd.f32 %v2006, %v2036
      %s2041 = sadd.s32 %s1753, 81
      %s2042 = scalar_lea.vmem %s214, %s2041
      %v2043 = vld [vmem:[%s2042] sm:$0x7]
      %v2044 = vld [vmem:[%s431] sm:$0xf]
      %v2045 = vunpack.c.l.bf16 %v2044
      %v2046 = vunpack.c.l.bf16 %v2043
      %2048 = vset.pattern.permute.xlu0 0
      %2049 = vperm.xlu0 %2048, %v2045
      %v2050 = vpop.permute.xlu0 %2049
      %v2053 = vlaneseq
      %v2054 = vshrl.u32 %v2053, 7
      %v2055 = vsub.s32 0, %v2054
      %v2056 = vrot.slane %v2046, %v2055
      %v2057 = vlaneseq
      %v2058 = vshrl.u32 %v2057, 7
      %v2059 = vsub.s32 2, %v2058
      %v2060 = vrot.slane %v2046, %v2059
      %v2063 = vlaneseq
      %v2064 = vshrl.u32 %v2063, 7
      %v2065 = vsub.s32 0, %v2064
      %v2066 = vrot.slane %v2056, %v2065
      %v2067 = vlaneseq
      %v2068 = vshrl.u32 %v2067, 7
      %v2069 = vsub.s32 0, %v2068
      %v2070 = vrot.slane %v2060, %v2069
      %v2071 = vmul.f32 %v2050, %v2066
      %v2072 = vmul.f32 %v2050, %v2070
      %v2073 = vadd.f32 %v2039, %v2071
      %v2074 = vadd.f32 %v2040, %v2072
      %s2075 = sadd.s32 %s252, 18
      %s2076 = scalar_lea.vmem %s214, %s2075
      %v2077 = vld [vmem:[%s2076] sm:$0x7]
      %v2078 = vld [vmem:[%s466] sm:$0xf]
      %v2079 = vunpack.c.l.bf16 %v2078
      %v2080 = vunpack.c.l.bf16 %v2077
      %2082 = vset.pattern.permute.xlu0 0
      %2083 = vperm.xlu0 %2082, %v2079
      %v2084 = vpop.permute.xlu0 %2083
      %v2087 = vlaneseq
      %v2088 = vshrl.u32 %v2087, 7
      %v2089 = vsub.s32 0, %v2088
      %v2090 = vrot.slane %v2080, %v2089
      %v2091 = vlaneseq
      %v2092 = vshrl.u32 %v2091, 7
      %v2093 = vsub.s32 2, %v2092
      %v2094 = vrot.slane %v2080, %v2093
      %v2097 = vlaneseq
      %v2098 = vshrl.u32 %v2097, 7
      %v2099 = vsub.s32 0, %v2098
      %v2100 = vrot.slane %v2090, %v2099
      %v2101 = vlaneseq
      %v2102 = vshrl.u32 %v2101, 7
      %v2103 = vsub.s32 0, %v2102
      %v2104 = vrot.slane %v2094, %v2103
      %v2105 = vmul.f32 %v2084, %v2100
      %v2106 = vmul.f32 %v2084, %v2104
      %v2107 = vadd.f32 %v2073, %v2105
      %v2108 = vadd.f32 %v2074, %v2106
      %v2109 = vld [vmem:[%s498] sm:$0xf]
      %v2110 = vunpack.c.l.bf16 %v2109
      %2112 = vset.pattern.permute.xlu0 0
      %2113 = vperm.xlu0 %2112, %v2110
      %v2114 = vpop.permute.xlu0 %2113
      %v2116 = vlaneseq
      %v2117 = vshrl.u32 %v2116, 7
      %v2118 = vsub.s32 4, %v2117
      %v2119 = vrot.slane %v2080, %v2118
      %v2121 = vlaneseq
      %v2122 = vshrl.u32 %v2121, 7
      %v2123 = vsub.s32 0, %v2122
      %v2124 = vrot.slane %v2119, %v2123
      %v2125 = vmul.f32 %v2114, %v2100
      %v2126 = vmul.f32 %v2114, %v2104
      %v2127 = vmul.f32 %v2114, %v2124
      %2131 = vrot.lane.b32.xlu0 %v2125, 127
      %v2132 = vpop.permute.xlu0 %2131
      %2133 = vrot.lane.b32.xlu0 %v2126, 127
      %v2134 = vpop.permute.xlu0 %2133
      %2135 = vrot.lane.b32.xlu0 %v2127, 127
      %v2136 = vpop.permute.xlu0 %2135
      %v2137 = vsel %vm316, %v2132, %v2134
      %v2138 = vsel %vm316, %v2134, %v2136
      %v2141 = vadd.f32 %v2107, %v2137
      %v2142 = vadd.f32 %v2108, %v2138
      %s2143 = sadd.s32 %s2075, 27
      %s2144 = scalar_lea.vmem %s214, %s2143
      %v2145 = vld [vmem:[%s2144] sm:$0x7]
      %v2146 = vld [vmem:[%s536] sm:$0xf]
      %v2147 = vunpack.c.l.bf16 %v2146
      %v2148 = vunpack.c.l.bf16 %v2145
      %2150 = vset.pattern.permute.xlu0 0
      %2151 = vperm.xlu0 %2150, %v2147
      %v2152 = vpop.permute.xlu0 %2151
      %v2155 = vlaneseq
      %v2156 = vshrl.u32 %v2155, 7
      %v2157 = vsub.s32 0, %v2156
      %v2158 = vrot.slane %v2148, %v2157
      %v2159 = vlaneseq
      %v2160 = vshrl.u32 %v2159, 7
      %v2161 = vsub.s32 2, %v2160
      %v2162 = vrot.slane %v2148, %v2161
      %v2165 = vlaneseq
      %v2166 = vshrl.u32 %v2165, 7
      %v2167 = vsub.s32 0, %v2166
      %v2168 = vrot.slane %v2158, %v2167
      %v2169 = vlaneseq
      %v2170 = vshrl.u32 %v2169, 7
      %v2171 = vsub.s32 0, %v2170
      %v2172 = vrot.slane %v2162, %v2171
      %v2173 = vmul.f32 %v2152, %v2168
      %v2174 = vmul.f32 %v2152, %v2172
      %v2175 = vadd.f32 %v2141, %v2173
      %v2176 = vadd.f32 %v2142, %v2174
      %v2177 = vmul.f32 %v2175, %v244
      %v2178 = vmul.f32 %v2176, %v244
      %v2179 = vadd.f32 %v2177, %v250
      %v2180 = vadd.f32 %v2178, %v250
      %v2181 = vmax.f32 %v2179, 0.0
      %v2182 = vmax.f32 %v2180, 0.0
      %v2183 = vmin.f32 %v2181, 20.0
      %v2184 = vmin.f32 %v2182, 20.0
      %v2185 = vsel %vm238, 0.0, %v2183
      %v2186 = vsel %vm239, 0.0, %v2184
      %v2187 = vpack.c.bf16 %v2185, %v2185
      %v2188 = vpack.c.bf16 %v2186, %v2186
      %v2191 = vunpack.c.l.b16 %v2187
      %v2192 = vunpack.c.l.b16 %v2188
      %v2193 = vpack.c.b16 %v2192, %v2191
      %s2195 = scalar_lea.vmem %s223, 40
      %2196 = vst [vmem:[%s2195] sm:$0xff] %v2193
      %v2197 = vld [vmem:[%s2076] sm:$0x7]
      %v2198 = vld [vmem:[%s2] sm:$0xf]
      %v2199 = vunpack.c.l.bf16 %v2198
      %v2200 = vunpack.c.l.bf16 %v2197
      %2202 = vset.pattern.permute.xlu0 0
      %2203 = vperm.xlu0 %2202, %v2199
      %v2204 = vpop.permute.xlu0 %2203
      %v2207 = vlaneseq
      %v2208 = vshrl.u32 %v2207, 7
      %v2209 = vsub.s32 0, %v2208
      %v2210 = vrot.slane %v2200, %v2209
      %v2211 = vlaneseq
      %v2212 = vshrl.u32 %v2211, 7
      %v2213 = vsub.s32 2, %v2212
      %v2214 = vrot.slane %v2200, %v2213
      %v2217 = vlaneseq
      %v2218 = vshrl.u32 %v2217, 7
      %v2219 = vsub.s32 0, %v2218
      %v2220 = vrot.slane %v2210, %v2219
      %v2221 = vlaneseq
      %v2222 = vshrl.u32 %v2221, 7
      %v2223 = vsub.s32 0, %v2222
      %v2224 = vrot.slane %v2214, %v2223
      %v2225 = vmul.f32 %v2204, %v2220
      %v2226 = vmul.f32 %v2204, %v2224
      %v2227 = vadd.f32 %v2225, 0.0
      %v2228 = vadd.f32 %v2226, 0.0
      %v2229 = vld [vmem:[%s287] sm:$0xf]
      %v2230 = vunpack.c.l.bf16 %v2229
      %2232 = vset.pattern.permute.xlu0 0
      %2233 = vperm.xlu0 %2232, %v2230
      %v2234 = vpop.permute.xlu0 %2233
      %v2236 = vlaneseq
      %v2237 = vshrl.u32 %v2236, 7
      %v2238 = vsub.s32 4, %v2237
      %v2239 = vrot.slane %v2200, %v2238
      %v2241 = vlaneseq
      %v2242 = vshrl.u32 %v2241, 7
      %v2243 = vsub.s32 0, %v2242
      %v2244 = vrot.slane %v2239, %v2243
      %v2245 = vmul.f32 %v2234, %v2220
      %v2246 = vmul.f32 %v2234, %v2224
      %v2247 = vmul.f32 %v2234, %v2244
      %2251 = vrot.lane.b32.xlu0 %v2245, 127
      %v2252 = vpop.permute.xlu0 %2251
      %2253 = vrot.lane.b32.xlu0 %v2246, 127
      %v2254 = vpop.permute.xlu0 %2253
      %2255 = vrot.lane.b32.xlu0 %v2247, 127
      %v2256 = vpop.permute.xlu0 %2255
      %v2257 = vsel %vm316, %v2252, %v2254
      %v2258 = vsel %vm316, %v2254, %v2256
      %v2261 = vadd.f32 %v2227, %v2257
      %v2262 = vadd.f32 %v2228, %v2258
      %v2263 = vld [vmem:[%s2144] sm:$0x7]
      %v2264 = vld [vmem:[%s326] sm:$0xf]
      %v2265 = vunpack.c.l.bf16 %v2264
      %v2266 = vunpack.c.l.bf16 %v2263
      %2268 = vset.pattern.permute.xlu0 0
      %2269 = vperm.xlu0 %2268, %v2265
      %v2270 = vpop.permute.xlu0 %2269
      %v2273 = vlaneseq
      %v2274 = vshrl.u32 %v2273, 7
      %v2275 = vsub.s32 0, %v2274
      %v2276 = vrot.slane %v2266, %v2275
      %v2277 = vlaneseq
      %v2278 = vshrl.u32 %v2277, 7
      %v2279 = vsub.s32 2, %v2278
      %v2280 = vrot.slane %v2266, %v2279
      %v2283 = vlaneseq
      %v2284 = vshrl.u32 %v2283, 7
      %v2285 = vsub.s32 0, %v2284
      %v2286 = vrot.slane %v2276, %v2285
      %v2287 = vlaneseq
      %v2288 = vshrl.u32 %v2287, 7
      %v2289 = vsub.s32 0, %v2288
      %v2290 = vrot.slane %v2280, %v2289
      %v2291 = vmul.f32 %v2270, %v2286
      %v2292 = vmul.f32 %v2270, %v2290
      %v2293 = vadd.f32 %v2261, %v2291
      %v2294 = vadd.f32 %v2262, %v2292
      %s2295 = sadd.s32 %s2075, 54
      %s2296 = scalar_lea.vmem %s214, %s2295
      %v2297 = vld [vmem:[%s2296] sm:$0x7]
      %v2298 = vld [vmem:[%s361] sm:$0xf]
      %v2299 = vunpack.c.l.bf16 %v2298
      %v2300 = vunpack.c.l.bf16 %v2297
      %2302 = vset.pattern.permute.xlu0 0
      %2303 = vperm.xlu0 %2302, %v2299
      %v2304 = vpop.permute.xlu0 %2303
      %v2307 = vlaneseq
      %v2308 = vshrl.u32 %v2307, 7
      %v2309 = vsub.s32 0, %v2308
      %v2310 = vrot.slane %v2300, %v2309
      %v2311 = vlaneseq
      %v2312 = vshrl.u32 %v2311, 7
      %v2313 = vsub.s32 2, %v2312
      %v2314 = vrot.slane %v2300, %v2313
      %v2317 = vlaneseq
      %v2318 = vshrl.u32 %v2317, 7
      %v2319 = vsub.s32 0, %v2318
      %v2320 = vrot.slane %v2310, %v2319
      %v2321 = vlaneseq
      %v2322 = vshrl.u32 %v2321, 7
      %v2323 = vsub.s32 0, %v2322
      %v2324 = vrot.slane %v2314, %v2323
      %v2325 = vmul.f32 %v2304, %v2320
      %v2326 = vmul.f32 %v2304, %v2324
      %v2327 = vadd.f32 %v2293, %v2325
      %v2328 = vadd.f32 %v2294, %v2326
      %v2329 = vld [vmem:[%s393] sm:$0xf]
      %v2330 = vunpack.c.l.bf16 %v2329
      %2332 = vset.pattern.permute.xlu0 0
      %2333 = vperm.xlu0 %2332, %v2330
      %v2334 = vpop.permute.xlu0 %2333
      %v2336 = vlaneseq
      %v2337 = vshrl.u32 %v2336, 7
      %v2338 = vsub.s32 4, %v2337
      %v2339 = vrot.slane %v2300, %v2338
      %v2341 = vlaneseq
      %v2342 = vshrl.u32 %v2341, 7
      %v2343 = vsub.s32 0, %v2342
      %v2344 = vrot.slane %v2339, %v2343
      %v2345 = vmul.f32 %v2334, %v2320
      %v2346 = vmul.f32 %v2334, %v2324
      %v2347 = vmul.f32 %v2334, %v2344
      %2351 = vrot.lane.b32.xlu0 %v2345, 127
      %v2352 = vpop.permute.xlu0 %2351
      %2353 = vrot.lane.b32.xlu0 %v2346, 127
      %v2354 = vpop.permute.xlu0 %2353
      %2355 = vrot.lane.b32.xlu0 %v2347, 127
      %v2356 = vpop.permute.xlu0 %2355
      %v2357 = vsel %vm316, %v2352, %v2354
      %v2358 = vsel %vm316, %v2354, %v2356
      %v2361 = vadd.f32 %v2327, %v2357
      %v2362 = vadd.f32 %v2328, %v2358
      %s2363 = sadd.s32 %s2075, 81
      %s2364 = scalar_lea.vmem %s214, %s2363
      %v2365 = vld [vmem:[%s2364] sm:$0x7]
      %v2366 = vld [vmem:[%s431] sm:$0xf]
      %v2367 = vunpack.c.l.bf16 %v2366
      %v2368 = vunpack.c.l.bf16 %v2365
      %2370 = vset.pattern.permute.xlu0 0
      %2371 = vperm.xlu0 %2370, %v2367
      %v2372 = vpop.permute.xlu0 %2371
      %v2375 = vlaneseq
      %v2376 = vshrl.u32 %v2375, 7
      %v2377 = vsub.s32 0, %v2376
      %v2378 = vrot.slane %v2368, %v2377
      %v2379 = vlaneseq
      %v2380 = vshrl.u32 %v2379, 7
      %v2381 = vsub.s32 2, %v2380
      %v2382 = vrot.slane %v2368, %v2381
      %v2385 = vlaneseq
      %v2386 = vshrl.u32 %v2385, 7
      %v2387 = vsub.s32 0, %v2386
      %v2388 = vrot.slane %v2378, %v2387
      %v2389 = vlaneseq
      %v2390 = vshrl.u32 %v2389, 7
      %v2391 = vsub.s32 0, %v2390
      %v2392 = vrot.slane %v2382, %v2391
      %v2393 = vmul.f32 %v2372, %v2388
      %v2394 = vmul.f32 %v2372, %v2392
      %v2395 = vadd.f32 %v2361, %v2393
      %v2396 = vadd.f32 %v2362, %v2394
      %s2397 = sadd.s32 %s252, 21
      %s2398 = scalar_lea.vmem %s214, %s2397
      %v2399 = vld [vmem:[%s2398] sm:$0x7]
      %v2400 = vld [vmem:[%s466] sm:$0xf]
      %v2401 = vunpack.c.l.bf16 %v2400
      %v2402 = vunpack.c.l.bf16 %v2399
      %2404 = vset.pattern.permute.xlu0 0
      %2405 = vperm.xlu0 %2404, %v2401
      %v2406 = vpop.permute.xlu0 %2405
      %v2409 = vlaneseq
      %v2410 = vshrl.u32 %v2409, 7
      %v2411 = vsub.s32 0, %v2410
      %v2412 = vrot.slane %v2402, %v2411
      %v2413 = vlaneseq
      %v2414 = vshrl.u32 %v2413, 7
      %v2415 = vsub.s32 2, %v2414
      %v2416 = vrot.slane %v2402, %v2415
      %v2419 = vlaneseq
      %v2420 = vshrl.u32 %v2419, 7
      %v2421 = vsub.s32 0, %v2420
      %v2422 = vrot.slane %v2412, %v2421
      %v2423 = vlaneseq
      %v2424 = vshrl.u32 %v2423, 7
      %v2425 = vsub.s32 0, %v2424
      %v2426 = vrot.slane %v2416, %v2425
      %v2427 = vmul.f32 %v2406, %v2422
      %v2428 = vmul.f32 %v2406, %v2426
      %v2429 = vadd.f32 %v2395, %v2427
      %v2430 = vadd.f32 %v2396, %v2428
      %v2431 = vld [vmem:[%s498] sm:$0xf]
      %v2432 = vunpack.c.l.bf16 %v2431
      %2434 = vset.pattern.permute.xlu0 0
      %2435 = vperm.xlu0 %2434, %v2432
      %v2436 = vpop.permute.xlu0 %2435
      %v2438 = vlaneseq
      %v2439 = vshrl.u32 %v2438, 7
      %v2440 = vsub.s32 4, %v2439
      %v2441 = vrot.slane %v2402, %v2440
      %v2443 = vlaneseq
      %v2444 = vshrl.u32 %v2443, 7
      %v2445 = vsub.s32 0, %v2444
      %v2446 = vrot.slane %v2441, %v2445
      %v2447 = vmul.f32 %v2436, %v2422
      %v2448 = vmul.f32 %v2436, %v2426
      %v2449 = vmul.f32 %v2436, %v2446
      %2453 = vrot.lane.b32.xlu0 %v2447, 127
      %v2454 = vpop.permute.xlu0 %2453
      %2455 = vrot.lane.b32.xlu0 %v2448, 127
      %v2456 = vpop.permute.xlu0 %2455
      %2457 = vrot.lane.b32.xlu0 %v2449, 127
      %v2458 = vpop.permute.xlu0 %2457
      %v2459 = vsel %vm316, %v2454, %v2456
      %v2460 = vsel %vm316, %v2456, %v2458
      %v2463 = vadd.f32 %v2429, %v2459
      %v2464 = vadd.f32 %v2430, %v2460
      %s2465 = sadd.s32 %s2397, 27
      %s2466 = scalar_lea.vmem %s214, %s2465
      %v2467 = vld [vmem:[%s2466] sm:$0x7]
      %v2468 = vld [vmem:[%s536] sm:$0xf]
      %v2469 = vunpack.c.l.bf16 %v2468
      %v2470 = vunpack.c.l.bf16 %v2467
      %2472 = vset.pattern.permute.xlu0 0
      %2473 = vperm.xlu0 %2472, %v2469
      %v2474 = vpop.permute.xlu0 %2473
      %v2477 = vlaneseq
      %v2478 = vshrl.u32 %v2477, 7
      %v2479 = vsub.s32 0, %v2478
      %v2480 = vrot.slane %v2470, %v2479
      %v2481 = vlaneseq
      %v2482 = vshrl.u32 %v2481, 7
      %v2483 = vsub.s32 2, %v2482
      %v2484 = vrot.slane %v2470, %v2483
      %v2487 = vlaneseq
      %v2488 = vshrl.u32 %v2487, 7
      %v2489 = vsub.s32 0, %v2488
      %v2490 = vrot.slane %v2480, %v2489
      %v2491 = vlaneseq
      %v2492 = vshrl.u32 %v2491, 7
      %v2493 = vsub.s32 0, %v2492
      %v2494 = vrot.slane %v2484, %v2493
      %v2495 = vmul.f32 %v2474, %v2490
      %v2496 = vmul.f32 %v2474, %v2494
      %v2497 = vadd.f32 %v2463, %v2495
      %v2498 = vadd.f32 %v2464, %v2496
      %v2499 = vmul.f32 %v2497, %v244
      %v2500 = vmul.f32 %v2498, %v244
      %v2501 = vadd.f32 %v2499, %v250
      %v2502 = vadd.f32 %v2500, %v250
      %v2503 = vmax.f32 %v2501, 0.0
      %v2504 = vmax.f32 %v2502, 0.0
      %v2505 = vmin.f32 %v2503, 20.0
      %v2506 = vmin.f32 %v2504, 20.0
      %v2507 = vsel %vm238, 0.0, %v2505
      %v2508 = vsel %vm239, 0.0, %v2506
      %v2509 = vpack.c.bf16 %v2507, %v2507
      %v2510 = vpack.c.bf16 %v2508, %v2508
      %v2513 = vunpack.c.l.b16 %v2509
      %v2514 = vunpack.c.l.b16 %v2510
      %v2515 = vpack.c.b16 %v2514, %v2513
      %s2517 = scalar_lea.vmem %s223, 48
      %2518 = vst [vmem:[%s2517] sm:$0xff] %v2515
      %v2519 = vld [vmem:[%s2398] sm:$0x7]
      %v2520 = vld [vmem:[%s2] sm:$0xf]
      %v2521 = vunpack.c.l.bf16 %v2520
      %v2522 = vunpack.c.l.bf16 %v2519
      %2524 = vset.pattern.permute.xlu0 0
      %2525 = vperm.xlu0 %2524, %v2521
      %v2526 = vpop.permute.xlu0 %2525
      %v2529 = vlaneseq
      %v2530 = vshrl.u32 %v2529, 7
      %v2531 = vsub.s32 0, %v2530
      %v2532 = vrot.slane %v2522, %v2531
      %v2533 = vlaneseq
      %v2534 = vshrl.u32 %v2533, 7
      %v2535 = vsub.s32 2, %v2534
      %v2536 = vrot.slane %v2522, %v2535
      %v2539 = vlaneseq
      %v2540 = vshrl.u32 %v2539, 7
      %v2541 = vsub.s32 0, %v2540
      %v2542 = vrot.slane %v2532, %v2541
      %v2543 = vlaneseq
      %v2544 = vshrl.u32 %v2543, 7
      %v2545 = vsub.s32 0, %v2544
      %v2546 = vrot.slane %v2536, %v2545
      %v2547 = vmul.f32 %v2526, %v2542
      %v2548 = vmul.f32 %v2526, %v2546
      %v2549 = vadd.f32 %v2547, 0.0
      %v2550 = vadd.f32 %v2548, 0.0
      %v2551 = vld [vmem:[%s287] sm:$0xf]
      %v2552 = vunpack.c.l.bf16 %v2551
      %2554 = vset.pattern.permute.xlu0 0
      %2555 = vperm.xlu0 %2554, %v2552
      %v2556 = vpop.permute.xlu0 %2555
      %v2558 = vlaneseq
      %v2559 = vshrl.u32 %v2558, 7
      %v2560 = vsub.s32 4, %v2559
      %v2561 = vrot.slane %v2522, %v2560
      %v2563 = vlaneseq
      %v2564 = vshrl.u32 %v2563, 7
      %v2565 = vsub.s32 0, %v2564
      %v2566 = vrot.slane %v2561, %v2565
      %v2567 = vmul.f32 %v2556, %v2542
      %v2568 = vmul.f32 %v2556, %v2546
      %v2569 = vmul.f32 %v2556, %v2566
      %2573 = vrot.lane.b32.xlu0 %v2567, 127
      %v2574 = vpop.permute.xlu0 %2573
      %2575 = vrot.lane.b32.xlu0 %v2568, 127
      %v2576 = vpop.permute.xlu0 %2575
      %2577 = vrot.lane.b32.xlu0 %v2569, 127
      %v2578 = vpop.permute.xlu0 %2577
      %v2579 = vsel %vm316, %v2574, %v2576
      %v2580 = vsel %vm316, %v2576, %v2578
      %v2583 = vadd.f32 %v2549, %v2579
      %v2584 = vadd.f32 %v2550, %v2580
      %v2585 = vld [vmem:[%s2466] sm:$0x7]
      %v2586 = vld [vmem:[%s326] sm:$0xf]
      %v2587 = vunpack.c.l.bf16 %v2586
      %v2588 = vunpack.c.l.bf16 %v2585
      %2590 = vset.pattern.permute.xlu0 0
      %2591 = vperm.xlu0 %2590, %v2587
      %v2592 = vpop.permute.xlu0 %2591
      %v2595 = vlaneseq
      %v2596 = vshrl.u32 %v2595, 7
      %v2597 = vsub.s32 0, %v2596
      %v2598 = vrot.slane %v2588, %v2597
      %v2599 = vlaneseq
      %v2600 = vshrl.u32 %v2599, 7
      %v2601 = vsub.s32 2, %v2600
      %v2602 = vrot.slane %v2588, %v2601
      %v2605 = vlaneseq
      %v2606 = vshrl.u32 %v2605, 7
      %v2607 = vsub.s32 0, %v2606
      %v2608 = vrot.slane %v2598, %v2607
      %v2609 = vlaneseq
      %v2610 = vshrl.u32 %v2609, 7
      %v2611 = vsub.s32 0, %v2610
      %v2612 = vrot.slane %v2602, %v2611
      %v2613 = vmul.f32 %v2592, %v2608
      %v2614 = vmul.f32 %v2592, %v2612
      %v2615 = vadd.f32 %v2583, %v2613
      %v2616 = vadd.f32 %v2584, %v2614
      %s2617 = sadd.s32 %s2397, 54
      %s2618 = scalar_lea.vmem %s214, %s2617
      %v2619 = vld [vmem:[%s2618] sm:$0x7]
      %v2620 = vld [vmem:[%s361] sm:$0xf]
      %v2621 = vunpack.c.l.bf16 %v2620
      %v2622 = vunpack.c.l.bf16 %v2619
      %2624 = vset.pattern.permute.xlu0 0
      %2625 = vperm.xlu0 %2624, %v2621
      %v2626 = vpop.permute.xlu0 %2625
      %v2629 = vlaneseq
      %v2630 = vshrl.u32 %v2629, 7
      %v2631 = vsub.s32 0, %v2630
      %v2632 = vrot.slane %v2622, %v2631
      %v2633 = vlaneseq
      %v2634 = vshrl.u32 %v2633, 7
      %v2635 = vsub.s32 2, %v2634
      %v2636 = vrot.slane %v2622, %v2635
      %v2639 = vlaneseq
      %v2640 = vshrl.u32 %v2639, 7
      %v2641 = vsub.s32 0, %v2640
      %v2642 = vrot.slane %v2632, %v2641
      %v2643 = vlaneseq
      %v2644 = vshrl.u32 %v2643, 7
      %v2645 = vsub.s32 0, %v2644
      %v2646 = vrot.slane %v2636, %v2645
      %v2647 = vmul.f32 %v2626, %v2642
      %v2648 = vmul.f32 %v2626, %v2646
      %v2649 = vadd.f32 %v2615, %v2647
      %v2650 = vadd.f32 %v2616, %v2648
      %v2651 = vld [vmem:[%s393] sm:$0xf]
      %v2652 = vunpack.c.l.bf16 %v2651
      %2654 = vset.pattern.permute.xlu0 0
      %2655 = vperm.xlu0 %2654, %v2652
      %v2656 = vpop.permute.xlu0 %2655
      %v2658 = vlaneseq
      %v2659 = vshrl.u32 %v2658, 7
      %v2660 = vsub.s32 4, %v2659
      %v2661 = vrot.slane %v2622, %v2660
      %v2663 = vlaneseq
      %v2664 = vshrl.u32 %v2663, 7
      %v2665 = vsub.s32 0, %v2664
      %v2666 = vrot.slane %v2661, %v2665
      %v2667 = vmul.f32 %v2656, %v2642
      %v2668 = vmul.f32 %v2656, %v2646
      %v2669 = vmul.f32 %v2656, %v2666
      %2673 = vrot.lane.b32.xlu0 %v2667, 127
      %v2674 = vpop.permute.xlu0 %2673
      %2675 = vrot.lane.b32.xlu0 %v2668, 127
      %v2676 = vpop.permute.xlu0 %2675
      %2677 = vrot.lane.b32.xlu0 %v2669, 127
      %v2678 = vpop.permute.xlu0 %2677
      %v2679 = vsel %vm316, %v2674, %v2676
      %v2680 = vsel %vm316, %v2676, %v2678
      %v2683 = vadd.f32 %v2649, %v2679
      %v2684 = vadd.f32 %v2650, %v2680
      %s2685 = sadd.s32 %s2397, 81
      %s2686 = scalar_lea.vmem %s214, %s2685
      %v2687 = vld [vmem:[%s2686] sm:$0x7]
      %v2688 = vld [vmem:[%s431] sm:$0xf]
      %v2689 = vunpack.c.l.bf16 %v2688
      %v2690 = vunpack.c.l.bf16 %v2687
      %2692 = vset.pattern.permute.xlu0 0
      %2693 = vperm.xlu0 %2692, %v2689
      %v2694 = vpop.permute.xlu0 %2693
      %v2697 = vlaneseq
      %v2698 = vshrl.u32 %v2697, 7
      %v2699 = vsub.s32 0, %v2698
      %v2700 = vrot.slane %v2690, %v2699
      %v2701 = vlaneseq
      %v2702 = vshrl.u32 %v2701, 7
      %v2703 = vsub.s32 2, %v2702
      %v2704 = vrot.slane %v2690, %v2703
      %v2707 = vlaneseq
      %v2708 = vshrl.u32 %v2707, 7
      %v2709 = vsub.s32 0, %v2708
      %v2710 = vrot.slane %v2700, %v2709
      %v2711 = vlaneseq
      %v2712 = vshrl.u32 %v2711, 7
      %v2713 = vsub.s32 0, %v2712
      %v2714 = vrot.slane %v2704, %v2713
      %v2715 = vmul.f32 %v2694, %v2710
      %v2716 = vmul.f32 %v2694, %v2714
      %v2717 = vadd.f32 %v2683, %v2715
      %v2718 = vadd.f32 %v2684, %v2716
      %s2719 = sadd.s32 %s252, 24
      %s2720 = scalar_lea.vmem %s214, %s2719
      %v2721 = vld [vmem:[%s2720] sm:$0x7]
      %v2722 = vld [vmem:[%s466] sm:$0xf]
      %v2723 = vunpack.c.l.bf16 %v2722
      %v2724 = vunpack.c.l.bf16 %v2721
      %2726 = vset.pattern.permute.xlu0 0
      %2727 = vperm.xlu0 %2726, %v2723
      %v2728 = vpop.permute.xlu0 %2727
      %v2731 = vlaneseq
      %v2732 = vshrl.u32 %v2731, 7
      %v2733 = vsub.s32 0, %v2732
      %v2734 = vrot.slane %v2724, %v2733
      %v2735 = vlaneseq
      %v2736 = vshrl.u32 %v2735, 7
      %v2737 = vsub.s32 2, %v2736
      %v2738 = vrot.slane %v2724, %v2737
      %v2741 = vlaneseq
      %v2742 = vshrl.u32 %v2741, 7
      %v2743 = vsub.s32 0, %v2742
      %v2744 = vrot.slane %v2734, %v2743
      %v2745 = vlaneseq
      %v2746 = vshrl.u32 %v2745, 7
      %v2747 = vsub.s32 0, %v2746
      %v2748 = vrot.slane %v2738, %v2747
      %v2749 = vmul.f32 %v2728, %v2744
      %v2750 = vmul.f32 %v2728, %v2748
      %v2751 = vadd.f32 %v2717, %v2749
      %v2752 = vadd.f32 %v2718, %v2750
      %v2753 = vld [vmem:[%s498] sm:$0xf]
      %v2754 = vunpack.c.l.bf16 %v2753
      %2756 = vset.pattern.permute.xlu0 0
      %2757 = vperm.xlu0 %2756, %v2754
      %v2758 = vpop.permute.xlu0 %2757
      %v2760 = vlaneseq
      %v2761 = vshrl.u32 %v2760, 7
      %v2762 = vsub.s32 4, %v2761
      %v2763 = vrot.slane %v2724, %v2762
      %v2765 = vlaneseq
      %v2766 = vshrl.u32 %v2765, 7
      %v2767 = vsub.s32 0, %v2766
      %v2768 = vrot.slane %v2763, %v2767
      %v2769 = vmul.f32 %v2758, %v2744
      %v2770 = vmul.f32 %v2758, %v2748
      %v2771 = vmul.f32 %v2758, %v2768
      %2775 = vrot.lane.b32.xlu0 %v2769, 127
      %v2776 = vpop.permute.xlu0 %2775
      %2777 = vrot.lane.b32.xlu0 %v2770, 127
      %v2778 = vpop.permute.xlu0 %2777
      %2779 = vrot.lane.b32.xlu0 %v2771, 127
      %v2780 = vpop.permute.xlu0 %2779
      %v2781 = vsel %vm316, %v2776, %v2778
      %v2782 = vsel %vm316, %v2778, %v2780
      %v2785 = vadd.f32 %v2751, %v2781
      %v2786 = vadd.f32 %v2752, %v2782
      %s2787 = sadd.s32 %s2719, 27
      %s2788 = scalar_lea.vmem %s214, %s2787
      %v2789 = vld [vmem:[%s2788] sm:$0x7]
      %v2790 = vld [vmem:[%s536] sm:$0xf]
      %v2791 = vunpack.c.l.bf16 %v2790
      %v2792 = vunpack.c.l.bf16 %v2789
      %2794 = vset.pattern.permute.xlu0 0
      %2795 = vperm.xlu0 %2794, %v2791
      %v2796 = vpop.permute.xlu0 %2795
      %v2799 = vlaneseq
      %v2800 = vshrl.u32 %v2799, 7
      %v2801 = vsub.s32 0, %v2800
      %v2802 = vrot.slane %v2792, %v2801
      %v2803 = vlaneseq
      %v2804 = vshrl.u32 %v2803, 7
      %v2805 = vsub.s32 2, %v2804
      %v2806 = vrot.slane %v2792, %v2805
      %v2809 = vlaneseq
      %v2810 = vshrl.u32 %v2809, 7
      %v2811 = vsub.s32 0, %v2810
      %v2812 = vrot.slane %v2802, %v2811
      %v2813 = vlaneseq
      %v2814 = vshrl.u32 %v2813, 7
      %v2815 = vsub.s32 0, %v2814
      %v2816 = vrot.slane %v2806, %v2815
      %v2817 = vmul.f32 %v2796, %v2812
      %v2818 = vmul.f32 %v2796, %v2816
      %v2819 = vadd.f32 %v2785, %v2817
      %v2820 = vadd.f32 %v2786, %v2818
      %v2821 = vmul.f32 %v2819, %v244
      %v2822 = vmul.f32 %v2820, %v244
      %v2823 = vadd.f32 %v2821, %v250
      %v2824 = vadd.f32 %v2822, %v250
      %v2825 = vmax.f32 %v2823, 0.0
      %v2826 = vmax.f32 %v2824, 0.0
      %v2827 = vmin.f32 %v2825, 20.0
      %v2828 = vmin.f32 %v2826, 20.0
      %v2829 = vsel %vm238, 0.0, %v2827
      %v2830 = vsel %vm239, 0.0, %v2828
      %v2831 = vpack.c.bf16 %v2829, %v2829
      %v2832 = vpack.c.bf16 %v2830, %v2830
      %v2835 = vunpack.c.l.b16 %v2831
      %v2836 = vunpack.c.l.b16 %v2832
      %v2837 = vpack.c.b16 %v2836, %v2835
      %s2839 = scalar_lea.vmem %s223, 56
      %2840 = vst [vmem:[%s2839] sm:$0xff] %v2837
      %s2841 = smul.u32 2, %s27
      %p2842 = scmp.lt.s32.totalorder %s26, 1
      %s2843 = scalar_select %p2842, %s26, 1
      %p2844 = scmp.lt.s32.totalorder %s2841, 1
      %s2845 = scalar_select %p2844, %s2841, 1
      %s2846 = smul.addr %s2843, 16
      %s2847 = sadd.s32 %s2845, %s2846
      %s2848 = smul.addr %s2847, 4
      %s2849 = scalar_lea.vmem %s5, %s2848
      // Predicated region
      $region37: #{_lambda_.2} parent=35 // pred_check
        %p2850 = pneg %p143
      $region38: #{_lambda_.2} parent=35 // pred_check_branch
        %2852 = sbr.rel (%p2850) target = $region40
      $region39: #{_lambda_.2} parent=35 // pred_region
        %s2853 = smul.u32 2, %s27
      $region40: #{_lambda_.2} parent=35 // pred_fallthru
        _
    $region36: #{_lambda_.2} parent=5 // pred_fallthru
      _
    %p2854 = scmp.le.s32.totalorder 2, %s17
    // Predicated region
    $region41: #{_lambda_.2} parent=5 // pred_check
      %p2855 = pneg %p2854
    $region42: #{_lambda_.2} parent=5 // pred_check_branch
      %2857 = sbr.rel (%p2855) target = $region44
    $region43: #{_lambda_.2} parent=5 // pred_region
      %s2858 = ssub.s32 %s17, 2
      // Predicated region
      $region45: #{_lambda_.2} parent=43 // pred_check
        %p2859 = pneg %p149
      $region46: #{_lambda_.2} parent=43 // pred_check_branch
        %2861 = sbr.rel (%p2859) target = $region48
      $region47: #{_lambda_.2} parent=43 // pred_region
        %s2862 = smul.u32 2, %s29
        %p2863 = scmp.lt.s32.totalorder %s28, 1
        %s2864 = scalar_select %p2863, %s28, 1
        %p2865 = scmp.lt.s32.totalorder %s2862, 1
        %s2866 = scalar_select %p2865, %s2862, 1
        %s2867 = smul.addr %s2864, 16
        %s2868 = sadd.s32 %s2866, %s2867
        %s2869 = smul.addr %s2868, 4
        %s2870 = scalar_lea.vmem %s5, %s2869
      $region48: #{_lambda_.2} parent=43 // pred_fallthru
        _
    $region44: #{_lambda_.2} parent=5 // pred_fallthru
      _
  $region6: #{_lambda_.2} parent=0 // loop_footer
    %s21 = sadd.s32 1, %s17
  $region7: #{_lambda_.2} parent=0 // loop_footer_branch
    %16 = sbr.rel target = $region3
  $region8: #{_lambda_.2} parent=0 // loop_exit
    _

// kernel: _lambda_.3
$region0: #{_lambda_.3}
  #allocation0 [shape = 'u32[]', space=smem, size = 0x4, offset = 0x4, fixed_abs, tag = 'smem constant byte address 0x4 - core index']
  #allocation1 [shape = 'u32[144,128]{1,0:T(1,128)}', space=vmem, size = 0x12000, scoped, tag = 'internal scratch']
  #allocation2 [shape = 's32[1]{0}', space=sflag, size = 0x4, scoped, tag = 'scoped memory for _lambda_.3']
  #allocation3 [shape = 'u8[512]{0}', space=smem, size = 0x200, scoped, tag = 'prefetched SMEM operand 0']
  %s0 = inlined_call_operand.vmem [shape: s32[2], index: 0, kind: input, shape index: {}]
  %s1 = inlined_call_operand.vmem [shape: bf16[2,2,5,8,258], index: 1, kind: input, shape index: {}]
  %s2 = inlined_call_operand.vmem [shape: bf16[9,8,8], index: 2, kind: input, shape index: {}]
  %s3 = inlined_call_operand.vmem [shape: f32[8,1], index: 3, kind: input, shape index: {}]
  %s4 = inlined_call_operand.vmem [shape: f32[8,1], index: 4, kind: input, shape index: {}]
  %s5 = inlined_call_operand.vmem [shape: f32[2,4,8,256], index: 5, kind: output, shape index: {}]
  %s6 = sld [smem:[#allocation0]]
  $region49: #{_lambda_.3} parent=0
    _
  %s8 = ssub.s32 1, %s6
  %s9 = scalar_select 0, %s8, %s6
  %s10 = sshll.u32 %s0, 4
  %s11 = int_to_ptr.vmem [resolvable:$true] %s10
  %13 = dma.vmem_to_smem %s11, 16, [#allocation3], [#allocation2]
  %14 = dma.done [#allocation2], 16
  %15 = sfence
  loop: start=0, step=1, limit=4
  $region2: #{_lambda_.3} parent=0 // loop_pre_header
    _
  $region3: #{_lambda_.3} parent=0 // loop_header
    %s17 = sphi 0, %s21
    %p18 = scmp.ge.s32.totalorder %s17, 4
    %s24 = sphi 0, %s36
    %s25 = sphi 0, %s32
    %s26 = sphi 0, %s24
    %s27 = sphi 0, %s25
    %s28 = sphi 0, %s26
    %s29 = sphi 0, %s27
    %s39 = sphi 0, %s41
    %s42 = sphi 0, %s39
    %s43 = sphi 0, %s42
    %s59 = sphi 0, %s43
    %s63 = sphi 0, %s63
    %s65 = sphi 0, %s63
    %s66 = sphi 0, %s65
    %s80 = sphi 0, %s66
    %s84 = sphi 0, %s84
    %s86 = sphi 0, %s84
    %s87 = sphi 0, %s86
    %s101 = sphi 0, %s87
    %s105 = sphi 0, %s105
    %s107 = sphi 0, %s105
    %s108 = sphi 0, %s107
    %s122 = sphi 0, %s108
    %s130 = sphi 0, %s132
    %s133 = sphi 0, %s130
    %s134 = sphi 0, %s133
    %s150 = sphi 0, %s134
  $region4: #{_lambda_.3} parent=0 // loop_header_branch
    %20 = sbr.rel (%p18) target = $region8
  $region5: #{_lambda_.3} parent=0 // loop_body
    %s22 = ssub.s32 %s17, 1
    %s23 = ssub.s32 %s17, 2
    %s30 = sadd.s32 1, %s25
    %p31 = scmp.ge.s32.totalorder %s30, 1
    %s32 = scalar_select %p31, 0, %s30
    %s33 = sadd.s32 1, %s24
    %s34 = scalar_select %p31, %s33, %s24
    %p35 = scmp.ge.s32.totalorder %s34, 2
    %s36 = scalar_select %p35, 0, %s34
    %s37 = ssub.s32 %s24, %s36
    %p38 = scmp.eq.s32.totalorder %s37, 0
    %s40 = sadd.s32 %s39, 1
    %s41 = scalar_select %p38, %s39, %s40
    %p44 = pneg %p38
    %p45 = scmp.eq.s32.totalorder %s17, 1
    %p46 = por %p44, %p45
    %p47 = scmp.ne.s32.totalorder %s39, %s42
    %p48 = scmp.eq.s32.totalorder %s17, 0
    %p49 = por %p47, %p48
    %p50 = scmp.ne.s32.totalorder %s39, %s42
    %p51 = scmp.eq.s32.totalorder %s22, 1
    %p52 = por %p50, %p51
    %p53 = scmp.ne.s32.totalorder %s42, %s43
    %p54 = scmp.eq.s32.totalorder %s22, 0
    %p55 = por %p53, %p54
    %p56 = scmp.ne.s32.totalorder %s42, %s43
    %p57 = scmp.eq.s32.totalorder %s23, 1
    %p58 = por %p56, %p57
    %p60 = scmp.ne.s32.totalorder %s43, %s59
    %p61 = scmp.eq.s32.totalorder %s23, 0
    %p62 = por %p60, %p61
    %s64 = sadd.s32 %s63, 1
    %p67 = scmp.eq.s32.totalorder %s17, 1
    %p68 = scmp.ne.s32.totalorder %s63, %s65
    %p69 = scmp.eq.s32.totalorder %s17, 0
    %p70 = por %p68, %p69
    %p71 = scmp.ne.s32.totalorder %s63, %s65
    %p72 = scmp.eq.s32.totalorder %s22, 1
    %p73 = por %p71, %p72
    %p74 = scmp.ne.s32.totalorder %s65, %s66
    %p75 = scmp.eq.s32.totalorder %s22, 0
    %p76 = por %p74, %p75
    %p77 = scmp.ne.s32.totalorder %s65, %s66
    %p78 = scmp.eq.s32.totalorder %s23, 1
    %p79 = por %p77, %p78
    %p81 = scmp.ne.s32.totalorder %s66, %s80
    %p82 = scmp.eq.s32.totalorder %s23, 0
    %p83 = por %p81, %p82
    %s85 = sadd.s32 %s84, 1
    %p88 = scmp.eq.s32.totalorder %s17, 1
    %p89 = scmp.ne.s32.totalorder %s84, %s86
    %p90 = scmp.eq.s32.totalorder %s17, 0
    %p91 = por %p89, %p90
    %p92 = scmp.ne.s32.totalorder %s84, %s86
    %p93 = scmp.eq.s32.totalorder %s22, 1
    %p94 = por %p92, %p93
    %p95 = scmp.ne.s32.totalorder %s86, %s87
    %p96 = scmp.eq.s32.totalorder %s22, 0
    %p97 = por %p95, %p96
    %p98 = scmp.ne.s32.totalorder %s86, %s87
    %p99 = scmp.eq.s32.totalorder %s23, 1
    %p100 = por %p98, %p99
    %p102 = scmp.ne.s32.totalorder %s87, %s101
    %p103 = scmp.eq.s32.totalorder %s23, 0
    %p104 = por %p102, %p103
    %s106 = sadd.s32 %s105, 1
    %p109 = scmp.eq.s32.totalorder %s17, 1
    %p110 = scmp.ne.s32.totalorder %s105, %s107
    %p111 = scmp.eq.s32.totalorder %s17, 0
    %p112 = por %p110, %p111
    %p113 = scmp.ne.s32.totalorder %s105, %s107
    %p114 = scmp.eq.s32.totalorder %s22, 1
    %p115 = por %p113, %p114
    %p116 = scmp.ne.s32.totalorder %s107, %s108
    %p117 = scmp.eq.s32.totalorder %s22, 0
    %p118 = por %p116, %p117
    %p119 = scmp.ne.s32.totalorder %s107, %s108
    %p120 = scmp.eq.s32.totalorder %s23, 1
    %p121 = por %p119, %p120
    %p123 = scmp.ne.s32.totalorder %s108, %s122
    %p124 = scmp.eq.s32.totalorder %s23, 0
    %p125 = por %p123, %p124
    %s126 = ssub.s32 %s24, %s36
    %s127 = ssub.s32 %s25, %s32
    %s128 = sor.u32 %s126, %s127
    %p129 = scmp.eq.s32.totalorder %s128, 0
    %s131 = sadd.s32 %s130, 1
    %s132 = scalar_select %p129, %s130, %s131
    %p135 = pneg %p129
    %p136 = scmp.eq.s32.totalorder %s17, 1
    %p137 = por %p135, %p136
    %p138 = scmp.ne.s32.totalorder %s130, %s133
    %p139 = scmp.eq.s32.totalorder %s17, 0
    %p140 = por %p138, %p139
    %p141 = scmp.ne.s32.totalorder %s130, %s133
    %p142 = scmp.eq.s32.totalorder %s22, 1
    %p143 = por %p141, %p142
    %p144 = scmp.ne.s32.totalorder %s133, %s134
    %p145 = scmp.eq.s32.totalorder %s22, 0
    %p146 = por %p144, %p145
    %p147 = scmp.ne.s32.totalorder %s133, %s134
    %p148 = scmp.eq.s32.totalorder %s23, 1
    %p149 = por %p147, %p148
    %p151 = scmp.ne.s32.totalorder %s134, %s150
    %p152 = scmp.eq.s32.totalorder %s23, 0
    %p153 = por %p151, %p152
    %p154 = scmp.le.s32.totalorder 1, %s17
    %p155 = scmp.lt.s32.totalorder %s17, 3
    %p156 = pnand %p154, %p155
    %p157 = pneg %p156
    // Predicated region
    $region9: #{_lambda_.3} parent=5 // pred_check
      _
    $region10: #{_lambda_.3} parent=5 // pred_check_branch
      %159 = sbr.rel (%p156) target = $region12
    $region11: #{_lambda_.3} parent=5 // pred_region
      %s160 = ssub.s32 %s17, 1
      // Predicated region
      $region13: #{_lambda_.3} parent=11 // pred_check
        %p161 = pneg %p76
      $region14: #{_lambda_.3} parent=11 // pred_check_branch
        %163 = sbr.rel (%p161) target = $region16
      $region15: #{_lambda_.3} parent=11 // pred_region
        _
      $region16: #{_lambda_.3} parent=11 // pred_fallthru
        _
      // Predicated region
      $region17: #{_lambda_.3} parent=11 // pred_check
        %p164 = pneg %p97
      $region18: #{_lambda_.3} parent=11 // pred_check_branch
        %166 = sbr.rel (%p164) target = $region20
      $region19: #{_lambda_.3} parent=11 // pred_region
        _
      $region20: #{_lambda_.3} parent=11 // pred_fallthru
        _
      // Predicated region
      $region21: #{_lambda_.3} parent=11 // pred_check
        %p167 = pneg %p118
      $region22: #{_lambda_.3} parent=11 // pred_check_branch
        %169 = sbr.rel (%p167) target = $region24
      $region23: #{_lambda_.3} parent=11 // pred_region
        _
      $region24: #{_lambda_.3} parent=11 // pred_fallthru
        _
    $region12: #{_lambda_.3} parent=5 // pred_fallthru
      _
    %p170 = scmp.lt.s32.totalorder %s17, 2
    // Predicated region
    $region25: #{_lambda_.3} parent=5 // pred_check
      %p171 = pneg %p170
    $region26: #{_lambda_.3} parent=5 // pred_check_branch
      %173 = sbr.rel (%p171) target = $region28
    $region27: #{_lambda_.3} parent=5 // pred_region
      // Predicated region
      $region29: #{_lambda_.3} parent=27 // pred_check
        %p174 = pneg %p49
      $region30: #{_lambda_.3} parent=27 // pred_check_branch
        %176 = sbr.rel (%p174) target = $region32
      $region31: #{_lambda_.3} parent=27 // pred_region
        %p177 = scmp.lt.s32.totalorder %s24, 1
        %s178 = scalar_select %p177, %s24, 1
        %s179 = smul.addr %s178, 30
        %s180 = smul.addr %s179, 4
        %s181 = scalar_lea.vmem %s1, %s180
      $region32: #{_lambda_.3} parent=27 // pred_fallthru
        _
    $region28: #{_lambda_.3} parent=5 // pred_fallthru
      _
    %p182 = scmp.le.s32.totalorder 1, %s17
    %p183 = scmp.lt.s32.totalorder %s17, 3
    %p184 = pnand %p182, %p183
    %p185 = pneg %p184
    // Predicated region
    $region33: #{_lambda_.3} parent=5 // pred_check
      _
    $region34: #{_lambda_.3} parent=5 // pred_check_branch
      %187 = sbr.rel (%p184) target = $region36
    $region35: #{_lambda_.3} parent=5 // pred_region
      %s188 = ssub.s32 %s17, 1
      %p189 = scmp.lt.s32.totalorder %s26, 1
      %s190 = scalar_select %p189, %s26, 1
      %s191 = smul.addr %s190, 30
      %s192 = smul.addr %s191, 4
      %s193 = scalar_lea.vmem %s1, %s192
      %p194 = pneg %p55
      %p195 = pneg %p52
      %p196 = pneg %p76
      %p197 = pneg %p73
      %p198 = pneg %p97
      %p199 = pneg %p94
      %p200 = pneg %p118
      %p201 = pneg %p115
      %p202 = pneg %p146
      %p203 = pneg %p143
      %s204 = smul.u32 2, %s27
      %p205 = scmp.lt.s32.totalorder %s26, 1
      %s206 = scalar_select %p205, %s26, 1
      %p207 = scmp.lt.s32.totalorder %s204, 1
      %s208 = scalar_select %p207, %s204, 1
      %s209 = smul.addr %s206, 8
      %s210 = sadd.s32 %s208, %s209
      %s211 = smul.addr %s210, 8
      %s212 = scalar_lea.vmem %s5, %s211
      %p213 = scmp.lt.s32.totalorder %s26, 1
      %s214 = scalar_select %p213, %s26, 1
      %s215 = smul.addr %s214, 30
      %s216 = smul.addr %s215, 4
      %s217 = scalar_lea.vmem %s1, %s216
      %s218 = smul.u32 2, %s27
      %p219 = scmp.lt.s32.totalorder %s26, 1
      %s220 = scalar_select %p219, %s26, 1
      %p221 = scmp.lt.s32.totalorder %s218, 1
      %s222 = scalar_select %p221, %s218, 1
      %s223 = smul.addr %s220, 8
      %s224 = sadd.s32 %s222, %s223
      %s225 = smul.addr %s224, 8
      %s226 = scalar_lea.vmem %s5, %s225
      %s227 = smul.u32 2, %s27
      %s229 = smul.u32 %s27, 256
      %v230 = vlaneseq
      %v231 = vand.u32 %v230, 127
      %v232 = vadd.s32 %v231, 128
      %v233 = vstv %s229
      %v234 = vadd.s32 %v231, %v233
      %v235 = vadd.s32 %v232, %v233
      %s236 = sld [smem:[#allocation3 + %s26]]
      %v237 = vstv %s236
      %vm238 = vcmp.ge.s32.totalorder %v234, %v237
      %vm239 = vcmp.ge.s32.totalorder %v235, %v237
      %v240 = vsel %vm238, 1, 0
      %v241 = vsel %vm239, 1, 0
      %vm242 = vcmp.eq.s32.totalorder %v240, 1
      %vm243 = vcmp.eq.s32.totalorder %v241, 1
      %v244 = vld [vmem:[%s3] sm:$0xff]
      %246 = vset.pattern.permute.xlu0 0
      %247 = vperm.xlu0 %246, %v244
      %v248 = vpop.permute.xlu0 %247
      %v250 = vld [vmem:[%s4] sm:$0xff]
      %252 = vset.pattern.permute.xlu0 0
      %253 = vperm.xlu0 %252, %v250
      %v254 = vpop.permute.xlu0 %253
      %s256 = sshra.s32 %s229, 7
      %s257 = sand.u32 %s229, 127
      %s258 = smul.addr %s256, 4
      %s259 = scalar_lea.vmem %s217, %s258
      %v260 = vld [vmem:[%s259] sm:$0xff]
      %v261 = vld [vmem:[%s259 + $0x8] sm:$0xf]
      %v262 = vld [vmem:[%s2] sm:$0xf]
      %s263 = scalar_lea.vmem %s2, 4
      %v264 = vld [vmem:[%s263] sm:$0xf]
      %v267 = vunpack.c.l.b16 %v260
      %v268 = vunpack.c.h.b16 %v260
      %v269 = vunpack.c.l.b16 %v261
      %v270 = vpack.c.b16 %v267, %v267
      %v271 = vpack.c.b16 %v268, %v268
      %v272 = vpack.c.b16 %v269, %v269
      %273 = vrot.lane.b32.xlu0 %v270, 127
      %v274 = vpop.permute.xlu0 %273
      %275 = vrot.lane.b32.xlu0 %v271, 127
      %v276 = vpop.permute.xlu0 %275
      %277 = vrot.lane.b32.xlu0 %v272, 127
      %v278 = vpop.permute.xlu0 %277
      %vm279 = vcmask 1039360
      %v280 = vsel %vm279, %v274, %v276
      %v281 = vsel %vm279, %v276, %v278
      %vm282 = vcmask 64512
      %v284 = vsel %vm282, %v264, 0
      %vm286 = vcmask 1043456
      %v288 = vsel %vm286, %v280, 0
      %v291 = vsel %vm286, %v281, 0
      %293 = vmatprep.subr.bf16.mxu0 %v291
      %294 = vmatpush1.bf16.msra.mxu0 %v288
      %295 = vmatprep.subr.bf16.mxu0 0
      %296 = vmatpush1.bf16.msra.mxu0 0
      %297 = vmatprep.subr.bf16.mxu0 0
      %298 = vmatpush1.bf16.msra.mxu0 0
      %299 = vmatprep.subr.bf16.mxu0 0
      %300 = vmatpush1.bf16.msra.mxu0 0
      %301 = vmatprep.subr.bf16.mxu0 0
      %302 = vmatpush1.bf16.msra.mxu0 0
      %303 = vmatprep.subr.bf16.mxu0 0
      %304 = vmatpush1.bf16.msra.mxu0 0
      %305 = vmatprep.subr.bf16.mxu0 0
      %306 = vmatpush1.bf16.msra.mxu0 0
      %307 = vmatprep.subr.bf16.mxu0 0
      %308 = vmatpush1.bf16.msra.mxu0 0
      %309 = vmatprep.subr.bf16.mxu0 0
      %310 = vmatpush1.bf16.msra.mxu0 0
      %311 = vmatprep.subr.bf16.mxu0 0
      %312 = vmatpush1.bf16.msra.mxu0 0
      %313 = vmatprep.subr.bf16.mxu0 0
      %314 = vmatpush1.bf16.msra.mxu0 0
      %315 = vmatprep.subr.bf16.mxu0 0
      %316 = vmatpush1.bf16.msra.mxu0 0
      %317 = vmatprep.subr.bf16.mxu0 0
      %318 = vmatpush1.bf16.msra.mxu0 0
      %319 = vmatprep.subr.bf16.mxu0 0
      %320 = vmatpush1.bf16.msra.mxu0 0
      %321 = vmatprep.subr.bf16.mxu0 0
      %322 = vmatpush1.bf16.msra.mxu0 0
      %323 = vmatprep.subr.bf16.mxu0 0
      %324 = vmatpush1.bf16.msra.mxu0 0
      %325 = vmatprep.mubr.bf16.mxu0 0
      %326 = vmatmul.mubr.bf16.gmra.mrb[0].mxu0 %v284
      %v327 = vpop.f32.mrb[0].mxu0
      %v328 = vadd.f32 0.0, %v327
      %v329 = vpop.f32.mrb[0].mxu0
      %v330 = vadd.f32 0.0, %v329
      %v331 = vpop.f32.mrb[0].mxu0
      %v332 = vpop.f32.mrb[0].mxu0
      %333 = vdwg.mxu0
      %v335 = vsel %vm282, %v262, 0
      %v338 = vsel %vm286, %v270, 0
      %v341 = vsel %vm286, %v271, 0
      %343 = vmatprep.subr.bf16.mxu0 %v341
      %344 = vmatpush1.bf16.msra.mxu0 %v338
      %345 = vmatprep.subr.bf16.mxu0 0
      %346 = vmatpush1.bf16.msra.mxu0 0
      %347 = vmatprep.subr.bf16.mxu0 0
      %348 = vmatpush1.bf16.msra.mxu0 0
      %349 = vmatprep.subr.bf16.mxu0 0
      %350 = vmatpush1.bf16.msra.mxu0 0
      %351 = vmatprep.subr.bf16.mxu0 0
      %352 = vmatpush1.bf16.msra.mxu0 0
      %353 = vmatprep.subr.bf16.mxu0 0
      %354 = vmatpush1.bf16.msra.mxu0 0
      %355 = vmatprep.subr.bf16.mxu0 0
      %356 = vmatpush1.bf16.msra.mxu0 0
      %357 = vmatprep.subr.bf16.mxu0 0
      %358 = vmatpush1.bf16.msra.mxu0 0
      %359 = vmatprep.subr.bf16.mxu0 0
      %360 = vmatpush1.bf16.msra.mxu0 0
      %361 = vmatprep.subr.bf16.mxu0 0
      %362 = vmatpush1.bf16.msra.mxu0 0
      %363 = vmatprep.subr.bf16.mxu0 0
      %364 = vmatpush1.bf16.msra.mxu0 0
      %365 = vmatprep.subr.bf16.mxu0 0
      %366 = vmatpush1.bf16.msra.mxu0 0
      %367 = vmatprep.subr.bf16.mxu0 0
      %368 = vmatpush1.bf16.msra.mxu0 0
      %369 = vmatprep.subr.bf16.mxu0 0
      %370 = vmatpush1.bf16.msra.mxu0 0
      %371 = vmatprep.subr.bf16.mxu0 0
      %372 = vmatpush1.bf16.msra.mxu0 0
      %373 = vmatprep.subr.bf16.mxu0 0
      %374 = vmatpush1.bf16.msra.mxu0 0
      %375 = vmatprep.mubr.bf16.mxu0 0
      %376 = vmatmul.mubr.bf16.gmra.mrb[0].mxu0 %v335
      %v377 = vpop.f32.mrb[0].mxu0
      %v378 = vadd.f32 %v328, %v377
      %v379 = vpop.f32.mrb[0].mxu0
      %v380 = vadd.f32 %v330, %v379
      %v381 = vpop.f32.mrb[0].mxu0
      %v382 = vpop.f32.mrb[0].mxu0
      %383 = vdwg.mxu0
      %s384 = scalar_lea.vmem %s2, 8
      %v385 = vld [vmem:[%s384] sm:$0xf]
      %386 = vrot.lane.b32.xlu0 %v270, 126
      %v387 = vpop.permute.xlu0 %386
      %388 = vrot.lane.b32.xlu0 %v271, 126
      %v389 = vpop.permute.xlu0 %388
      %390 = vrot.lane.b32.xlu0 %v272, 126
      %v391 = vpop.permute.xlu0 %390
      %vm392 = vcmask 1031168
      %v393 = vsel %vm392, %v387, %v389
      %v394 = vsel %vm392, %v389, %v391
      %v396 = vsel %vm282, %v385, 0
      %v399 = vsel %vm286, %v393, 0
      %v402 = vsel %vm286, %v394, 0
      %404 = vmatprep.subr.bf16.mxu0 %v402
      %405 = vmatpush1.bf16.msra.mxu0 %v399
      %406 = vmatprep.subr.bf16.mxu0 0
      %407 = vmatpush1.bf16.msra.mxu0 0
      %408 = vmatprep.subr.bf16.mxu0 0
      %409 = vmatpush1.bf16.msra.mxu0 0
      %410 = vmatprep.subr.bf16.mxu0 0
      %411 = vmatpush1.bf16.msra.mxu0 0
      %412 = vmatprep.subr.bf16.mxu0 0
      %413 = vmatpush1.bf16.msra.mxu0 0
      %414 = vmatprep.subr.bf16.mxu0 0
      %415 = vmatpush1.bf16.msra.mxu0 0
      %416 = vmatprep.subr.bf16.mxu0 0
      %417 = vmatpush1.bf16.msra.mxu0 0
      %418 = vmatprep.subr.bf16.mxu0 0
      %419 = vmatpush1.bf16.msra.mxu0 0
      %420 = vmatprep.subr.bf16.mxu0 0
      %421 = vmatpush1.bf16.msra.mxu0 0
      %422 = vmatprep.subr.bf16.mxu0 0
      %423 = vmatpush1.bf16.msra.mxu0 0
      %424 = vmatprep.subr.bf16.mxu0 0
      %425 = vmatpush1.bf16.msra.mxu0 0
      %426 = vmatprep.subr.bf16.mxu0 0
      %427 = vmatpush1.bf16.msra.mxu0 0
      %428 = vmatprep.subr.bf16.mxu0 0
      %429 = vmatpush1.bf16.msra.mxu0 0
      %430 = vmatprep.subr.bf16.mxu0 0
      %431 = vmatpush1.bf16.msra.mxu0 0
      %432 = vmatprep.subr.bf16.mxu0 0
      %433 = vmatpush1.bf16.msra.mxu0 0
      %434 = vmatprep.subr.bf16.mxu0 0
      %435 = vmatpush1.bf16.msra.mxu0 0
      %436 = vmatprep.mubr.bf16.mxu0 0
      %437 = vmatmul.mubr.bf16.gmra.mrb[0].mxu0 %v396
      %v438 = vpop.f32.mrb[0].mxu0
      %v439 = vadd.f32 0.0, %v438
      %v440 = vpop.f32.mrb[0].mxu0
      %v441 = vadd.f32 0.0, %v440
      %v442 = vpop.f32.mrb[0].mxu0
      %v443 = vpop.f32.mrb[0].mxu0
      %444 = vdwg.mxu0
      %v445 = vadd.f32 %v378, %v439
      %v446 = vadd.f32 %v380, %v441
      %s447 = sadd.s32 %s256, 15
      %s448 = smul.addr %s447, 4
      %s449 = scalar_lea.vmem %s217, %s448
      %v450 = vld [vmem:[%s449] sm:$0xff]
      %v451 = vld [vmem:[%s449 + $0x8] sm:$0xf]
      %s452 = scalar_lea.vmem %s2, 12
      %v453 = vld [vmem:[%s452] sm:$0xf]
      %v455 = vunpack.c.l.b16 %v450
      %v456 = vunpack.c.h.b16 %v450
      %v457 = vpack.c.b16 %v455, %v455
      %v458 = vpack.c.b16 %v456, %v456
      %v460 = vsel %vm282, %v453, 0
      %v463 = vsel %vm286, %v457, 0
      %v466 = vsel %vm286, %v458, 0
      %468 = vmatprep.subr.bf16.mxu0 %v466
      %469 = vmatpush1.bf16.msra.mxu0 %v463
      %470 = vmatprep.subr.bf16.mxu0 0
      %471 = vmatpush1.bf16.msra.mxu0 0
      %472 = vmatprep.subr.bf16.mxu0 0
      %473 = vmatpush1.bf16.msra.mxu0 0
      %474 = vmatprep.subr.bf16.mxu0 0
      %475 = vmatpush1.bf16.msra.mxu0 0
      %476 = vmatprep.subr.bf16.mxu0 0
      %477 = vmatpush1.bf16.msra.mxu0 0
      %478 = vmatprep.subr.bf16.mxu0 0
      %479 = vmatpush1.bf16.msra.mxu0 0
      %480 = vmatprep.subr.bf16.mxu0 0
      %481 = vmatpush1.bf16.msra.mxu0 0
      %482 = vmatprep.subr.bf16.mxu0 0
      %483 = vmatpush1.bf16.msra.mxu0 0
      %484 = vmatprep.subr.bf16.mxu0 0
      %485 = vmatpush1.bf16.msra.mxu0 0
      %486 = vmatprep.subr.bf16.mxu0 0
      %487 = vmatpush1.bf16.msra.mxu0 0
      %488 = vmatprep.subr.bf16.mxu0 0
      %489 = vmatpush1.bf16.msra.mxu0 0
      %490 = vmatprep.subr.bf16.mxu0 0
      %491 = vmatpush1.bf16.msra.mxu0 0
      %492 = vmatprep.subr.bf16.mxu0 0
      %493 = vmatpush1.bf16.msra.mxu0 0
      %494 = vmatprep.subr.bf16.mxu0 0
      %495 = vmatpush1.bf16.msra.mxu0 0
      %496 = vmatprep.subr.bf16.mxu0 0
      %497 = vmatpush1.bf16.msra.mxu0 0
      %498 = vmatprep.subr.bf16.mxu0 0
      %499 = vmatpush1.bf16.msra.mxu0 0
      %500 = vmatprep.mubr.bf16.mxu0 0
      %501 = vmatmul.mubr.bf16.gmra.mrb[0].mxu0 %v460
      %v502 = vpop.f32.mrb[0].mxu0
      %v503 = vadd.f32 0.0, %v502
      %v504 = vpop.f32.mrb[0].mxu0
      %v505 = vadd.f32 0.0, %v504
      %v506 = vpop.f32.mrb[0].mxu0
      %v507 = vpop.f32.mrb[0].mxu0
      %508 = vdwg.mxu0
      %v509 = vadd.f32 %v445, %v503
      %v510 = vadd.f32 %v446, %v505
      %s511 = scalar_lea.vmem %s2, 16
      %v512 = vld [vmem:[%s511] sm:$0xf]
      %v514 = vunpack.c.l.b16 %v451
      %v515 = vpack.c.b16 %v514, %v514
      %516 = vrot.lane.b32.xlu0 %v457, 127
      %v517 = vpop.permute.xlu0 %516
      %518 = vrot.lane.b32.xlu0 %v458, 127
      %v519 = vpop.permute.xlu0 %518
      %520 = vrot.lane.b32.xlu0 %v515, 127
      %v521 = vpop.permute.xlu0 %520
      %v522 = vsel %vm279, %v517, %v519
      %v523 = vsel %vm279, %v519, %v521
      %v525 = vsel %vm282, %v512, 0
      %v528 = vsel %vm286, %v522, 0
      %v531 = vsel %vm286, %v523, 0
      %533 = vmatprep.subr.bf16.mxu0 %v531
      %534 = vmatpush1.bf16.msra.mxu0 %v528
      %535 = vmatprep.subr.bf16.mxu0 0
      %536 = vmatpush1.bf16.msra.mxu0 0
      %537 = vmatprep.subr.bf16.mxu0 0
      %538 = vmatpush1.bf16.msra.mxu0 0
      %539 = vmatprep.subr.bf16.mxu0 0
      %540 = vmatpush1.bf16.msra.mxu0 0
      %541 = vmatprep.subr.bf16.mxu0 0
      %542 = vmatpush1.bf16.msra.mxu0 0
      %543 = vmatprep.subr.bf16.mxu0 0
      %544 = vmatpush1.bf16.msra.mxu0 0
      %545 = vmatprep.subr.bf16.mxu0 0
      %546 = vmatpush1.bf16.msra.mxu0 0
      %547 = vmatprep.subr.bf16.mxu0 0
      %548 = vmatpush1.bf16.msra.mxu0 0
      %549 = vmatprep.subr.bf16.mxu0 0
      %550 = vmatpush1.bf16.msra.mxu0 0
      %551 = vmatprep.subr.bf16.mxu0 0
      %552 = vmatpush1.bf16.msra.mxu0 0
      %553 = vmatprep.subr.bf16.mxu0 0
      %554 = vmatpush1.bf16.msra.mxu0 0
      %555 = vmatprep.subr.bf16.mxu0 0
      %556 = vmatpush1.bf16.msra.mxu0 0
      %557 = vmatprep.subr.bf16.mxu0 0
      %558 = vmatpush1.bf16.msra.mxu0 0
      %559 = vmatprep.subr.bf16.mxu0 0
      %560 = vmatpush1.bf16.msra.mxu0 0
      %561 = vmatprep.subr.bf16.mxu0 0
      %562 = vmatpush1.bf16.msra.mxu0 0
      %563 = vmatprep.subr.bf16.mxu0 0
      %564 = vmatpush1.bf16.msra.mxu0 0
      %565 = vmatprep.mubr.bf16.mxu0 0
      %566 = vmatmul.mubr.bf16.gmra.mrb[0].mxu0 %v525
      %v567 = vpop.f32.mrb[0].mxu0
      %v568 = vadd.f32 0.0, %v567
      %v569 = vpop.f32.mrb[0].mxu0
      %v570 = vadd.f32 0.0, %v569
      %v571 = vpop.f32.mrb[0].mxu0
      %v572 = vpop.f32.mrb[0].mxu0
      %573 = vdwg.mxu0
      %v574 = vadd.f32 %v509, %v568
      %v575 = vadd.f32 %v510, %v570
      %s576 = scalar_lea.vmem %s2, 20
      %v577 = vld [vmem:[%s576] sm:$0xf]
      %578 = vrot.lane.b32.xlu0 %v457, 126
      %v579 = vpop.permute.xlu0 %578
      %580 = vrot.lane.b32.xlu0 %v458, 126
      %v581 = vpop.permute.xlu0 %580
      %582 = vrot.lane.b32.xlu0 %v515, 126
      %v583 = vpop.permute.xlu0 %582
      %v584 = vsel %vm392, %v579, %v581
      %v585 = vsel %vm392, %v581, %v583
      %v587 = vsel %vm282, %v577, 0
      %v590 = vsel %vm286, %v584, 0
      %v593 = vsel %vm286, %v585, 0
      %595 = vmatprep.subr.bf16.mxu0 %v593
      %596 = vmatpush1.bf16.msra.mxu0 %v590
      %597 = vmatprep.subr.bf16.mxu0 0
      %598 = vmatpush1.bf16.msra.mxu0 0
      %599 = vmatprep.subr.bf16.mxu0 0
      %600 = vmatpush1.bf16.msra.mxu0 0
      %601 = vmatprep.subr.bf16.mxu0 0
      %602 = vmatpush1.bf16.msra.mxu0 0
      %603 = vmatprep.subr.bf16.mxu0 0
      %604 = vmatpush1.bf16.msra.mxu0 0
      %605 = vmatprep.subr.bf16.mxu0 0
      %606 = vmatpush1.bf16.msra.mxu0 0
      %607 = vmatprep.subr.bf16.mxu0 0
      %608 = vmatpush1.bf16.msra.mxu0 0
      %609 = vmatprep.subr.bf16.mxu0 0
      %610 = vmatpush1.bf16.msra.mxu0 0
      %611 = vmatprep.subr.bf16.mxu0 0
      %612 = vmatpush1.bf16.msra.mxu0 0
      %613 = vmatprep.subr.bf16.mxu0 0
      %614 = vmatpush1.bf16.msra.mxu0 0
      %615 = vmatprep.subr.bf16.mxu0 0
      %616 = vmatpush1.bf16.msra.mxu0 0
      %617 = vmatprep.subr.bf16.mxu0 0
      %618 = vmatpush1.bf16.msra.mxu0 0
      %619 = vmatprep.subr.bf16.mxu0 0
      %620 = vmatpush1.bf16.msra.mxu0 0
      %621 = vmatprep.subr.bf16.mxu0 0
      %622 = vmatpush1.bf16.msra.mxu0 0
      %623 = vmatprep.subr.bf16.mxu0 0
      %624 = vmatpush1.bf16.msra.mxu0 0
      %625 = vmatprep.subr.bf16.mxu0 0
      %626 = vmatpush1.bf16.msra.mxu0 0
      %627 = vmatprep.mubr.bf16.mxu0 0
      %628 = vmatmul.mubr.bf16.gmra.mrb[0].mxu0 %v587
      %v629 = vpop.f32.mrb[0].mxu0
      %v630 = vadd.f32 0.0, %v629
      %v631 = vpop.f32.mrb[0].mxu0
      %v632 = vadd.f32 0.0, %v631
      %v633 = vpop.f32.mrb[0].mxu0
      %v634 = vpop.f32.mrb[0].mxu0
      %635 = vdwg.mxu0
      %v636 = vadd.f32 %v574, %v630
      %v637 = vadd.f32 %v575, %v632
      %s638 = sadd.s32 %s256, 3
      %s639 = smul.addr %s638, 4
      %s640 = scalar_lea.vmem %s217, %s639
      %v641 = vld [vmem:[%s640] sm:$0xff]
      %v642 = vld [vmem:[%s640 + $0x8] sm:$0xf]
      %s643 = scalar_lea.vmem %s2, 24
      %v644 = vld [vmem:[%s643] sm:$0xf]
      %v646 = vunpack.c.l.b16 %v641
      %v647 = vunpack.c.h.b16 %v641
      %v648 = vpack.c.b16 %v646, %v646
      %v649 = vpack.c.b16 %v647, %v647
      %v651 = vsel %vm282, %v644, 0
      %v654 = vsel %vm286, %v648, 0
      %v657 = vsel %vm286, %v649, 0
      %659 = vmatprep.subr.bf16.mxu0 %v657
      %660 = vmatpush1.bf16.msra.mxu0 %v654
      %661 = vmatprep.subr.bf16.mxu0 0
      %662 = vmatpush1.bf16.msra.mxu0 0
      %663 = vmatprep.subr.bf16.mxu0 0
      %664 = vmatpush1.bf16.msra.mxu0 0
      %665 = vmatprep.subr.bf16.mxu0 0
      %666 = vmatpush1.bf16.msra.mxu0 0
      %667 = vmatprep.subr.bf16.mxu0 0
      %668 = vmatpush1.bf16.msra.mxu0 0
      %669 = vmatprep.subr.bf16.mxu0 0
      %670 = vmatpush1.bf16.msra.mxu0 0
      %671 = vmatprep.subr.bf16.mxu0 0
      %672 = vmatpush1.bf16.msra.mxu0 0
      %673 = vmatprep.subr.bf16.mxu0 0
      %674 = vmatpush1.bf16.msra.mxu0 0
      %675 = vmatprep.subr.bf16.mxu0 0
      %676 = vmatpush1.bf16.msra.mxu0 0
      %677 = vmatprep.subr.bf16.mxu0 0
      %678 = vmatpush1.bf16.msra.mxu0 0
      %679 = vmatprep.subr.bf16.mxu0 0
      %680 = vmatpush1.bf16.msra.mxu0 0
      %681 = vmatprep.subr.bf16.mxu0 0
      %682 = vmatpush1.bf16.msra.mxu0 0
      %683 = vmatprep.subr.bf16.mxu0 0
      %684 = vmatpush1.bf16.msra.mxu0 0
      %685 = vmatprep.subr.bf16.mxu0 0
      %686 = vmatpush1.bf16.msra.mxu0 0
      %687 = vmatprep.subr.bf16.mxu0 0
      %688 = vmatpush1.bf16.msra.mxu0 0
      %689 = vmatprep.subr.bf16.mxu0 0
      %690 = vmatpush1.bf16.msra.mxu0 0
      %691 = vmatprep.mubr.bf16.mxu0 0
      %692 = vmatmul.mubr.bf16.gmra.mrb[0].mxu0 %v651
      %v693 = vpop.f32.mrb[0].mxu0
      %v694 = vadd.f32 0.0, %v693
      %v695 = vpop.f32.mrb[0].mxu0
      %v696 = vadd.f32 0.0, %v695
      %v697 = vpop.f32.mrb[0].mxu0
      %v698 = vpop.f32.mrb[0].mxu0
      %699 = vdwg.mxu0
      %v700 = vadd.f32 %v636, %v694
      %v701 = vadd.f32 %v637, %v696
      %s702 = scalar_lea.vmem %s2, 28
      %v703 = vld [vmem:[%s702] sm:$0xf]
      %v705 = vunpack.c.l.b16 %v642
      %v706 = vpack.c.b16 %v705, %v705
      %707 = vrot.lane.b32.xlu0 %v648, 127
      %v708 = vpop.permute.xlu0 %707
      %709 = vrot.lane.b32.xlu0 %v649, 127
      %v710 = vpop.permute.xlu0 %709
      %711 = vrot.lane.b32.xlu0 %v706, 127
      %v712 = vpop.permute.xlu0 %711
      %v713 = vsel %vm279, %v708, %v710
      %v714 = vsel %vm279, %v710, %v712
      %v716 = vsel %vm282, %v703, 0
      %v719 = vsel %vm286, %v713, 0
      %v722 = vsel %vm286, %v714, 0
      %724 = vmatprep.subr.bf16.mxu0 %v722
      %725 = vmatpush1.bf16.msra.mxu0 %v719
      %726 = vmatprep.subr.bf16.mxu0 0
      %727 = vmatpush1.bf16.msra.mxu0 0
      %728 = vmatprep.subr.bf16.mxu0 0
      %729 = vmatpush1.bf16.msra.mxu0 0
      %730 = vmatprep.subr.bf16.mxu0 0
      %731 = vmatpush1.bf16.msra.mxu0 0
      %732 = vmatprep.subr.bf16.mxu0 0
      %733 = vmatpush1.bf16.msra.mxu0 0
      %734 = vmatprep.subr.bf16.mxu0 0
      %735 = vmatpush1.bf16.msra.mxu0 0
      %736 = vmatprep.subr.bf16.mxu0 0
      %737 = vmatpush1.bf16.msra.mxu0 0
      %738 = vmatprep.subr.bf16.mxu0 0
      %739 = vmatpush1.bf16.msra.mxu0 0
      %740 = vmatprep.subr.bf16.mxu0 0
      %741 = vmatpush1.bf16.msra.mxu0 0
      %742 = vmatprep.subr.bf16.mxu0 0
      %743 = vmatpush1.bf16.msra.mxu0 0
      %744 = vmatprep.subr.bf16.mxu0 0
      %745 = vmatpush1.bf16.msra.mxu0 0
      %746 = vmatprep.subr.bf16.mxu0 0
      %747 = vmatpush1.bf16.msra.mxu0 0
      %748 = vmatprep.subr.bf16.mxu0 0
      %749 = vmatpush1.bf16.msra.mxu0 0
      %750 = vmatprep.subr.bf16.mxu0 0
      %751 = vmatpush1.bf16.msra.mxu0 0
      %752 = vmatprep.subr.bf16.mxu0 0
      %753 = vmatpush1.bf16.msra.mxu0 0
      %754 = vmatprep.subr.bf16.mxu0 0
      %755 = vmatpush1.bf16.msra.mxu0 0
      %756 = vmatprep.mubr.bf16.mxu0 0
      %757 = vmatmul.mubr.bf16.gmra.mrb[0].mxu0 %v716
      %v758 = vpop.f32.mrb[0].mxu0
      %v759 = vadd.f32 0.0, %v758
      %v760 = vpop.f32.mrb[0].mxu0
      %v761 = vadd.f32 0.0, %v760
      %v762 = vpop.f32.mrb[0].mxu0
      %v763 = vpop.f32.mrb[0].mxu0
      %764 = vdwg.mxu0
      %v765 = vadd.f32 %v700, %v759
      %v766 = vadd.f32 %v701, %v761
      %s767 = scalar_lea.vmem %s2, 32
      %v768 = vld [vmem:[%s767] sm:$0xf]
      %769 = vrot.lane.b32.xlu0 %v648, 126
      %v770 = vpop.permute.xlu0 %769
      %771 = vrot.lane.b32.xlu0 %v649, 126
      %v772 = vpop.permute.xlu0 %771
      %773 = vrot.lane.b32.xlu0 %v706, 126
      %v774 = vpop.permute.xlu0 %773
      %v775 = vsel %vm392, %v770, %v772
      %v776 = vsel %vm392, %v772, %v774
      %v778 = vsel %vm282, %v768, 0
      %v781 = vsel %vm286, %v775, 0
      %v784 = vsel %vm286, %v776, 0
      %786 = vmatprep.subr.bf16.mxu0 %v784
      %787 = vmatpush1.bf16.msra.mxu0 %v781
      %788 = vmatprep.subr.bf16.mxu0 0
      %789 = vmatpush1.bf16.msra.mxu0 0
      %790 = vmatprep.subr.bf16.mxu0 0
      %791 = vmatpush1.bf16.msra.mxu0 0
      %792 = vmatprep.subr.bf16.mxu0 0
      %793 = vmatpush1.bf16.msra.mxu0 0
      %794 = vmatprep.subr.bf16.mxu0 0
      %795 = vmatpush1.bf16.msra.mxu0 0
      %796 = vmatprep.subr.bf16.mxu0 0
      %797 = vmatpush1.bf16.msra.mxu0 0
      %798 = vmatprep.subr.bf16.mxu0 0
      %799 = vmatpush1.bf16.msra.mxu0 0
      %800 = vmatprep.subr.bf16.mxu0 0
      %801 = vmatpush1.bf16.msra.mxu0 0
      %802 = vmatprep.subr.bf16.mxu0 0
      %803 = vmatpush1.bf16.msra.mxu0 0
      %804 = vmatprep.subr.bf16.mxu0 0
      %805 = vmatpush1.bf16.msra.mxu0 0
      %806 = vmatprep.subr.bf16.mxu0 0
      %807 = vmatpush1.bf16.msra.mxu0 0
      %808 = vmatprep.subr.bf16.mxu0 0
      %809 = vmatpush1.bf16.msra.mxu0 0
      %810 = vmatprep.subr.bf16.mxu0 0
      %811 = vmatpush1.bf16.msra.mxu0 0
      %812 = vmatprep.subr.bf16.mxu0 0
      %813 = vmatpush1.bf16.msra.mxu0 0
      %814 = vmatprep.subr.bf16.mxu0 0
      %815 = vmatpush1.bf16.msra.mxu0 0
      %816 = vmatprep.subr.bf16.mxu0 0
      %817 = vmatpush1.bf16.msra.mxu0 0
      %818 = vmatprep.mubr.bf16.mxu0 0
      %819 = vmatmul.mubr.bf16.gmra.mrb[0].mxu0 %v778
      %v820 = vpop.f32.mrb[0].mxu0
      %v821 = vadd.f32 0.0, %v820
      %v822 = vpop.f32.mrb[0].mxu0
      %v823 = vadd.f32 0.0, %v822
      %v824 = vpop.f32.mrb[0].mxu0
      %v825 = vpop.f32.mrb[0].mxu0
      %826 = vdwg.mxu0
      %v827 = vadd.f32 %v765, %v821
      %v828 = vadd.f32 %v766, %v823
      %v829 = vmul.f32 %v827, %v248
      %v830 = vmul.f32 %v828, %v248
      %v831 = vadd.f32 %v829, %v254
      %v832 = vadd.f32 %v830, %v254
      %v833 = vmax.f32 %v831, 0.0
      %v834 = vmax.f32 %v832, 0.0
      %v835 = vmin.f32 %v833, 20.0
      %v836 = vmin.f32 %v834, 20.0
      %v837 = vsel %vm242, 0.0, %v835
      %v838 = vsel %vm243, 0.0, %v836
      %839 = vst [vmem:[%s226] sm:$0xff] %v837
      %840 = vst [vmem:[%s226 + $0x8] sm:$0xff] %v838
      %v841 = vld [vmem:[%s640] sm:$0xff]
      %v842 = vld [vmem:[%s640 + $0x8] sm:$0xf]
      %v843 = vld [vmem:[%s2] sm:$0xf]
      %v844 = vld [vmem:[%s263] sm:$0xf]
      %v847 = vunpack.c.l.b16 %v841
      %v848 = vunpack.c.h.b16 %v841
      %v849 = vunpack.c.l.b16 %v842
      %v850 = vpack.c.b16 %v847, %v847
      %v851 = vpack.c.b16 %v848, %v848
      %v852 = vpack.c.b16 %v849, %v849
      %853 = vrot.lane.b32.xlu0 %v850, 127
      %v854 = vpop.permute.xlu0 %853
      %855 = vrot.lane.b32.xlu0 %v851, 127
      %v856 = vpop.permute.xlu0 %855
      %857 = vrot.lane.b32.xlu0 %v852, 127
      %v858 = vpop.permute.xlu0 %857
      %v859 = vsel %vm279, %v854, %v856
      %v860 = vsel %vm279, %v856, %v858
      %v862 = vsel %vm282, %v844, 0
      %v865 = vsel %vm286, %v859, 0
      %v868 = vsel %vm286, %v860, 0
      %870 = vmatprep.subr.bf16.mxu0 %v868
      %871 = vmatpush1.bf16.msra.mxu0 %v865
      %872 = vmatprep.subr.bf16.mxu0 0
      %873 = vmatpush1.bf16.msra.mxu0 0
      %874 = vmatprep.subr.bf16.mxu0 0
      %875 = vmatpush1.bf16.msra.mxu0 0
      %876 = vmatprep.subr.bf16.mxu0 0
      %877 = vmatpush1.bf16.msra.mxu0 0
      %878 = vmatprep.subr.bf16.mxu0 0
      %879 = vmatpush1.bf16.msra.mxu0 0
      %880 = vmatprep.subr.bf16.mxu0 0
      %881 = vmatpush1.bf16.msra.mxu0 0
      %882 = vmatprep.subr.bf16.mxu0 0
      %883 = vmatpush1.bf16.msra.mxu0 0
      %884 = vmatprep.subr.bf16.mxu0 0
      %885 = vmatpush1.bf16.msra.mxu0 0
      %886 = vmatprep.subr.bf16.mxu0 0
      %887 = vmatpush1.bf16.msra.mxu0 0
      %888 = vmatprep.subr.bf16.mxu0 0
      %889 = vmatpush1.bf16.msra.mxu0 0
      %890 = vmatprep.subr.bf16.mxu0 0
      %891 = vmatpush1.bf16.msra.mxu0 0
      %892 = vmatprep.subr.bf16.mxu0 0
      %893 = vmatpush1.bf16.msra.mxu0 0
      %894 = vmatprep.subr.bf16.mxu0 0
      %895 = vmatpush1.bf16.msra.mxu0 0
      %896 = vmatprep.subr.bf16.mxu0 0
      %897 = vmatpush1.bf16.msra.mxu0 0
      %898 = vmatprep.subr.bf16.mxu0 0
      %899 = vmatpush1.bf16.msra.mxu0 0
      %900 = vmatprep.subr.bf16.mxu0 0
      %901 = vmatpush1.bf16.msra.mxu0 0
      %902 = vmatprep.mubr.bf16.mxu0 0
      %903 = vmatmul.mubr.bf16.gmra.mrb[0].mxu0 %v862
      %v904 = vpop.f32.mrb[0].mxu0
      %v905 = vadd.f32 0.0, %v904
      %v906 = vpop.f32.mrb[0].mxu0
      %v907 = vadd.f32 0.0, %v906
      %v908 = vpop.f32.mrb[0].mxu0
      %v909 = vpop.f32.mrb[0].mxu0
      %910 = vdwg.mxu0
      %v912 = vsel %vm282, %v843, 0
      %v915 = vsel %vm286, %v850, 0
      %v918 = vsel %vm286, %v851, 0
      %920 = vmatprep.subr.bf16.mxu0 %v918
      %921 = vmatpush1.bf16.msra.mxu0 %v915
      %922 = vmatprep.subr.bf16.mxu0 0
      %923 = vmatpush1.bf16.msra.mxu0 0
      %924 = vmatprep.subr.bf16.mxu0 0
      %925 = vmatpush1.bf16.msra.mxu0 0
      %926 = vmatprep.subr.bf16.mxu0 0
      %927 = vmatpush1.bf16.msra.mxu0 0
      %928 = vmatprep.subr.bf16.mxu0 0
      %929 = vmatpush1.bf16.msra.mxu0 0
      %930 = vmatprep.subr.bf16.mxu0 0
      %931 = vmatpush1.bf16.msra.mxu0 0
      %932 = vmatprep.subr.bf16.mxu0 0
      %933 = vmatpush1.bf16.msra.mxu0 0
      %934 = vmatprep.subr.bf16.mxu0 0
      %935 = vmatpush1.bf16.msra.mxu0 0
      %936 = vmatprep.subr.bf16.mxu0 0
      %937 = vmatpush1.bf16.msra.mxu0 0
      %938 = vmatprep.subr.bf16.mxu0 0
      %939 = vmatpush1.bf16.msra.mxu0 0
      %940 = vmatprep.subr.bf16.mxu0 0
      %941 = vmatpush1.bf16.msra.mxu0 0
      %942 = vmatprep.subr.bf16.mxu0 0
      %943 = vmatpush1.bf16.msra.mxu0 0
      %944 = vmatprep.subr.bf16.mxu0 0
      %945 = vmatpush1.bf16.msra.mxu0 0
      %946 = vmatprep.subr.bf16.mxu0 0
      %947 = vmatpush1.bf16.msra.mxu0 0
      %948 = vmatprep.subr.bf16.mxu0 0
      %949 = vmatpush1.bf16.msra.mxu0 0
      %950 = vmatprep.subr.bf16.mxu0 0
      %951 = vmatpush1.bf16.msra.mxu0 0
      %952 = vmatprep.mubr.bf16.mxu0 0
      %953 = vmatmul.mubr.bf16.gmra.mrb[0].mxu0 %v912
      %v954 = vpop.f32.mrb[0].mxu0
      %v955 = vadd.f32 %v905, %v954
      %v956 = vpop.f32.mrb[0].mxu0
      %v957 = vadd.f32 %v907, %v956
      %v958 = vpop.f32.mrb[0].mxu0
      %v959 = vpop.f32.mrb[0].mxu0
      %960 = vdwg.mxu0
      %v961 = vld [vmem:[%s384] sm:$0xf]
      %962 = vrot.lane.b32.xlu0 %v850, 126
      %v963 = vpop.permute.xlu0 %962
      %964 = vrot.lane.b32.xlu0 %v851, 126
      %v965 = vpop.permute.xlu0 %964
      %966 = vrot.lane.b32.xlu0 %v852, 126
      %v967 = vpop.permute.xlu0 %966
      %v968 = vsel %vm392, %v963, %v965
      %v969 = vsel %vm392, %v965, %v967
      %v971 = vsel %vm282, %v961, 0
      %v974 = vsel %vm286, %v968, 0
      %v977 = vsel %vm286, %v969, 0
      %979 = vmatprep.subr.bf16.mxu0 %v977
      %980 = vmatpush1.bf16.msra.mxu0 %v974
      %981 = vmatprep.subr.bf16.mxu0 0
      %982 = vmatpush1.bf16.msra.mxu0 0
      %983 = vmatprep.subr.bf16.mxu0 0
      %984 = vmatpush1.bf16.msra.mxu0 0
      %985 = vmatprep.subr.bf16.mxu0 0
      %986 = vmatpush1.bf16.msra.mxu0 0
      %987 = vmatprep.subr.bf16.mxu0 0
      %988 = vmatpush1.bf16.msra.mxu0 0
      %989 = vmatprep.subr.bf16.mxu0 0
      %990 = vmatpush1.bf16.msra.mxu0 0
      %991 = vmatprep.subr.bf16.mxu0 0
      %992 = vmatpush1.bf16.msra.mxu0 0
      %993 = vmatprep.subr.bf16.mxu0 0
      %994 = vmatpush1.bf16.msra.mxu0 0
      %995 = vmatprep.subr.bf16.mxu0 0
      %996 = vmatpush1.bf16.msra.mxu0 0
      %997 = vmatprep.subr.bf16.mxu0 0
      %998 = vmatpush1.bf16.msra.mxu0 0
      %999 = vmatprep.subr.bf16.mxu0 0
      %1000 = vmatpush1.bf16.msra.mxu0 0
      %1001 = vmatprep.subr.bf16.mxu0 0
      %1002 = vmatpush1.bf16.msra.mxu0 0
      %1003 = vmatprep.subr.bf16.mxu0 0
      %1004 = vmatpush1.bf16.msra.mxu0 0
      %1005 = vmatprep.subr.bf16.mxu0 0
      %1006 = vmatpush1.bf16.msra.mxu0 0
      %1007 = vmatprep.subr.bf16.mxu0 0
      %1008 = vmatpush1.bf16.msra.mxu0 0
      %1009 = vmatprep.subr.bf16.mxu0 0
      %1010 = vmatpush1.bf16.msra.mxu0 0
      %1011 = vmatprep.mubr.bf16.mxu0 0
      %1012 = vmatmul.mubr.bf16.gmra.mrb[0].mxu0 %v971
      %v1013 = vpop.f32.mrb[0].mxu0
      %v1014 = vadd.f32 0.0, %v1013
      %v1015 = vpop.f32.mrb[0].mxu0
      %v1016 = vadd.f32 0.0, %v1015
      %v1017 = vpop.f32.mrb[0].mxu0
      %v1018 = vpop.f32.mrb[0].mxu0
      %1019 = vdwg.mxu0
      %v1020 = vadd.f32 %v955, %v1014
      %v1021 = vadd.f32 %v957, %v1016
      %s1022 = sadd.s32 %s638, 15
      %s1023 = smul.addr %s1022, 4
      %s1024 = scalar_lea.vmem %s217, %s1023
      %v1025 = vld [vmem:[%s1024] sm:$0xff]
      %v1026 = vld [vmem:[%s1024 + $0x8] sm:$0xf]
      %v1027 = vld [vmem:[%s452] sm:$0xf]
      %v1029 = vunpack.c.l.b16 %v1025
      %v1030 = vunpack.c.h.b16 %v1025
      %v1031 = vpack.c.b16 %v1029, %v1029
      %v1032 = vpack.c.b16 %v1030, %v1030
      %v1034 = vsel %vm282, %v1027, 0
      %v1037 = vsel %vm286, %v1031, 0
      %v1040 = vsel %vm286, %v1032, 0
      %1042 = vmatprep.subr.bf16.mxu0 %v1040
      %1043 = vmatpush1.bf16.msra.mxu0 %v1037
      %1044 = vmatprep.subr.bf16.mxu0 0
      %1045 = vmatpush1.bf16.msra.mxu0 0
      %1046 = vmatprep.subr.bf16.mxu0 0
      %1047 = vmatpush1.bf16.msra.mxu0 0
      %1048 = vmatprep.subr.bf16.mxu0 0
      %1049 = vmatpush1.bf16.msra.mxu0 0
      %1050 = vmatprep.subr.bf16.mxu0 0
      %1051 = vmatpush1.bf16.msra.mxu0 0
      %1052 = vmatprep.subr.bf16.mxu0 0
      %1053 = vmatpush1.bf16.msra.mxu0 0
      %1054 = vmatprep.subr.bf16.mxu0 0
      %1055 = vmatpush1.bf16.msra.mxu0 0
      %1056 = vmatprep.subr.bf16.mxu0 0
      %1057 = vmatpush1.bf16.msra.mxu0 0
      %1058 = vmatprep.subr.bf16.mxu0 0
      %1059 = vmatpush1.bf16.msra.mxu0 0
      %1060 = vmatprep.subr.bf16.mxu0 0
      %1061 = vmatpush1.bf16.msra.mxu0 0
      %1062 = vmatprep.subr.bf16.mxu0 0
      %1063 = vmatpush1.bf16.msra.mxu0 0
      %1064 = vmatprep.subr.bf16.mxu0 0
      %1065 = vmatpush1.bf16.msra.mxu0 0
      %1066 = vmatprep.subr.bf16.mxu0 0
      %1067 = vmatpush1.bf16.msra.mxu0 0
      %1068 = vmatprep.subr.bf16.mxu0 0
      %1069 = vmatpush1.bf16.msra.mxu0 0
      %1070 = vmatprep.subr.bf16.mxu0 0
      %1071 = vmatpush1.bf16.msra.mxu0 0
      %1072 = vmatprep.subr.bf16.mxu0 0
      %1073 = vmatpush1.bf16.msra.mxu0 0
      %1074 = vmatprep.mubr.bf16.mxu0 0
      %1075 = vmatmul.mubr.bf16.gmra.mrb[0].mxu0 %v1034
      %v1076 = vpop.f32.mrb[0].mxu0
      %v1077 = vadd.f32 0.0, %v1076
      %v1078 = vpop.f32.mrb[0].mxu0
      %v1079 = vadd.f32 0.0, %v1078
      %v1080 = vpop.f32.mrb[0].mxu0
      %v1081 = vpop.f32.mrb[0].mxu0
      %1082 = vdwg.mxu0
      %v1083 = vadd.f32 %v1020, %v1077
      %v1084 = vadd.f32 %v1021, %v1079
      %v1085 = vld [vmem:[%s511] sm:$0xf]
      %v1087 = vunpack.c.l.b16 %v1026
      %v1088 = vpack.c.b16 %v1087, %v1087
      %1089 = vrot.lane.b32.xlu0 %v1031, 127
      %v1090 = vpop.permute.xlu0 %1089
      %1091 = vrot.lane.b32.xlu0 %v1032, 127
      %v1092 = vpop.permute.xlu0 %1091
      %1093 = vrot.lane.b32.xlu0 %v1088, 127
      %v1094 = vpop.permute.xlu0 %1093
      %v1095 = vsel %vm279, %v1090, %v1092
      %v1096 = vsel %vm279, %v1092, %v1094
      %v1098 = vsel %vm282, %v1085, 0
      %v1101 = vsel %vm286, %v1095, 0
      %v1104 = vsel %vm286, %v1096, 0
      %1106 = vmatprep.subr.bf16.mxu0 %v1104
      %1107 = vmatpush1.bf16.msra.mxu0 %v1101
      %1108 = vmatprep.subr.bf16.mxu0 0
      %1109 = vmatpush1.bf16.msra.mxu0 0
      %1110 = vmatprep.subr.bf16.mxu0 0
      %1111 = vmatpush1.bf16.msra.mxu0 0
      %1112 = vmatprep.subr.bf16.mxu0 0
      %1113 = vmatpush1.bf16.msra.mxu0 0
      %1114 = vmatprep.subr.bf16.mxu0 0
      %1115 = vmatpush1.bf16.msra.mxu0 0
      %1116 = vmatprep.subr.bf16.mxu0 0
      %1117 = vmatpush1.bf16.msra.mxu0 0
      %1118 = vmatprep.subr.bf16.mxu0 0
      %1119 = vmatpush1.bf16.msra.mxu0 0
      %1120 = vmatprep.subr.bf16.mxu0 0
      %1121 = vmatpush1.bf16.msra.mxu0 0
      %1122 = vmatprep.subr.bf16.mxu0 0
      %1123 = vmatpush1.bf16.msra.mxu0 0
      %1124 = vmatprep.subr.bf16.mxu0 0
      %1125 = vmatpush1.bf16.msra.mxu0 0
      %1126 = vmatprep.subr.bf16.mxu0 0
      %1127 = vmatpush1.bf16.msra.mxu0 0
      %1128 = vmatprep.subr.bf16.mxu0 0
      %1129 = vmatpush1.bf16.msra.mxu0 0
      %1130 = vmatprep.subr.bf16.mxu0 0
      %1131 = vmatpush1.bf16.msra.mxu0 0
      %1132 = vmatprep.subr.bf16.mxu0 0
      %1133 = vmatpush1.bf16.msra.mxu0 0
      %1134 = vmatprep.subr.bf16.mxu0 0
      %1135 = vmatpush1.bf16.msra.mxu0 0
      %1136 = vmatprep.subr.bf16.mxu0 0
      %1137 = vmatpush1.bf16.msra.mxu0 0
      %1138 = vmatprep.mubr.bf16.mxu0 0
      %1139 = vmatmul.mubr.bf16.gmra.mrb[0].mxu0 %v1098
      %v1140 = vpop.f32.mrb[0].mxu0
      %v1141 = vadd.f32 0.0, %v1140
      %v1142 = vpop.f32.mrb[0].mxu0
      %v1143 = vadd.f32 0.0, %v1142
      %v1144 = vpop.f32.mrb[0].mxu0
      %v1145 = vpop.f32.mrb[0].mxu0
      %1146 = vdwg.mxu0
      %v1147 = vadd.f32 %v1083, %v1141
      %v1148 = vadd.f32 %v1084, %v1143
      %v1149 = vld [vmem:[%s576] sm:$0xf]
      %1150 = vrot.lane.b32.xlu0 %v1031, 126
      %v1151 = vpop.permute.xlu0 %1150
      %1152 = vrot.lane.b32.xlu0 %v1032, 126
      %v1153 = vpop.permute.xlu0 %1152
      %1154 = vrot.lane.b32.xlu0 %v1088, 126
      %v1155 = vpop.permute.xlu0 %1154
      %v1156 = vsel %vm392, %v1151, %v1153
      %v1157 = vsel %vm392, %v1153, %v1155
      %v1159 = vsel %vm282, %v1149, 0
      %v1162 = vsel %vm286, %v1156, 0
      %v1165 = vsel %vm286, %v1157, 0
      %1167 = vmatprep.subr.bf16.mxu0 %v1165
      %1168 = vmatpush1.bf16.msra.mxu0 %v1162
      %1169 = vmatprep.subr.bf16.mxu0 0
      %1170 = vmatpush1.bf16.msra.mxu0 0
      %1171 = vmatprep.subr.bf16.mxu0 0
      %1172 = vmatpush1.bf16.msra.mxu0 0
      %1173 = vmatprep.subr.bf16.mxu0 0
      %1174 = vmatpush1.bf16.msra.mxu0 0
      %1175 = vmatprep.subr.bf16.mxu0 0
      %1176 = vmatpush1.bf16.msra.mxu0 0
      %1177 = vmatprep.subr.bf16.mxu0 0
      %1178 = vmatpush1.bf16.msra.mxu0 0
      %1179 = vmatprep.subr.bf16.mxu0 0
      %1180 = vmatpush1.bf16.msra.mxu0 0
      %1181 = vmatprep.subr.bf16.mxu0 0
      %1182 = vmatpush1.bf16.msra.mxu0 0
      %1183 = vmatprep.subr.bf16.mxu0 0
      %1184 = vmatpush1.bf16.msra.mxu0 0
      %1185 = vmatprep.subr.bf16.mxu0 0
      %1186 = vmatpush1.bf16.msra.mxu0 0
      %1187 = vmatprep.subr.bf16.mxu0 0
      %1188 = vmatpush1.bf16.msra.mxu0 0
      %1189 = vmatprep.subr.bf16.mxu0 0
      %1190 = vmatpush1.bf16.msra.mxu0 0
      %1191 = vmatprep.subr.bf16.mxu0 0
      %1192 = vmatpush1.bf16.msra.mxu0 0
      %1193 = vmatprep.subr.bf16.mxu0 0
      %1194 = vmatpush1.bf16.msra.mxu0 0
      %1195 = vmatprep.subr.bf16.mxu0 0
      %1196 = vmatpush1.bf16.msra.mxu0 0
      %1197 = vmatprep.subr.bf16.mxu0 0
      %1198 = vmatpush1.bf16.msra.mxu0 0
      %1199 = vmatprep.mubr.bf16.mxu0 0
      %1200 = vmatmul.mubr.bf16.gmra.mrb[0].mxu0 %v1159
      %v1201 = vpop.f32.mrb[0].mxu0
      %v1202 = vadd.f32 0.0, %v1201
      %v1203 = vpop.f32.mrb[0].mxu0
      %v1204 = vadd.f32 0.0, %v1203
      %v1205 = vpop.f32.mrb[0].mxu0
      %v1206 = vpop.f32.mrb[0].mxu0
      %1207 = vdwg.mxu0
      %v1208 = vadd.f32 %v1147, %v1202
      %v1209 = vadd.f32 %v1148, %v1204
      %s1210 = sadd.s32 %s256, 6
      %s1211 = smul.addr %s1210, 4
      %s1212 = scalar_lea.vmem %s217, %s1211
      %v1213 = vld [vmem:[%s1212] sm:$0xff]
      %v1214 = vld [vmem:[%s1212 + $0x8] sm:$0xf]
      %v1215 = vld [vmem:[%s643] sm:$0xf]
      %v1217 = vunpack.c.l.b16 %v1213
      %v1218 = vunpack.c.h.b16 %v1213
      %v1219 = vpack.c.b16 %v1217, %v1217
      %v1220 = vpack.c.b16 %v1218, %v1218
      %v1222 = vsel %vm282, %v1215, 0
      %v1225 = vsel %vm286, %v1219, 0
      %v1228 = vsel %vm286, %v1220, 0
      %1230 = vmatprep.subr.bf16.mxu0 %v1228
      %1231 = vmatpush1.bf16.msra.mxu0 %v1225
      %1232 = vmatprep.subr.bf16.mxu0 0
      %1233 = vmatpush1.bf16.msra.mxu0 0
      %1234 = vmatprep.subr.bf16.mxu0 0
      %1235 = vmatpush1.bf16.msra.mxu0 0
      %1236 = vmatprep.subr.bf16.mxu0 0
      %1237 = vmatpush1.bf16.msra.mxu0 0
      %1238 = vmatprep.subr.bf16.mxu0 0
      %1239 = vmatpush1.bf16.msra.mxu0 0
      %1240 = vmatprep.subr.bf16.mxu0 0
      %1241 = vmatpush1.bf16.msra.mxu0 0
      %1242 = vmatprep.subr.bf16.mxu0 0
      %1243 = vmatpush1.bf16.msra.mxu0 0
      %1244 = vmatprep.subr.bf16.mxu0 0
      %1245 = vmatpush1.bf16.msra.mxu0 0
      %1246 = vmatprep.subr.bf16.mxu0 0
      %1247 = vmatpush1.bf16.msra.mxu0 0
      %1248 = vmatprep.subr.bf16.mxu0 0
      %1249 = vmatpush1.bf16.msra.mxu0 0
      %1250 = vmatprep.subr.bf16.mxu0 0
      %1251 = vmatpush1.bf16.msra.mxu0 0
      %1252 = vmatprep.subr.bf16.mxu0 0
      %1253 = vmatpush1.bf16.msra.mxu0 0
      %1254 = vmatprep.subr.bf16.mxu0 0
      %1255 = vmatpush1.bf16.msra.mxu0 0
      %1256 = vmatprep.subr.bf16.mxu0 0
      %1257 = vmatpush1.bf16.msra.mxu0 0
      %1258 = vmatprep.subr.bf16.mxu0 0
      %1259 = vmatpush1.bf16.msra.mxu0 0
      %1260 = vmatprep.subr.bf16.mxu0 0
      %1261 = vmatpush1.bf16.msra.mxu0 0
      %1262 = vmatprep.mubr.bf16.mxu0 0
      %1263 = vmatmul.mubr.bf16.gmra.mrb[0].mxu0 %v1222
      %v1264 = vpop.f32.mrb[0].mxu0
      %v1265 = vadd.f32 0.0, %v1264
      %v1266 = vpop.f32.mrb[0].mxu0
      %v1267 = vadd.f32 0.0, %v1266
      %v1268 = vpop.f32.mrb[0].mxu0
      %v1269 = vpop.f32.mrb[0].mxu0
      %1270 = vdwg.mxu0
      %v1271 = vadd.f32 %v1208, %v1265
      %v1272 = vadd.f32 %v1209, %v1267
      %v1273 = vld [vmem:[%s702] sm:$0xf]
      %v1275 = vunpack.c.l.b16 %v1214
      %v1276 = vpack.c.b16 %v1275, %v1275
      %1277 = vrot.lane.b32.xlu0 %v1219, 127
      %v1278 = vpop.permute.xlu0 %1277
      %1279 = vrot.lane.b32.xlu0 %v1220, 127
      %v1280 = vpop.permute.xlu0 %1279
      %1281 = vrot.lane.b32.xlu0 %v1276, 127
      %v1282 = vpop.permute.xlu0 %1281
      %v1283 = vsel %vm279, %v1278, %v1280
      %v1284 = vsel %vm279, %v1280, %v1282
      %v1286 = vsel %vm282, %v1273, 0
      %v1289 = vsel %vm286, %v1283, 0
      %v1292 = vsel %vm286, %v1284, 0
      %1294 = vmatprep.subr.bf16.mxu0 %v1292
      %1295 = vmatpush1.bf16.msra.mxu0 %v1289
      %1296 = vmatprep.subr.bf16.mxu0 0
      %1297 = vmatpush1.bf16.msra.mxu0 0
      %1298 = vmatprep.subr.bf16.mxu0 0
      %1299 = vmatpush1.bf16.msra.mxu0 0
      %1300 = vmatprep.subr.bf16.mxu0 0
      %1301 = vmatpush1.bf16.msra.mxu0 0
      %1302 = vmatprep.subr.bf16.mxu0 0
      %1303 = vmatpush1.bf16.msra.mxu0 0
      %1304 = vmatprep.subr.bf16.mxu0 0
      %1305 = vmatpush1.bf16.msra.mxu0 0
      %1306 = vmatprep.subr.bf16.mxu0 0
      %1307 = vmatpush1.bf16.msra.mxu0 0
      %1308 = vmatprep.subr.bf16.mxu0 0
      %1309 = vmatpush1.bf16.msra.mxu0 0
      %1310 = vmatprep.subr.bf16.mxu0 0
      %1311 = vmatpush1.bf16.msra.mxu0 0
      %1312 = vmatprep.subr.bf16.mxu0 0
      %1313 = vmatpush1.bf16.msra.mxu0 0
      %1314 = vmatprep.subr.bf16.mxu0 0
      %1315 = vmatpush1.bf16.msra.mxu0 0
      %1316 = vmatprep.subr.bf16.mxu0 0
      %1317 = vmatpush1.bf16.msra.mxu0 0
      %1318 = vmatprep.subr.bf16.mxu0 0
      %1319 = vmatpush1.bf16.msra.mxu0 0
      %1320 = vmatprep.subr.bf16.mxu0 0
      %1321 = vmatpush1.bf16.msra.mxu0 0
      %1322 = vmatprep.subr.bf16.mxu0 0
      %1323 = vmatpush1.bf16.msra.mxu0 0
      %1324 = vmatprep.subr.bf16.mxu0 0
      %1325 = vmatpush1.bf16.msra.mxu0 0
      %1326 = vmatprep.mubr.bf16.mxu0 0
      %1327 = vmatmul.mubr.bf16.gmra.mrb[0].mxu0 %v1286
      %v1328 = vpop.f32.mrb[0].mxu0
      %v1329 = vadd.f32 0.0, %v1328
      %v1330 = vpop.f32.mrb[0].mxu0
      %v1331 = vadd.f32 0.0, %v1330
      %v1332 = vpop.f32.mrb[0].mxu0
      %v1333 = vpop.f32.mrb[0].mxu0
      %1334 = vdwg.mxu0
      %v1335 = vadd.f32 %v1271, %v1329
      %v1336 = vadd.f32 %v1272, %v1331
      %v1337 = vld [vmem:[%s767] sm:$0xf]
      %1338 = vrot.lane.b32.xlu0 %v1219, 126
      %v1339 = vpop.permute.xlu0 %1338
      %1340 = vrot.lane.b32.xlu0 %v1220, 126
      %v1341 = vpop.permute.xlu0 %1340
      %1342 = vrot.lane.b32.xlu0 %v1276, 126
      %v1343 = vpop.permute.xlu0 %1342
      %v1344 = vsel %vm392, %v1339, %v1341
      %v1345 = vsel %vm392, %v1341, %v1343
      %v1347 = vsel %vm282, %v1337, 0
      %v1350 = vsel %vm286, %v1344, 0
      %v1353 = vsel %vm286, %v1345, 0
      %1355 = vmatprep.subr.bf16.mxu0 %v1353
      %1356 = vmatpush1.bf16.msra.mxu0 %v1350
      %1357 = vmatprep.subr.bf16.mxu0 0
      %1358 = vmatpush1.bf16.msra.mxu0 0
      %1359 = vmatprep.subr.bf16.mxu0 0
      %1360 = vmatpush1.bf16.msra.mxu0 0
      %1361 = vmatprep.subr.bf16.mxu0 0
      %1362 = vmatpush1.bf16.msra.mxu0 0
      %1363 = vmatprep.subr.bf16.mxu0 0
      %1364 = vmatpush1.bf16.msra.mxu0 0
      %1365 = vmatprep.subr.bf16.mxu0 0
      %1366 = vmatpush1.bf16.msra.mxu0 0
      %1367 = vmatprep.subr.bf16.mxu0 0
      %1368 = vmatpush1.bf16.msra.mxu0 0
      %1369 = vmatprep.subr.bf16.mxu0 0
      %1370 = vmatpush1.bf16.msra.mxu0 0
      %1371 = vmatprep.subr.bf16.mxu0 0
      %1372 = vmatpush1.bf16.msra.mxu0 0
      %1373 = vmatprep.subr.bf16.mxu0 0
      %1374 = vmatpush1.bf16.msra.mxu0 0
      %1375 = vmatprep.subr.bf16.mxu0 0
      %1376 = vmatpush1.bf16.msra.mxu0 0
      %1377 = vmatprep.subr.bf16.mxu0 0
      %1378 = vmatpush1.bf16.msra.mxu0 0
      %1379 = vmatprep.subr.bf16.mxu0 0
      %1380 = vmatpush1.bf16.msra.mxu0 0
      %1381 = vmatprep.subr.bf16.mxu0 0
      %1382 = vmatpush1.bf16.msra.mxu0 0
      %1383 = vmatprep.subr.bf16.mxu0 0
      %1384 = vmatpush1.bf16.msra.mxu0 0
      %1385 = vmatprep.subr.bf16.mxu0 0
      %1386 = vmatpush1.bf16.msra.mxu0 0
      %1387 = vmatprep.mubr.bf16.mxu0 0
      %1388 = vmatmul.mubr.bf16.gmra.mrb[0].mxu0 %v1347
      %v1389 = vpop.f32.mrb[0].mxu0
      %v1390 = vadd.f32 0.0, %v1389
      %v1391 = vpop.f32.mrb[0].mxu0
      %v1392 = vadd.f32 0.0, %v1391
      %v1393 = vpop.f32.mrb[0].mxu0
      %v1394 = vpop.f32.mrb[0].mxu0
      %1395 = vdwg.mxu0
      %v1396 = vadd.f32 %v1335, %v1390
      %v1397 = vadd.f32 %v1336, %v1392
      %v1398 = vmul.f32 %v1396, %v248
      %v1399 = vmul.f32 %v1397, %v248
      %v1400 = vadd.f32 %v1398, %v254
      %v1401 = vadd.f32 %v1399, %v254
      %v1402 = vmax.f32 %v1400, 0.0
      %v1403 = vmax.f32 %v1401, 0.0
      %v1404 = vmin.f32 %v1402, 20.0
      %v1405 = vmin.f32 %v1403, 20.0
      %v1406 = vsel %vm242, 0.0, %v1404
      %v1407 = vsel %vm243, 0.0, %v1405
      %s1408 = scalar_lea.vmem %s226, 16
      %1409 = vst [vmem:[%s1408] sm:$0xff] %v1406
      %1410 = vst [vmem:[%s1408 + $0x8] sm:$0xff] %v1407
      %v1411 = vld [vmem:[%s1212] sm:$0xff]
      %v1412 = vld [vmem:[%s1212 + $0x8] sm:$0xf]
      %v1413 = vld [vmem:[%s2] sm:$0xf]
      %v1414 = vld [vmem:[%s263] sm:$0xf]
      %v1417 = vunpack.c.l.b16 %v1411
      %v1418 = vunpack.c.h.b16 %v1411
      %v1419 = vunpack.c.l.b16 %v1412
      %v1420 = vpack.c.b16 %v1417, %v1417
      %v1421 = vpack.c.b16 %v1418, %v1418
      %v1422 = vpack.c.b16 %v1419, %v1419
      %1423 = vrot.lane.b32.xlu0 %v1420, 127
      %v1424 = vpop.permute.xlu0 %1423
      %1425 = vrot.lane.b32.xlu0 %v1421, 127
      %v1426 = vpop.permute.xlu0 %1425
      %1427 = vrot.lane.b32.xlu0 %v1422, 127
      %v1428 = vpop.permute.xlu0 %1427
      %v1429 = vsel %vm279, %v1424, %v1426
      %v1430 = vsel %vm279, %v1426, %v1428
      %v1432 = vsel %vm282, %v1414, 0
      %v1435 = vsel %vm286, %v1429, 0
      %v1438 = vsel %vm286, %v1430, 0
      %1440 = vmatprep.subr.bf16.mxu0 %v1438
      %1441 = vmatpush1.bf16.msra.mxu0 %v1435
      %1442 = vmatprep.subr.bf16.mxu0 0
      %1443 = vmatpush1.bf16.msra.mxu0 0
      %1444 = vmatprep.subr.bf16.mxu0 0
      %1445 = vmatpush1.bf16.msra.mxu0 0
      %1446 = vmatprep.subr.bf16.mxu0 0
      %1447 = vmatpush1.bf16.msra.mxu0 0
      %1448 = vmatprep.subr.bf16.mxu0 0
      %1449 = vmatpush1.bf16.msra.mxu0 0
      %1450 = vmatprep.subr.bf16.mxu0 0
      %1451 = vmatpush1.bf16.msra.mxu0 0
      %1452 = vmatprep.subr.bf16.mxu0 0
      %1453 = vmatpush1.bf16.msra.mxu0 0
      %1454 = vmatprep.subr.bf16.mxu0 0
      %1455 = vmatpush1.bf16.msra.mxu0 0
      %1456 = vmatprep.subr.bf16.mxu0 0
      %1457 = vmatpush1.bf16.msra.mxu0 0
      %1458 = vmatprep.subr.bf16.mxu0 0
      %1459 = vmatpush1.bf16.msra.mxu0 0
      %1460 = vmatprep.subr.bf16.mxu0 0
      %1461 = vmatpush1.bf16.msra.mxu0 0
      %1462 = vmatprep.subr.bf16.mxu0 0
      %1463 = vmatpush1.bf16.msra.mxu0 0
      %1464 = vmatprep.subr.bf16.mxu0 0
      %1465 = vmatpush1.bf16.msra.mxu0 0
      %1466 = vmatprep.subr.bf16.mxu0 0
      %1467 = vmatpush1.bf16.msra.mxu0 0
      %1468 = vmatprep.subr.bf16.mxu0 0
      %1469 = vmatpush1.bf16.msra.mxu0 0
      %1470 = vmatprep.subr.bf16.mxu0 0
      %1471 = vmatpush1.bf16.msra.mxu0 0
      %1472 = vmatprep.mubr.bf16.mxu0 0
      %1473 = vmatmul.mubr.bf16.gmra.mrb[0].mxu0 %v1432
      %v1474 = vpop.f32.mrb[0].mxu0
      %v1475 = vadd.f32 0.0, %v1474
      %v1476 = vpop.f32.mrb[0].mxu0
      %v1477 = vadd.f32 0.0, %v1476
      %v1478 = vpop.f32.mrb[0].mxu0
      %v1479 = vpop.f32.mrb[0].mxu0
      %1480 = vdwg.mxu0
      %v1482 = vsel %vm282, %v1413, 0
      %v1485 = vsel %vm286, %v1420, 0
      %v1488 = vsel %vm286, %v1421, 0
      %1490 = vmatprep.subr.bf16.mxu0 %v1488
      %1491 = vmatpush1.bf16.msra.mxu0 %v1485
      %1492 = vmatprep.subr.bf16.mxu0 0
      %1493 = vmatpush1.bf16.msra.mxu0 0
      %1494 = vmatprep.subr.bf16.mxu0 0
      %1495 = vmatpush1.bf16.msra.mxu0 0
      %1496 = vmatprep.subr.bf16.mxu0 0
      %1497 = vmatpush1.bf16.msra.mxu0 0
      %1498 = vmatprep.subr.bf16.mxu0 0
      %1499 = vmatpush1.bf16.msra.mxu0 0
      %1500 = vmatprep.subr.bf16.mxu0 0
      %1501 = vmatpush1.bf16.msra.mxu0 0
      %1502 = vmatprep.subr.bf16.mxu0 0
      %1503 = vmatpush1.bf16.msra.mxu0 0
      %1504 = vmatprep.subr.bf16.mxu0 0
      %1505 = vmatpush1.bf16.msra.mxu0 0
      %1506 = vmatprep.subr.bf16.mxu0 0
      %1507 = vmatpush1.bf16.msra.mxu0 0
      %1508 = vmatprep.subr.bf16.mxu0 0
      %1509 = vmatpush1.bf16.msra.mxu0 0
      %1510 = vmatprep.subr.bf16.mxu0 0
      %1511 = vmatpush1.bf16.msra.mxu0 0
      %1512 = vmatprep.subr.bf16.mxu0 0
      %1513 = vmatpush1.bf16.msra.mxu0 0
      %1514 = vmatprep.subr.bf16.mxu0 0
      %1515 = vmatpush1.bf16.msra.mxu0 0
      %1516 = vmatprep.subr.bf16.mxu0 0
      %1517 = vmatpush1.bf16.msra.mxu0 0
      %1518 = vmatprep.subr.bf16.mxu0 0
      %1519 = vmatpush1.bf16.msra.mxu0 0
      %1520 = vmatprep.subr.bf16.mxu0 0
      %1521 = vmatpush1.bf16.msra.mxu0 0
      %1522 = vmatprep.mubr.bf16.mxu0 0
      %1523 = vmatmul.mubr.bf16.gmra.mrb[0].mxu0 %v1482
      %v1524 = vpop.f32.mrb[0].mxu0
      %v1525 = vadd.f32 %v1475, %v1524
      %v1526 = vpop.f32.mrb[0].mxu0
      %v1527 = vadd.f32 %v1477, %v1526
      %v1528 = vpop.f32.mrb[0].mxu0
      %v1529 = vpop.f32.mrb[0].mxu0
      %1530 = vdwg.mxu0
      %v1531 = vld [vmem:[%s384] sm:$0xf]
      %1532 = vrot.lane.b32.xlu0 %v1420, 126
      %v1533 = vpop.permute.xlu0 %1532
      %1534 = vrot.lane.b32.xlu0 %v1421, 126
      %v1535 = vpop.permute.xlu0 %1534
      %1536 = vrot.lane.b32.xlu0 %v1422, 126
      %v1537 = vpop.permute.xlu0 %1536
      %v1538 = vsel %vm392, %v1533, %v1535
      %v1539 = vsel %vm392, %v1535, %v1537
      %v1541 = vsel %vm282, %v1531, 0
      %v1544 = vsel %vm286, %v1538, 0
      %v1547 = vsel %vm286, %v1539, 0
      %1549 = vmatprep.subr.bf16.mxu0 %v1547
      %1550 = vmatpush1.bf16.msra.mxu0 %v1544
      %1551 = vmatprep.subr.bf16.mxu0 0
      %1552 = vmatpush1.bf16.msra.mxu0 0
      %1553 = vmatprep.subr.bf16.mxu0 0
      %1554 = vmatpush1.bf16.msra.mxu0 0
      %1555 = vmatprep.subr.bf16.mxu0 0
      %1556 = vmatpush1.bf16.msra.mxu0 0
      %1557 = vmatprep.subr.bf16.mxu0 0
      %1558 = vmatpush1.bf16.msra.mxu0 0
      %1559 = vmatprep.subr.bf16.mxu0 0
      %1560 = vmatpush1.bf16.msra.mxu0 0
      %1561 = vmatprep.subr.bf16.mxu0 0
      %1562 = vmatpush1.bf16.msra.mxu0 0
      %1563 = vmatprep.subr.bf16.mxu0 0
      %1564 = vmatpush1.bf16.msra.mxu0 0
      %1565 = vmatprep.subr.bf16.mxu0 0
      %1566 = vmatpush1.bf16.msra.mxu0 0
      %1567 = vmatprep.subr.bf16.mxu0 0
      %1568 = vmatpush1.bf16.msra.mxu0 0
      %1569 = vmatprep.subr.bf16.mxu0 0
      %1570 = vmatpush1.bf16.msra.mxu0 0
      %1571 = vmatprep.subr.bf16.mxu0 0
      %1572 = vmatpush1.bf16.msra.mxu0 0
      %1573 = vmatprep.subr.bf16.mxu0 0
      %1574 = vmatpush1.bf16.msra.mxu0 0
      %1575 = vmatprep.subr.bf16.mxu0 0
      %1576 = vmatpush1.bf16.msra.mxu0 0
      %1577 = vmatprep.subr.bf16.mxu0 0
      %1578 = vmatpush1.bf16.msra.mxu0 0
      %1579 = vmatprep.subr.bf16.mxu0 0
      %1580 = vmatpush1.bf16.msra.mxu0 0
      %1581 = vmatprep.mubr.bf16.mxu0 0
      %1582 = vmatmul.mubr.bf16.gmra.mrb[0].mxu0 %v1541
      %v1583 = vpop.f32.mrb[0].mxu0
      %v1584 = vadd.f32 0.0, %v1583
      %v1585 = vpop.f32.mrb[0].mxu0
      %v1586 = vadd.f32 0.0, %v1585
      %v1587 = vpop.f32.mrb[0].mxu0
      %v1588 = vpop.f32.mrb[0].mxu0
      %1589 = vdwg.mxu0
      %v1590 = vadd.f32 %v1525, %v1584
      %v1591 = vadd.f32 %v1527, %v1586
      %s1592 = sadd.s32 %s1210, 15
      %s1593 = smul.addr %s1592, 4
      %s1594 = scalar_lea.vmem %s217, %s1593
      %v1595 = vld [vmem:[%s1594] sm:$0xff]
      %v1596 = vld [vmem:[%s1594 + $0x8] sm:$0xf]
      %v1597 = vld [vmem:[%s452] sm:$0xf]
      %v1599 = vunpack.c.l.b16 %v1595
      %v1600 = vunpack.c.h.b16 %v1595
      %v1601 = vpack.c.b16 %v1599, %v1599
      %v1602 = vpack.c.b16 %v1600, %v1600
      %v1604 = vsel %vm282, %v1597, 0
      %v1607 = vsel %vm286, %v1601, 0
      %v1610 = vsel %vm286, %v1602, 0
      %1612 = vmatprep.subr.bf16.mxu0 %v1610
      %1613 = vmatpush1.bf16.msra.mxu0 %v1607
      %1614 = vmatprep.subr.bf16.mxu0 0
      %1615 = vmatpush1.bf16.msra.mxu0 0
      %1616 = vmatprep.subr.bf16.mxu0 0
      %1617 = vmatpush1.bf16.msra.mxu0 0
      %1618 = vmatprep.subr.bf16.mxu0 0
      %1619 = vmatpush1.bf16.msra.mxu0 0
      %1620 = vmatprep.subr.bf16.mxu0 0
      %1621 = vmatpush1.bf16.msra.mxu0 0
      %1622 = vmatprep.subr.bf16.mxu0 0
      %1623 = vmatpush1.bf16.msra.mxu0 0
      %1624 = vmatprep.subr.bf16.mxu0 0
      %1625 = vmatpush1.bf16.msra.mxu0 0
      %1626 = vmatprep.subr.bf16.mxu0 0
      %1627 = vmatpush1.bf16.msra.mxu0 0
      %1628 = vmatprep.subr.bf16.mxu0 0
      %1629 = vmatpush1.bf16.msra.mxu0 0
      %1630 = vmatprep.subr.bf16.mxu0 0
      %1631 = vmatpush1.bf16.msra.mxu0 0
      %1632 = vmatprep.subr.bf16.mxu0 0
      %1633 = vmatpush1.bf16.msra.mxu0 0
      %1634 = vmatprep.subr.bf16.mxu0 0
      %1635 = vmatpush1.bf16.msra.mxu0 0
      %1636 = vmatprep.subr.bf16.mxu0 0
      %1637 = vmatpush1.bf16.msra.mxu0 0
      %1638 = vmatprep.subr.bf16.mxu0 0
      %1639 = vmatpush1.bf16.msra.mxu0 0
      %1640 = vmatprep.subr.bf16.mxu0 0
      %1641 = vmatpush1.bf16.msra.mxu0 0
      %1642 = vmatprep.subr.bf16.mxu0 0
      %1643 = vmatpush1.bf16.msra.mxu0 0
      %1644 = vmatprep.mubr.bf16.mxu0 0
      %1645 = vmatmul.mubr.bf16.gmra.mrb[0].mxu0 %v1604
      %v1646 = vpop.f32.mrb[0].mxu0
      %v1647 = vadd.f32 0.0, %v1646
      %v1648 = vpop.f32.mrb[0].mxu0
      %v1649 = vadd.f32 0.0, %v1648
      %v1650 = vpop.f32.mrb[0].mxu0
      %v1651 = vpop.f32.mrb[0].mxu0
      %1652 = vdwg.mxu0
      %v1653 = vadd.f32 %v1590, %v1647
      %v1654 = vadd.f32 %v1591, %v1649
      %v1655 = vld [vmem:[%s511] sm:$0xf]
      %v1657 = vunpack.c.l.b16 %v1596
      %v1658 = vpack.c.b16 %v1657, %v1657
      %1659 = vrot.lane.b32.xlu0 %v1601, 127
      %v1660 = vpop.permute.xlu0 %1659
      %1661 = vrot.lane.b32.xlu0 %v1602, 127
      %v1662 = vpop.permute.xlu0 %1661
      %1663 = vrot.lane.b32.xlu0 %v1658, 127
      %v1664 = vpop.permute.xlu0 %1663
      %v1665 = vsel %vm279, %v1660, %v1662
      %v1666 = vsel %vm279, %v1662, %v1664
      %v1668 = vsel %vm282, %v1655, 0
      %v1671 = vsel %vm286, %v1665, 0
      %v1674 = vsel %vm286, %v1666, 0
      %1676 = vmatprep.subr.bf16.mxu0 %v1674
      %1677 = vmatpush1.bf16.msra.mxu0 %v1671
      %1678 = vmatprep.subr.bf16.mxu0 0
      %1679 = vmatpush1.bf16.msra.mxu0 0
      %1680 = vmatprep.subr.bf16.mxu0 0
      %1681 = vmatpush1.bf16.msra.mxu0 0
      %1682 = vmatprep.subr.bf16.mxu0 0
      %1683 = vmatpush1.bf16.msra.mxu0 0
      %1684 = vmatprep.subr.bf16.mxu0 0
      %1685 = vmatpush1.bf16.msra.mxu0 0
      %1686 = vmatprep.subr.bf16.mxu0 0
      %1687 = vmatpush1.bf16.msra.mxu0 0
      %1688 = vmatprep.subr.bf16.mxu0 0
      %1689 = vmatpush1.bf16.msra.mxu0 0
      %1690 = vmatprep.subr.bf16.mxu0 0
      %1691 = vmatpush1.bf16.msra.mxu0 0
      %1692 = vmatprep.subr.bf16.mxu0 0
      %1693 = vmatpush1.bf16.msra.mxu0 0
      %1694 = vmatprep.subr.bf16.mxu0 0
      %1695 = vmatpush1.bf16.msra.mxu0 0
      %1696 = vmatprep.subr.bf16.mxu0 0
      %1697 = vmatpush1.bf16.msra.mxu0 0
      %1698 = vmatprep.subr.bf16.mxu0 0
      %1699 = vmatpush1.bf16.msra.mxu0 0
      %1700 = vmatprep.subr.bf16.mxu0 0
      %1701 = vmatpush1.bf16.msra.mxu0 0
      %1702 = vmatprep.subr.bf16.mxu0 0
      %1703 = vmatpush1.bf16.msra.mxu0 0
      %1704 = vmatprep.subr.bf16.mxu0 0
      %1705 = vmatpush1.bf16.msra.mxu0 0
      %1706 = vmatprep.subr.bf16.mxu0 0
      %1707 = vmatpush1.bf16.msra.mxu0 0
      %1708 = vmatprep.mubr.bf16.mxu0 0
      %1709 = vmatmul.mubr.bf16.gmra.mrb[0].mxu0 %v1668
      %v1710 = vpop.f32.mrb[0].mxu0
      %v1711 = vadd.f32 0.0, %v1710
      %v1712 = vpop.f32.mrb[0].mxu0
      %v1713 = vadd.f32 0.0, %v1712
      %v1714 = vpop.f32.mrb[0].mxu0
      %v1715 = vpop.f32.mrb[0].mxu0
      %1716 = vdwg.mxu0
      %v1717 = vadd.f32 %v1653, %v1711
      %v1718 = vadd.f32 %v1654, %v1713
      %v1719 = vld [vmem:[%s576] sm:$0xf]
      %1720 = vrot.lane.b32.xlu0 %v1601, 126
      %v1721 = vpop.permute.xlu0 %1720
      %1722 = vrot.lane.b32.xlu0 %v1602, 126
      %v1723 = vpop.permute.xlu0 %1722
      %1724 = vrot.lane.b32.xlu0 %v1658, 126
      %v1725 = vpop.permute.xlu0 %1724
      %v1726 = vsel %vm392, %v1721, %v1723
      %v1727 = vsel %vm392, %v1723, %v1725
      %v1729 = vsel %vm282, %v1719, 0
      %v1732 = vsel %vm286, %v1726, 0
      %v1735 = vsel %vm286, %v1727, 0
      %1737 = vmatprep.subr.bf16.mxu0 %v1735
      %1738 = vmatpush1.bf16.msra.mxu0 %v1732
      %1739 = vmatprep.subr.bf16.mxu0 0
      %1740 = vmatpush1.bf16.msra.mxu0 0
      %1741 = vmatprep.subr.bf16.mxu0 0
      %1742 = vmatpush1.bf16.msra.mxu0 0
      %1743 = vmatprep.subr.bf16.mxu0 0
      %1744 = vmatpush1.bf16.msra.mxu0 0
      %1745 = vmatprep.subr.bf16.mxu0 0
      %1746 = vmatpush1.bf16.msra.mxu0 0
      %1747 = vmatprep.subr.bf16.mxu0 0
      %1748 = vmatpush1.bf16.msra.mxu0 0
      %1749 = vmatprep.subr.bf16.mxu0 0
      %1750 = vmatpush1.bf16.msra.mxu0 0
      %1751 = vmatprep.subr.bf16.mxu0 0
      %1752 = vmatpush1.bf16.msra.mxu0 0
      %1753 = vmatprep.subr.bf16.mxu0 0
      %1754 = vmatpush1.bf16.msra.mxu0 0
      %1755 = vmatprep.subr.bf16.mxu0 0
      %1756 = vmatpush1.bf16.msra.mxu0 0
      %1757 = vmatprep.subr.bf16.mxu0 0
      %1758 = vmatpush1.bf16.msra.mxu0 0
      %1759 = vmatprep.subr.bf16.mxu0 0
      %1760 = vmatpush1.bf16.msra.mxu0 0
      %1761 = vmatprep.subr.bf16.mxu0 0
      %1762 = vmatpush1.bf16.msra.mxu0 0
      %1763 = vmatprep.subr.bf16.mxu0 0
      %1764 = vmatpush1.bf16.msra.mxu0 0
      %1765 = vmatprep.subr.bf16.mxu0 0
      %1766 = vmatpush1.bf16.msra.mxu0 0
      %1767 = vmatprep.subr.bf16.mxu0 0
      %1768 = vmatpush1.bf16.msra.mxu0 0
      %1769 = vmatprep.mubr.bf16.mxu0 0
      %1770 = vmatmul.mubr.bf16.gmra.mrb[0].mxu0 %v1729
      %v1771 = vpop.f32.mrb[0].mxu0
      %v1772 = vadd.f32 0.0, %v1771
      %v1773 = vpop.f32.mrb[0].mxu0
      %v1774 = vadd.f32 0.0, %v1773
      %v1775 = vpop.f32.mrb[0].mxu0
      %v1776 = vpop.f32.mrb[0].mxu0
      %1777 = vdwg.mxu0
      %v1778 = vadd.f32 %v1717, %v1772
      %v1779 = vadd.f32 %v1718, %v1774
      %s1780 = sadd.s32 %s256, 9
      %s1781 = smul.addr %s1780, 4
      %s1782 = scalar_lea.vmem %s217, %s1781
      %v1783 = vld [vmem:[%s1782] sm:$0xff]
      %v1784 = vld [vmem:[%s1782 + $0x8] sm:$0xf]
      %v1785 = vld [vmem:[%s643] sm:$0xf]
      %v1787 = vunpack.c.l.b16 %v1783
      %v1788 = vunpack.c.h.b16 %v1783
      %v1789 = vpack.c.b16 %v1787, %v1787
      %v1790 = vpack.c.b16 %v1788, %v1788
      %v1792 = vsel %vm282, %v1785, 0
      %v1795 = vsel %vm286, %v1789, 0
      %v1798 = vsel %vm286, %v1790, 0
      %1800 = vmatprep.subr.bf16.mxu0 %v1798
      %1801 = vmatpush1.bf16.msra.mxu0 %v1795
      %1802 = vmatprep.subr.bf16.mxu0 0
      %1803 = vmatpush1.bf16.msra.mxu0 0
      %1804 = vmatprep.subr.bf16.mxu0 0
      %1805 = vmatpush1.bf16.msra.mxu0 0
      %1806 = vmatprep.subr.bf16.mxu0 0
      %1807 = vmatpush1.bf16.msra.mxu0 0
      %1808 = vmatprep.subr.bf16.mxu0 0
      %1809 = vmatpush1.bf16.msra.mxu0 0
      %1810 = vmatprep.subr.bf16.mxu0 0
      %1811 = vmatpush1.bf16.msra.mxu0 0
      %1812 = vmatprep.subr.bf16.mxu0 0
      %1813 = vmatpush1.bf16.msra.mxu0 0
      %1814 = vmatprep.subr.bf16.mxu0 0
      %1815 = vmatpush1.bf16.msra.mxu0 0
      %1816 = vmatprep.subr.bf16.mxu0 0
      %1817 = vmatpush1.bf16.msra.mxu0 0
      %1818 = vmatprep.subr.bf16.mxu0 0
      %1819 = vmatpush1.bf16.msra.mxu0 0
      %1820 = vmatprep.subr.bf16.mxu0 0
      %1821 = vmatpush1.bf16.msra.mxu0 0
      %1822 = vmatprep.subr.bf16.mxu0 0
      %1823 = vmatpush1.bf16.msra.mxu0 0
      %1824 = vmatprep.subr.bf16.mxu0 0
      %1825 = vmatpush1.bf16.msra.mxu0 0
      %1826 = vmatprep.subr.bf16.mxu0 0
      %1827 = vmatpush1.bf16.msra.mxu0 0
      %1828 = vmatprep.subr.bf16.mxu0 0
      %1829 = vmatpush1.bf16.msra.mxu0 0
      %1830 = vmatprep.subr.bf16.mxu0 0
      %1831 = vmatpush1.bf16.msra.mxu0 0
      %1832 = vmatprep.mubr.bf16.mxu0 0
      %1833 = vmatmul.mubr.bf16.gmra.mrb[0].mxu0 %v1792
      %v1834 = vpop.f32.mrb[0].mxu0
      %v1835 = vadd.f32 0.0, %v1834
      %v1836 = vpop.f32.mrb[0].mxu0
      %v1837 = vadd.f32 0.0, %v1836
      %v1838 = vpop.f32.mrb[0].mxu0
      %v1839 = vpop.f32.mrb[0].mxu0
      %1840 = vdwg.mxu0
      %v1841 = vadd.f32 %v1778, %v1835
      %v1842 = vadd.f32 %v1779, %v1837
      %v1843 = vld [vmem:[%s702] sm:$0xf]
      %v1845 = vunpack.c.l.b16 %v1784
      %v1846 = vpack.c.b16 %v1845, %v1845
      %1847 = vrot.lane.b32.xlu0 %v1789, 127
      %v1848 = vpop.permute.xlu0 %1847
      %1849 = vrot.lane.b32.xlu0 %v1790, 127
      %v1850 = vpop.permute.xlu0 %1849
      %1851 = vrot.lane.b32.xlu0 %v1846, 127
      %v1852 = vpop.permute.xlu0 %1851
      %v1853 = vsel %vm279, %v1848, %v1850
      %v1854 = vsel %vm279, %v1850, %v1852
      %v1856 = vsel %vm282, %v1843, 0
      %v1859 = vsel %vm286, %v1853, 0
      %v1862 = vsel %vm286, %v1854, 0
      %1864 = vmatprep.subr.bf16.mxu0 %v1862
      %1865 = vmatpush1.bf16.msra.mxu0 %v1859
      %1866 = vmatprep.subr.bf16.mxu0 0
      %1867 = vmatpush1.bf16.msra.mxu0 0
      %1868 = vmatprep.subr.bf16.mxu0 0
      %1869 = vmatpush1.bf16.msra.mxu0 0
      %1870 = vmatprep.subr.bf16.mxu0 0
      %1871 = vmatpush1.bf16.msra.mxu0 0
      %1872 = vmatprep.subr.bf16.mxu0 0
      %1873 = vmatpush1.bf16.msra.mxu0 0
      %1874 = vmatprep.subr.bf16.mxu0 0
      %1875 = vmatpush1.bf16.msra.mxu0 0
      %1876 = vmatprep.subr.bf16.mxu0 0
      %1877 = vmatpush1.bf16.msra.mxu0 0
      %1878 = vmatprep.subr.bf16.mxu0 0
      %1879 = vmatpush1.bf16.msra.mxu0 0
      %1880 = vmatprep.subr.bf16.mxu0 0
      %1881 = vmatpush1.bf16.msra.mxu0 0
      %1882 = vmatprep.subr.bf16.mxu0 0
      %1883 = vmatpush1.bf16.msra.mxu0 0
      %1884 = vmatprep.subr.bf16.mxu0 0
      %1885 = vmatpush1.bf16.msra.mxu0 0
      %1886 = vmatprep.subr.bf16.mxu0 0
      %1887 = vmatpush1.bf16.msra.mxu0 0
      %1888 = vmatprep.subr.bf16.mxu0 0
      %1889 = vmatpush1.bf16.msra.mxu0 0
      %1890 = vmatprep.subr.bf16.mxu0 0
      %1891 = vmatpush1.bf16.msra.mxu0 0
      %1892 = vmatprep.subr.bf16.mxu0 0
      %1893 = vmatpush1.bf16.msra.mxu0 0
      %1894 = vmatprep.subr.bf16.mxu0 0
      %1895 = vmatpush1.bf16.msra.mxu0 0
      %1896 = vmatprep.mubr.bf16.mxu0 0
      %1897 = vmatmul.mubr.bf16.gmra.mrb[0].mxu0 %v1856
      %v1898 = vpop.f32.mrb[0].mxu0
      %v1899 = vadd.f32 0.0, %v1898
      %v1900 = vpop.f32.mrb[0].mxu0
      %v1901 = vadd.f32 0.0, %v1900
      %v1902 = vpop.f32.mrb[0].mxu0
      %v1903 = vpop.f32.mrb[0].mxu0
      %1904 = vdwg.mxu0
      %v1905 = vadd.f32 %v1841, %v1899
      %v1906 = vadd.f32 %v1842, %v1901
      %v1907 = vld [vmem:[%s767] sm:$0xf]
      %1908 = vrot.lane.b32.xlu0 %v1789, 126
      %v1909 = vpop.permute.xlu0 %1908
      %1910 = vrot.lane.b32.xlu0 %v1790, 126
      %v1911 = vpop.permute.xlu0 %1910
      %1912 = vrot.lane.b32.xlu0 %v1846, 126
      %v1913 = vpop.permute.xlu0 %1912
      %v1914 = vsel %vm392, %v1909, %v1911
      %v1915 = vsel %vm392, %v1911, %v1913
      %v1917 = vsel %vm282, %v1907, 0
      %v1920 = vsel %vm286, %v1914, 0
      %v1923 = vsel %vm286, %v1915, 0
      %1925 = vmatprep.subr.bf16.mxu0 %v1923
      %1926 = vmatpush1.bf16.msra.mxu0 %v1920
      %1927 = vmatprep.subr.bf16.mxu0 0
      %1928 = vmatpush1.bf16.msra.mxu0 0
      %1929 = vmatprep.subr.bf16.mxu0 0
      %1930 = vmatpush1.bf16.msra.mxu0 0
      %1931 = vmatprep.subr.bf16.mxu0 0
      %1932 = vmatpush1.bf16.msra.mxu0 0
      %1933 = vmatprep.subr.bf16.mxu0 0
      %1934 = vmatpush1.bf16.msra.mxu0 0
      %1935 = vmatprep.subr.bf16.mxu0 0
      %1936 = vmatpush1.bf16.msra.mxu0 0
      %1937 = vmatprep.subr.bf16.mxu0 0
      %1938 = vmatpush1.bf16.msra.mxu0 0
      %1939 = vmatprep.subr.bf16.mxu0 0
      %1940 = vmatpush1.bf16.msra.mxu0 0
      %1941 = vmatprep.subr.bf16.mxu0 0
      %1942 = vmatpush1.bf16.msra.mxu0 0
      %1943 = vmatprep.subr.bf16.mxu0 0
      %1944 = vmatpush1.bf16.msra.mxu0 0
      %1945 = vmatprep.subr.bf16.mxu0 0
      %1946 = vmatpush1.bf16.msra.mxu0 0
      %1947 = vmatprep.subr.bf16.mxu0 0
      %1948 = vmatpush1.bf16.msra.mxu0 0
      %1949 = vmatprep.subr.bf16.mxu0 0
      %1950 = vmatpush1.bf16.msra.mxu0 0
      %1951 = vmatprep.subr.bf16.mxu0 0
      %1952 = vmatpush1.bf16.msra.mxu0 0
      %1953 = vmatprep.subr.bf16.mxu0 0
      %1954 = vmatpush1.bf16.msra.mxu0 0
      %1955 = vmatprep.subr.bf16.mxu0 0
      %1956 = vmatpush1.bf16.msra.mxu0 0
      %1957 = vmatprep.mubr.bf16.mxu0 0
      %1958 = vmatmul.mubr.bf16.gmra.mrb[0].mxu0 %v1917
      %v1959 = vpop.f32.mrb[0].mxu0
      %v1960 = vadd.f32 0.0, %v1959
      %v1961 = vpop.f32.mrb[0].mxu0
      %v1962 = vadd.f32 0.0, %v1961
      %v1963 = vpop.f32.mrb[0].mxu0
      %v1964 = vpop.f32.mrb[0].mxu0
      %1965 = vdwg.mxu0
      %v1966 = vadd.f32 %v1905, %v1960
      %v1967 = vadd.f32 %v1906, %v1962
      %v1968 = vmul.f32 %v1966, %v248
      %v1969 = vmul.f32 %v1967, %v248
      %v1970 = vadd.f32 %v1968, %v254
      %v1971 = vadd.f32 %v1969, %v254
      %v1972 = vmax.f32 %v1970, 0.0
      %v1973 = vmax.f32 %v1971, 0.0
      %v1974 = vmin.f32 %v1972, 20.0
      %v1975 = vmin.f32 %v1973, 20.0
      %v1976 = vsel %vm242, 0.0, %v1974
      %v1977 = vsel %vm243, 0.0, %v1975
      %s1978 = scalar_lea.vmem %s226, 32
      %1979 = vst [vmem:[%s1978] sm:$0xff] %v1976
      %1980 = vst [vmem:[%s1978 + $0x8] sm:$0xff] %v1977
      %v1981 = vld [vmem:[%s1782] sm:$0xff]
      %v1982 = vld [vmem:[%s1782 + $0x8] sm:$0xf]
      %v1983 = vld [vmem:[%s2] sm:$0xf]
      %v1984 = vld [vmem:[%s263] sm:$0xf]
      %v1987 = vunpack.c.l.b16 %v1981
      %v1988 = vunpack.c.h.b16 %v1981
      %v1989 = vunpack.c.l.b16 %v1982
      %v1990 = vpack.c.b16 %v1987, %v1987
      %v1991 = vpack.c.b16 %v1988, %v1988
      %v1992 = vpack.c.b16 %v1989, %v1989
      %1993 = vrot.lane.b32.xlu0 %v1990, 127
      %v1994 = vpop.permute.xlu0 %1993
      %1995 = vrot.lane.b32.xlu0 %v1991, 127
      %v1996 = vpop.permute.xlu0 %1995
      %1997 = vrot.lane.b32.xlu0 %v1992, 127
      %v1998 = vpop.permute.xlu0 %1997
      %v1999 = vsel %vm279, %v1994, %v1996
      %v2000 = vsel %vm279, %v1996, %v1998
      %v2002 = vsel %vm282, %v1984, 0
      %v2005 = vsel %vm286, %v1999, 0
      %v2008 = vsel %vm286, %v2000, 0
      %2010 = vmatprep.subr.bf16.mxu0 %v2008
      %2011 = vmatpush1.bf16.msra.mxu0 %v2005
      %2012 = vmatprep.subr.bf16.mxu0 0
      %2013 = vmatpush1.bf16.msra.mxu0 0
      %2014 = vmatprep.subr.bf16.mxu0 0
      %2015 = vmatpush1.bf16.msra.mxu0 0
      %2016 = vmatprep.subr.bf16.mxu0 0
      %2017 = vmatpush1.bf16.msra.mxu0 0
      %2018 = vmatprep.subr.bf16.mxu0 0
      %2019 = vmatpush1.bf16.msra.mxu0 0
      %2020 = vmatprep.subr.bf16.mxu0 0
      %2021 = vmatpush1.bf16.msra.mxu0 0
      %2022 = vmatprep.subr.bf16.mxu0 0
      %2023 = vmatpush1.bf16.msra.mxu0 0
      %2024 = vmatprep.subr.bf16.mxu0 0
      %2025 = vmatpush1.bf16.msra.mxu0 0
      %2026 = vmatprep.subr.bf16.mxu0 0
      %2027 = vmatpush1.bf16.msra.mxu0 0
      %2028 = vmatprep.subr.bf16.mxu0 0
      %2029 = vmatpush1.bf16.msra.mxu0 0
      %2030 = vmatprep.subr.bf16.mxu0 0
      %2031 = vmatpush1.bf16.msra.mxu0 0
      %2032 = vmatprep.subr.bf16.mxu0 0
      %2033 = vmatpush1.bf16.msra.mxu0 0
      %2034 = vmatprep.subr.bf16.mxu0 0
      %2035 = vmatpush1.bf16.msra.mxu0 0
      %2036 = vmatprep.subr.bf16.mxu0 0
      %2037 = vmatpush1.bf16.msra.mxu0 0
      %2038 = vmatprep.subr.bf16.mxu0 0
      %2039 = vmatpush1.bf16.msra.mxu0 0
      %2040 = vmatprep.subr.bf16.mxu0 0
      %2041 = vmatpush1.bf16.msra.mxu0 0
      %2042 = vmatprep.mubr.bf16.mxu0 0
      %2043 = vmatmul.mubr.bf16.gmra.mrb[0].mxu0 %v2002
      %v2044 = vpop.f32.mrb[0].mxu0
      %v2045 = vadd.f32 0.0, %v2044
      %v2046 = vpop.f32.mrb[0].mxu0
      %v2047 = vadd.f32 0.0, %v2046
      %v2048 = vpop.f32.mrb[0].mxu0
      %v2049 = vpop.f32.mrb[0].mxu0
      %2050 = vdwg.mxu0
      %v2052 = vsel %vm282, %v1983, 0
      %v2055 = vsel %vm286, %v1990, 0
      %v2058 = vsel %vm286, %v1991, 0
      %2060 = vmatprep.subr.bf16.mxu0 %v2058
      %2061 = vmatpush1.bf16.msra.mxu0 %v2055
      %2062 = vmatprep.subr.bf16.mxu0 0
      %2063 = vmatpush1.bf16.msra.mxu0 0
      %2064 = vmatprep.subr.bf16.mxu0 0
      %2065 = vmatpush1.bf16.msra.mxu0 0
      %2066 = vmatprep.subr.bf16.mxu0 0
      %2067 = vmatpush1.bf16.msra.mxu0 0
      %2068 = vmatprep.subr.bf16.mxu0 0
      %2069 = vmatpush1.bf16.msra.mxu0 0
      %2070 = vmatprep.subr.bf16.mxu0 0
      %2071 = vmatpush1.bf16.msra.mxu0 0
      %2072 = vmatprep.subr.bf16.mxu0 0
      %2073 = vmatpush1.bf16.msra.mxu0 0
      %2074 = vmatprep.subr.bf16.mxu0 0
      %2075 = vmatpush1.bf16.msra.mxu0 0
      %2076 = vmatprep.subr.bf16.mxu0 0
      %2077 = vmatpush1.bf16.msra.mxu0 0
      %2078 = vmatprep.subr.bf16.mxu0 0
      %2079 = vmatpush1.bf16.msra.mxu0 0
      %2080 = vmatprep.subr.bf16.mxu0 0
      %2081 = vmatpush1.bf16.msra.mxu0 0
      %2082 = vmatprep.subr.bf16.mxu0 0
      %2083 = vmatpush1.bf16.msra.mxu0 0
      %2084 = vmatprep.subr.bf16.mxu0 0
      %2085 = vmatpush1.bf16.msra.mxu0 0
      %2086 = vmatprep.subr.bf16.mxu0 0
      %2087 = vmatpush1.bf16.msra.mxu0 0
      %2088 = vmatprep.subr.bf16.mxu0 0
      %2089 = vmatpush1.bf16.msra.mxu0 0
      %2090 = vmatprep.subr.bf16.mxu0 0
      %2091 = vmatpush1.bf16.msra.mxu0 0
      %2092 = vmatprep.mubr.bf16.mxu0 0
      %2093 = vmatmul.mubr.bf16.gmra.mrb[0].mxu0 %v2052
      %v2094 = vpop.f32.mrb[0].mxu0
      %v2095 = vadd.f32 %v2045, %v2094
      %v2096 = vpop.f32.mrb[0].mxu0
      %v2097 = vadd.f32 %v2047, %v2096
      %v2098 = vpop.f32.mrb[0].mxu0
      %v2099 = vpop.f32.mrb[0].mxu0
      %2100 = vdwg.mxu0
      %v2101 = vld [vmem:[%s384] sm:$0xf]
      %2102 = vrot.lane.b32.xlu0 %v1990, 126
      %v2103 = vpop.permute.xlu0 %2102
      %2104 = vrot.lane.b32.xlu0 %v1991, 126
      %v2105 = vpop.permute.xlu0 %2104
      %2106 = vrot.lane.b32.xlu0 %v1992, 126
      %v2107 = vpop.permute.xlu0 %2106
      %v2108 = vsel %vm392, %v2103, %v2105
      %v2109 = vsel %vm392, %v2105, %v2107
      %v2111 = vsel %vm282, %v2101, 0
      %v2114 = vsel %vm286, %v2108, 0
      %v2117 = vsel %vm286, %v2109, 0
      %2119 = vmatprep.subr.bf16.mxu0 %v2117
      %2120 = vmatpush1.bf16.msra.mxu0 %v2114
      %2121 = vmatprep.subr.bf16.mxu0 0
      %2122 = vmatpush1.bf16.msra.mxu0 0
      %2123 = vmatprep.subr.bf16.mxu0 0
      %2124 = vmatpush1.bf16.msra.mxu0 0
      %2125 = vmatprep.subr.bf16.mxu0 0
      %2126 = vmatpush1.bf16.msra.mxu0 0
      %2127 = vmatprep.subr.bf16.mxu0 0
      %2128 = vmatpush1.bf16.msra.mxu0 0
      %2129 = vmatprep.subr.bf16.mxu0 0
      %2130 = vmatpush1.bf16.msra.mxu0 0
      %2131 = vmatprep.subr.bf16.mxu0 0
      %2132 = vmatpush1.bf16.msra.mxu0 0
      %2133 = vmatprep.subr.bf16.mxu0 0
      %2134 = vmatpush1.bf16.msra.mxu0 0
      %2135 = vmatprep.subr.bf16.mxu0 0
      %2136 = vmatpush1.bf16.msra.mxu0 0
      %2137 = vmatprep.subr.bf16.mxu0 0
      %2138 = vmatpush1.bf16.msra.mxu0 0
      %2139 = vmatprep.subr.bf16.mxu0 0
      %2140 = vmatpush1.bf16.msra.mxu0 0
      %2141 = vmatprep.subr.bf16.mxu0 0
      %2142 = vmatpush1.bf16.msra.mxu0 0
      %2143 = vmatprep.subr.bf16.mxu0 0
      %2144 = vmatpush1.bf16.msra.mxu0 0
      %2145 = vmatprep.subr.bf16.mxu0 0
      %2146 = vmatpush1.bf16.msra.mxu0 0
      %2147 = vmatprep.subr.bf16.mxu0 0
      %2148 = vmatpush1.bf16.msra.mxu0 0
      %2149 = vmatprep.subr.bf16.mxu0 0
      %2150 = vmatpush1.bf16.msra.mxu0 0
      %2151 = vmatprep.mubr.bf16.mxu0 0
      %2152 = vmatmul.mubr.bf16.gmra.mrb[0].mxu0 %v2111
      %v2153 = vpop.f32.mrb[0].mxu0
      %v2154 = vadd.f32 0.0, %v2153
      %v2155 = vpop.f32.mrb[0].mxu0
      %v2156 = vadd.f32 0.0, %v2155
      %v2157 = vpop.f32.mrb[0].mxu0
      %v2158 = vpop.f32.mrb[0].mxu0
      %2159 = vdwg.mxu0
      %v2160 = vadd.f32 %v2095, %v2154
      %v2161 = vadd.f32 %v2097, %v2156
      %s2162 = sadd.s32 %s1780, 15
      %s2163 = smul.addr %s2162, 4
      %s2164 = scalar_lea.vmem %s217, %s2163
      %v2165 = vld [vmem:[%s2164] sm:$0xff]
      %v2166 = vld [vmem:[%s2164 + $0x8] sm:$0xf]
      %v2167 = vld [vmem:[%s452] sm:$0xf]
      %v2169 = vunpack.c.l.b16 %v2165
      %v2170 = vunpack.c.h.b16 %v2165
      %v2171 = vpack.c.b16 %v2169, %v2169
      %v2172 = vpack.c.b16 %v2170, %v2170
      %v2174 = vsel %vm282, %v2167, 0
      %v2177 = vsel %vm286, %v2171, 0
      %v2180 = vsel %vm286, %v2172, 0
      %2182 = vmatprep.subr.bf16.mxu0 %v2180
      %2183 = vmatpush1.bf16.msra.mxu0 %v2177
      %2184 = vmatprep.subr.bf16.mxu0 0
      %2185 = vmatpush1.bf16.msra.mxu0 0
      %2186 = vmatprep.subr.bf16.mxu0 0
      %2187 = vmatpush1.bf16.msra.mxu0 0
      %2188 = vmatprep.subr.bf16.mxu0 0
      %2189 = vmatpush1.bf16.msra.mxu0 0
      %2190 = vmatprep.subr.bf16.mxu0 0
      %2191 = vmatpush1.bf16.msra.mxu0 0
      %2192 = vmatprep.subr.bf16.mxu0 0
      %2193 = vmatpush1.bf16.msra.mxu0 0
      %2194 = vmatprep.subr.bf16.mxu0 0
      %2195 = vmatpush1.bf16.msra.mxu0 0
      %2196 = vmatprep.subr.bf16.mxu0 0
      %2197 = vmatpush1.bf16.msra.mxu0 0
      %2198 = vmatprep.subr.bf16.mxu0 0
      %2199 = vmatpush1.bf16.msra.mxu0 0
      %2200 = vmatprep.subr.bf16.mxu0 0
      %2201 = vmatpush1.bf16.msra.mxu0 0
      %2202 = vmatprep.subr.bf16.mxu0 0
      %2203 = vmatpush1.bf16.msra.mxu0 0
      %2204 = vmatprep.subr.bf16.mxu0 0
      %2205 = vmatpush1.bf16.msra.mxu0 0
      %2206 = vmatprep.subr.bf16.mxu0 0
      %2207 = vmatpush1.bf16.msra.mxu0 0
      %2208 = vmatprep.subr.bf16.mxu0 0
      %2209 = vmatpush1.bf16.msra.mxu0 0
      %2210 = vmatprep.subr.bf16.mxu0 0
      %2211 = vmatpush1.bf16.msra.mxu0 0
      %2212 = vmatprep.subr.bf16.mxu0 0
      %2213 = vmatpush1.bf16.msra.mxu0 0
      %2214 = vmatprep.mubr.bf16.mxu0 0
      %2215 = vmatmul.mubr.bf16.gmra.mrb[0].mxu0 %v2174
      %v2216 = vpop.f32.mrb[0].mxu0
      %v2217 = vadd.f32 0.0, %v2216
      %v2218 = vpop.f32.mrb[0].mxu0
      %v2219 = vadd.f32 0.0, %v2218
      %v2220 = vpop.f32.mrb[0].mxu0
      %v2221 = vpop.f32.mrb[0].mxu0
      %2222 = vdwg.mxu0
      %v2223 = vadd.f32 %v2160, %v2217
      %v2224 = vadd.f32 %v2161, %v2219
      %v2225 = vld [vmem:[%s511] sm:$0xf]
      %v2227 = vunpack.c.l.b16 %v2166
      %v2228 = vpack.c.b16 %v2227, %v2227
      %2229 = vrot.lane.b32.xlu0 %v2171, 127
      %v2230 = vpop.permute.xlu0 %2229
      %2231 = vrot.lane.b32.xlu0 %v2172, 127
      %v2232 = vpop.permute.xlu0 %2231
      %2233 = vrot.lane.b32.xlu0 %v2228, 127
      %v2234 = vpop.permute.xlu0 %2233
      %v2235 = vsel %vm279, %v2230, %v2232
      %v2236 = vsel %vm279, %v2232, %v2234
      %v2238 = vsel %vm282, %v2225, 0
      %v2241 = vsel %vm286, %v2235, 0
      %v2244 = vsel %vm286, %v2236, 0
      %2246 = vmatprep.subr.bf16.mxu0 %v2244
      %2247 = vmatpush1.bf16.msra.mxu0 %v2241
      %2248 = vmatprep.subr.bf16.mxu0 0
      %2249 = vmatpush1.bf16.msra.mxu0 0
      %2250 = vmatprep.subr.bf16.mxu0 0
      %2251 = vmatpush1.bf16.msra.mxu0 0
      %2252 = vmatprep.subr.bf16.mxu0 0
      %2253 = vmatpush1.bf16.msra.mxu0 0
      %2254 = vmatprep.subr.bf16.mxu0 0
      %2255 = vmatpush1.bf16.msra.mxu0 0
      %2256 = vmatprep.subr.bf16.mxu0 0
      %2257 = vmatpush1.bf16.msra.mxu0 0
      %2258 = vmatprep.subr.bf16.mxu0 0
      %2259 = vmatpush1.bf16.msra.mxu0 0
      %2260 = vmatprep.subr.bf16.mxu0 0
      %2261 = vmatpush1.bf16.msra.mxu0 0
      %2262 = vmatprep.subr.bf16.mxu0 0
      %2263 = vmatpush1.bf16.msra.mxu0 0
      %2264 = vmatprep.subr.bf16.mxu0 0
      %2265 = vmatpush1.bf16.msra.mxu0 0
      %2266 = vmatprep.subr.bf16.mxu0 0
      %2267 = vmatpush1.bf16.msra.mxu0 0
      %2268 = vmatprep.subr.bf16.mxu0 0
      %2269 = vmatpush1.bf16.msra.mxu0 0
      %2270 = vmatprep.subr.bf16.mxu0 0
      %2271 = vmatpush1.bf16.msra.mxu0 0
      %2272 = vmatprep.subr.bf16.mxu0 0
      %2273 = vmatpush1.bf16.msra.mxu0 0
      %2274 = vmatprep.subr.bf16.mxu0 0
      %2275 = vmatpush1.bf16.msra.mxu0 0
      %2276 = vmatprep.subr.bf16.mxu0 0
      %2277 = vmatpush1.bf16.msra.mxu0 0
      %2278 = vmatprep.mubr.bf16.mxu0 0
      %2279 = vmatmul.mubr.bf16.gmra.mrb[0].mxu0 %v2238
      %v2280 = vpop.f32.mrb[0].mxu0
      %v2281 = vadd.f32 0.0, %v2280
      %v2282 = vpop.f32.mrb[0].mxu0
      %v2283 = vadd.f32 0.0, %v2282
      %v2284 = vpop.f32.mrb[0].mxu0
      %v2285 = vpop.f32.mrb[0].mxu0
      %2286 = vdwg.mxu0
      %v2287 = vadd.f32 %v2223, %v2281
      %v2288 = vadd.f32 %v2224, %v2283
      %v2289 = vld [vmem:[%s576] sm:$0xf]
      %2290 = vrot.lane.b32.xlu0 %v2171, 126
      %v2291 = vpop.permute.xlu0 %2290
      %2292 = vrot.lane.b32.xlu0 %v2172, 126
      %v2293 = vpop.permute.xlu0 %2292
      %2294 = vrot.lane.b32.xlu0 %v2228, 126
      %v2295 = vpop.permute.xlu0 %2294
      %v2296 = vsel %vm392, %v2291, %v2293
      %v2297 = vsel %vm392, %v2293, %v2295
      %v2299 = vsel %vm282, %v2289, 0
      %v2302 = vsel %vm286, %v2296, 0
      %v2305 = vsel %vm286, %v2297, 0
      %2307 = vmatprep.subr.bf16.mxu0 %v2305
      %2308 = vmatpush1.bf16.msra.mxu0 %v2302
      %2309 = vmatprep.subr.bf16.mxu0 0
      %2310 = vmatpush1.bf16.msra.mxu0 0
      %2311 = vmatprep.subr.bf16.mxu0 0
      %2312 = vmatpush1.bf16.msra.mxu0 0
      %2313 = vmatprep.subr.bf16.mxu0 0
      %2314 = vmatpush1.bf16.msra.mxu0 0
      %2315 = vmatprep.subr.bf16.mxu0 0
      %2316 = vmatpush1.bf16.msra.mxu0 0
      %2317 = vmatprep.subr.bf16.mxu0 0
      %2318 = vmatpush1.bf16.msra.mxu0 0
      %2319 = vmatprep.subr.bf16.mxu0 0
      %2320 = vmatpush1.bf16.msra.mxu0 0
      %2321 = vmatprep.subr.bf16.mxu0 0
      %2322 = vmatpush1.bf16.msra.mxu0 0
      %2323 = vmatprep.subr.bf16.mxu0 0
      %2324 = vmatpush1.bf16.msra.mxu0 0
      %2325 = vmatprep.subr.bf16.mxu0 0
      %2326 = vmatpush1.bf16.msra.mxu0 0
      %2327 = vmatprep.subr.bf16.mxu0 0
      %2328 = vmatpush1.bf16.msra.mxu0 0
      %2329 = vmatprep.subr.bf16.mxu0 0
      %2330 = vmatpush1.bf16.msra.mxu0 0
      %2331 = vmatprep.subr.bf16.mxu0 0
      %2332 = vmatpush1.bf16.msra.mxu0 0
      %2333 = vmatprep.subr.bf16.mxu0 0
      %2334 = vmatpush1.bf16.msra.mxu0 0
      %2335 = vmatprep.subr.bf16.mxu0 0
      %2336 = vmatpush1.bf16.msra.mxu0 0
      %2337 = vmatprep.subr.bf16.mxu0 0
      %2338 = vmatpush1.bf16.msra.mxu0 0
      %2339 = vmatprep.mubr.bf16.mxu0 0
      %2340 = vmatmul.mubr.bf16.gmra.mrb[0].mxu0 %v2299
      %v2341 = vpop.f32.mrb[0].mxu0
      %v2342 = vadd.f32 0.0, %v2341
      %v2343 = vpop.f32.mrb[0].mxu0
      %v2344 = vadd.f32 0.0, %v2343
      %v2345 = vpop.f32.mrb[0].mxu0
      %v2346 = vpop.f32.mrb[0].mxu0
      %2347 = vdwg.mxu0
      %v2348 = vadd.f32 %v2287, %v2342
      %v2349 = vadd.f32 %v2288, %v2344
      %s2350 = sadd.s32 %s256, 12
      %s2351 = smul.addr %s2350, 4
      %s2352 = scalar_lea.vmem %s217, %s2351
      %v2353 = vld [vmem:[%s2352] sm:$0xff]
      %v2354 = vld [vmem:[%s2352 + $0x8] sm:$0xf]
      %v2355 = vld [vmem:[%s643] sm:$0xf]
      %v2357 = vunpack.c.l.b16 %v2353
      %v2358 = vunpack.c.h.b16 %v2353
      %v2359 = vpack.c.b16 %v2357, %v2357
      %v2360 = vpack.c.b16 %v2358, %v2358
      %v2362 = vsel %vm282, %v2355, 0
      %v2365 = vsel %vm286, %v2359, 0
      %v2368 = vsel %vm286, %v2360, 0
      %2370 = vmatprep.subr.bf16.mxu0 %v2368
      %2371 = vmatpush1.bf16.msra.mxu0 %v2365
      %2372 = vmatprep.subr.bf16.mxu0 0
      %2373 = vmatpush1.bf16.msra.mxu0 0
      %2374 = vmatprep.subr.bf16.mxu0 0
      %2375 = vmatpush1.bf16.msra.mxu0 0
      %2376 = vmatprep.subr.bf16.mxu0 0
      %2377 = vmatpush1.bf16.msra.mxu0 0
      %2378 = vmatprep.subr.bf16.mxu0 0
      %2379 = vmatpush1.bf16.msra.mxu0 0
      %2380 = vmatprep.subr.bf16.mxu0 0
      %2381 = vmatpush1.bf16.msra.mxu0 0
      %2382 = vmatprep.subr.bf16.mxu0 0
      %2383 = vmatpush1.bf16.msra.mxu0 0
      %2384 = vmatprep.subr.bf16.mxu0 0
      %2385 = vmatpush1.bf16.msra.mxu0 0
      %2386 = vmatprep.subr.bf16.mxu0 0
      %2387 = vmatpush1.bf16.msra.mxu0 0
      %2388 = vmatprep.subr.bf16.mxu0 0
      %2389 = vmatpush1.bf16.msra.mxu0 0
      %2390 = vmatprep.subr.bf16.mxu0 0
      %2391 = vmatpush1.bf16.msra.mxu0 0
      %2392 = vmatprep.subr.bf16.mxu0 0
      %2393 = vmatpush1.bf16.msra.mxu0 0
      %2394 = vmatprep.subr.bf16.mxu0 0
      %2395 = vmatpush1.bf16.msra.mxu0 0
      %2396 = vmatprep.subr.bf16.mxu0 0
      %2397 = vmatpush1.bf16.msra.mxu0 0
      %2398 = vmatprep.subr.bf16.mxu0 0
      %2399 = vmatpush1.bf16.msra.mxu0 0
      %2400 = vmatprep.subr.bf16.mxu0 0
      %2401 = vmatpush1.bf16.msra.mxu0 0
      %2402 = vmatprep.mubr.bf16.mxu0 0
      %2403 = vmatmul.mubr.bf16.gmra.mrb[0].mxu0 %v2362
      %v2404 = vpop.f32.mrb[0].mxu0
      %v2405 = vadd.f32 0.0, %v2404
      %v2406 = vpop.f32.mrb[0].mxu0
      %v2407 = vadd.f32 0.0, %v2406
      %v2408 = vpop.f32.mrb[0].mxu0
      %v2409 = vpop.f32.mrb[0].mxu0
      %2410 = vdwg.mxu0
      %v2411 = vadd.f32 %v2348, %v2405
      %v2412 = vadd.f32 %v2349, %v2407
      %v2413 = vld [vmem:[%s702] sm:$0xf]
      %v2415 = vunpack.c.l.b16 %v2354
      %v2416 = vpack.c.b16 %v2415, %v2415
      %2417 = vrot.lane.b32.xlu0 %v2359, 127
      %v2418 = vpop.permute.xlu0 %2417
      %2419 = vrot.lane.b32.xlu0 %v2360, 127
      %v2420 = vpop.permute.xlu0 %2419
      %2421 = vrot.lane.b32.xlu0 %v2416, 127
      %v2422 = vpop.permute.xlu0 %2421
      %v2423 = vsel %vm279, %v2418, %v2420
      %v2424 = vsel %vm279, %v2420, %v2422
      %v2426 = vsel %vm282, %v2413, 0
      %v2429 = vsel %vm286, %v2423, 0
      %v2432 = vsel %vm286, %v2424, 0
      %2434 = vmatprep.subr.bf16.mxu0 %v2432
      %2435 = vmatpush1.bf16.msra.mxu0 %v2429
      %2436 = vmatprep.subr.bf16.mxu0 0
      %2437 = vmatpush1.bf16.msra.mxu0 0
      %2438 = vmatprep.subr.bf16.mxu0 0
      %2439 = vmatpush1.bf16.msra.mxu0 0
      %2440 = vmatprep.subr.bf16.mxu0 0
      %2441 = vmatpush1.bf16.msra.mxu0 0
      %2442 = vmatprep.subr.bf16.mxu0 0
      %2443 = vmatpush1.bf16.msra.mxu0 0
      %2444 = vmatprep.subr.bf16.mxu0 0
      %2445 = vmatpush1.bf16.msra.mxu0 0
      %2446 = vmatprep.subr.bf16.mxu0 0
      %2447 = vmatpush1.bf16.msra.mxu0 0
      %2448 = vmatprep.subr.bf16.mxu0 0
      %2449 = vmatpush1.bf16.msra.mxu0 0
      %2450 = vmatprep.subr.bf16.mxu0 0
      %2451 = vmatpush1.bf16.msra.mxu0 0
      %2452 = vmatprep.subr.bf16.mxu0 0
      %2453 = vmatpush1.bf16.msra.mxu0 0
      %2454 = vmatprep.subr.bf16.mxu0 0
      %2455 = vmatpush1.bf16.msra.mxu0 0
      %2456 = vmatprep.subr.bf16.mxu0 0
      %2457 = vmatpush1.bf16.msra.mxu0 0
      %2458 = vmatprep.subr.bf16.mxu0 0
      %2459 = vmatpush1.bf16.msra.mxu0 0
      %2460 = vmatprep.subr.bf16.mxu0 0
      %2461 = vmatpush1.bf16.msra.mxu0 0
      %2462 = vmatprep.subr.bf16.mxu0 0
      %2463 = vmatpush1.bf16.msra.mxu0 0
      %2464 = vmatprep.subr.bf16.mxu0 0
      %2465 = vmatpush1.bf16.msra.mxu0 0
      %2466 = vmatprep.mubr.bf16.mxu0 0
      %2467 = vmatmul.mubr.bf16.gmra.mrb[0].mxu0 %v2426
      %v2468 = vpop.f32.mrb[0].mxu0
      %v2469 = vadd.f32 0.0, %v2468
      %v2470 = vpop.f32.mrb[0].mxu0
      %v2471 = vadd.f32 0.0, %v2470
      %v2472 = vpop.f32.mrb[0].mxu0
      %v2473 = vpop.f32.mrb[0].mxu0
      %2474 = vdwg.mxu0
      %v2475 = vadd.f32 %v2411, %v2469
      %v2476 = vadd.f32 %v2412, %v2471
      %v2477 = vld [vmem:[%s767] sm:$0xf]
      %2478 = vrot.lane.b32.xlu0 %v2359, 126
      %v2479 = vpop.permute.xlu0 %2478
      %2480 = vrot.lane.b32.xlu0 %v2360, 126
      %v2481 = vpop.permute.xlu0 %2480
      %2482 = vrot.lane.b32.xlu0 %v2416, 126
      %v2483 = vpop.permute.xlu0 %2482
      %v2484 = vsel %vm392, %v2479, %v2481
      %v2485 = vsel %vm392, %v2481, %v2483
      %v2487 = vsel %vm282, %v2477, 0
      %v2490 = vsel %vm286, %v2484, 0
      %v2493 = vsel %vm286, %v2485, 0
      %2495 = vmatprep.subr.bf16.mxu0 %v2493
      %2496 = vmatpush1.bf16.msra.mxu0 %v2490
      %2497 = vmatprep.subr.bf16.mxu0 0
      %2498 = vmatpush1.bf16.msra.mxu0 0
      %2499 = vmatprep.subr.bf16.mxu0 0
      %2500 = vmatpush1.bf16.msra.mxu0 0
      %2501 = vmatprep.subr.bf16.mxu0 0
      %2502 = vmatpush1.bf16.msra.mxu0 0
      %2503 = vmatprep.subr.bf16.mxu0 0
      %2504 = vmatpush1.bf16.msra.mxu0 0
      %2505 = vmatprep.subr.bf16.mxu0 0
      %2506 = vmatpush1.bf16.msra.mxu0 0
      %2507 = vmatprep.subr.bf16.mxu0 0
      %2508 = vmatpush1.bf16.msra.mxu0 0
      %2509 = vmatprep.subr.bf16.mxu0 0
      %2510 = vmatpush1.bf16.msra.mxu0 0
      %2511 = vmatprep.subr.bf16.mxu0 0
      %2512 = vmatpush1.bf16.msra.mxu0 0
      %2513 = vmatprep.subr.bf16.mxu0 0
      %2514 = vmatpush1.bf16.msra.mxu0 0
      %2515 = vmatprep.subr.bf16.mxu0 0
      %2516 = vmatpush1.bf16.msra.mxu0 0
      %2517 = vmatprep.subr.bf16.mxu0 0
      %2518 = vmatpush1.bf16.msra.mxu0 0
      %2519 = vmatprep.subr.bf16.mxu0 0
      %2520 = vmatpush1.bf16.msra.mxu0 0
      %2521 = vmatprep.subr.bf16.mxu0 0
      %2522 = vmatpush1.bf16.msra.mxu0 0
      %2523 = vmatprep.subr.bf16.mxu0 0
      %2524 = vmatpush1.bf16.msra.mxu0 0
      %2525 = vmatprep.subr.bf16.mxu0 0
      %2526 = vmatpush1.bf16.msra.mxu0 0
      %2527 = vmatprep.mubr.bf16.mxu0 0
      %2528 = vmatmul.mubr.bf16.gmra.mrb[0].mxu0 %v2487
      %v2529 = vpop.f32.mrb[0].mxu0
      %v2530 = vadd.f32 0.0, %v2529
      %v2531 = vpop.f32.mrb[0].mxu0
      %v2532 = vadd.f32 0.0, %v2531
      %v2533 = vpop.f32.mrb[0].mxu0
      %v2534 = vpop.f32.mrb[0].mxu0
      %2535 = vdwg.mxu0
      %v2536 = vadd.f32 %v2475, %v2530
      %v2537 = vadd.f32 %v2476, %v2532
      %v2538 = vmul.f32 %v2536, %v248
      %v2539 = vmul.f32 %v2537, %v248
      %v2540 = vadd.f32 %v2538, %v254
      %v2541 = vadd.f32 %v2539, %v254
      %v2542 = vmax.f32 %v2540, 0.0
      %v2543 = vmax.f32 %v2541, 0.0
      %v2544 = vmin.f32 %v2542, 20.0
      %v2545 = vmin.f32 %v2543, 20.0
      %v2546 = vsel %vm242, 0.0, %v2544
      %v2547 = vsel %vm243, 0.0, %v2545
      %s2548 = scalar_lea.vmem %s226, 48
      %2549 = vst [vmem:[%s2548] sm:$0xff] %v2546
      %2550 = vst [vmem:[%s2548 + $0x8] sm:$0xff] %v2547
      %s2551 = smul.u32 2, %s27
      %p2552 = scmp.lt.s32.totalorder %s26, 1
      %s2553 = scalar_select %p2552, %s26, 1
      %p2554 = scmp.lt.s32.totalorder %s2551, 1
      %s2555 = scalar_select %p2554, %s2551, 1
      %s2556 = smul.addr %s2553, 8
      %s2557 = sadd.s32 %s2555, %s2556
      %s2558 = smul.addr %s2557, 8
      %s2559 = scalar_lea.vmem %s5, %s2558
      // Predicated region
      $region37: #{_lambda_.3} parent=35 // pred_check
        %p2560 = pneg %p143
      $region38: #{_lambda_.3} parent=35 // pred_check_branch
        %2562 = sbr.rel (%p2560) target = $region40
      $region39: #{_lambda_.3} parent=35 // pred_region
        %s2563 = smul.u32 2, %s27
      $region40: #{_lambda_.3} parent=35 // pred_fallthru
        _
    $region36: #{_lambda_.3} parent=5 // pred_fallthru
      _
    %p2564 = scmp.le.s32.totalorder 2, %s17
    // Predicated region
    $region41: #{_lambda_.3} parent=5 // pred_check
      %p2565 = pneg %p2564
    $region42: #{_lambda_.3} parent=5 // pred_check_branch
      %2567 = sbr.rel (%p2565) target = $region44
    $region43: #{_lambda_.3} parent=5 // pred_region
      %s2568 = ssub.s32 %s17, 2
      // Predicated region
      $region45: #{_lambda_.3} parent=43 // pred_check
        %p2569 = pneg %p149
      $region46: #{_lambda_.3} parent=43 // pred_check_branch
        %2571 = sbr.rel (%p2569) target = $region48
      $region47: #{_lambda_.3} parent=43 // pred_region
        %s2572 = smul.u32 2, %s29
        %p2573 = scmp.lt.s32.totalorder %s28, 1
        %s2574 = scalar_select %p2573, %s28, 1
        %p2575 = scmp.lt.s32.totalorder %s2572, 1
        %s2576 = scalar_select %p2575, %s2572, 1
        %s2577 = smul.addr %s2574, 8
        %s2578 = sadd.s32 %s2576, %s2577
        %s2579 = smul.addr %s2578, 8
        %s2580 = scalar_lea.vmem %s5, %s2579
      $region48: #{_lambda_.3} parent=43 // pred_fallthru
        _
    $region44: #{_lambda_.3} parent=5 // pred_fallthru
      _
  $region6: #{_lambda_.3} parent=0 // loop_footer
    %s21 = sadd.s32 1, %s17
  $region7: #{_lambda_.3} parent=0 // loop_footer_branch
    %16 = sbr.rel target = $region3
  $region8: #{_lambda_.3} parent=0 // loop_exit
    _

</llo_original>
